<compile_context>
chip_gen: v7x
topology: tpu7x:2x2x1
jax: 0.10.0
libtpu: 0.0.40
codegen_flags: <defaults>
</compile_context>

<pallas_src>
import functools

import jax
import jax.numpy as jnp
from jax.experimental import pallas as pl
from jax.experimental.pallas import tpu as pltpu

_EPS = 1e-5


def _vmem_limit(est_bytes):
    """Scoped-VMEM limit: estimate * 1.5 margin for (8,128)/(16,128) layout
    padding, floored at a safe default, capped below physical VMEM."""
    return int(min(max(int(est_bytes * 1.5), 16 * 2 ** 20), 96 * 2 ** 20))


# ----------------------------- kernel bodies ---------------------------------
def _stats_kernel(x_ref, sum_ref, sq_ref):
    """Per-image per-channel sum and sum-of-squares (VPU/XLU reduction)."""
    H, W, C = x_ref.shape
    x = x_ref[...]
    sum_ref[...] = jnp.sum(x, axis=(0, 1)).reshape(1, C)
    sq_ref[...] = jnp.sum(x * x, axis=(0, 1)).reshape(1, C)


def _write_padded(pad_ref, act):
    """Write `act` (H, W, C) into pad_ref (H+2, W+2, C), zeroing only the halo."""
    H, W, C = act.shape
    dt = pad_ref.dtype
    pad_ref[0:1, :, :] = jnp.zeros((1, W + 2, C), dt)
    pad_ref[H + 1:H + 2, :, :] = jnp.zeros((1, W + 2, C), dt)
    pad_ref[:, 0:1, :] = jnp.zeros((H + 2, 1, C), dt)
    pad_ref[:, W + 1:W + 2, :] = jnp.zeros((H + 2, 1, C), dt)
    pad_ref[1:H + 1, 1:W + 1, :] = act


def _conv3x3_im2col(pad_ref, slab_ref, w_ref, stride):
    """3x3 conv (padding already in pad_ref) as ONE MXU matmul.

    Builds a bf16 im2col slab (Ho, Wo, 9*Cin) in VMEM scratch, then multiplies
    the (Ho*Wo, 9*Cin) slab with the (9*Cin, Cout) bf16 weight (f32 accum).
    """
    Ho, Wo, nine_c = slab_ref.shape
    c = nine_c // 9
    for kh in range(3):
        for kw in range(3):
            if stride == 1:
                tap = pad_ref[kh:kh + Ho, kw:kw + Wo, :]
            else:
                tap = pad_ref[pl.ds(kh, Ho, stride), pl.ds(kw, Wo, stride), :]
            j = kh * 3 + kw
            slab_ref[:, :, j * c:(j + 1) * c] = tap.astype(slab_ref.dtype)
    slab = slab_ref[...].reshape(Ho * Wo, nine_c)
    # TODO(synk): a 3-D dot_general contracting the last axis would avoid the
    # sublane-regrouping reshape when Wo is not a multiple of 16 (bf16).
    return jnp.dot(slab, w_ref[...], preferred_element_type=jnp.float32)


def _conv1_kernel(*refs, stride, has_shortcut):
    """relu(bn1(x)) -> 3x3 stride-s conv, fused shortcut + BN2 partial stats."""
    if has_shortcut:
        (x_ref, scale1_ref, shift1_ref, w1_ref, ws_ref,
         y_ref, sc_ref, s2_ref, ss2_ref, pad_ref, slab_ref) = refs
    else:
        (x_ref, scale1_ref, shift1_ref, w1_ref,
         y_ref, s2_ref, ss2_ref, pad_ref, slab_ref) = refs

    H, W, cin = x_ref.shape
    Ho, Wo, cout = y_ref.shape
    scale = scale1_ref[...].reshape(1, 1, cin)
    shift = shift1_ref[...].reshape(1, 1, cin)

    a1 = jnp.maximum(x_ref[...] * scale + shift, 0.0)        # f32 elementwise
    _write_padded(pad_ref, a1.astype(pad_ref.dtype))         # cast once
    y2d = _conv3x3_im2col(pad_ref, slab_ref, w1_ref, stride)  # (Ho*Wo,cout) f32

    # Fused BN2 batch-statistic partials for this image (reduced over N outside
    # the kernel -> no resident accumulator, batch axis stays "parallel").
    s2_ref[...] = jnp.sum(y2d, axis=0).reshape(1, cout)
    ss2_ref[...] = jnp.sum(y2d * y2d, axis=0).reshape(1, cout)
    y_ref[...] = y2d.reshape(Ho, Wo, cout)

    if has_shortcut:
        # Projection shortcut: 1x1 conv (stride s) on relu(bn1(x)). Decimate x
        # first so BN/ReLU only runs on the kept pixels; one bf16 MXU dot.
        if stride == 1:
            xd = x_ref[...]
        else:
            xd = x_ref[pl.ds(0, Ho, stride), pl.ds(0, Wo, stride), :]
        a1d = jnp.maximum(xd * scale + shift, 0.0)
        sc = jnp.dot(a1d.reshape(Ho * Wo, cin).astype(jnp.bfloat16), ws_ref[...],
                     preferred_element_type=jnp.float32)
        sc_ref[...] = sc.reshape(Ho, Wo, cout)


def _conv2_kernel(y1_ref, sc_ref, scale2_ref, shift2_ref, w2_ref,
                  out_ref, pad_ref, slab_ref):
    """relu(bn2(y1)) -> 3x3 stride-1 conv, plus the precomputed shortcut."""
    Ho, Wo, cout = out_ref.shape
    a2 = jnp.maximum(
        y1_ref[...] * scale2_ref[...].reshape(1, 1, cout)
        + shift2_ref[...].reshape(1, 1, cout), 0.0)
    _write_padded(pad_ref, a2.astype(pad_ref.dtype))
    y2d = _conv3x3_im2col(pad_ref, slab_ref, w2_ref, 1)       # (Ho*Wo,cout) f32
    out_ref[...] = y2d.reshape(Ho, Wo, cout) + sc_ref[...]


# ----------------------------- pallas_call wrappers ---------------------------
def _channel_stats(x):
    """Per-channel sum / sum-of-squares over (N,H,W): per-image partials on a
    'parallel' grid, reduced over N in plain JAX."""
    N, H, W, C = x.shape
    sums, sqs = pl.pallas_call(
        _stats_kernel,
        out_shape=(jax.ShapeDtypeStruct((N, 1, C), jnp.float32),
                   jax.ShapeDtypeStruct((N, 1, C), jnp.float32)),
        grid=(N,),
        in_specs=[pl.BlockSpec((None, H, W, C), lambda n: (n, 0, 0, 0))],
        out_specs=(pl.BlockSpec((None, 1, C), lambda n: (n, 0, 0)),
                   pl.BlockSpec((None, 1, C), lambda n: (n, 0, 0))),
        compiler_params=pltpu.CompilerParams(
            dimension_semantics=("parallel",),
            vmem_limit_bytes=_vmem_limit(2 * H * W * C * 4 + 4 * C * 4)),
    )(x)
    return jnp.sum(sums, axis=0), jnp.sum(sqs, axis=0)      # (1, C) each


def _bn_scale_shift(s, ss, gamma, beta, count):
    """Fold training-mode BN (biased batch variance) into per-channel scale/shift."""
    mean = s / count
    var = jnp.maximum(ss / count - mean * mean, 0.0)   # f32; clamp cancellation
    scale = gamma * jax.lax.rsqrt(var + _EPS)
    shift = beta - mean * scale
    return scale, shift


def _conv1_call(x, scale1, shift1, w1, ws, *, stride, has_shortcut):
    N, H, W, cin = x.shape
    cout = w1.shape[1]
    Ho = (H - 1) // stride + 1
    Wo = (W - 1) // stride + 1
    pad_dtype = jnp.bfloat16 if stride == 1 else jnp.float32
    pad_bytes = 2 if stride == 1 else 4

    in_specs = [
        pl.BlockSpec((None, H, W, cin), lambda n: (n, 0, 0, 0)),
        pl.BlockSpec((1, cin), lambda n: (0, 0)),
        pl.BlockSpec((1, cin), lambda n: (0, 0)),
        pl.BlockSpec((9 * cin, cout), lambda n: (0, 0)),
    ]
    args = [x, scale1, shift1, w1]
    out_shape = [jax.ShapeDtypeStruct((N, Ho, Wo, cout), jnp.float32)]
    out_specs = [pl.BlockSpec((None, Ho, Wo, cout), lambda n: (n, 0, 0, 0))]
    if has_shortcut:
        in_specs.append(pl.BlockSpec((cin, cout), lambda n: (0, 0)))
        args.append(ws)
        out_shape.append(jax.ShapeDtypeStruct((N, Ho, Wo, cout), jnp.float32))
        out_specs.append(pl.BlockSpec((None, Ho, Wo, cout), lambda n: (n, 0, 0, 0)))
    out_shape += [jax.ShapeDtypeStruct((N, 1, cout), jnp.float32)] * 2
    out_specs += [pl.BlockSpec((None, 1, cout), lambda n: (n, 0, 0))] * 2

    vmem_est = (2 * (H * W * cin * 4 + 4 * cin * 4 + 9 * cin * cout * 2
                     + (cin * cout * 2 if has_shortcut else 0))
                + 2 * (Ho * Wo * cout * 4 * (2 if has_shortcut else 1)
                       + 4 * cout * 4)
                + (H + 2) * (W + 2) * cin * pad_bytes
                + Ho * Wo * 9 * cin * 2)

    outs = pl.pallas_call(
        functools.partial(_conv1_kernel, stride=stride, has_shortcut=has_shortcut),
        out_shape=tuple(out_shape),
        grid=(N,),
        in_specs=in_specs,
        out_specs=tuple(out_specs),
        scratch_shapes=[
            pltpu.VMEM((H + 2, W + 2, cin), pad_dtype),     # zero-halo padded act
            pltpu.VMEM((Ho, Wo, 9 * cin), jnp.bfloat16),    # bf16 im2col slab
        ],
        compiler_params=pltpu.CompilerParams(
            dimension_semantics=("parallel",),              # images independent
            vmem_limit_bytes=_vmem_limit(vmem_est)),
    )(*args)

    if has_shortcut:
        y1, sc, s2p, ss2p = outs
    else:
        y1, s2p, ss2p = outs
        sc = None
    return y1, sc, jnp.sum(s2p, axis=0), jnp.sum(ss2p, axis=0)


def _conv2_call(y1, sc, scale2, shift2, w2):
    N, Ho, Wo, cout = y1.shape
    vmem_est = (2 * (2 * Ho * Wo * cout * 4 + 4 * cout * 4 + 9 * cout * cout * 2)
                + 2 * Ho * Wo * cout * 4
                + (Ho + 2) * (Wo + 2) * cout * 2
                + Ho * Wo * 9 * cout * 2)
    return pl.pallas_call(
        _conv2_kernel,
        out_shape=jax.ShapeDtypeStruct((N, Ho, Wo, cout), jnp.float32),
        grid=(N,),
        in_specs=[
            pl.BlockSpec((None, Ho, Wo, cout), lambda n: (n, 0, 0, 0)),
            pl.BlockSpec((None, Ho, Wo, cout), lambda n: (n, 0, 0, 0)),
            pl.BlockSpec((1, cout), lambda n: (0, 0)),
            pl.BlockSpec((1, cout), lambda n: (0, 0)),
            pl.BlockSpec((9 * cout, cout), lambda n: (0, 0)),
        ],
        out_specs=pl.BlockSpec((None, Ho, Wo, cout), lambda n: (n, 0, 0, 0)),
        scratch_shapes=[
            pltpu.VMEM((Ho + 2, Wo + 2, cout), jnp.bfloat16),
            pltpu.VMEM((Ho, Wo, 9 * cout), jnp.bfloat16),
        ],
        compiler_params=pltpu.CompilerParams(
            dimension_semantics=("parallel",),
            vmem_limit_bytes=_vmem_limit(vmem_est)),
    )(y1, sc, scale2, shift2, w2)


# ----------------------------- public API -------------------------------------
def prepare_params(params, stride):
    """One-time conversion of PyTorch-layout params to the kernel layout:
    OIHW conv weights -> im2col (9*Cin, Cout) bf16, BN affine -> (1, C) f32."""
    cout, cin = params["w1"].shape[:2]
    has_shortcut = (stride != 1) or (cin != cout)
    w1 = jnp.transpose(params["w1"], (2, 3, 1, 0)).reshape(9 * cin, cout)
    w2 = jnp.transpose(params["w2"], (2, 3, 1, 0)).reshape(9 * cout, cout)
    pp = {
        "w1": w1.astype(jnp.bfloat16),
        "w2": w2.astype(jnp.bfloat16),
        "g1": params["g1"].reshape(1, cin).astype(jnp.float32),
        "b1": params["b1"].reshape(1, cin).astype(jnp.float32),
        "g2": params["g2"].reshape(1, cout).astype(jnp.float32),
        "b2": params["b2"].reshape(1, cout).astype(jnp.float32),
    }
    if has_shortcut:
        pp["ws"] = jnp.transpose(params["ws"][:, :, 0, 0], (1, 0)).astype(jnp.bfloat16)
    return pp, has_shortcut


@functools.partial(jax.jit, static_argnames=("stride", "has_shortcut"))
def preact_block_nhwc(x, pp, *, stride, has_shortcut):
    """PreActBlock forward on an NHWC activation (the layout-stable hot path)."""
    N, H, W, _ = x.shape
    Ho = (H - 1) // stride + 1
    Wo = (W - 1) // stride + 1

    # pass 1: BN1 batch statistics (per-image partials, reduced over N).
    # TODO(synk): at the network level, fuse these into the previous block's
    # conv2 epilogue so only the network input needs a standalone stats pass.
    s1, ss1 = _channel_stats(x)
    scale1, shift1 = _bn_scale_shift(s1, ss1, pp["g1"], pp["b1"], N * H * W)

    # pass 2: relu(bn1(x)) -> conv1 (3x3, stride s) + fused projection shortcut
    #         + fused BN2 partial statistics.
    y1, sc, s2, ss2 = _conv1_call(x, scale1, shift1, pp["w1"], pp.get("ws"),
                                  stride=stride, has_shortcut=has_shortcut)
    if not has_shortcut:
        sc = x                                   # identity shortcut

    scale2, shift2 = _bn_scale_shift(s2, ss2, pp["g2"], pp["b2"], N * Ho * Wo)

    # pass 3: relu(bn2(y1)) -> conv2 (3x3, stride 1) + shortcut add.
    return _conv2_call(y1, sc, scale2, shift2, pp["w2"])


def preact_block(x_nchw, params, stride):
    """PyTorch-interface wrapper: (N, Cin, H, W) f32 -> (N, Cout, Ho, Wo) f32."""
    pp, has_shortcut = prepare_params(params, stride)
    x = jnp.transpose(x_nchw, (0, 2, 3, 1)).astype(jnp.float32)
    out = preact_block_nhwc(x, pp, stride=stride, has_shortcut=has_shortcut)
    return jnp.transpose(out, (0, 3, 1, 2))


# --------------------------- pure-JAX reference -------------------------------
def _bn_relu_train(x, gamma, beta):
    mu = jnp.mean(x, axis=(0, 2, 3), keepdims=True)
    var = jnp.mean((x - mu) ** 2, axis=(0, 2, 3), keepdims=True)
    y = gamma.reshape(1, -1, 1, 1) * (x - mu) * jax.lax.rsqrt(var + _EPS) \
        + beta.reshape(1, -1, 1, 1)
    return jnp.maximum(y, 0.0)


def _conv2d(x, w, stride, padding):
    return jax.lax.conv_general_dilated(
        x, w, (stride, stride), [(padding, padding)] * 2,
        dimension_numbers=("NCHW", "OIHW", "NCHW"),
        precision=jax.lax.Precision.HIGHEST)


def ref_forward(x, p, stride):
    out = _bn_relu_train(x, p["g1"], p["b1"])
    cin, cout = x.shape[1], p["w1"].shape[0]
    shortcut = _conv2d(out, p["ws"], stride, 0) if (stride != 1 or cin != cout) else x
    out = _conv2d(out, p["w1"], stride, 1)
    out = _bn_relu_train(out, p["g2"], p["b2"])
    out = _conv2d(out, p["w2"], 1, 1)
    return out + shortcut


def init_params(key, in_planes, planes, stride):
    ks = jax.random.split(key, 7)
    p = {
        "g1": 1.0 + 0.1 * jax.random.normal(ks[0], (in_planes,), jnp.float32),
        "b1": 0.1 * jax.random.normal(ks[1], (in_planes,), jnp.float32),
        "w1": 0.2 * jax.random.normal(ks[2], (planes, in_planes, 3, 3), jnp.float32),
        "g2": 1.0 + 0.1 * jax.random.normal(ks[3], (planes,), jnp.float32),
        "b2": 0.1 * jax.random.normal(ks[4], (planes,), jnp.float32),
        "w2": 0.2 * jax.random.normal(ks[5], (planes, planes, 3, 3), jnp.float32),
    }
    if stride != 1 or in_planes != planes:
        p["ws"] = 0.2 * jax.random.normal(ks[6], (planes, in_planes, 1, 1), jnp.float32)
    return p


if __name__ == "__main__":
    root = jax.random.PRNGKey(0)
    configs = [
        (4, 4, 1),   # identity shortcut
        (4, 8, 2),   # projection (1x1, stride 2) shortcut
    ]
    for idx, (in_planes, planes, stride) in enumerate(configs):
        kx, kp = jax.random.split(jax.random.fold_in(root, idx))
        x = jax.random.normal(kx, (2, in_planes, 16, 16), jnp.float32)
        params = init_params(kp, in_planes, planes, stride)
        out = jax.block_until_ready(preact_block(x, params, stride))
        ref = ref_forward(x, params, stride)
        assert out.shape == ref.shape, (out.shape, ref.shape)
        err = float(jnp.max(jnp.abs(out - ref)))
        scale = float(jnp.max(jnp.abs(ref)))
        # Convs run single-pass bf16 on the MXU with f32 accumulation; allow
        # bf16-level error relative to the HIGHEST-precision f32 reference.
        assert err <= 1e-2 * (1.0 + scale), \
            f"config {idx}: max abs err {err} vs ref max {scale}"
    print("KERNEL_OK")
</pallas_src>

<mosaic_0001>
module attributes {stable_mosaic.version = 11 : i64} {
  func.func @_stats_kernel(%arg0: i32, %arg1: memref<1x16x16x4xf32, #tpu.memory_space<vmem>>, %arg2: memref<1x1x4xf32, #tpu.memory_space<vmem>>, %arg3: memref<1x1x4xf32, #tpu.memory_space<vmem>>) attributes {dimension_semantics = [#tpu.dimension_semantics<parallel>], iteration_bounds = array<i64: 2>, scalar_prefetch = 0 : i64, scratch_operands = 0 : i64, tpu.core_type = #tpu.core_type<tc>, window_params = [{transform_indices = @transform_0, window_bounds = array<i64: 1, 16, 16, 4>}, {transform_indices = @transform_1, window_bounds = array<i64: 1, 1, 4>}, {transform_indices = @transform_2, window_bounds = array<i64: 1, 1, 4>}]} {
    %c0 = arith.constant 0 : index
    %c0_0 = arith.constant 0 : index
    %c0_1 = arith.constant 0 : index
    %c0_2 = arith.constant 0 : index
    %0 = vector.load %arg1[%c0, %c0_0, %c0_1, %c0_2] : memref<1x16x16x4xf32, #tpu.memory_space<vmem>>, vector<1x16x16x4xf32>
    %1 = vector.shape_cast %0 : vector<1x16x16x4xf32> to vector<16x16x4xf32>
    %cst = arith.constant dense<0.000000e+00> : vector<4xf32>
    %2 = vector.multi_reduction <add>, %1, %cst [0, 1] : vector<16x16x4xf32> to vector<4xf32>
    %3 = vector.shape_cast %2 : vector<4xf32> to vector<1x4xf32>
    %c0_3 = arith.constant 0 : index
    %c0_4 = arith.constant 0 : index
    %c0_5 = arith.constant 0 : index
    %4 = vector.load %arg2[%c0_3, %c0_4, %c0_5] : memref<1x1x4xf32, #tpu.memory_space<vmem>>, vector<1x1x4xf32>
    %5 = vector.shape_cast %4 : vector<1x1x4xf32> to vector<1x4xf32>
    %6 = vector.shape_cast %3 : vector<1x4xf32> to vector<1x1x4xf32>
    tpu.vector_store %arg2[%c0_3, %c0_4, %c0_5], %6 {strides = array<i32>} : memref<1x1x4xf32, #tpu.memory_space<vmem>>, vector<1x1x4xf32>,
    %7 = arith.mulf %1, %1 : vector<16x16x4xf32>
    %cst_6 = arith.constant dense<0.000000e+00> : vector<4xf32>
    %8 = vector.multi_reduction <add>, %7, %cst_6 [0, 1] : vector<16x16x4xf32> to vector<4xf32>
    %9 = vector.shape_cast %8 : vector<4xf32> to vector<1x4xf32>
    %c0_7 = arith.constant 0 : index
    %c0_8 = arith.constant 0 : index
    %c0_9 = arith.constant 0 : index
    %10 = vector.load %arg3[%c0_7, %c0_8, %c0_9] : memref<1x1x4xf32, #tpu.memory_space<vmem>>, vector<1x1x4xf32>
    %11 = vector.shape_cast %10 : vector<1x1x4xf32> to vector<1x4xf32>
    %12 = vector.shape_cast %9 : vector<1x4xf32> to vector<1x1x4xf32>
    tpu.vector_store %arg3[%c0_7, %c0_8, %c0_9], %12 {strides = array<i32>} : memref<1x1x4xf32, #tpu.memory_space<vmem>>, vector<1x1x4xf32>,
    return
  }
  func.func @transform_0(%arg0: i32) -> (i32, i32, i32, i32) {
    %c0_i32 = arith.constant 0 : i32
    %c0_i32_0 = arith.constant 0 : i32
    %c0_i32_1 = arith.constant 0 : i32
    %c0_i32_2 = arith.constant 0 : i32
    return %arg0, %c0_i32, %c0_i32_0, %c0_i32_1 : i32, i32, i32, i32
  }
  func.func @transform_1(%arg0: i32) -> (i32, i32, i32) {
    %c0_i32 = arith.constant 0 : i32
    %c0_i32_0 = arith.constant 0 : i32
    %c0_i32_1 = arith.constant 0 : i32
    return %arg0, %c0_i32, %c0_i32_0 : i32, i32, i32
  }
  func.func @transform_2(%arg0: i32) -> (i32, i32, i32) {
    %c0_i32 = arith.constant 0 : i32
    %c0_i32_0 = arith.constant 0 : i32
    %c0_i32_1 = arith.constant 0 : i32
    return %arg0, %c0_i32, %c0_i32_0 : i32, i32, i32
  }
}

module attributes {stable_mosaic.version = 11 : i64} {
  func.func @_conv1_kernel(%arg0: i32, %arg1: memref<1x16x16x4xf32, #tpu.memory_space<vmem>>, %arg2: memref<1x4xf32, #tpu.memory_space<vmem>>, %arg3: memref<1x4xf32, #tpu.memory_space<vmem>>, %arg4: memref<36x4xbf16, #tpu.memory_space<vmem>>, %arg5: memref<1x16x16x4xf32, #tpu.memory_space<vmem>>, %arg6: memref<1x1x4xf32, #tpu.memory_space<vmem>>, %arg7: memref<1x1x4xf32, #tpu.memory_space<vmem>>, %arg8: memref<18x18x4xbf16, #tpu.memory_space<vmem>>, %arg9: memref<16x16x36xbf16, #tpu.memory_space<vmem>>) attributes {dimension_semantics = [#tpu.dimension_semantics<parallel>], iteration_bounds = array<i64: 2>, scalar_prefetch = 0 : i64, scratch_operands = 2 : i64, tpu.core_type = #tpu.core_type<tc>, window_params = [{transform_indices = @transform_0, window_bounds = array<i64: 1, 16, 16, 4>}, {pipeline_mode = #tpu.pipeline_mode<synchronous>, transform_indices = @transform_1, window_bounds = array<i64: 1, 4>}, {pipeline_mode = #tpu.pipeline_mode<synchronous>, transform_indices = @transform_2, window_bounds = array<i64: 1, 4>}, {pipeline_mode = #tpu.pipeline_mode<synchronous>, transform_indices = @transform_3, window_bounds = array<i64: 36, 4>}, {transform_indices = @transform_4, window_bounds = array<i64: 1, 16, 16, 4>}, {transform_indices = @transform_5, window_bounds = array<i64: 1, 1, 4>}, {transform_indices = @transform_6, window_bounds = array<i64: 1, 1, 4>}]} {
    %c0 = arith.constant 0 : index
    %c0_0 = arith.constant 0 : index
    %0 = vector.load %arg2[%c0, %c0_0] : memref<1x4xf32, #tpu.memory_space<vmem>>, vector<1x4xf32>
    %1 = vector.shape_cast %0 : vector<1x4xf32> to vector<1x1x4xf32>
    %c0_1 = arith.constant 0 : index
    %c0_2 = arith.constant 0 : index
    %2 = vector.load %arg3[%c0_1, %c0_2] : memref<1x4xf32, #tpu.memory_space<vmem>>, vector<1x4xf32>
    %3 = vector.shape_cast %2 : vector<1x4xf32> to vector<1x1x4xf32>
    %c0_3 = arith.constant 0 : index
    %c0_4 = arith.constant 0 : index
    %c0_5 = arith.constant 0 : index
    %c0_6 = arith.constant 0 : index
    %4 = vector.load %arg1[%c0_3, %c0_4, %c0_5, %c0_6] : memref<1x16x16x4xf32, #tpu.memory_space<vmem>>, vector<1x16x16x4xf32>
    %5 = vector.shape_cast %4 : vector<1x16x16x4xf32> to vector<16x16x4xf32>
    %6 = vector.broadcast %1 : vector<1x1x4xf32> to vector<16x16x4xf32>
    %7 = arith.mulf %5, %6 : vector<16x16x4xf32>
    %8 = vector.broadcast %3 : vector<1x1x4xf32> to vector<16x16x4xf32>
    %9 = arith.addf %7, %8 : vector<16x16x4xf32>
    %cst = arith.constant 0.000000e+00 : f32
    %10 = vector.broadcast %cst : f32 to vector<16x16x4xf32>
    %11 = arith.maximumf %9, %10 : vector<16x16x4xf32>
    %12 = arith.truncf %11 : vector<16x16x4xf32> to vector<16x16x4xbf16>
    %cst_7 = arith.constant 0.000000e+00 : bf16
    %13 = vector.broadcast %cst_7 : bf16 to vector<1x18x4xbf16>
    %c0_8 = arith.constant 0 : index
    %c0_9 = arith.constant 0 : index
    %c0_10 = arith.constant 0 : index
    %14 = vector.load %arg8[%c0_8, %c0_9, %c0_10] : memref<18x18x4xbf16, #tpu.memory_space<vmem>>, vector<1x18x4xbf16>
    tpu.vector_store %arg8[%c0_8, %c0_9, %c0_10], %13 {strides = array<i32>} : memref<18x18x4xbf16, #tpu.memory_space<vmem>>, vector<1x18x4xbf16>,
    %cst_11 = arith.constant 0.000000e+00 : bf16
    %15 = vector.broadcast %cst_11 : bf16 to vector<1x18x4xbf16>
    %c17 = arith.constant 17 : index
    %c0_12 = arith.constant 0 : index
    %c0_13 = arith.constant 0 : index
    %16 = vector.load %arg8[%c17, %c0_12, %c0_13] : memref<18x18x4xbf16, #tpu.memory_space<vmem>>, vector<1x18x4xbf16>
    tpu.vector_store %arg8[%c17, %c0_12, %c0_13], %15 {strides = array<i32>} : memref<18x18x4xbf16, #tpu.memory_space<vmem>>, vector<1x18x4xbf16>,
    %cst_14 = arith.constant 0.000000e+00 : bf16
    %17 = vector.broadcast %cst_14 : bf16 to vector<18x1x4xbf16>
    %c0_15 = arith.constant 0 : index
    %c0_16 = arith.constant 0 : index
    %c0_17 = arith.constant 0 : index
    %18 = vector.load %arg8[%c0_15, %c0_16, %c0_17] : memref<18x18x4xbf16, #tpu.memory_space<vmem>>, vector<18x1x4xbf16>
    tpu.vector_store %arg8[%c0_15, %c0_16, %c0_17], %17 {strides = array<i32>} : memref<18x18x4xbf16, #tpu.memory_space<vmem>>, vector<18x1x4xbf16>,
    %cst_18 = arith.constant 0.000000e+00 : bf16
    %19 = vector.broadcast %cst_18 : bf16 to vector<18x1x4xbf16>
    %c0_19 = arith.constant 0 : index
    %c17_20 = arith.constant 17 : index
    %c0_21 = arith.constant 0 : index
    %20 = vector.load %arg8[%c0_19, %c17_20, %c0_21] : memref<18x18x4xbf16, #tpu.memory_space<vmem>>, vector<18x1x4xbf16>
    tpu.vector_store %arg8[%c0_19, %c17_20, %c0_21], %19 {strides = array<i32>} : memref<18x18x4xbf16, #tpu.memory_space<vmem>>, vector<18x1x4xbf16>,
    %c1 = arith.constant 1 : index
    %c1_22 = arith.constant 1 : index
    %c0_23 = arith.constant 0 : index
    %21 = vector.load %arg8[%c1, %c1_22, %c0_23] : memref<18x18x4xbf16, #tpu.memory_space<vmem>>, vector<16x16x4xbf16>
    tpu.vector_store %arg8[%c1, %c1_22, %c0_23], %12 {strides = array<i32>} : memref<18x18x4xbf16, #tpu.memory_space<vmem>>, vector<16x16x4xbf16>,
    %c0_24 = arith.constant 0 : index
    %c0_25 = arith.constant 0 : index
    %c0_26 = arith.constant 0 : index
    %22 = vector.load %arg8[%c0_24, %c0_25, %c0_26] : memref<18x18x4xbf16, #tpu.memory_space<vmem>>, vector<16x16x4xbf16>
    %c0_27 = arith.constant 0 : index
    %c0_28 = arith.constant 0 : index
    %c0_29 = arith.constant 0 : index
    %23 = vector.load %arg9[%c0_27, %c0_28, %c0_29] : memref<16x16x36xbf16, #tpu.memory_space<vmem>>, vector<16x16x4xbf16>
    tpu.vector_store %arg9[%c0_27, %c0_28, %c0_29], %22 {strides = array<i32>} : memref<16x16x36xbf16, #tpu.memory_space<vmem>>, vector<16x16x4xbf16>,
    %c0_30 = arith.constant 0 : index
    %c1_31 = arith.constant 1 : index
    %c0_32 = arith.constant 0 : index
    %24 = vector.load %arg8[%c0_30, %c1_31, %c0_32] : memref<18x18x4xbf16, #tpu.memory_space<vmem>>, vector<16x16x4xbf16>
    %c0_33 = arith.constant 0 : index
    %c0_34 = arith.constant 0 : index
    %c4 = arith.constant 4 : index
    %25 = vector.load %arg9[%c0_33, %c0_34, %c4] : memref<16x16x36xbf16, #tpu.memory_space<vmem>>, vector<16x16x4xbf16>
    tpu.vector_store %arg9[%c0_33, %c0_34, %c4], %24 {strides = array<i32>} : memref<16x16x36xbf16, #tpu.memory_space<vmem>>, vector<16x16x4xbf16>,
    %c0_35 = arith.constant 0 : index
    %c2 = arith.constant 2 : index
    %c0_36 = arith.constant 0 : index
    %26 = vector.load %arg8[%c0_35, %c2, %c0_36] : memref<18x18x4xbf16, #tpu.memory_space<vmem>>, vector<16x16x4xbf16>
    %c0_37 = arith.constant 0 : index
    %c0_38 = arith.constant 0 : index
    %c8 = arith.constant 8 : index
    %27 = vector.load %arg9[%c0_37, %c0_38, %c8] : memref<16x16x36xbf16, #tpu.memory_space<vmem>>, vector<16x16x4xbf16>
    tpu.vector_store %arg9[%c0_37, %c0_38, %c8], %26 {strides = array<i32>} : memref<16x16x36xbf16, #tpu.memory_space<vmem>>, vector<16x16x4xbf16>,
    %c1_39 = arith.constant 1 : index
    %c0_40 = arith.constant 0 : index
    %c0_41 = arith.constant 0 : index
    %28 = vector.load %arg8[%c1_39, %c0_40, %c0_41] : memref<18x18x4xbf16, #tpu.memory_space<vmem>>, vector<16x16x4xbf16>
    %c0_42 = arith.constant 0 : index
    %c0_43 = arith.constant 0 : index
    %c12 = arith.constant 12 : index
    %29 = vector.load %arg9[%c0_42, %c0_43, %c12] : memref<16x16x36xbf16, #tpu.memory_space<vmem>>, vector<16x16x4xbf16>
    tpu.vector_store %arg9[%c0_42, %c0_43, %c12], %28 {strides = array<i32>} : memref<16x16x36xbf16, #tpu.memory_space<vmem>>, vector<16x16x4xbf16>,
    %c1_44 = arith.constant 1 : index
    %c1_45 = arith.constant 1 : index
    %c0_46 = arith.constant 0 : index
    %30 = vector.load %arg8[%c1_44, %c1_45, %c0_46] : memref<18x18x4xbf16, #tpu.memory_space<vmem>>, vector<16x16x4xbf16>
    %c0_47 = arith.constant 0 : index
    %c0_48 = arith.constant 0 : index
    %c16 = arith.constant 16 : index
    %31 = vector.load %arg9[%c0_47, %c0_48, %c16] : memref<16x16x36xbf16, #tpu.memory_space<vmem>>, vector<16x16x4xbf16>
    tpu.vector_store %arg9[%c0_47, %c0_48, %c16], %30 {strides = array<i32>} : memref<16x16x36xbf16, #tpu.memory_space<vmem>>, vector<16x16x4xbf16>,
    %c1_49 = arith.constant 1 : index
    %c2_50 = arith.constant 2 : index
    %c0_51 = arith.constant 0 : index
    %32 = vector.load %arg8[%c1_49, %c2_50, %c0_51] : memref<18x18x4xbf16, #tpu.memory_space<vmem>>, vector<16x16x4xbf16>
    %c0_52 = arith.constant 0 : index
    %c0_53 = arith.constant 0 : index
    %c20 = arith.constant 20 : index
    %33 = vector.load %arg9[%c0_52, %c0_53, %c20] : memref<16x16x36xbf16, #tpu.memory_space<vmem>>, vector<16x16x4xbf16>
    tpu.vector_store %arg9[%c0_52, %c0_53, %c20], %32 {strides = array<i32>} : memref<16x16x36xbf16, #tpu.memory_space<vmem>>, vector<16x16x4xbf16>,
    %c2_54 = arith.constant 2 : index
    %c0_55 = arith.constant 0 : index
    %c0_56 = arith.constant 0 : index
    %34 = vector.load %arg8[%c2_54, %c0_55, %c0_56] : memref<18x18x4xbf16, #tpu.memory_space<vmem>>, vector<16x16x4xbf16>
    %c0_57 = arith.constant 0 : index
    %c0_58 = arith.constant 0 : index
    %c24 = arith.constant 24 : index
    %35 = vector.load %arg9[%c0_57, %c0_58, %c24] : memref<16x16x36xbf16, #tpu.memory_space<vmem>>, vector<16x16x4xbf16>
    tpu.vector_store %arg9[%c0_57, %c0_58, %c24], %34 {strides = array<i32>} : memref<16x16x36xbf16, #tpu.memory_space<vmem>>, vector<16x16x4xbf16>,
    %c2_59 = arith.constant 2 : index
    %c1_60 = arith.constant 1 : index
    %c0_61 = arith.constant 0 : index
    %36 = vector.load %arg8[%c2_59, %c1_60, %c0_61] : memref<18x18x4xbf16, #tpu.memory_space<vmem>>, vector<16x16x4xbf16>
    %c0_62 = arith.constant 0 : index
    %c0_63 = arith.constant 0 : index
    %c28 = arith.constant 28 : index
    %37 = vector.load %arg9[%c0_62, %c0_63, %c28] : memref<16x16x36xbf16, #tpu.memory_space<vmem>>, vector<16x16x4xbf16>
    tpu.vector_store %arg9[%c0_62, %c0_63, %c28], %36 {strides = array<i32>} : memref<16x16x36xbf16, #tpu.memory_space<vmem>>, vector<16x16x4xbf16>,
    %c2_64 = arith.constant 2 : index
    %c2_65 = arith.constant 2 : index
    %c0_66 = arith.constant 0 : index
    %38 = vector.load %arg8[%c2_64, %c2_65, %c0_66] : memref<18x18x4xbf16, #tpu.memory_space<vmem>>, vector<16x16x4xbf16>
    %c0_67 = arith.constant 0 : index
    %c0_68 = arith.constant 0 : index
    %c32 = arith.constant 32 : index
    %39 = vector.load %arg9[%c0_67, %c0_68, %c32] : memref<16x16x36xbf16, #tpu.memory_space<vmem>>, vector<16x16x4xbf16>
    tpu.vector_store %arg9[%c0_67, %c0_68, %c32], %38 {strides = array<i32>} : memref<16x16x36xbf16, #tpu.memory_space<vmem>>, vector<16x16x4xbf16>,
    %c0_69 = arith.constant 0 : index
    %c0_70 = arith.constant 0 : index
    %c0_71 = arith.constant 0 : index
    %40 = vector.load %arg9[%c0_69, %c0_70, %c0_71] : memref<16x16x36xbf16, #tpu.memory_space<vmem>>, vector<16x16x36xbf16>
    %41 = vector.shape_cast %40 : vector<16x16x36xbf16> to vector<256x36xbf16>
    %c0_72 = arith.constant 0 : index
    %c0_73 = arith.constant 0 : index
    %42 = vector.load %arg4[%c0_72, %c0_73] : memref<36x4xbf16, #tpu.memory_space<vmem>>, vector<36x4xbf16>
    %cst_74 = arith.constant dense<0.000000e+00> : vector<256x4xf32>
    %43 = tpu.matmul %41, %42, %cst_74 {dimension_numbers = #tpu.dot_dimension_numbers<[1], [0], [0], [1], [0, 0, 1, 1], [], []>} : vector<256x36xbf16>, vector<36x4xbf16>, vector<256x4xf32> -> vector<256x4xf32>
    %cst_75 = arith.constant dense<0.000000e+00> : vector<4xf32>
    %44 = vector.multi_reduction <add>, %43, %cst_75 [0] : vector<256x4xf32> to vector<4xf32>
    %45 = vector.shape_cast %44 : vector<4xf32> to vector<1x4xf32>
    %c0_76 = arith.constant 0 : index
    %c0_77 = arith.constant 0 : index
    %c0_78 = arith.constant 0 : index
    %46 = vector.load %arg6[%c0_76, %c0_77, %c0_78] : memref<1x1x4xf32, #tpu.memory_space<vmem>>, vector<1x1x4xf32>
    %47 = vector.shape_cast %46 : vector<1x1x4xf32> to vector<1x4xf32>
    %48 = vector.shape_cast %45 : vector<1x4xf32> to vector<1x1x4xf32>
    tpu.vector_store %arg6[%c0_76, %c0_77, %c0_78], %48 {strides = array<i32>} : memref<1x1x4xf32, #tpu.memory_space<vmem>>, vector<1x1x4xf32>,
    %49 = arith.mulf %43, %43 : vector<256x4xf32>
    %cst_79 = arith.constant dense<0.000000e+00> : vector<4xf32>
    %50 = vector.multi_reduction <add>, %49, %cst_79 [0] : vector<256x4xf32> to vector<4xf32>
    %51 = vector.shape_cast %50 : vector<4xf32> to vector<1x4xf32>
    %c0_80 = arith.constant 0 : index
    %c0_81 = arith.constant 0 : index
    %c0_82 = arith.constant 0 : index
    %52 = vector.load %arg7[%c0_80, %c0_81, %c0_82] : memref<1x1x4xf32, #tpu.memory_space<vmem>>, vector<1x1x4xf32>
    %53 = vector.shape_cast %52 : vector<1x1x4xf32> to vector<1x4xf32>
    %54 = vector.shape_cast %51 : vector<1x4xf32> to vector<1x1x4xf32>
    tpu.vector_store %arg7[%c0_80, %c0_81, %c0_82], %54 {strides = array<i32>} : memref<1x1x4xf32, #tpu.memory_space<vmem>>, vector<1x1x4xf32>,
    %55 = vector.shape_cast %43 : vector<256x4xf32> to vector<16x16x4xf32>
    %c0_83 = arith.constant 0 : index
    %c0_84 = arith.constant 0 : index
    %c0_85 = arith.constant 0 : index
    %c0_86 = arith.constant 0 : index
    %56 = vector.load %arg5[%c0_83, %c0_84, %c0_85, %c0_86] : memref<1x16x16x4xf32, #tpu.memory_space<vmem>>, vector<1x16x16x4xf32>
    %57 = vector.shape_cast %56 : vector<1x16x16x4xf32> to vector<16x16x4xf32>
    %58 = vector.shape_cast %55 : vector<16x16x4xf32> to vector<1x16x16x4xf32>
    tpu.vector_store %arg5[%c0_83, %c0_84, %c0_85, %c0_86], %58 {strides = array<i32>} : memref<1x16x16x4xf32, #tpu.memory_space<vmem>>, vector<1x16x16x4xf32>,
    return
  }
  func.func @transform_0(%arg0: i32) -> (i32, i32, i32, i32) {
    %c0_i32 = arith.constant 0 : i32
    %c0_i32_0 = arith.constant 0 : i32
    %c0_i32_1 = arith.constant 0 : i32
    %c0_i32_2 = arith.constant 0 : i32
    return %arg0, %c0_i32, %c0_i32_0, %c0_i32_1 : i32, i32, i32, i32
  }
  func.func @transform_1(%arg0: i32) -> (i32, i32) {
    %c0_i32 = arith.constant 0 : i32
    %c0_i32_0 = arith.constant 0 : i32
    %c0_i32_1 = arith.constant 0 : i32
    return %c0_i32, %c0_i32_0 : i32, i32
  }
  func.func @transform_2(%arg0: i32) -> (i32, i32) {
    %c0_i32 = arith.constant 0 : i32
    %c0_i32_0 = arith.constant 0 : i32
    %c0_i32_1 = arith.constant 0 : i32
    return %c0_i32, %c0_i32_0 : i32, i32
  }
  func.func @transform_3(%arg0: i32) -> (i32, i32) {
    %c0_i32 = arith.constant 0 : i32
    %c0_i32_0 = arith.constant 0 : i32
    %c0_i32_1 = arith.constant 0 : i32
    return %c0_i32, %c0_i32_0 : i32, i32
  }
  func.func @transform_4(%arg0: i32) -> (i32, i32, i32, i32) {
    %c0_i32 = arith.constant 0 : i32
    %c0_i32_0 = arith.constant 0 : i32
    %c0_i32_1 = arith.constant 0 : i32
    %c0_i32_2 = arith.constant 0 : i32
    return %arg0, %c0_i32, %c0_i32_0, %c0_i32_1 : i32, i32, i32, i32
  }
  func.func @transform_5(%arg0: i32) -> (i32, i32, i32) {
    %c0_i32 = arith.constant 0 : i32
    %c0_i32_0 = arith.constant 0 : i32
    %c0_i32_1 = arith.constant 0 : i32
    return %arg0, %c0_i32, %c0_i32_0 : i32, i32, i32
  }
  func.func @transform_6(%arg0: i32) -> (i32, i32, i32) {
    %c0_i32 = arith.constant 0 : i32
    %c0_i32_0 = arith.constant 0 : i32
    %c0_i32_1 = arith.constant 0 : i32
    return %arg0, %c0_i32, %c0_i32_0 : i32, i32, i32
  }
}

module attributes {stable_mosaic.version = 11 : i64} {
  func.func @_conv2_kernel(%arg0: i32, %arg1: memref<1x16x16x4xf32, #tpu.memory_space<vmem>>, %arg2: memref<1x16x16x4xf32, #tpu.memory_space<vmem>>, %arg3: memref<1x4xf32, #tpu.memory_space<vmem>>, %arg4: memref<1x4xf32, #tpu.memory_space<vmem>>, %arg5: memref<36x4xbf16, #tpu.memory_space<vmem>>, %arg6: memref<1x16x16x4xf32, #tpu.memory_space<vmem>>, %arg7: memref<18x18x4xbf16, #tpu.memory_space<vmem>>, %arg8: memref<16x16x36xbf16, #tpu.memory_space<vmem>>) attributes {dimension_semantics = [#tpu.dimension_semantics<parallel>], iteration_bounds = array<i64: 2>, scalar_prefetch = 0 : i64, scratch_operands = 2 : i64, tpu.core_type = #tpu.core_type<tc>, window_params = [{transform_indices = @transform_0, window_bounds = array<i64: 1, 16, 16, 4>}, {transform_indices = @transform_1, window_bounds = array<i64: 1, 16, 16, 4>}, {pipeline_mode = #tpu.pipeline_mode<synchronous>, transform_indices = @transform_2, window_bounds = array<i64: 1, 4>}, {pipeline_mode = #tpu.pipeline_mode<synchronous>, transform_indices = @transform_3, window_bounds = array<i64: 1, 4>}, {pipeline_mode = #tpu.pipeline_mode<synchronous>, transform_indices = @transform_4, window_bounds = array<i64: 36, 4>}, {transform_indices = @transform_5, window_bounds = array<i64: 1, 16, 16, 4>}]} {
    %c0 = arith.constant 0 : index
    %c0_0 = arith.constant 0 : index
    %c0_1 = arith.constant 0 : index
    %c0_2 = arith.constant 0 : index
    %0 = vector.load %arg1[%c0, %c0_0, %c0_1, %c0_2] : memref<1x16x16x4xf32, #tpu.memory_space<vmem>>, vector<1x16x16x4xf32>
    %1 = vector.shape_cast %0 : vector<1x16x16x4xf32> to vector<16x16x4xf32>
    %c0_3 = arith.constant 0 : index
    %c0_4 = arith.constant 0 : index
    %2 = vector.load %arg3[%c0_3, %c0_4] : memref<1x4xf32, #tpu.memory_space<vmem>>, vector<1x4xf32>
    %3 = vector.shape_cast %2 : vector<1x4xf32> to vector<1x1x4xf32>
    %4 = vector.broadcast %3 : vector<1x1x4xf32> to vector<16x16x4xf32>
    %5 = arith.mulf %1, %4 : vector<16x16x4xf32>
    %c0_5 = arith.constant 0 : index
    %c0_6 = arith.constant 0 : index
    %6 = vector.load %arg4[%c0_5, %c0_6] : memref<1x4xf32, #tpu.memory_space<vmem>>, vector<1x4xf32>
    %7 = vector.shape_cast %6 : vector<1x4xf32> to vector<1x1x4xf32>
    %8 = vector.broadcast %7 : vector<1x1x4xf32> to vector<16x16x4xf32>
    %9 = arith.addf %5, %8 : vector<16x16x4xf32>
    %cst = arith.constant 0.000000e+00 : f32
    %10 = vector.broadcast %cst : f32 to vector<16x16x4xf32>
    %11 = arith.maximumf %9, %10 : vector<16x16x4xf32>
    %12 = arith.truncf %11 : vector<16x16x4xf32> to vector<16x16x4xbf16>
    %cst_7 = arith.constant 0.000000e+00 : bf16
    %13 = vector.broadcast %cst_7 : bf16 to vector<1x18x4xbf16>
    %c0_8 = arith.constant 0 : index
    %c0_9 = arith.constant 0 : index
    %c0_10 = arith.constant 0 : index
    %14 = vector.load %arg7[%c0_8, %c0_9, %c0_10] : memref<18x18x4xbf16, #tpu.memory_space<vmem>>, vector<1x18x4xbf16>
    tpu.vector_store %arg7[%c0_8, %c0_9, %c0_10], %13 {strides = array<i32>} : memref<18x18x4xbf16, #tpu.memory_space<vmem>>, vector<1x18x4xbf16>,
    %cst_11 = arith.constant 0.000000e+00 : bf16
    %15 = vector.broadcast %cst_11 : bf16 to vector<1x18x4xbf16>
    %c17 = arith.constant 17 : index
    %c0_12 = arith.constant 0 : index
    %c0_13 = arith.constant 0 : index
    %16 = vector.load %arg7[%c17, %c0_12, %c0_13] : memref<18x18x4xbf16, #tpu.memory_space<vmem>>, vector<1x18x4xbf16>
    tpu.vector_store %arg7[%c17, %c0_12, %c0_13], %15 {strides = array<i32>} : memref<18x18x4xbf16, #tpu.memory_space<vmem>>, vector<1x18x4xbf16>,
    %cst_14 = arith.constant 0.000000e+00 : bf16
    %17 = vector.broadcast %cst_14 : bf16 to vector<18x1x4xbf16>
    %c0_15 = arith.constant 0 : index
    %c0_16 = arith.constant 0 : index
    %c0_17 = arith.constant 0 : index
    %18 = vector.load %arg7[%c0_15, %c0_16, %c0_17] : memref<18x18x4xbf16, #tpu.memory_space<vmem>>, vector<18x1x4xbf16>
    tpu.vector_store %arg7[%c0_15, %c0_16, %c0_17], %17 {strides = array<i32>} : memref<18x18x4xbf16, #tpu.memory_space<vmem>>, vector<18x1x4xbf16>,
    %cst_18 = arith.constant 0.000000e+00 : bf16
    %19 = vector.broadcast %cst_18 : bf16 to vector<18x1x4xbf16>
    %c0_19 = arith.constant 0 : index
    %c17_20 = arith.constant 17 : index
    %c0_21 = arith.constant 0 : index
    %20 = vector.load %arg7[%c0_19, %c17_20, %c0_21] : memref<18x18x4xbf16, #tpu.memory_space<vmem>>, vector<18x1x4xbf16>
    tpu.vector_store %arg7[%c0_19, %c17_20, %c0_21], %19 {strides = array<i32>} : memref<18x18x4xbf16, #tpu.memory_space<vmem>>, vector<18x1x4xbf16>,
    %c1 = arith.constant 1 : index
    %c1_22 = arith.constant 1 : index
    %c0_23 = arith.constant 0 : index
    %21 = vector.load %arg7[%c1, %c1_22, %c0_23] : memref<18x18x4xbf16, #tpu.memory_space<vmem>>, vector<16x16x4xbf16>
    tpu.vector_store %arg7[%c1, %c1_22, %c0_23], %12 {strides = array<i32>} : memref<18x18x4xbf16, #tpu.memory_space<vmem>>, vector<16x16x4xbf16>,
    %c0_24 = arith.constant 0 : index
    %c0_25 = arith.constant 0 : index
    %c0_26 = arith.constant 0 : index
    %22 = vector.load %arg7[%c0_24, %c0_25, %c0_26] : memref<18x18x4xbf16, #tpu.memory_space<vmem>>, vector<16x16x4xbf16>
    %c0_27 = arith.constant 0 : index
    %c0_28 = arith.constant 0 : index
    %c0_29 = arith.constant 0 : index
    %23 = vector.load %arg8[%c0_27, %c0_28, %c0_29] : memref<16x16x36xbf16, #tpu.memory_space<vmem>>, vector<16x16x4xbf16>
    tpu.vector_store %arg8[%c0_27, %c0_28, %c0_29], %22 {strides = array<i32>} : memref<16x16x36xbf16, #tpu.memory_space<vmem>>, vector<16x16x4xbf16>,
    %c0_30 = arith.constant 0 : index
    %c1_31 = arith.constant 1 : index
    %c0_32 = arith.constant 0 : index
    %24 = vector.load %arg7[%c0_30, %c1_31, %c0_32] : memref<18x18x4xbf16, #tpu.memory_space<vmem>>, vector<16x16x4xbf16>
    %c0_33 = arith.constant 0 : index
    %c0_34 = arith.constant 0 : index
    %c4 = arith.constant 4 : index
    %25 = vector.load %arg8[%c0_33, %c0_34, %c4] : memref<16x16x36xbf16, #tpu.memory_space<vmem>>, vector<16x16x4xbf16>
    tpu.vector_store %arg8[%c0_33, %c0_34, %c4], %24 {strides = array<i32>} : memref<16x16x36xbf16, #tpu.memory_space<vmem>>, vector<16x16x4xbf16>,
    %c0_35 = arith.constant 0 : index
    %c2 = arith.constant 2 : index
    %c0_36 = arith.constant 0 : index
    %26 = vector.load %arg7[%c0_35, %c2, %c0_36] : memref<18x18x4xbf16, #tpu.memory_space<vmem>>, vector<16x16x4xbf16>
    %c0_37 = arith.constant 0 : index
    %c0_38 = arith.constant 0 : index
    %c8 = arith.constant 8 : index
    %27 = vector.load %arg8[%c0_37, %c0_38, %c8] : memref<16x16x36xbf16, #tpu.memory_space<vmem>>, vector<16x16x4xbf16>
    tpu.vector_store %arg8[%c0_37, %c0_38, %c8], %26 {strides = array<i32>} : memref<16x16x36xbf16, #tpu.memory_space<vmem>>, vector<16x16x4xbf16>,
    %c1_39 = arith.constant 1 : index
    %c0_40 = arith.constant 0 : index
    %c0_41 = arith.constant 0 : index
    %28 = vector.load %arg7[%c1_39, %c0_40, %c0_41] : memref<18x18x4xbf16, #tpu.memory_space<vmem>>, vector<16x16x4xbf16>
    %c0_42 = arith.constant 0 : index
    %c0_43 = arith.constant 0 : index
    %c12 = arith.constant 12 : index
    %29 = vector.load %arg8[%c0_42, %c0_43, %c12] : memref<16x16x36xbf16, #tpu.memory_space<vmem>>, vector<16x16x4xbf16>
    tpu.vector_store %arg8[%c0_42, %c0_43, %c12], %28 {strides = array<i32>} : memref<16x16x36xbf16, #tpu.memory_space<vmem>>, vector<16x16x4xbf16>,
    %c1_44 = arith.constant 1 : index
    %c1_45 = arith.constant 1 : index
    %c0_46 = arith.constant 0 : index
    %30 = vector.load %arg7[%c1_44, %c1_45, %c0_46] : memref<18x18x4xbf16, #tpu.memory_space<vmem>>, vector<16x16x4xbf16>
    %c0_47 = arith.constant 0 : index
    %c0_48 = arith.constant 0 : index
    %c16 = arith.constant 16 : index
    %31 = vector.load %arg8[%c0_47, %c0_48, %c16] : memref<16x16x36xbf16, #tpu.memory_space<vmem>>, vector<16x16x4xbf16>
    tpu.vector_store %arg8[%c0_47, %c0_48, %c16], %30 {strides = array<i32>} : memref<16x16x36xbf16, #tpu.memory_space<vmem>>, vector<16x16x4xbf16>,
    %c1_49 = arith.constant 1 : index
    %c2_50 = arith.constant 2 : index
    %c0_51 = arith.constant 0 : index
    %32 = vector.load %arg7[%c1_49, %c2_50, %c0_51] : memref<18x18x4xbf16, #tpu.memory_space<vmem>>, vector<16x16x4xbf16>
    %c0_52 = arith.constant 0 : index
    %c0_53 = arith.constant 0 : index
    %c20 = arith.constant 20 : index
    %33 = vector.load %arg8[%c0_52, %c0_53, %c20] : memref<16x16x36xbf16, #tpu.memory_space<vmem>>, vector<16x16x4xbf16>
    tpu.vector_store %arg8[%c0_52, %c0_53, %c20], %32 {strides = array<i32>} : memref<16x16x36xbf16, #tpu.memory_space<vmem>>, vector<16x16x4xbf16>,
    %c2_54 = arith.constant 2 : index
    %c0_55 = arith.constant 0 : index
    %c0_56 = arith.constant 0 : index
    %34 = vector.load %arg7[%c2_54, %c0_55, %c0_56] : memref<18x18x4xbf16, #tpu.memory_space<vmem>>, vector<16x16x4xbf16>
    %c0_57 = arith.constant 0 : index
    %c0_58 = arith.constant 0 : index
    %c24 = arith.constant 24 : index
    %35 = vector.load %arg8[%c0_57, %c0_58, %c24] : memref<16x16x36xbf16, #tpu.memory_space<vmem>>, vector<16x16x4xbf16>
    tpu.vector_store %arg8[%c0_57, %c0_58, %c24], %34 {strides = array<i32>} : memref<16x16x36xbf16, #tpu.memory_space<vmem>>, vector<16x16x4xbf16>,
    %c2_59 = arith.constant 2 : index
    %c1_60 = arith.constant 1 : index
    %c0_61 = arith.constant 0 : index
    %36 = vector.load %arg7[%c2_59, %c1_60, %c0_61] : memref<18x18x4xbf16, #tpu.memory_space<vmem>>, vector<16x16x4xbf16>
    %c0_62 = arith.constant 0 : index
    %c0_63 = arith.constant 0 : index
    %c28 = arith.constant 28 : index
    %37 = vector.load %arg8[%c0_62, %c0_63, %c28] : memref<16x16x36xbf16, #tpu.memory_space<vmem>>, vector<16x16x4xbf16>
    tpu.vector_store %arg8[%c0_62, %c0_63, %c28], %36 {strides = array<i32>} : memref<16x16x36xbf16, #tpu.memory_space<vmem>>, vector<16x16x4xbf16>,
    %c2_64 = arith.constant 2 : index
    %c2_65 = arith.constant 2 : index
    %c0_66 = arith.constant 0 : index
    %38 = vector.load %arg7[%c2_64, %c2_65, %c0_66] : memref<18x18x4xbf16, #tpu.memory_space<vmem>>, vector<16x16x4xbf16>
    %c0_67 = arith.constant 0 : index
    %c0_68 = arith.constant 0 : index
    %c32 = arith.constant 32 : index
    %39 = vector.load %arg8[%c0_67, %c0_68, %c32] : memref<16x16x36xbf16, #tpu.memory_space<vmem>>, vector<16x16x4xbf16>
    tpu.vector_store %arg8[%c0_67, %c0_68, %c32], %38 {strides = array<i32>} : memref<16x16x36xbf16, #tpu.memory_space<vmem>>, vector<16x16x4xbf16>,
    %c0_69 = arith.constant 0 : index
    %c0_70 = arith.constant 0 : index
    %c0_71 = arith.constant 0 : index
    %40 = vector.load %arg8[%c0_69, %c0_70, %c0_71] : memref<16x16x36xbf16, #tpu.memory_space<vmem>>, vector<16x16x36xbf16>
    %41 = vector.shape_cast %40 : vector<16x16x36xbf16> to vector<256x36xbf16>
    %c0_72 = arith.constant 0 : index
    %c0_73 = arith.constant 0 : index
    %42 = vector.load %arg5[%c0_72, %c0_73] : memref<36x4xbf16, #tpu.memory_space<vmem>>, vector<36x4xbf16>
    %cst_74 = arith.constant dense<0.000000e+00> : vector<256x4xf32>
    %43 = tpu.matmul %41, %42, %cst_74 {dimension_numbers = #tpu.dot_dimension_numbers<[1], [0], [0], [1], [0, 0, 1, 1], [], []>} : vector<256x36xbf16>, vector<36x4xbf16>, vector<256x4xf32> -> vector<256x4xf32>
    %44 = vector.shape_cast %43 : vector<256x4xf32> to vector<16x16x4xf32>
    %c0_75 = arith.constant 0 : index
    %c0_76 = arith.constant 0 : index
    %c0_77 = arith.constant 0 : index
    %c0_78 = arith.constant 0 : index
    %45 = vector.load %arg2[%c0_75, %c0_76, %c0_77, %c0_78] : memref<1x16x16x4xf32, #tpu.memory_space<vmem>>, vector<1x16x16x4xf32>
    %46 = vector.shape_cast %45 : vector<1x16x16x4xf32> to vector<16x16x4xf32>
    %47 = arith.addf %44, %46 : vector<16x16x4xf32>
    %c0_79 = arith.constant 0 : index
    %c0_80 = arith.constant 0 : index
    %c0_81 = arith.constant 0 : index
    %c0_82 = arith.constant 0 : index
    %48 = vector.load %arg6[%c0_79, %c0_80, %c0_81, %c0_82] : memref<1x16x16x4xf32, #tpu.memory_space<vmem>>, vector<1x16x16x4xf32>
    %49 = vector.shape_cast %48 : vector<1x16x16x4xf32> to vector<16x16x4xf32>
    %50 = vector.shape_cast %47 : vector<16x16x4xf32> to vector<1x16x16x4xf32>
    tpu.vector_store %arg6[%c0_79, %c0_80, %c0_81, %c0_82], %50 {strides = array<i32>} : memref<1x16x16x4xf32, #tpu.memory_space<vmem>>, vector<1x16x16x4xf32>,
    return
  }
  func.func @transform_0(%arg0: i32) -> (i32, i32, i32, i32) {
    %c0_i32 = arith.constant 0 : i32
    %c0_i32_0 = arith.constant 0 : i32
    %c0_i32_1 = arith.constant 0 : i32
    %c0_i32_2 = arith.constant 0 : i32
    return %arg0, %c0_i32, %c0_i32_0, %c0_i32_1 : i32, i32, i32, i32
  }
  func.func @transform_1(%arg0: i32) -> (i32, i32, i32, i32) {
    %c0_i32 = arith.constant 0 : i32
    %c0_i32_0 = arith.constant 0 : i32
    %c0_i32_1 = arith.constant 0 : i32
    %c0_i32_2 = arith.constant 0 : i32
    return %arg0, %c0_i32, %c0_i32_0, %c0_i32_1 : i32, i32, i32, i32
  }
  func.func @transform_2(%arg0: i32) -> (i32, i32) {
    %c0_i32 = arith.constant 0 : i32
    %c0_i32_0 = arith.constant 0 : i32
    %c0_i32_1 = arith.constant 0 : i32
    return %c0_i32, %c0_i32_0 : i32, i32
  }
  func.func @transform_3(%arg0: i32) -> (i32, i32) {
    %c0_i32 = arith.constant 0 : i32
    %c0_i32_0 = arith.constant 0 : i32
    %c0_i32_1 = arith.constant 0 : i32
    return %c0_i32, %c0_i32_0 : i32, i32
  }
  func.func @transform_4(%arg0: i32) -> (i32, i32) {
    %c0_i32 = arith.constant 0 : i32
    %c0_i32_0 = arith.constant 0 : i32
    %c0_i32_1 = arith.constant 0 : i32
    return %c0_i32, %c0_i32_0 : i32, i32
  }
  func.func @transform_5(%arg0: i32) -> (i32, i32, i32, i32) {
    %c0_i32 = arith.constant 0 : i32
    %c0_i32_0 = arith.constant 0 : i32
    %c0_i32_1 = arith.constant 0 : i32
    %c0_i32_2 = arith.constant 0 : i32
    return %arg0, %c0_i32, %c0_i32_0, %c0_i32_1 : i32, i32, i32, i32
  }
}

</mosaic_0001>

<llo_original>
// kernel: preact_block_nhwc.3
$region0: #{preact_block_nhwc.3}
  #allocation0 [shape = 'u32[]', space=smem, size = 0x4, offset = 0x4, fixed_abs, tag = 'smem constant byte address 0x4 - core index']
  #allocation1 [shape = 'u32[144,128]{1,0:T(1,128)}', space=vmem, size = 0x12000, scoped, tag = 'internal scratch']
  %s0 = inlined_call_operand.vmem [shape: f32[2,16,16,4], index: 0, kind: input, shape index: {}]
  %s1 = inlined_call_operand.vmem [shape: f32[2,1,4], index: 1, kind: output, shape index: {0}]
  %s2 = inlined_call_operand.vmem [shape: f32[2,1,4], index: 2, kind: output, shape index: {1}]
  %3 = xla_tuple %s1, %s2
  %s4 = sld [smem:[#allocation0]]
  $region45: #{preact_block_nhwc.3} parent=0
    _
  %s6 = ssub.s32 1, %s4
  %s7 = scalar_select 0, %s6, %s4
  loop: start=0, step=1, limit=4
  $region2: #{preact_block_nhwc.3} parent=0 // loop_pre_header
    _
  $region3: #{preact_block_nhwc.3} parent=0 // loop_header
    %s9 = sphi 0, %s13
    %p10 = scmp.ge.s32.totalorder %s9, 4
    %s19 = sphi 0, %s21
    %s22 = sphi 0, %s19
    %s23 = sphi 0, %s22
    %s39 = sphi 0, %s23
    %s45 = sphi 0, %s47
    %s48 = sphi 0, %s45
    %s49 = sphi 0, %s48
    %s65 = sphi 0, %s49
    %s71 = sphi 0, %s73
    %s74 = sphi 0, %s71
    %s75 = sphi 0, %s74
    %s91 = sphi 0, %s75
  $region4: #{preact_block_nhwc.3} parent=0 // loop_header_branch
    %12 = sbr.rel (%p10) target = $region8
  $region5: #{preact_block_nhwc.3} parent=0 // loop_body
    %s14 = ssub.s32 %s9, 1
    %s15 = ssub.s32 %s9, 2
    %s16 = sadd.s32 %s9, 1
    %s17 = ssub.s32 %s9, %s16
    %p18 = scmp.eq.s32.totalorder %s17, 0
    %s20 = sadd.s32 %s19, 1
    %s21 = scalar_select %p18, %s19, %s20
    %p24 = pneg %p18
    %p25 = scmp.eq.s32.totalorder %s9, 1
    %p26 = por %p24, %p25
    %p27 = scmp.ne.s32.totalorder %s19, %s22
    %p28 = scmp.eq.s32.totalorder %s9, 0
    %p29 = por %p27, %p28
    %p30 = scmp.ne.s32.totalorder %s19, %s22
    %p31 = scmp.eq.s32.totalorder %s14, 1
    %p32 = por %p30, %p31
    %p33 = scmp.ne.s32.totalorder %s22, %s23
    %p34 = scmp.eq.s32.totalorder %s14, 0
    %p35 = por %p33, %p34
    %p36 = scmp.ne.s32.totalorder %s22, %s23
    %p37 = scmp.eq.s32.totalorder %s15, 1
    %p38 = por %p36, %p37
    %p40 = scmp.ne.s32.totalorder %s23, %s39
    %p41 = scmp.eq.s32.totalorder %s15, 0
    %p42 = por %p40, %p41
    %s43 = ssub.s32 %s9, %s16
    %p44 = scmp.eq.s32.totalorder %s43, 0
    %s46 = sadd.s32 %s45, 1
    %s47 = scalar_select %p44, %s45, %s46
    %p50 = pneg %p44
    %p51 = scmp.eq.s32.totalorder %s9, 1
    %p52 = por %p50, %p51
    %p53 = scmp.ne.s32.totalorder %s45, %s48
    %p54 = scmp.eq.s32.totalorder %s9, 0
    %p55 = por %p53, %p54
    %p56 = scmp.ne.s32.totalorder %s45, %s48
    %p57 = scmp.eq.s32.totalorder %s14, 1
    %p58 = por %p56, %p57
    %p59 = scmp.ne.s32.totalorder %s48, %s49
    %p60 = scmp.eq.s32.totalorder %s14, 0
    %p61 = por %p59, %p60
    %p62 = scmp.ne.s32.totalorder %s48, %s49
    %p63 = scmp.eq.s32.totalorder %s15, 1
    %p64 = por %p62, %p63
    %p66 = scmp.ne.s32.totalorder %s49, %s65
    %p67 = scmp.eq.s32.totalorder %s15, 0
    %p68 = por %p66, %p67
    %s69 = ssub.s32 %s9, %s16
    %p70 = scmp.eq.s32.totalorder %s69, 0
    %s72 = sadd.s32 %s71, 1
    %s73 = scalar_select %p70, %s71, %s72
    %p76 = pneg %p70
    %p77 = scmp.eq.s32.totalorder %s9, 1
    %p78 = por %p76, %p77
    %p79 = scmp.ne.s32.totalorder %s71, %s74
    %p80 = scmp.eq.s32.totalorder %s9, 0
    %p81 = por %p79, %p80
    %p82 = scmp.ne.s32.totalorder %s71, %s74
    %p83 = scmp.eq.s32.totalorder %s14, 1
    %p84 = por %p82, %p83
    %p85 = scmp.ne.s32.totalorder %s74, %s75
    %p86 = scmp.eq.s32.totalorder %s14, 0
    %p87 = por %p85, %p86
    %p88 = scmp.ne.s32.totalorder %s74, %s75
    %p89 = scmp.eq.s32.totalorder %s15, 1
    %p90 = por %p88, %p89
    %p92 = scmp.ne.s32.totalorder %s75, %s91
    %p93 = scmp.eq.s32.totalorder %s15, 0
    %p94 = por %p92, %p93
    %p95 = scmp.le.s32.totalorder 1, %s9
    %p96 = scmp.lt.s32.totalorder %s9, 3
    %p97 = pnand %p95, %p96
    %p98 = pneg %p97
    // Predicated region
    $region9: #{preact_block_nhwc.3} parent=5 // pred_check
      _
    $region10: #{preact_block_nhwc.3} parent=5 // pred_check_branch
      %100 = sbr.rel (%p97) target = $region12
    $region11: #{preact_block_nhwc.3} parent=5 // pred_region
      %s101 = ssub.s32 %s9, 1
    $region12: #{preact_block_nhwc.3} parent=5 // pred_fallthru
      _
    %p102 = scmp.lt.s32.totalorder %s9, 2
    // Predicated region
    $region13: #{preact_block_nhwc.3} parent=5 // pred_check
      %p103 = pneg %p102
    $region14: #{preact_block_nhwc.3} parent=5 // pred_check_branch
      %105 = sbr.rel (%p103) target = $region16
    $region15: #{preact_block_nhwc.3} parent=5 // pred_region
      // Predicated region
      $region17: #{preact_block_nhwc.3} parent=15 // pred_check
        %p106 = pneg %p29
      $region18: #{preact_block_nhwc.3} parent=15 // pred_check_branch
        %108 = sbr.rel (%p106) target = $region20
      $region19: #{preact_block_nhwc.3} parent=15 // pred_region
        %p109 = scmp.lt.s32.totalorder %s9, 1
        %s110 = scalar_select %p109, %s9, 1
        %s111 = smul.addr %s110, 32
        %s112 = smul.addr %s111, 8
        %s113 = scalar_lea.vmem %s0, %s112
      $region20: #{preact_block_nhwc.3} parent=15 // pred_fallthru
        _
    $region16: #{preact_block_nhwc.3} parent=5 // pred_fallthru
      _
    %p114 = scmp.le.s32.totalorder 1, %s9
    %p115 = scmp.lt.s32.totalorder %s9, 3
    %p116 = pnand %p114, %p115
    %p117 = pneg %p116
    // Predicated region
    $region21: #{preact_block_nhwc.3} parent=5 // pred_check
      _
    $region22: #{preact_block_nhwc.3} parent=5 // pred_check_branch
      %119 = sbr.rel (%p116) target = $region24
    $region23: #{preact_block_nhwc.3} parent=5 // pred_region
      %s120 = ssub.s32 %s9, 1
      %p121 = scmp.lt.s32.totalorder %s14, 1
      %s122 = scalar_select %p121, %s14, 1
      %s123 = smul.addr %s122, 32
      %s124 = smul.addr %s123, 8
      %s125 = scalar_lea.vmem %s0, %s124
      %p126 = pneg %p35
      %p127 = pneg %p32
      %p128 = pneg %p61
      %p129 = pneg %p58
      %p130 = scmp.lt.s32.totalorder %s14, 1
      %s131 = scalar_select %p130, %s14, 1
      %s132 = scalar_lea.vmem %s1, %s131
      %p133 = pneg %p87
      %p134 = pneg %p84
      %p135 = scmp.lt.s32.totalorder %s14, 1
      %s136 = scalar_select %p135, %s14, 1
      %s137 = scalar_lea.vmem %s2, %s136
      %p138 = scmp.lt.s32.totalorder %s14, 1
      %s139 = scalar_select %p138, %s14, 1
      %s140 = smul.addr %s139, 32
      %s141 = smul.addr %s140, 8
      %s142 = scalar_lea.vmem %s0, %s141
      %p143 = scmp.lt.s32.totalorder %s14, 1
      %s144 = scalar_select %p143, %s14, 1
      %s145 = scalar_lea.vmem %s1, %s144
      %p146 = scmp.lt.s32.totalorder %s14, 1
      %s147 = scalar_select %p146, %s14, 1
      %s148 = scalar_lea.vmem %s2, %s147
      %v149 = vld [vmem:[%s142] sm:$0xff]
      %v150 = vld [vmem:[%s142 + $0x8] sm:$0xff]
      %v151 = vld [vmem:[%s142 + $0x10] sm:$0xff]
      %v152 = vld [vmem:[%s142 + $0x18] sm:$0xff]
      %v153 = vld [vmem:[%s142 + $0x20] sm:$0xff]
      %v154 = vld [vmem:[%s142 + $0x28] sm:$0xff]
      %v155 = vld [vmem:[%s142 + $0x30] sm:$0xff]
      %v156 = vld [vmem:[%s142 + $0x38] sm:$0xff]
      %v157 = vld [vmem:[%s142 + $0x40] sm:$0xff]
      %v158 = vld [vmem:[%s142 + $0x48] sm:$0xff]
      %v159 = vld [vmem:[%s142 + $0x50] sm:$0xff]
      %v160 = vld [vmem:[%s142 + $0x58] sm:$0xff]
      %v161 = vld [vmem:[%s142 + $0x60] sm:$0xff]
      %v162 = vld [vmem:[%s142 + $0x68] sm:$0xff]
      %v163 = vld [vmem:[%s142 + $0x70] sm:$0xff]
      %v164 = vld [vmem:[%s142 + $0x78] sm:$0xff]
      %v165 = vld [vmem:[%s142 + $0x80] sm:$0xff]
      %v166 = vld [vmem:[%s142 + $0x88] sm:$0xff]
      %v167 = vld [vmem:[%s142 + $0x90] sm:$0xff]
      %v168 = vld [vmem:[%s142 + $0x98] sm:$0xff]
      %v169 = vld [vmem:[%s142 + $0xa0] sm:$0xff]
      %v170 = vld [vmem:[%s142 + $0xa8] sm:$0xff]
      %v171 = vld [vmem:[%s142 + $0xb0] sm:$0xff]
      %v172 = vld [vmem:[%s142 + $0xb8] sm:$0xff]
      %v173 = vld [vmem:[%s142 + $0xc0] sm:$0xff]
      %v174 = vld [vmem:[%s142 + $0xc8] sm:$0xff]
      %v175 = vld [vmem:[%s142 + $0xd0] sm:$0xff]
      %v176 = vld [vmem:[%s142 + $0xd8] sm:$0xff]
      %v177 = vld [vmem:[%s142 + $0xe0] sm:$0xff]
      %v178 = vld [vmem:[%s142 + $0xe8] sm:$0xff]
      %v179 = vld [vmem:[%s142 + $0xf0] sm:$0xff]
      %v180 = vld [vmem:[%s142 + $0xf8] sm:$0xff]
      %vm181 = vcmask 31744
      %v182 = vsel %vm181, %v149, 0.0
      %v183 = vsel %vm181, %v150, 0.0
      %v184 = vadd.f32 %v182, %v183
      %v185 = vsel %vm181, %v151, 0.0
      %v186 = vadd.f32 %v184, %v185
      %v187 = vsel %vm181, %v152, 0.0
      %v188 = vadd.f32 %v186, %v187
      %v189 = vsel %vm181, %v153, 0.0
      %v190 = vadd.f32 %v188, %v189
      %v191 = vsel %vm181, %v154, 0.0
      %v192 = vadd.f32 %v190, %v191
      %v193 = vsel %vm181, %v155, 0.0
      %v194 = vadd.f32 %v192, %v193
      %v195 = vsel %vm181, %v156, 0.0
      %v196 = vadd.f32 %v194, %v195
      %v197 = vsel %vm181, %v157, 0.0
      %v198 = vadd.f32 %v196, %v197
      %v199 = vsel %vm181, %v158, 0.0
      %v200 = vadd.f32 %v198, %v199
      %v201 = vsel %vm181, %v159, 0.0
      %v202 = vadd.f32 %v200, %v201
      %v203 = vsel %vm181, %v160, 0.0
      %v204 = vadd.f32 %v202, %v203
      %v205 = vsel %vm181, %v161, 0.0
      %v206 = vadd.f32 %v204, %v205
      %v207 = vsel %vm181, %v162, 0.0
      %v208 = vadd.f32 %v206, %v207
      %v209 = vsel %vm181, %v163, 0.0
      %v210 = vadd.f32 %v208, %v209
      %v211 = vsel %vm181, %v164, 0.0
      %v212 = vadd.f32 %v210, %v211
      %v213 = vsel %vm181, %v165, 0.0
      %v214 = vadd.f32 %v212, %v213
      %v215 = vsel %vm181, %v166, 0.0
      %v216 = vadd.f32 %v214, %v215
      %v217 = vsel %vm181, %v167, 0.0
      %v218 = vadd.f32 %v216, %v217
      %v219 = vsel %vm181, %v168, 0.0
      %v220 = vadd.f32 %v218, %v219
      %v221 = vsel %vm181, %v169, 0.0
      %v222 = vadd.f32 %v220, %v221
      %v223 = vsel %vm181, %v170, 0.0
      %v224 = vadd.f32 %v222, %v223
      %v225 = vsel %vm181, %v171, 0.0
      %v226 = vadd.f32 %v224, %v225
      %v227 = vsel %vm181, %v172, 0.0
      %v228 = vadd.f32 %v226, %v227
      %v229 = vsel %vm181, %v173, 0.0
      %v230 = vadd.f32 %v228, %v229
      %v231 = vsel %vm181, %v174, 0.0
      %v232 = vadd.f32 %v230, %v231
      %v233 = vsel %vm181, %v175, 0.0
      %v234 = vadd.f32 %v232, %v233
      %v235 = vsel %vm181, %v176, 0.0
      %v236 = vadd.f32 %v234, %v235
      %v237 = vsel %vm181, %v177, 0.0
      %v238 = vadd.f32 %v236, %v237
      %v239 = vsel %vm181, %v178, 0.0
      %v240 = vadd.f32 %v238, %v239
      %v241 = vsel %vm181, %v179, 0.0
      %v242 = vadd.f32 %v240, %v241
      %v243 = vsel %vm181, %v180, 0.0
      %v244 = vadd.f32 %v242, %v243
      %v245 = vrot.slane %v244, 4
      %v246 = vadd.f32 %v244, %v245
      %v247 = vrot.slane %v246, 2
      %v248 = vadd.f32 %v246, %v247
      %v249 = vrot.slane %v248, 1
      %v250 = vadd.f32 %v248, %v249
      %vm251 = vcmask 24576
      %252 = vst.msk [vmem:[%s145] sm:$0x1] %vm251, %v250
      %v253 = vmul.f32 %v149, %v149
      %v254 = vmul.f32 %v150, %v150
      %v255 = vmul.f32 %v151, %v151
      %v256 = vmul.f32 %v152, %v152
      %v257 = vmul.f32 %v153, %v153
      %v258 = vmul.f32 %v154, %v154
      %v259 = vmul.f32 %v155, %v155
      %v260 = vmul.f32 %v156, %v156
      %v261 = vmul.f32 %v157, %v157
      %v262 = vmul.f32 %v158, %v158
      %v263 = vmul.f32 %v159, %v159
      %v264 = vmul.f32 %v160, %v160
      %v265 = vmul.f32 %v161, %v161
      %v266 = vmul.f32 %v162, %v162
      %v267 = vmul.f32 %v163, %v163
      %v268 = vmul.f32 %v164, %v164
      %v269 = vmul.f32 %v165, %v165
      %v270 = vmul.f32 %v166, %v166
      %v271 = vmul.f32 %v167, %v167
      %v272 = vmul.f32 %v168, %v168
      %v273 = vmul.f32 %v169, %v169
      %v274 = vmul.f32 %v170, %v170
      %v275 = vmul.f32 %v171, %v171
      %v276 = vmul.f32 %v172, %v172
      %v277 = vmul.f32 %v173, %v173
      %v278 = vmul.f32 %v174, %v174
      %v279 = vmul.f32 %v175, %v175
      %v280 = vmul.f32 %v176, %v176
      %v281 = vmul.f32 %v177, %v177
      %v282 = vmul.f32 %v178, %v178
      %v283 = vmul.f32 %v179, %v179
      %v284 = vmul.f32 %v180, %v180
      %v285 = vsel %vm181, %v253, 0.0
      %v286 = vsel %vm181, %v254, 0.0
      %v287 = vadd.f32 %v285, %v286
      %v288 = vsel %vm181, %v255, 0.0
      %v289 = vadd.f32 %v287, %v288
      %v290 = vsel %vm181, %v256, 0.0
      %v291 = vadd.f32 %v289, %v290
      %v292 = vsel %vm181, %v257, 0.0
      %v293 = vadd.f32 %v291, %v292
      %v294 = vsel %vm181, %v258, 0.0
      %v295 = vadd.f32 %v293, %v294
      %v296 = vsel %vm181, %v259, 0.0
      %v297 = vadd.f32 %v295, %v296
      %v298 = vsel %vm181, %v260, 0.0
      %v299 = vadd.f32 %v297, %v298
      %v300 = vsel %vm181, %v261, 0.0
      %v301 = vadd.f32 %v299, %v300
      %v302 = vsel %vm181, %v262, 0.0
      %v303 = vadd.f32 %v301, %v302
      %v304 = vsel %vm181, %v263, 0.0
      %v305 = vadd.f32 %v303, %v304
      %v306 = vsel %vm181, %v264, 0.0
      %v307 = vadd.f32 %v305, %v306
      %v308 = vsel %vm181, %v265, 0.0
      %v309 = vadd.f32 %v307, %v308
      %v310 = vsel %vm181, %v266, 0.0
      %v311 = vadd.f32 %v309, %v310
      %v312 = vsel %vm181, %v267, 0.0
      %v313 = vadd.f32 %v311, %v312
      %v314 = vsel %vm181, %v268, 0.0
      %v315 = vadd.f32 %v313, %v314
      %v316 = vsel %vm181, %v269, 0.0
      %v317 = vadd.f32 %v315, %v316
      %v318 = vsel %vm181, %v270, 0.0
      %v319 = vadd.f32 %v317, %v318
      %v320 = vsel %vm181, %v271, 0.0
      %v321 = vadd.f32 %v319, %v320
      %v322 = vsel %vm181, %v272, 0.0
      %v323 = vadd.f32 %v321, %v322
      %v324 = vsel %vm181, %v273, 0.0
      %v325 = vadd.f32 %v323, %v324
      %v326 = vsel %vm181, %v274, 0.0
      %v327 = vadd.f32 %v325, %v326
      %v328 = vsel %vm181, %v275, 0.0
      %v329 = vadd.f32 %v327, %v328
      %v330 = vsel %vm181, %v276, 0.0
      %v331 = vadd.f32 %v329, %v330
      %v332 = vsel %vm181, %v277, 0.0
      %v333 = vadd.f32 %v331, %v332
      %v334 = vsel %vm181, %v278, 0.0
      %v335 = vadd.f32 %v333, %v334
      %v336 = vsel %vm181, %v279, 0.0
      %v337 = vadd.f32 %v335, %v336
      %v338 = vsel %vm181, %v280, 0.0
      %v339 = vadd.f32 %v337, %v338
      %v340 = vsel %vm181, %v281, 0.0
      %v341 = vadd.f32 %v339, %v340
      %v342 = vsel %vm181, %v282, 0.0
      %v343 = vadd.f32 %v341, %v342
      %v344 = vsel %vm181, %v283, 0.0
      %v345 = vadd.f32 %v343, %v344
      %v346 = vsel %vm181, %v284, 0.0
      %v347 = vadd.f32 %v345, %v346
      %v348 = vrot.slane %v347, 4
      %v349 = vadd.f32 %v347, %v348
      %v350 = vrot.slane %v349, 2
      %v351 = vadd.f32 %v349, %v350
      %v352 = vrot.slane %v351, 1
      %v353 = vadd.f32 %v351, %v352
      %354 = vst.msk [vmem:[%s148] sm:$0x1] %vm251, %v353
      %p355 = scmp.lt.s32.totalorder %s14, 1
      %s356 = scalar_select %p355, %s14, 1
      %s357 = scalar_lea.vmem %s1, %s356
      %p358 = scmp.lt.s32.totalorder %s14, 1
      %s359 = scalar_select %p358, %s14, 1
      %s360 = scalar_lea.vmem %s2, %s359
      // Predicated region
      $region25: #{preact_block_nhwc.3} parent=23 // pred_check
        %p361 = pneg %p58
      $region26: #{preact_block_nhwc.3} parent=23 // pred_check_branch
        %363 = sbr.rel (%p361) target = $region28
      $region27: #{preact_block_nhwc.3} parent=23 // pred_region
        _
      $region28: #{preact_block_nhwc.3} parent=23 // pred_fallthru
        _
      // Predicated region
      $region29: #{preact_block_nhwc.3} parent=23 // pred_check
        %p364 = pneg %p84
      $region30: #{preact_block_nhwc.3} parent=23 // pred_check_branch
        %366 = sbr.rel (%p364) target = $region32
      $region31: #{preact_block_nhwc.3} parent=23 // pred_region
        _
      $region32: #{preact_block_nhwc.3} parent=23 // pred_fallthru
        _
    $region24: #{preact_block_nhwc.3} parent=5 // pred_fallthru
      _
    %p367 = scmp.le.s32.totalorder 2, %s9
    // Predicated region
    $region33: #{preact_block_nhwc.3} parent=5 // pred_check
      %p368 = pneg %p367
    $region34: #{preact_block_nhwc.3} parent=5 // pred_check_branch
      %370 = sbr.rel (%p368) target = $region36
    $region35: #{preact_block_nhwc.3} parent=5 // pred_region
      %s371 = ssub.s32 %s9, 2
      // Predicated region
      $region37: #{preact_block_nhwc.3} parent=35 // pred_check
        %p372 = pneg %p64
      $region38: #{preact_block_nhwc.3} parent=35 // pred_check_branch
        %374 = sbr.rel (%p372) target = $region40
      $region39: #{preact_block_nhwc.3} parent=35 // pred_region
        %p375 = scmp.lt.s32.totalorder %s15, 1
        %s376 = scalar_select %p375, %s15, 1
        %s377 = scalar_lea.vmem %s1, %s376
      $region40: #{preact_block_nhwc.3} parent=35 // pred_fallthru
        _
      // Predicated region
      $region41: #{preact_block_nhwc.3} parent=35 // pred_check
        %p378 = pneg %p90
      $region42: #{preact_block_nhwc.3} parent=35 // pred_check_branch
        %380 = sbr.rel (%p378) target = $region44
      $region43: #{preact_block_nhwc.3} parent=35 // pred_region
        %p381 = scmp.lt.s32.totalorder %s15, 1
        %s382 = scalar_select %p381, %s15, 1
        %s383 = scalar_lea.vmem %s2, %s382
      $region44: #{preact_block_nhwc.3} parent=35 // pred_fallthru
        _
    $region36: #{preact_block_nhwc.3} parent=5 // pred_fallthru
      _
  $region6: #{preact_block_nhwc.3} parent=0 // loop_footer
    %s13 = sadd.s32 1, %s9
  $region7: #{preact_block_nhwc.3} parent=0 // loop_footer_branch
    %8 = sbr.rel target = $region3
  $region8: #{preact_block_nhwc.3} parent=0 // loop_exit
    _

// kernel: preact_block_nhwc.4
$region0: #{preact_block_nhwc.4}
  #allocation0 [shape = 'u32[]', space=smem, size = 0x4, offset = 0x4, fixed_abs, tag = 'smem constant byte address 0x4 - core index']
  #allocation1 [shape = 'u32[144,128]{1,0:T(1,128)}', space=vmem, size = 0x12000, scoped, tag = 'internal scratch']
  #allocation2 [shape = 'bf16[18,18,4]{2,1,0:T(8,128)(2,1)}', space=vmem, size = 0x1b000, scoped, tag = 'scratch operand']
  #allocation3 [shape = 'bf16[16,16,36]{2,1,0:T(16,128)(2,1)}', space=vmem, size = 0x10000, scoped, tag = 'scratch operand']
  %s0 = inlined_call_operand.vmem [shape: f32[2,16,16,4], index: 0, kind: input, shape index: {}]
  %s1 = inlined_call_operand.vmem [shape: f32[1,4], index: 1, kind: input, shape index: {}]
  %s2 = inlined_call_operand.vmem [shape: f32[1,4], index: 2, kind: input, shape index: {}]
  %s3 = inlined_call_operand.vmem [shape: bf16[36,4], index: 3, kind: input, shape index: {}]
  %s4 = inlined_call_operand.vmem [shape: f32[2,16,16,4], index: 4, kind: output, shape index: {0}]
  %s5 = inlined_call_operand.vmem [shape: f32[2,1,4], index: 5, kind: output, shape index: {1}]
  %s6 = inlined_call_operand.vmem [shape: f32[2,1,4], index: 6, kind: output, shape index: {2}]
  %7 = xla_tuple %s4, %s5, %s6
  %s8 = sld [smem:[#allocation0]]
  $region65: #{preact_block_nhwc.4} parent=0
    _
  %s10 = ssub.s32 1, %s8
  %s11 = scalar_select 0, %s10, %s8
  loop: start=0, step=1, limit=4
  $region2: #{preact_block_nhwc.4} parent=0 // loop_pre_header
    _
  $region3: #{preact_block_nhwc.4} parent=0 // loop_header
    %s13 = sphi 0, %s17
    %p14 = scmp.ge.s32.totalorder %s13, 4
    %s23 = sphi 0, %s25
    %s26 = sphi 0, %s23
    %s27 = sphi 0, %s26
    %s43 = sphi 0, %s27
    %s47 = sphi 0, %s47
    %s49 = sphi 0, %s47
    %s50 = sphi 0, %s49
    %s64 = sphi 0, %s50
    %s68 = sphi 0, %s68
    %s70 = sphi 0, %s68
    %s71 = sphi 0, %s70
    %s85 = sphi 0, %s71
    %s89 = sphi 0, %s89
    %s91 = sphi 0, %s89
    %s92 = sphi 0, %s91
    %s106 = sphi 0, %s92
    %s112 = sphi 0, %s114
    %s115 = sphi 0, %s112
    %s116 = sphi 0, %s115
    %s132 = sphi 0, %s116
    %s138 = sphi 0, %s140
    %s141 = sphi 0, %s138
    %s142 = sphi 0, %s141
    %s158 = sphi 0, %s142
    %s164 = sphi 0, %s166
    %s167 = sphi 0, %s164
    %s168 = sphi 0, %s167
    %s184 = sphi 0, %s168
  $region4: #{preact_block_nhwc.4} parent=0 // loop_header_branch
    %16 = sbr.rel (%p14) target = $region8
  $region5: #{preact_block_nhwc.4} parent=0 // loop_body
    %s18 = ssub.s32 %s13, 1
    %s19 = ssub.s32 %s13, 2
    %s20 = sadd.s32 %s13, 1
    %s21 = ssub.s32 %s13, %s20
    %p22 = scmp.eq.s32.totalorder %s21, 0
    %s24 = sadd.s32 %s23, 1
    %s25 = scalar_select %p22, %s23, %s24
    %p28 = pneg %p22
    %p29 = scmp.eq.s32.totalorder %s13, 1
    %p30 = por %p28, %p29
    %p31 = scmp.ne.s32.totalorder %s23, %s26
    %p32 = scmp.eq.s32.totalorder %s13, 0
    %p33 = por %p31, %p32
    %p34 = scmp.ne.s32.totalorder %s23, %s26
    %p35 = scmp.eq.s32.totalorder %s18, 1
    %p36 = por %p34, %p35
    %p37 = scmp.ne.s32.totalorder %s26, %s27
    %p38 = scmp.eq.s32.totalorder %s18, 0
    %p39 = por %p37, %p38
    %p40 = scmp.ne.s32.totalorder %s26, %s27
    %p41 = scmp.eq.s32.totalorder %s19, 1
    %p42 = por %p40, %p41
    %p44 = scmp.ne.s32.totalorder %s27, %s43
    %p45 = scmp.eq.s32.totalorder %s19, 0
    %p46 = por %p44, %p45
    %s48 = sadd.s32 %s47, 1
    %p51 = scmp.eq.s32.totalorder %s13, 1
    %p52 = scmp.ne.s32.totalorder %s47, %s49
    %p53 = scmp.eq.s32.totalorder %s13, 0
    %p54 = por %p52, %p53
    %p55 = scmp.ne.s32.totalorder %s47, %s49
    %p56 = scmp.eq.s32.totalorder %s18, 1
    %p57 = por %p55, %p56
    %p58 = scmp.ne.s32.totalorder %s49, %s50
    %p59 = scmp.eq.s32.totalorder %s18, 0
    %p60 = por %p58, %p59
    %p61 = scmp.ne.s32.totalorder %s49, %s50
    %p62 = scmp.eq.s32.totalorder %s19, 1
    %p63 = por %p61, %p62
    %p65 = scmp.ne.s32.totalorder %s50, %s64
    %p66 = scmp.eq.s32.totalorder %s19, 0
    %p67 = por %p65, %p66
    %s69 = sadd.s32 %s68, 1
    %p72 = scmp.eq.s32.totalorder %s13, 1
    %p73 = scmp.ne.s32.totalorder %s68, %s70
    %p74 = scmp.eq.s32.totalorder %s13, 0
    %p75 = por %p73, %p74
    %p76 = scmp.ne.s32.totalorder %s68, %s70
    %p77 = scmp.eq.s32.totalorder %s18, 1
    %p78 = por %p76, %p77
    %p79 = scmp.ne.s32.totalorder %s70, %s71
    %p80 = scmp.eq.s32.totalorder %s18, 0
    %p81 = por %p79, %p80
    %p82 = scmp.ne.s32.totalorder %s70, %s71
    %p83 = scmp.eq.s32.totalorder %s19, 1
    %p84 = por %p82, %p83
    %p86 = scmp.ne.s32.totalorder %s71, %s85
    %p87 = scmp.eq.s32.totalorder %s19, 0
    %p88 = por %p86, %p87
    %s90 = sadd.s32 %s89, 1
    %p93 = scmp.eq.s32.totalorder %s13, 1
    %p94 = scmp.ne.s32.totalorder %s89, %s91
    %p95 = scmp.eq.s32.totalorder %s13, 0
    %p96 = por %p94, %p95
    %p97 = scmp.ne.s32.totalorder %s89, %s91
    %p98 = scmp.eq.s32.totalorder %s18, 1
    %p99 = por %p97, %p98
    %p100 = scmp.ne.s32.totalorder %s91, %s92
    %p101 = scmp.eq.s32.totalorder %s18, 0
    %p102 = por %p100, %p101
    %p103 = scmp.ne.s32.totalorder %s91, %s92
    %p104 = scmp.eq.s32.totalorder %s19, 1
    %p105 = por %p103, %p104
    %p107 = scmp.ne.s32.totalorder %s92, %s106
    %p108 = scmp.eq.s32.totalorder %s19, 0
    %p109 = por %p107, %p108
    %s110 = ssub.s32 %s13, %s20
    %p111 = scmp.eq.s32.totalorder %s110, 0
    %s113 = sadd.s32 %s112, 1
    %s114 = scalar_select %p111, %s112, %s113
    %p117 = pneg %p111
    %p118 = scmp.eq.s32.totalorder %s13, 1
    %p119 = por %p117, %p118
    %p120 = scmp.ne.s32.totalorder %s112, %s115
    %p121 = scmp.eq.s32.totalorder %s13, 0
    %p122 = por %p120, %p121
    %p123 = scmp.ne.s32.totalorder %s112, %s115
    %p124 = scmp.eq.s32.totalorder %s18, 1
    %p125 = por %p123, %p124
    %p126 = scmp.ne.s32.totalorder %s115, %s116
    %p127 = scmp.eq.s32.totalorder %s18, 0
    %p128 = por %p126, %p127
    %p129 = scmp.ne.s32.totalorder %s115, %s116
    %p130 = scmp.eq.s32.totalorder %s19, 1
    %p131 = por %p129, %p130
    %p133 = scmp.ne.s32.totalorder %s116, %s132
    %p134 = scmp.eq.s32.totalorder %s19, 0
    %p135 = por %p133, %p134
    %s136 = ssub.s32 %s13, %s20
    %p137 = scmp.eq.s32.totalorder %s136, 0
    %s139 = sadd.s32 %s138, 1
    %s140 = scalar_select %p137, %s138, %s139
    %p143 = pneg %p137
    %p144 = scmp.eq.s32.totalorder %s13, 1
    %p145 = por %p143, %p144
    %p146 = scmp.ne.s32.totalorder %s138, %s141
    %p147 = scmp.eq.s32.totalorder %s13, 0
    %p148 = por %p146, %p147
    %p149 = scmp.ne.s32.totalorder %s138, %s141
    %p150 = scmp.eq.s32.totalorder %s18, 1
    %p151 = por %p149, %p150
    %p152 = scmp.ne.s32.totalorder %s141, %s142
    %p153 = scmp.eq.s32.totalorder %s18, 0
    %p154 = por %p152, %p153
    %p155 = scmp.ne.s32.totalorder %s141, %s142
    %p156 = scmp.eq.s32.totalorder %s19, 1
    %p157 = por %p155, %p156
    %p159 = scmp.ne.s32.totalorder %s142, %s158
    %p160 = scmp.eq.s32.totalorder %s19, 0
    %p161 = por %p159, %p160
    %s162 = ssub.s32 %s13, %s20
    %p163 = scmp.eq.s32.totalorder %s162, 0
    %s165 = sadd.s32 %s164, 1
    %s166 = scalar_select %p163, %s164, %s165
    %p169 = pneg %p163
    %p170 = scmp.eq.s32.totalorder %s13, 1
    %p171 = por %p169, %p170
    %p172 = scmp.ne.s32.totalorder %s164, %s167
    %p173 = scmp.eq.s32.totalorder %s13, 0
    %p174 = por %p172, %p173
    %p175 = scmp.ne.s32.totalorder %s164, %s167
    %p176 = scmp.eq.s32.totalorder %s18, 1
    %p177 = por %p175, %p176
    %p178 = scmp.ne.s32.totalorder %s167, %s168
    %p179 = scmp.eq.s32.totalorder %s18, 0
    %p180 = por %p178, %p179
    %p181 = scmp.ne.s32.totalorder %s167, %s168
    %p182 = scmp.eq.s32.totalorder %s19, 1
    %p183 = por %p181, %p182
    %p185 = scmp.ne.s32.totalorder %s168, %s184
    %p186 = scmp.eq.s32.totalorder %s19, 0
    %p187 = por %p185, %p186
    %p188 = scmp.le.s32.totalorder 1, %s13
    %p189 = scmp.lt.s32.totalorder %s13, 3
    %p190 = pnand %p188, %p189
    %p191 = pneg %p190
    // Predicated region
    $region9: #{preact_block_nhwc.4} parent=5 // pred_check
      _
    $region10: #{preact_block_nhwc.4} parent=5 // pred_check_branch
      %193 = sbr.rel (%p190) target = $region12
    $region11: #{preact_block_nhwc.4} parent=5 // pred_region
      %s194 = ssub.s32 %s13, 1
      // Predicated region
      $region13: #{preact_block_nhwc.4} parent=11 // pred_check
        %p195 = pneg %p60
      $region14: #{preact_block_nhwc.4} parent=11 // pred_check_branch
        %197 = sbr.rel (%p195) target = $region16
      $region15: #{preact_block_nhwc.4} parent=11 // pred_region
        _
      $region16: #{preact_block_nhwc.4} parent=11 // pred_fallthru
        _
      // Predicated region
      $region17: #{preact_block_nhwc.4} parent=11 // pred_check
        %p198 = pneg %p81
      $region18: #{preact_block_nhwc.4} parent=11 // pred_check_branch
        %200 = sbr.rel (%p198) target = $region20
      $region19: #{preact_block_nhwc.4} parent=11 // pred_region
        _
      $region20: #{preact_block_nhwc.4} parent=11 // pred_fallthru
        _
      // Predicated region
      $region21: #{preact_block_nhwc.4} parent=11 // pred_check
        %p201 = pneg %p102
      $region22: #{preact_block_nhwc.4} parent=11 // pred_check_branch
        %203 = sbr.rel (%p201) target = $region24
      $region23: #{preact_block_nhwc.4} parent=11 // pred_region
        _
      $region24: #{preact_block_nhwc.4} parent=11 // pred_fallthru
        _
    $region12: #{preact_block_nhwc.4} parent=5 // pred_fallthru
      _
    %p204 = scmp.lt.s32.totalorder %s13, 2
    // Predicated region
    $region25: #{preact_block_nhwc.4} parent=5 // pred_check
      %p205 = pneg %p204
    $region26: #{preact_block_nhwc.4} parent=5 // pred_check_branch
      %207 = sbr.rel (%p205) target = $region28
    $region27: #{preact_block_nhwc.4} parent=5 // pred_region
      // Predicated region
      $region29: #{preact_block_nhwc.4} parent=27 // pred_check
        %p208 = pneg %p33
      $region30: #{preact_block_nhwc.4} parent=27 // pred_check_branch
        %210 = sbr.rel (%p208) target = $region32
      $region31: #{preact_block_nhwc.4} parent=27 // pred_region
        %p211 = scmp.lt.s32.totalorder %s13, 1
        %s212 = scalar_select %p211, %s13, 1
        %s213 = smul.addr %s212, 32
        %s214 = smul.addr %s213, 8
        %s215 = scalar_lea.vmem %s0, %s214
      $region32: #{preact_block_nhwc.4} parent=27 // pred_fallthru
        _
    $region28: #{preact_block_nhwc.4} parent=5 // pred_fallthru
      _
    %p216 = scmp.le.s32.totalorder 1, %s13
    %p217 = scmp.lt.s32.totalorder %s13, 3
    %p218 = pnand %p216, %p217
    %p219 = pneg %p218
    // Predicated region
    $region33: #{preact_block_nhwc.4} parent=5 // pred_check
      _
    $region34: #{preact_block_nhwc.4} parent=5 // pred_check_branch
      %221 = sbr.rel (%p218) target = $region36
    $region35: #{preact_block_nhwc.4} parent=5 // pred_region
      %s222 = ssub.s32 %s13, 1
      %p223 = scmp.lt.s32.totalorder %s18, 1
      %s224 = scalar_select %p223, %s18, 1
      %s225 = smul.addr %s224, 32
      %s226 = smul.addr %s225, 8
      %s227 = scalar_lea.vmem %s0, %s226
      %p228 = pneg %p39
      %p229 = pneg %p36
      %p230 = pneg %p60
      %p231 = pneg %p57
      %p232 = pneg %p81
      %p233 = pneg %p78
      %p234 = pneg %p102
      %p235 = pneg %p99
      %p236 = pneg %p128
      %p237 = pneg %p125
      %p238 = scmp.lt.s32.totalorder %s18, 1
      %s239 = scalar_select %p238, %s18, 1
      %s240 = smul.addr %s239, 32
      %s241 = smul.addr %s240, 8
      %s242 = scalar_lea.vmem %s4, %s241
      %p243 = pneg %p154
      %p244 = pneg %p151
      %p245 = scmp.lt.s32.totalorder %s18, 1
      %s246 = scalar_select %p245, %s18, 1
      %s247 = scalar_lea.vmem %s5, %s246
      %p248 = pneg %p180
      %p249 = pneg %p177
      %p250 = scmp.lt.s32.totalorder %s18, 1
      %s251 = scalar_select %p250, %s18, 1
      %s252 = scalar_lea.vmem %s6, %s251
      %p253 = scmp.lt.s32.totalorder %s18, 1
      %s254 = scalar_select %p253, %s18, 1
      %s255 = smul.addr %s254, 32
      %s256 = smul.addr %s255, 8
      %s257 = scalar_lea.vmem %s0, %s256
      %p258 = scmp.lt.s32.totalorder %s18, 1
      %s259 = scalar_select %p258, %s18, 1
      %s260 = smul.addr %s259, 32
      %s261 = smul.addr %s260, 8
      %s262 = scalar_lea.vmem %s4, %s261
      %p263 = scmp.lt.s32.totalorder %s18, 1
      %s264 = scalar_select %p263, %s18, 1
      %s265 = scalar_lea.vmem %s5, %s264
      %p266 = scmp.lt.s32.totalorder %s18, 1
      %s267 = scalar_select %p266, %s18, 1
      %s268 = scalar_lea.vmem %s6, %s267
      %v270 = vld [vmem:[%s1] sm:$0x1]
      %v271 = vld [vmem:[%s2] sm:$0x1]
      %v272 = vld [vmem:[%s257] sm:$0xff]
      %v273 = vld [vmem:[%s257 + $0x8] sm:$0xff]
      %v274 = vld [vmem:[%s257 + $0x10] sm:$0xff]
      %v275 = vld [vmem:[%s257 + $0x18] sm:$0xff]
      %v276 = vld [vmem:[%s257 + $0x20] sm:$0xff]
      %v277 = vld [vmem:[%s257 + $0x28] sm:$0xff]
      %v278 = vld [vmem:[%s257 + $0x30] sm:$0xff]
      %v279 = vld [vmem:[%s257 + $0x38] sm:$0xff]
      %v280 = vld [vmem:[%s257 + $0x40] sm:$0xff]
      %v281 = vld [vmem:[%s257 + $0x48] sm:$0xff]
      %v282 = vld [vmem:[%s257 + $0x50] sm:$0xff]
      %v283 = vld [vmem:[%s257 + $0x58] sm:$0xff]
      %v284 = vld [vmem:[%s257 + $0x60] sm:$0xff]
      %v285 = vld [vmem:[%s257 + $0x68] sm:$0xff]
      %v286 = vld [vmem:[%s257 + $0x70] sm:$0xff]
      %v287 = vld [vmem:[%s257 + $0x78] sm:$0xff]
      %v288 = vld [vmem:[%s257 + $0x80] sm:$0xff]
      %v289 = vld [vmem:[%s257 + $0x88] sm:$0xff]
      %v290 = vld [vmem:[%s257 + $0x90] sm:$0xff]
      %v291 = vld [vmem:[%s257 + $0x98] sm:$0xff]
      %v292 = vld [vmem:[%s257 + $0xa0] sm:$0xff]
      %v293 = vld [vmem:[%s257 + $0xa8] sm:$0xff]
      %v294 = vld [vmem:[%s257 + $0xb0] sm:$0xff]
      %v295 = vld [vmem:[%s257 + $0xb8] sm:$0xff]
      %v296 = vld [vmem:[%s257 + $0xc0] sm:$0xff]
      %v297 = vld [vmem:[%s257 + $0xc8] sm:$0xff]
      %v298 = vld [vmem:[%s257 + $0xd0] sm:$0xff]
      %v299 = vld [vmem:[%s257 + $0xd8] sm:$0xff]
      %v300 = vld [vmem:[%s257 + $0xe0] sm:$0xff]
      %v301 = vld [vmem:[%s257 + $0xe8] sm:$0xff]
      %v302 = vld [vmem:[%s257 + $0xf0] sm:$0xff]
      %v303 = vld [vmem:[%s257 + $0xf8] sm:$0xff]
      %v305 = vlaneseq
      %v306 = vshrl.u32 %v305, 7
      %v307 = vsub.s32 0, %v306
      %v308 = vrot.slane %v270, %v307
      %v310 = vmul.f32 %v272, %v308
      %v311 = vmul.f32 %v273, %v308
      %v312 = vmul.f32 %v274, %v308
      %v313 = vmul.f32 %v275, %v308
      %v314 = vmul.f32 %v276, %v308
      %v315 = vmul.f32 %v277, %v308
      %v316 = vmul.f32 %v278, %v308
      %v317 = vmul.f32 %v279, %v308
      %v318 = vmul.f32 %v280, %v308
      %v319 = vmul.f32 %v281, %v308
      %v320 = vmul.f32 %v282, %v308
      %v321 = vmul.f32 %v283, %v308
      %v322 = vmul.f32 %v284, %v308
      %v323 = vmul.f32 %v285, %v308
      %v324 = vmul.f32 %v286, %v308
      %v325 = vmul.f32 %v287, %v308
      %v326 = vmul.f32 %v288, %v308
      %v327 = vmul.f32 %v289, %v308
      %v328 = vmul.f32 %v290, %v308
      %v329 = vmul.f32 %v291, %v308
      %v330 = vmul.f32 %v292, %v308
      %v331 = vmul.f32 %v293, %v308
      %v332 = vmul.f32 %v294, %v308
      %v333 = vmul.f32 %v295, %v308
      %v334 = vmul.f32 %v296, %v308
      %v335 = vmul.f32 %v297, %v308
      %v336 = vmul.f32 %v298, %v308
      %v337 = vmul.f32 %v299, %v308
      %v338 = vmul.f32 %v300, %v308
      %v339 = vmul.f32 %v301, %v308
      %v340 = vmul.f32 %v302, %v308
      %v341 = vmul.f32 %v303, %v308
      %v343 = vlaneseq
      %v344 = vshrl.u32 %v343, 7
      %v345 = vsub.s32 0, %v344
      %v346 = vrot.slane %v271, %v345
      %v348 = vadd.f32 %v310, %v346
      %v349 = vadd.f32 %v311, %v346
      %v350 = vadd.f32 %v312, %v346
      %v351 = vadd.f32 %v313, %v346
      %v352 = vadd.f32 %v314, %v346
      %v353 = vadd.f32 %v315, %v346
      %v354 = vadd.f32 %v316, %v346
      %v355 = vadd.f32 %v317, %v346
      %v356 = vadd.f32 %v318, %v346
      %v357 = vadd.f32 %v319, %v346
      %v358 = vadd.f32 %v320, %v346
      %v359 = vadd.f32 %v321, %v346
      %v360 = vadd.f32 %v322, %v346
      %v361 = vadd.f32 %v323, %v346
      %v362 = vadd.f32 %v324, %v346
      %v363 = vadd.f32 %v325, %v346
      %v364 = vadd.f32 %v326, %v346
      %v365 = vadd.f32 %v327, %v346
      %v366 = vadd.f32 %v328, %v346
      %v367 = vadd.f32 %v329, %v346
      %v368 = vadd.f32 %v330, %v346
      %v369 = vadd.f32 %v331, %v346
      %v370 = vadd.f32 %v332, %v346
      %v371 = vadd.f32 %v333, %v346
      %v372 = vadd.f32 %v334, %v346
      %v373 = vadd.f32 %v335, %v346
      %v374 = vadd.f32 %v336, %v346
      %v375 = vadd.f32 %v337, %v346
      %v376 = vadd.f32 %v338, %v346
      %v377 = vadd.f32 %v339, %v346
      %v378 = vadd.f32 %v340, %v346
      %v379 = vadd.f32 %v341, %v346
      %v380 = vmax.f32 %v348, 0.0
      %v381 = vmax.f32 %v349, 0.0
      %v382 = vmax.f32 %v350, 0.0
      %v383 = vmax.f32 %v351, 0.0
      %v384 = vmax.f32 %v352, 0.0
      %v385 = vmax.f32 %v353, 0.0
      %v386 = vmax.f32 %v354, 0.0
      %v387 = vmax.f32 %v355, 0.0
      %v388 = vmax.f32 %v356, 0.0
      %v389 = vmax.f32 %v357, 0.0
      %v390 = vmax.f32 %v358, 0.0
      %v391 = vmax.f32 %v359, 0.0
      %v392 = vmax.f32 %v360, 0.0
      %v393 = vmax.f32 %v361, 0.0
      %v394 = vmax.f32 %v362, 0.0
      %v395 = vmax.f32 %v363, 0.0
      %v396 = vmax.f32 %v364, 0.0
      %v397 = vmax.f32 %v365, 0.0
      %v398 = vmax.f32 %v366, 0.0
      %v399 = vmax.f32 %v367, 0.0
      %v400 = vmax.f32 %v368, 0.0
      %v401 = vmax.f32 %v369, 0.0
      %v402 = vmax.f32 %v370, 0.0
      %v403 = vmax.f32 %v371, 0.0
      %v404 = vmax.f32 %v372, 0.0
      %v405 = vmax.f32 %v373, 0.0
      %v406 = vmax.f32 %v374, 0.0
      %v407 = vmax.f32 %v375, 0.0
      %v408 = vmax.f32 %v376, 0.0
      %v409 = vmax.f32 %v377, 0.0
      %v410 = vmax.f32 %v378, 0.0
      %v411 = vmax.f32 %v379, 0.0
      %v412 = vpack.c.bf16 %v381, %v380
      %v413 = vpack.c.bf16 %v383, %v382
      %v414 = vpack.c.bf16 %v385, %v384
      %v415 = vpack.c.bf16 %v387, %v386
      %v416 = vpack.c.bf16 %v389, %v388
      %v417 = vpack.c.bf16 %v391, %v390
      %v418 = vpack.c.bf16 %v393, %v392
      %v419 = vpack.c.bf16 %v395, %v394
      %v420 = vpack.c.bf16 %v397, %v396
      %v421 = vpack.c.bf16 %v399, %v398
      %v422 = vpack.c.bf16 %v401, %v400
      %v423 = vpack.c.bf16 %v403, %v402
      %v424 = vpack.c.bf16 %v405, %v404
      %v425 = vpack.c.bf16 %v407, %v406
      %v426 = vpack.c.bf16 %v409, %v408
      %v427 = vpack.c.bf16 %v411, %v410
      %vm428 = vcmask 27648
      %429 = vst.msk [vmem:[#allocation2] sm:$0xf] %vm428, 0
      %430 = vst.msk [vmem:[#allocation2 + $0x4] sm:$0xf] %vm428, 0
      %vm431 = vcmask 24576
      %432 = vst.msk [vmem:[#allocation2 + $0x8] sm:$0x1] %vm431, 0
      %s433 = scalar_lea.vmem [#allocation2], 204
      %434 = vst.msk [vmem:[%s433] sm:$0xf] %vm428, 0
      %435 = vst.msk [vmem:[%s433 + $0x4] sm:$0xf] %vm428, 0
      %436 = vst.msk [vmem:[%s433 + $0x8] sm:$0x1] %vm431, 0
      %vm437 = vcmask 24576
      %vm438 = vsmask.f32 256
      %vm439 = vmand %vm437, %vm438
      %v440 = vld [vmem:[#allocation2] sm:$0x1]
      %v441 = vsel %vm439, 0, %v440
      %442 = vst [vmem:[#allocation2] sm:$0x1] %v441
      %v443 = vld [vmem:[#allocation2 + $0xc] sm:$0x1]
      %v444 = vsel %vm439, 0, %v443
      %445 = vst [vmem:[#allocation2 + $0xc] sm:$0x1] %v444
      %v446 = vld [vmem:[#allocation2 + $0x18] sm:$0x1]
      %v447 = vsel %vm439, 0, %v446
      %448 = vst [vmem:[#allocation2 + $0x18] sm:$0x1] %v447
      %v449 = vld [vmem:[#allocation2 + $0x24] sm:$0x1]
      %v450 = vsel %vm439, 0, %v449
      %451 = vst [vmem:[#allocation2 + $0x24] sm:$0x1] %v450
      %v452 = vld [vmem:[#allocation2 + $0x30] sm:$0x1]
      %v453 = vsel %vm439, 0, %v452
      %454 = vst [vmem:[#allocation2 + $0x30] sm:$0x1] %v453
      %v455 = vld [vmem:[#allocation2 + $0x3c] sm:$0x1]
      %v456 = vsel %vm439, 0, %v455
      %457 = vst [vmem:[#allocation2 + $0x3c] sm:$0x1] %v456
      %v458 = vld [vmem:[#allocation2 + $0x48] sm:$0x1]
      %v459 = vsel %vm439, 0, %v458
      %460 = vst [vmem:[#allocation2 + $0x48] sm:$0x1] %v459
      %v461 = vld [vmem:[#allocation2 + $0x54] sm:$0x1]
      %v462 = vsel %vm439, 0, %v461
      %463 = vst [vmem:[#allocation2 + $0x54] sm:$0x1] %v462
      %v464 = vld [vmem:[#allocation2 + $0x60] sm:$0x1]
      %v465 = vsel %vm439, 0, %v464
      %466 = vst [vmem:[#allocation2 + $0x60] sm:$0x1] %v465
      %v467 = vld [vmem:[#allocation2 + $0x6c] sm:$0x1]
      %v468 = vsel %vm439, 0, %v467
      %469 = vst [vmem:[#allocation2 + $0x6c] sm:$0x1] %v468
      %v470 = vld [vmem:[#allocation2 + $0x78] sm:$0x1]
      %v471 = vsel %vm439, 0, %v470
      %472 = vst [vmem:[#allocation2 + $0x78] sm:$0x1] %v471
      %v473 = vld [vmem:[#allocation2 + $0x84] sm:$0x1]
      %v474 = vsel %vm439, 0, %v473
      %475 = vst [vmem:[#allocation2 + $0x84] sm:$0x1] %v474
      %v476 = vld [vmem:[#allocation2 + $0x90] sm:$0x1]
      %v477 = vsel %vm439, 0, %v476
      %478 = vst [vmem:[#allocation2 + $0x90] sm:$0x1] %v477
      %v479 = vld [vmem:[#allocation2 + $0x9c] sm:$0x1]
      %v480 = vsel %vm439, 0, %v479
      %481 = vst [vmem:[#allocation2 + $0x9c] sm:$0x1] %v480
      %v482 = vld [vmem:[#allocation2 + $0xa8] sm:$0x1]
      %v483 = vsel %vm439, 0, %v482
      %484 = vst [vmem:[#allocation2 + $0xa8] sm:$0x1] %v483
      %v485 = vld [vmem:[#allocation2 + $0xb4] sm:$0x1]
      %v486 = vsel %vm439, 0, %v485
      %487 = vst [vmem:[#allocation2 + $0xb4] sm:$0x1] %v486
      %v488 = vld [vmem:[#allocation2 + $0xc0] sm:$0x1]
      %v489 = vsel %vm439, 0, %v488
      %490 = vst [vmem:[#allocation2 + $0xc0] sm:$0x1] %v489
      %v491 = vld [vmem:[#allocation2 + $0xcc] sm:$0x1]
      %v492 = vsel %vm439, 0, %v491
      %493 = vst [vmem:[#allocation2 + $0xcc] sm:$0x1] %v492
      %vm494 = vsmask.f32 7938
      %vm495 = vmand %vm437, %vm494
      %v496 = vld [vmem:[#allocation2 + $0x8] sm:$0x1]
      %v497 = vsel %vm495, 0, %v496
      %498 = vst [vmem:[#allocation2 + $0x8] sm:$0x1] %v497
      %v499 = vld [vmem:[#allocation2 + $0x14] sm:$0x1]
      %v500 = vsel %vm495, 0, %v499
      %501 = vst [vmem:[#allocation2 + $0x14] sm:$0x1] %v500
      %v502 = vld [vmem:[#allocation2 + $0x20] sm:$0x1]
      %v503 = vsel %vm495, 0, %v502
      %504 = vst [vmem:[#allocation2 + $0x20] sm:$0x1] %v503
      %v505 = vld [vmem:[#allocation2 + $0x2c] sm:$0x1]
      %v506 = vsel %vm495, 0, %v505
      %507 = vst [vmem:[#allocation2 + $0x2c] sm:$0x1] %v506
      %v508 = vld [vmem:[#allocation2 + $0x38] sm:$0x1]
      %v509 = vsel %vm495, 0, %v508
      %510 = vst [vmem:[#allocation2 + $0x38] sm:$0x1] %v509
      %v511 = vld [vmem:[#allocation2 + $0x44] sm:$0x1]
      %v512 = vsel %vm495, 0, %v511
      %513 = vst [vmem:[#allocation2 + $0x44] sm:$0x1] %v512
      %v514 = vld [vmem:[#allocation2 + $0x50] sm:$0x1]
      %v515 = vsel %vm495, 0, %v514
      %516 = vst [vmem:[#allocation2 + $0x50] sm:$0x1] %v515
      %v517 = vld [vmem:[#allocation2 + $0x5c] sm:$0x1]
      %v518 = vsel %vm495, 0, %v517
      %519 = vst [vmem:[#allocation2 + $0x5c] sm:$0x1] %v518
      %v520 = vld [vmem:[#allocation2 + $0x68] sm:$0x1]
      %v521 = vsel %vm495, 0, %v520
      %522 = vst [vmem:[#allocation2 + $0x68] sm:$0x1] %v521
      %v523 = vld [vmem:[#allocation2 + $0x74] sm:$0x1]
      %v524 = vsel %vm495, 0, %v523
      %525 = vst [vmem:[#allocation2 + $0x74] sm:$0x1] %v524
      %v526 = vld [vmem:[#allocation2 + $0x80] sm:$0x1]
      %v527 = vsel %vm495, 0, %v526
      %528 = vst [vmem:[#allocation2 + $0x80] sm:$0x1] %v527
      %v529 = vld [vmem:[#allocation2 + $0x8c] sm:$0x1]
      %v530 = vsel %vm495, 0, %v529
      %531 = vst [vmem:[#allocation2 + $0x8c] sm:$0x1] %v530
      %v532 = vld [vmem:[#allocation2 + $0x98] sm:$0x1]
      %v533 = vsel %vm495, 0, %v532
      %534 = vst [vmem:[#allocation2 + $0x98] sm:$0x1] %v533
      %v535 = vld [vmem:[#allocation2 + $0xa4] sm:$0x1]
      %v536 = vsel %vm495, 0, %v535
      %537 = vst [vmem:[#allocation2 + $0xa4] sm:$0x1] %v536
      %v538 = vld [vmem:[#allocation2 + $0xb0] sm:$0x1]
      %v539 = vsel %vm495, 0, %v538
      %540 = vst [vmem:[#allocation2 + $0xb0] sm:$0x1] %v539
      %v541 = vld [vmem:[#allocation2 + $0xbc] sm:$0x1]
      %v542 = vsel %vm495, 0, %v541
      %543 = vst [vmem:[#allocation2 + $0xbc] sm:$0x1] %v542
      %v544 = vld [vmem:[#allocation2 + $0xc8] sm:$0x1]
      %v545 = vsel %vm495, 0, %v544
      %546 = vst [vmem:[#allocation2 + $0xc8] sm:$0x1] %v545
      %v547 = vld [vmem:[#allocation2 + $0xd4] sm:$0x1]
      %v548 = vsel %vm495, 0, %v547
      %549 = vst [vmem:[#allocation2 + $0xd4] sm:$0x1] %v548
      %v566 = vunpack.c.l.b16 %v412
      %v567 = vunpack.c.h.b16 %v412
      %v568 = vunpack.c.l.b16 %v413
      %v569 = vunpack.c.h.b16 %v413
      %v570 = vunpack.c.l.b16 %v414
      %v571 = vunpack.c.h.b16 %v414
      %v572 = vunpack.c.l.b16 %v415
      %v573 = vunpack.c.h.b16 %v415
      %v574 = vunpack.c.l.b16 %v416
      %v575 = vunpack.c.h.b16 %v416
      %v576 = vunpack.c.l.b16 %v417
      %v577 = vunpack.c.h.b16 %v417
      %v578 = vunpack.c.l.b16 %v418
      %v579 = vunpack.c.h.b16 %v418
      %v580 = vunpack.c.l.b16 %v419
      %v581 = vunpack.c.h.b16 %v419
      %v582 = vunpack.c.l.b16 %v420
      %v583 = vunpack.c.h.b16 %v420
      %v584 = vunpack.c.l.b16 %v421
      %v585 = vunpack.c.h.b16 %v421
      %v586 = vunpack.c.l.b16 %v422
      %v587 = vunpack.c.h.b16 %v422
      %v588 = vunpack.c.l.b16 %v423
      %v589 = vunpack.c.h.b16 %v423
      %v590 = vunpack.c.l.b16 %v424
      %v591 = vunpack.c.h.b16 %v424
      %v592 = vunpack.c.l.b16 %v425
      %v593 = vunpack.c.h.b16 %v425
      %v594 = vunpack.c.l.b16 %v426
      %v595 = vunpack.c.h.b16 %v426
      %v596 = vunpack.c.l.b16 %v427
      %v597 = vunpack.c.h.b16 %v427
      %v598 = vpack.c.b16 %v566, %v566
      %v599 = vpack.c.b16 %v567, %v567
      %v600 = vpack.c.b16 %v568, %v568
      %v601 = vpack.c.b16 %v569, %v569
      %v602 = vpack.c.b16 %v570, %v570
      %v603 = vpack.c.b16 %v571, %v571
      %v604 = vpack.c.b16 %v572, %v572
      %v605 = vpack.c.b16 %v573, %v573
      %v606 = vpack.c.b16 %v574, %v574
      %v607 = vpack.c.b16 %v575, %v575
      %v608 = vpack.c.b16 %v576, %v576
      %v609 = vpack.c.b16 %v577, %v577
      %v610 = vpack.c.b16 %v578, %v578
      %v611 = vpack.c.b16 %v579, %v579
      %v612 = vpack.c.b16 %v580, %v580
      %v613 = vpack.c.b16 %v581, %v581
      %v614 = vpack.c.b16 %v582, %v582
      %v615 = vpack.c.b16 %v583, %v583
      %v616 = vpack.c.b16 %v584, %v584
      %v617 = vpack.c.b16 %v585, %v585
      %v618 = vpack.c.b16 %v586, %v586
      %v619 = vpack.c.b16 %v587, %v587
      %v620 = vpack.c.b16 %v588, %v588
      %v621 = vpack.c.b16 %v589, %v589
      %v622 = vpack.c.b16 %v590, %v590
      %v623 = vpack.c.b16 %v591, %v591
      %v624 = vpack.c.b16 %v592, %v592
      %v625 = vpack.c.b16 %v593, %v593
      %v626 = vpack.c.b16 %v594, %v594
      %v627 = vpack.c.b16 %v595, %v595
      %v628 = vpack.c.b16 %v596, %v596
      %v629 = vpack.c.b16 %v597, %v597
      %vm630 = vsmask.f32 4368
      %vm631 = vmor %vm438, %vm630
      %v633 = vshrl.u32 %v598, 16
      %v635 = vrot.slane %v633, 7
      %v636 = vshll.u32 %v598, 16
      %v638 = vor.u32 %v635, %v636
      %v639 = vrot.slane %v635, 4
      %v641 = vshrl.u32 %v599, 16
      %v643 = vrot.slane %v641, 7
      %v644 = vshll.u32 %v599, 16
      %v646 = vor.u32 %v643, %v644
      %v647 = vsel %vm631, %v639, %v646
      %v648 = vrot.slane %v643, 4
      %v650 = vshrl.u32 %v600, 16
      %v652 = vrot.slane %v650, 7
      %v653 = vshll.u32 %v600, 16
      %v655 = vor.u32 %v652, %v653
      %v656 = vrot.slane %v652, 4
      %v658 = vshrl.u32 %v601, 16
      %v660 = vrot.slane %v658, 7
      %v661 = vshll.u32 %v601, 16
      %v663 = vor.u32 %v660, %v661
      %v664 = vsel %vm631, %v656, %v663
      %v665 = vrot.slane %v660, 4
      %v667 = vshrl.u32 %v602, 16
      %v669 = vrot.slane %v667, 7
      %v670 = vshll.u32 %v602, 16
      %v672 = vor.u32 %v669, %v670
      %v673 = vrot.slane %v669, 4
      %v675 = vshrl.u32 %v603, 16
      %v677 = vrot.slane %v675, 7
      %v678 = vshll.u32 %v603, 16
      %v680 = vor.u32 %v677, %v678
      %v681 = vsel %vm631, %v673, %v680
      %v682 = vrot.slane %v677, 4
      %v684 = vshrl.u32 %v604, 16
      %v686 = vrot.slane %v684, 7
      %v687 = vshll.u32 %v604, 16
      %v689 = vor.u32 %v686, %v687
      %v690 = vrot.slane %v686, 4
      %v692 = vshrl.u32 %v605, 16
      %v694 = vrot.slane %v692, 7
      %v695 = vshll.u32 %v605, 16
      %v697 = vor.u32 %v694, %v695
      %v698 = vsel %vm631, %v690, %v697
      %v699 = vrot.slane %v694, 4
      %v701 = vshrl.u32 %v606, 16
      %v703 = vrot.slane %v701, 7
      %v704 = vshll.u32 %v606, 16
      %v706 = vor.u32 %v703, %v704
      %v707 = vrot.slane %v703, 4
      %v709 = vshrl.u32 %v607, 16
      %v711 = vrot.slane %v709, 7
      %v712 = vshll.u32 %v607, 16
      %v714 = vor.u32 %v711, %v712
      %v715 = vsel %vm631, %v707, %v714
      %v716 = vrot.slane %v711, 4
      %v718 = vshrl.u32 %v608, 16
      %v720 = vrot.slane %v718, 7
      %v721 = vshll.u32 %v608, 16
      %v723 = vor.u32 %v720, %v721
      %v724 = vrot.slane %v720, 4
      %v726 = vshrl.u32 %v609, 16
      %v728 = vrot.slane %v726, 7
      %v729 = vshll.u32 %v609, 16
      %v731 = vor.u32 %v728, %v729
      %v732 = vsel %vm631, %v724, %v731
      %v733 = vrot.slane %v728, 4
      %v735 = vshrl.u32 %v610, 16
      %v737 = vrot.slane %v735, 7
      %v738 = vshll.u32 %v610, 16
      %v740 = vor.u32 %v737, %v738
      %v741 = vrot.slane %v737, 4
      %v743 = vshrl.u32 %v611, 16
      %v745 = vrot.slane %v743, 7
      %v746 = vshll.u32 %v611, 16
      %v748 = vor.u32 %v745, %v746
      %v749 = vsel %vm631, %v741, %v748
      %v750 = vrot.slane %v745, 4
      %v752 = vshrl.u32 %v612, 16
      %v754 = vrot.slane %v752, 7
      %v755 = vshll.u32 %v612, 16
      %v757 = vor.u32 %v754, %v755
      %v758 = vrot.slane %v754, 4
      %v760 = vshrl.u32 %v613, 16
      %v762 = vrot.slane %v760, 7
      %v763 = vshll.u32 %v613, 16
      %v765 = vor.u32 %v762, %v763
      %v766 = vsel %vm631, %v758, %v765
      %v767 = vrot.slane %v762, 4
      %v769 = vshrl.u32 %v614, 16
      %v771 = vrot.slane %v769, 7
      %v772 = vshll.u32 %v614, 16
      %v774 = vor.u32 %v771, %v772
      %v775 = vrot.slane %v771, 4
      %v777 = vshrl.u32 %v615, 16
      %v779 = vrot.slane %v777, 7
      %v780 = vshll.u32 %v615, 16
      %v782 = vor.u32 %v779, %v780
      %v783 = vsel %vm631, %v775, %v782
      %v784 = vrot.slane %v779, 4
      %v786 = vshrl.u32 %v616, 16
      %v788 = vrot.slane %v786, 7
      %v789 = vshll.u32 %v616, 16
      %v791 = vor.u32 %v788, %v789
      %v792 = vrot.slane %v788, 4
      %v794 = vshrl.u32 %v617, 16
      %v796 = vrot.slane %v794, 7
      %v797 = vshll.u32 %v617, 16
      %v799 = vor.u32 %v796, %v797
      %v800 = vsel %vm631, %v792, %v799
      %v801 = vrot.slane %v796, 4
      %v803 = vshrl.u32 %v618, 16
      %v805 = vrot.slane %v803, 7
      %v806 = vshll.u32 %v618, 16
      %v808 = vor.u32 %v805, %v806
      %v809 = vrot.slane %v805, 4
      %v811 = vshrl.u32 %v619, 16
      %v813 = vrot.slane %v811, 7
      %v814 = vshll.u32 %v619, 16
      %v816 = vor.u32 %v813, %v814
      %v817 = vsel %vm631, %v809, %v816
      %v818 = vrot.slane %v813, 4
      %v820 = vshrl.u32 %v620, 16
      %v822 = vrot.slane %v820, 7
      %v823 = vshll.u32 %v620, 16
      %v825 = vor.u32 %v822, %v823
      %v826 = vrot.slane %v822, 4
      %v828 = vshrl.u32 %v621, 16
      %v830 = vrot.slane %v828, 7
      %v831 = vshll.u32 %v621, 16
      %v833 = vor.u32 %v830, %v831
      %v834 = vsel %vm631, %v826, %v833
      %v835 = vrot.slane %v830, 4
      %v837 = vshrl.u32 %v622, 16
      %v839 = vrot.slane %v837, 7
      %v840 = vshll.u32 %v622, 16
      %v842 = vor.u32 %v839, %v840
      %v843 = vrot.slane %v839, 4
      %v845 = vshrl.u32 %v623, 16
      %v847 = vrot.slane %v845, 7
      %v848 = vshll.u32 %v623, 16
      %v850 = vor.u32 %v847, %v848
      %v851 = vsel %vm631, %v843, %v850
      %v852 = vrot.slane %v847, 4
      %v854 = vshrl.u32 %v624, 16
      %v856 = vrot.slane %v854, 7
      %v857 = vshll.u32 %v624, 16
      %v859 = vor.u32 %v856, %v857
      %v860 = vrot.slane %v856, 4
      %v862 = vshrl.u32 %v625, 16
      %v864 = vrot.slane %v862, 7
      %v865 = vshll.u32 %v625, 16
      %v867 = vor.u32 %v864, %v865
      %v868 = vsel %vm631, %v860, %v867
      %v869 = vrot.slane %v864, 4
      %v871 = vshrl.u32 %v626, 16
      %v873 = vrot.slane %v871, 7
      %v874 = vshll.u32 %v626, 16
      %v876 = vor.u32 %v873, %v874
      %v877 = vrot.slane %v873, 4
      %v879 = vshrl.u32 %v627, 16
      %v881 = vrot.slane %v879, 7
      %v882 = vshll.u32 %v627, 16
      %v884 = vor.u32 %v881, %v882
      %v885 = vsel %vm631, %v877, %v884
      %v886 = vrot.slane %v881, 4
      %v888 = vshrl.u32 %v628, 16
      %v890 = vrot.slane %v888, 7
      %v891 = vshll.u32 %v628, 16
      %v893 = vor.u32 %v890, %v891
      %v894 = vrot.slane %v890, 4
      %v896 = vshrl.u32 %v629, 16
      %v898 = vrot.slane %v896, 7
      %v899 = vshll.u32 %v629, 16
      %v901 = vor.u32 %v898, %v899
      %v902 = vsel %vm631, %v894, %v901
      %v903 = vrot.slane %v898, 4
      %s952 = scalar_lea.vmem [#allocation2], 12
      %vm953 = vcmask 27648
      %vm954 = vmand %vm953, %vm494
      %v955 = vld [vmem:[%s952] sm:$0xf]
      %v956 = vsel %vm954, %v638, %v955
      %957 = vst [vmem:[%s952] sm:$0xf] %v956
      %958 = vst.msk [vmem:[%s952 + $0x4] sm:$0xf] %vm428, %v647
      %v959 = vld [vmem:[%s952 + $0x8] sm:$0x1]
      %v960 = vsel %vm439, %v648, %v959
      %961 = vst [vmem:[%s952 + $0x8] sm:$0x1] %v960
      %v962 = vld [vmem:[%s952 + $0xc] sm:$0xf]
      %v963 = vsel %vm954, %v655, %v962
      %964 = vst [vmem:[%s952 + $0xc] sm:$0xf] %v963
      %965 = vst.msk [vmem:[%s952 + $0x10] sm:$0xf] %vm428, %v664
      %v966 = vld [vmem:[%s952 + $0x14] sm:$0x1]
      %v967 = vsel %vm439, %v665, %v966
      %968 = vst [vmem:[%s952 + $0x14] sm:$0x1] %v967
      %v969 = vld [vmem:[%s952 + $0x18] sm:$0xf]
      %v970 = vsel %vm954, %v672, %v969
      %971 = vst [vmem:[%s952 + $0x18] sm:$0xf] %v970
      %972 = vst.msk [vmem:[%s952 + $0x1c] sm:$0xf] %vm428, %v681
      %v973 = vld [vmem:[%s952 + $0x20] sm:$0x1]
      %v974 = vsel %vm439, %v682, %v973
      %975 = vst [vmem:[%s952 + $0x20] sm:$0x1] %v974
      %v976 = vld [vmem:[%s952 + $0x24] sm:$0xf]
      %v977 = vsel %vm954, %v689, %v976
      %978 = vst [vmem:[%s952 + $0x24] sm:$0xf] %v977
      %979 = vst.msk [vmem:[%s952 + $0x28] sm:$0xf] %vm428, %v698
      %v980 = vld [vmem:[%s952 + $0x2c] sm:$0x1]
      %v981 = vsel %vm439, %v699, %v980
      %982 = vst [vmem:[%s952 + $0x2c] sm:$0x1] %v981
      %v983 = vld [vmem:[%s952 + $0x30] sm:$0xf]
      %v984 = vsel %vm954, %v706, %v983
      %985 = vst [vmem:[%s952 + $0x30] sm:$0xf] %v984
      %986 = vst.msk [vmem:[%s952 + $0x34] sm:$0xf] %vm428, %v715
      %v987 = vld [vmem:[%s952 + $0x38] sm:$0x1]
      %v988 = vsel %vm439, %v716, %v987
      %989 = vst [vmem:[%s952 + $0x38] sm:$0x1] %v988
      %v990 = vld [vmem:[%s952 + $0x3c] sm:$0xf]
      %v991 = vsel %vm954, %v723, %v990
      %992 = vst [vmem:[%s952 + $0x3c] sm:$0xf] %v991
      %993 = vst.msk [vmem:[%s952 + $0x40] sm:$0xf] %vm428, %v732
      %v994 = vld [vmem:[%s952 + $0x44] sm:$0x1]
      %v995 = vsel %vm439, %v733, %v994
      %996 = vst [vmem:[%s952 + $0x44] sm:$0x1] %v995
      %v997 = vld [vmem:[%s952 + $0x48] sm:$0xf]
      %v998 = vsel %vm954, %v740, %v997
      %999 = vst [vmem:[%s952 + $0x48] sm:$0xf] %v998
      %1000 = vst.msk [vmem:[%s952 + $0x4c] sm:$0xf] %vm428, %v749
      %v1001 = vld [vmem:[%s952 + $0x50] sm:$0x1]
      %v1002 = vsel %vm439, %v750, %v1001
      %1003 = vst [vmem:[%s952 + $0x50] sm:$0x1] %v1002
      %v1004 = vld [vmem:[%s952 + $0x54] sm:$0xf]
      %v1005 = vsel %vm954, %v757, %v1004
      %1006 = vst [vmem:[%s952 + $0x54] sm:$0xf] %v1005
      %1007 = vst.msk [vmem:[%s952 + $0x58] sm:$0xf] %vm428, %v766
      %v1008 = vld [vmem:[%s952 + $0x5c] sm:$0x1]
      %v1009 = vsel %vm439, %v767, %v1008
      %1010 = vst [vmem:[%s952 + $0x5c] sm:$0x1] %v1009
      %v1011 = vld [vmem:[%s952 + $0x60] sm:$0xf]
      %v1012 = vsel %vm954, %v774, %v1011
      %1013 = vst [vmem:[%s952 + $0x60] sm:$0xf] %v1012
      %1014 = vst.msk [vmem:[%s952 + $0x64] sm:$0xf] %vm428, %v783
      %v1015 = vld [vmem:[%s952 + $0x68] sm:$0x1]
      %v1016 = vsel %vm439, %v784, %v1015
      %1017 = vst [vmem:[%s952 + $0x68] sm:$0x1] %v1016
      %v1018 = vld [vmem:[%s952 + $0x6c] sm:$0xf]
      %v1019 = vsel %vm954, %v791, %v1018
      %1020 = vst [vmem:[%s952 + $0x6c] sm:$0xf] %v1019
      %1021 = vst.msk [vmem:[%s952 + $0x70] sm:$0xf] %vm428, %v800
      %v1022 = vld [vmem:[%s952 + $0x74] sm:$0x1]
      %v1023 = vsel %vm439, %v801, %v1022
      %1024 = vst [vmem:[%s952 + $0x74] sm:$0x1] %v1023
      %v1025 = vld [vmem:[%s952 + $0x78] sm:$0xf]
      %v1026 = vsel %vm954, %v808, %v1025
      %1027 = vst [vmem:[%s952 + $0x78] sm:$0xf] %v1026
      %1028 = vst.msk [vmem:[%s952 + $0x7c] sm:$0xf] %vm428, %v817
      %v1029 = vld [vmem:[%s952 + $0x80] sm:$0x1]
      %v1030 = vsel %vm439, %v818, %v1029
      %1031 = vst [vmem:[%s952 + $0x80] sm:$0x1] %v1030
      %v1032 = vld [vmem:[%s952 + $0x84] sm:$0xf]
      %v1033 = vsel %vm954, %v825, %v1032
      %1034 = vst [vmem:[%s952 + $0x84] sm:$0xf] %v1033
      %1035 = vst.msk [vmem:[%s952 + $0x88] sm:$0xf] %vm428, %v834
      %v1036 = vld [vmem:[%s952 + $0x8c] sm:$0x1]
      %v1037 = vsel %vm439, %v835, %v1036
      %1038 = vst [vmem:[%s952 + $0x8c] sm:$0x1] %v1037
      %v1039 = vld [vmem:[%s952 + $0x90] sm:$0xf]
      %v1040 = vsel %vm954, %v842, %v1039
      %1041 = vst [vmem:[%s952 + $0x90] sm:$0xf] %v1040
      %1042 = vst.msk [vmem:[%s952 + $0x94] sm:$0xf] %vm428, %v851
      %v1043 = vld [vmem:[%s952 + $0x98] sm:$0x1]
      %v1044 = vsel %vm439, %v852, %v1043
      %1045 = vst [vmem:[%s952 + $0x98] sm:$0x1] %v1044
      %v1046 = vld [vmem:[%s952 + $0x9c] sm:$0xf]
      %v1047 = vsel %vm954, %v859, %v1046
      %1048 = vst [vmem:[%s952 + $0x9c] sm:$0xf] %v1047
      %1049 = vst.msk [vmem:[%s952 + $0xa0] sm:$0xf] %vm428, %v868
      %v1050 = vld [vmem:[%s952 + $0xa4] sm:$0x1]
      %v1051 = vsel %vm439, %v869, %v1050
      %1052 = vst [vmem:[%s952 + $0xa4] sm:$0x1] %v1051
      %v1053 = vld [vmem:[%s952 + $0xa8] sm:$0xf]
      %v1054 = vsel %vm954, %v876, %v1053
      %1055 = vst [vmem:[%s952 + $0xa8] sm:$0xf] %v1054
      %1056 = vst.msk [vmem:[%s952 + $0xac] sm:$0xf] %vm428, %v885
      %v1057 = vld [vmem:[%s952 + $0xb0] sm:$0x1]
      %v1058 = vsel %vm439, %v886, %v1057
      %1059 = vst [vmem:[%s952 + $0xb0] sm:$0x1] %v1058
      %v1060 = vld [vmem:[%s952 + $0xb4] sm:$0xf]
      %v1061 = vsel %vm954, %v893, %v1060
      %1062 = vst [vmem:[%s952 + $0xb4] sm:$0xf] %v1061
      %1063 = vst.msk [vmem:[%s952 + $0xb8] sm:$0xf] %vm428, %v902
      %v1064 = vld [vmem:[%s952 + $0xbc] sm:$0x1]
      %v1065 = vsel %vm439, %v903, %v1064
      %1066 = vst [vmem:[%s952 + $0xbc] sm:$0x1] %v1065
      %v1067 = vld [vmem:[#allocation2] sm:$0xf]
      %v1068 = vld [vmem:[#allocation2 + $0x4] sm:$0xf]
      %v1069 = vld [vmem:[#allocation2 + $0xc] sm:$0xf]
      %v1070 = vld [vmem:[#allocation2 + $0x10] sm:$0xf]
      %v1071 = vld [vmem:[#allocation2 + $0x18] sm:$0xf]
      %v1072 = vld [vmem:[#allocation2 + $0x1c] sm:$0xf]
      %v1073 = vld [vmem:[#allocation2 + $0x24] sm:$0xf]
      %v1074 = vld [vmem:[#allocation2 + $0x28] sm:$0xf]
      %v1075 = vld [vmem:[#allocation2 + $0x30] sm:$0xf]
      %v1076 = vld [vmem:[#allocation2 + $0x34] sm:$0xf]
      %v1077 = vld [vmem:[#allocation2 + $0x3c] sm:$0xf]
      %v1078 = vld [vmem:[#allocation2 + $0x40] sm:$0xf]
      %v1079 = vld [vmem:[#allocation2 + $0x48] sm:$0xf]
      %v1080 = vld [vmem:[#allocation2 + $0x4c] sm:$0xf]
      %v1081 = vld [vmem:[#allocation2 + $0x54] sm:$0xf]
      %v1082 = vld [vmem:[#allocation2 + $0x58] sm:$0xf]
      %v1083 = vld [vmem:[#allocation2 + $0x60] sm:$0xf]
      %v1084 = vld [vmem:[#allocation2 + $0x64] sm:$0xf]
      %v1085 = vld [vmem:[#allocation2 + $0x6c] sm:$0xf]
      %v1086 = vld [vmem:[#allocation2 + $0x70] sm:$0xf]
      %v1087 = vld [vmem:[#allocation2 + $0x78] sm:$0xf]
      %v1088 = vld [vmem:[#allocation2 + $0x7c] sm:$0xf]
      %v1089 = vld [vmem:[#allocation2 + $0x84] sm:$0xf]
      %v1090 = vld [vmem:[#allocation2 + $0x88] sm:$0xf]
      %v1091 = vld [vmem:[#allocation2 + $0x90] sm:$0xf]
      %v1092 = vld [vmem:[#allocation2 + $0x94] sm:$0xf]
      %v1093 = vld [vmem:[#allocation2 + $0x9c] sm:$0xf]
      %v1094 = vld [vmem:[#allocation2 + $0xa0] sm:$0xf]
      %v1095 = vld [vmem:[#allocation2 + $0xa8] sm:$0xf]
      %v1096 = vld [vmem:[#allocation2 + $0xac] sm:$0xf]
      %v1097 = vld [vmem:[#allocation2 + $0xb4] sm:$0xf]
      %v1098 = vld [vmem:[#allocation2 + $0xb8] sm:$0xf]
      %v1131 = vunpack.c.l.b16 %v1067
      %v1132 = vunpack.c.l.b16 %v1068
      %v1133 = vunpack.c.l.b16 %v1069
      %v1134 = vunpack.c.l.b16 %v1070
      %v1135 = vunpack.c.l.b16 %v1071
      %v1136 = vunpack.c.l.b16 %v1072
      %v1137 = vunpack.c.l.b16 %v1073
      %v1138 = vunpack.c.l.b16 %v1074
      %v1139 = vunpack.c.l.b16 %v1075
      %v1140 = vunpack.c.l.b16 %v1076
      %v1141 = vunpack.c.l.b16 %v1077
      %v1142 = vunpack.c.l.b16 %v1078
      %v1143 = vunpack.c.l.b16 %v1079
      %v1144 = vunpack.c.l.b16 %v1080
      %v1145 = vunpack.c.l.b16 %v1081
      %v1146 = vunpack.c.l.b16 %v1082
      %v1147 = vunpack.c.l.b16 %v1083
      %v1148 = vunpack.c.l.b16 %v1084
      %v1149 = vunpack.c.l.b16 %v1085
      %v1150 = vunpack.c.l.b16 %v1086
      %v1151 = vunpack.c.l.b16 %v1087
      %v1152 = vunpack.c.l.b16 %v1088
      %v1153 = vunpack.c.l.b16 %v1089
      %v1154 = vunpack.c.l.b16 %v1090
      %v1155 = vunpack.c.l.b16 %v1091
      %v1156 = vunpack.c.l.b16 %v1092
      %v1157 = vunpack.c.l.b16 %v1093
      %v1158 = vunpack.c.l.b16 %v1094
      %v1159 = vunpack.c.l.b16 %v1095
      %v1160 = vunpack.c.l.b16 %v1096
      %v1161 = vunpack.c.l.b16 %v1097
      %v1162 = vunpack.c.l.b16 %v1098
      %v1163 = vpack.c.b16 %v1132, %v1131
      %v1164 = vpack.c.b16 %v1134, %v1133
      %v1165 = vpack.c.b16 %v1136, %v1135
      %v1166 = vpack.c.b16 %v1138, %v1137
      %v1167 = vpack.c.b16 %v1140, %v1139
      %v1168 = vpack.c.b16 %v1142, %v1141
      %v1169 = vpack.c.b16 %v1144, %v1143
      %v1170 = vpack.c.b16 %v1146, %v1145
      %v1171 = vpack.c.b16 %v1148, %v1147
      %v1172 = vpack.c.b16 %v1150, %v1149
      %v1173 = vpack.c.b16 %v1152, %v1151
      %v1174 = vpack.c.b16 %v1154, %v1153
      %v1175 = vpack.c.b16 %v1156, %v1155
      %v1176 = vpack.c.b16 %v1158, %v1157
      %v1177 = vpack.c.b16 %v1160, %v1159
      %v1178 = vpack.c.b16 %v1162, %v1161
      %vm1195 = vcmask 31744
      %1196 = vst.msk [vmem:[#allocation3] sm:$0xff] %vm1195, %v1163
      %1197 = vst.msk [vmem:[#allocation3 + $0x8] sm:$0xff] %vm1195, %v1164
      %1198 = vst.msk [vmem:[#allocation3 + $0x10] sm:$0xff] %vm1195, %v1165
      %1199 = vst.msk [vmem:[#allocation3 + $0x18] sm:$0xff] %vm1195, %v1166
      %1200 = vst.msk [vmem:[#allocation3 + $0x20] sm:$0xff] %vm1195, %v1167
      %1201 = vst.msk [vmem:[#allocation3 + $0x28] sm:$0xff] %vm1195, %v1168
      %1202 = vst.msk [vmem:[#allocation3 + $0x30] sm:$0xff] %vm1195, %v1169
      %1203 = vst.msk [vmem:[#allocation3 + $0x38] sm:$0xff] %vm1195, %v1170
      %1204 = vst.msk [vmem:[#allocation3 + $0x40] sm:$0xff] %vm1195, %v1171
      %1205 = vst.msk [vmem:[#allocation3 + $0x48] sm:$0xff] %vm1195, %v1172
      %1206 = vst.msk [vmem:[#allocation3 + $0x50] sm:$0xff] %vm1195, %v1173
      %1207 = vst.msk [vmem:[#allocation3 + $0x58] sm:$0xff] %vm1195, %v1174
      %1208 = vst.msk [vmem:[#allocation3 + $0x60] sm:$0xff] %vm1195, %v1175
      %1209 = vst.msk [vmem:[#allocation3 + $0x68] sm:$0xff] %vm1195, %v1176
      %1210 = vst.msk [vmem:[#allocation3 + $0x70] sm:$0xff] %vm1195, %v1177
      %1211 = vst.msk [vmem:[#allocation3 + $0x78] sm:$0xff] %vm1195, %v1178
      %v1212 = vld [vmem:[#allocation2] sm:$0xf]
      %v1213 = vld [vmem:[#allocation2 + $0x4] sm:$0xf]
      %v1214 = vld [vmem:[#allocation2 + $0x8] sm:$0x1]
      %v1215 = vld [vmem:[#allocation2 + $0xc] sm:$0xf]
      %v1216 = vld [vmem:[#allocation2 + $0x10] sm:$0xf]
      %v1217 = vld [vmem:[#allocation2 + $0x14] sm:$0x1]
      %v1218 = vld [vmem:[#allocation2 + $0x18] sm:$0xf]
      %v1219 = vld [vmem:[#allocation2 + $0x1c] sm:$0xf]
      %v1220 = vld [vmem:[#allocation2 + $0x20] sm:$0x1]
      %v1221 = vld [vmem:[#allocation2 + $0x24] sm:$0xf]
      %v1222 = vld [vmem:[#allocation2 + $0x28] sm:$0xf]
      %v1223 = vld [vmem:[#allocation2 + $0x2c] sm:$0x1]
      %v1224 = vld [vmem:[#allocation2 + $0x30] sm:$0xf]
      %v1225 = vld [vmem:[#allocation2 + $0x34] sm:$0xf]
      %v1226 = vld [vmem:[#allocation2 + $0x38] sm:$0x1]
      %v1227 = vld [vmem:[#allocation2 + $0x3c] sm:$0xf]
      %v1228 = vld [vmem:[#allocation2 + $0x40] sm:$0xf]
      %v1229 = vld [vmem:[#allocation2 + $0x44] sm:$0x1]
      %v1230 = vld [vmem:[#allocation2 + $0x48] sm:$0xf]
      %v1231 = vld [vmem:[#allocation2 + $0x4c] sm:$0xf]
      %v1232 = vld [vmem:[#allocation2 + $0x50] sm:$0x1]
      %v1233 = vld [vmem:[#allocation2 + $0x54] sm:$0xf]
      %v1234 = vld [vmem:[#allocation2 + $0x58] sm:$0xf]
      %v1235 = vld [vmem:[#allocation2 + $0x5c] sm:$0x1]
      %v1236 = vld [vmem:[#allocation2 + $0x60] sm:$0xf]
      %v1237 = vld [vmem:[#allocation2 + $0x64] sm:$0xf]
      %v1238 = vld [vmem:[#allocation2 + $0x68] sm:$0x1]
      %v1239 = vld [vmem:[#allocation2 + $0x6c] sm:$0xf]
      %v1240 = vld [vmem:[#allocation2 + $0x70] sm:$0xf]
      %v1241 = vld [vmem:[#allocation2 + $0x74] sm:$0x1]
      %v1242 = vld [vmem:[#allocation2 + $0x78] sm:$0xf]
      %v1243 = vld [vmem:[#allocation2 + $0x7c] sm:$0xf]
      %v1244 = vld [vmem:[#allocation2 + $0x80] sm:$0x1]
      %v1245 = vld [vmem:[#allocation2 + $0x84] sm:$0xf]
      %v1246 = vld [vmem:[#allocation2 + $0x88] sm:$0xf]
      %v1247 = vld [vmem:[#allocation2 + $0x8c] sm:$0x1]
      %v1248 = vld [vmem:[#allocation2 + $0x90] sm:$0xf]
      %v1249 = vld [vmem:[#allocation2 + $0x94] sm:$0xf]
      %v1250 = vld [vmem:[#allocation2 + $0x98] sm:$0x1]
      %v1251 = vld [vmem:[#allocation2 + $0x9c] sm:$0xf]
      %v1252 = vld [vmem:[#allocation2 + $0xa0] sm:$0xf]
      %v1253 = vld [vmem:[#allocation2 + $0xa4] sm:$0x1]
      %v1254 = vld [vmem:[#allocation2 + $0xa8] sm:$0xf]
      %v1255 = vld [vmem:[#allocation2 + $0xac] sm:$0xf]
      %v1256 = vld [vmem:[#allocation2 + $0xb0] sm:$0x1]
      %v1257 = vld [vmem:[#allocation2 + $0xb4] sm:$0xf]
      %v1258 = vld [vmem:[#allocation2 + $0xb8] sm:$0xf]
      %v1259 = vld [vmem:[#allocation2 + $0xbc] sm:$0x1]
      %v1308 = vunpack.c.l.b16 %v1212
      %v1309 = vunpack.c.l.b16 %v1213
      %v1310 = vunpack.c.l.b16 %v1214
      %v1311 = vunpack.c.l.b16 %v1215
      %v1312 = vunpack.c.l.b16 %v1216
      %v1313 = vunpack.c.l.b16 %v1217
      %v1314 = vunpack.c.l.b16 %v1218
      %v1315 = vunpack.c.l.b16 %v1219
      %v1316 = vunpack.c.l.b16 %v1220
      %v1317 = vunpack.c.l.b16 %v1221
      %v1318 = vunpack.c.l.b16 %v1222
      %v1319 = vunpack.c.l.b16 %v1223
      %v1320 = vunpack.c.l.b16 %v1224
      %v1321 = vunpack.c.l.b16 %v1225
      %v1322 = vunpack.c.l.b16 %v1226
      %v1323 = vunpack.c.l.b16 %v1227
      %v1324 = vunpack.c.l.b16 %v1228
      %v1325 = vunpack.c.l.b16 %v1229
      %v1326 = vunpack.c.l.b16 %v1230
      %v1327 = vunpack.c.l.b16 %v1231
      %v1328 = vunpack.c.l.b16 %v1232
      %v1329 = vunpack.c.l.b16 %v1233
      %v1330 = vunpack.c.l.b16 %v1234
      %v1331 = vunpack.c.l.b16 %v1235
      %v1332 = vunpack.c.l.b16 %v1236
      %v1333 = vunpack.c.l.b16 %v1237
      %v1334 = vunpack.c.l.b16 %v1238
      %v1335 = vunpack.c.l.b16 %v1239
      %v1336 = vunpack.c.l.b16 %v1240
      %v1337 = vunpack.c.l.b16 %v1241
      %v1338 = vunpack.c.l.b16 %v1242
      %v1339 = vunpack.c.l.b16 %v1243
      %v1340 = vunpack.c.l.b16 %v1244
      %v1341 = vunpack.c.l.b16 %v1245
      %v1342 = vunpack.c.l.b16 %v1246
      %v1343 = vunpack.c.l.b16 %v1247
      %v1344 = vunpack.c.l.b16 %v1248
      %v1345 = vunpack.c.l.b16 %v1249
      %v1346 = vunpack.c.l.b16 %v1250
      %v1347 = vunpack.c.l.b16 %v1251
      %v1348 = vunpack.c.l.b16 %v1252
      %v1349 = vunpack.c.l.b16 %v1253
      %v1350 = vunpack.c.l.b16 %v1254
      %v1351 = vunpack.c.l.b16 %v1255
      %v1352 = vunpack.c.l.b16 %v1256
      %v1353 = vunpack.c.l.b16 %v1257
      %v1354 = vunpack.c.l.b16 %v1258
      %v1355 = vunpack.c.l.b16 %v1259
      %v1356 = vpack.c.b16 %v1309, %v1308
      %v1357 = vpack.c.b16 %v1310, %v1310
      %v1358 = vpack.c.b16 %v1312, %v1311
      %v1359 = vpack.c.b16 %v1313, %v1313
      %v1360 = vpack.c.b16 %v1315, %v1314
      %v1361 = vpack.c.b16 %v1316, %v1316
      %v1362 = vpack.c.b16 %v1318, %v1317
      %v1363 = vpack.c.b16 %v1319, %v1319
      %v1364 = vpack.c.b16 %v1321, %v1320
      %v1365 = vpack.c.b16 %v1322, %v1322
      %v1366 = vpack.c.b16 %v1324, %v1323
      %v1367 = vpack.c.b16 %v1325, %v1325
      %v1368 = vpack.c.b16 %v1327, %v1326
      %v1369 = vpack.c.b16 %v1328, %v1328
      %v1370 = vpack.c.b16 %v1330, %v1329
      %v1371 = vpack.c.b16 %v1331, %v1331
      %v1372 = vpack.c.b16 %v1333, %v1332
      %v1373 = vpack.c.b16 %v1334, %v1334
      %v1374 = vpack.c.b16 %v1336, %v1335
      %v1375 = vpack.c.b16 %v1337, %v1337
      %v1376 = vpack.c.b16 %v1339, %v1338
      %v1377 = vpack.c.b16 %v1340, %v1340
      %v1378 = vpack.c.b16 %v1342, %v1341
      %v1379 = vpack.c.b16 %v1343, %v1343
      %v1380 = vpack.c.b16 %v1345, %v1344
      %v1381 = vpack.c.b16 %v1346, %v1346
      %v1382 = vpack.c.b16 %v1348, %v1347
      %v1383 = vpack.c.b16 %v1349, %v1349
      %v1384 = vpack.c.b16 %v1351, %v1350
      %v1385 = vpack.c.b16 %v1352, %v1352
      %v1386 = vpack.c.b16 %v1354, %v1353
      %v1387 = vpack.c.b16 %v1355, %v1355
      %vm1388 = vsmask.f32 7424
      %v1390 = vshrl.u32 %v1356, 16
      %v1392 = vshll.u32 %v1356, 16
      %v1394 = vrot.slane %v1392, 1
      %v1395 = vor.u32 %v1390, %v1394
      %v1397 = vshll.u32 %v1357, 16
      %v1399 = vrot.slane %v1397, 1
      %v1400 = vsel %vm1388, %v1395, %v1399
      %v1402 = vshrl.u32 %v1358, 16
      %v1404 = vshll.u32 %v1358, 16
      %v1406 = vrot.slane %v1404, 1
      %v1407 = vor.u32 %v1402, %v1406
      %v1409 = vshll.u32 %v1359, 16
      %v1411 = vrot.slane %v1409, 1
      %v1412 = vsel %vm1388, %v1407, %v1411
      %v1414 = vshrl.u32 %v1360, 16
      %v1416 = vshll.u32 %v1360, 16
      %v1418 = vrot.slane %v1416, 1
      %v1419 = vor.u32 %v1414, %v1418
      %v1421 = vshll.u32 %v1361, 16
      %v1423 = vrot.slane %v1421, 1
      %v1424 = vsel %vm1388, %v1419, %v1423
      %v1426 = vshrl.u32 %v1362, 16
      %v1428 = vshll.u32 %v1362, 16
      %v1430 = vrot.slane %v1428, 1
      %v1431 = vor.u32 %v1426, %v1430
      %v1433 = vshll.u32 %v1363, 16
      %v1435 = vrot.slane %v1433, 1
      %v1436 = vsel %vm1388, %v1431, %v1435
      %v1438 = vshrl.u32 %v1364, 16
      %v1440 = vshll.u32 %v1364, 16
      %v1442 = vrot.slane %v1440, 1
      %v1443 = vor.u32 %v1438, %v1442
      %v1445 = vshll.u32 %v1365, 16
      %v1447 = vrot.slane %v1445, 1
      %v1448 = vsel %vm1388, %v1443, %v1447
      %v1450 = vshrl.u32 %v1366, 16
      %v1452 = vshll.u32 %v1366, 16
      %v1454 = vrot.slane %v1452, 1
      %v1455 = vor.u32 %v1450, %v1454
      %v1457 = vshll.u32 %v1367, 16
      %v1459 = vrot.slane %v1457, 1
      %v1460 = vsel %vm1388, %v1455, %v1459
      %v1462 = vshrl.u32 %v1368, 16
      %v1464 = vshll.u32 %v1368, 16
      %v1466 = vrot.slane %v1464, 1
      %v1467 = vor.u32 %v1462, %v1466
      %v1469 = vshll.u32 %v1369, 16
      %v1471 = vrot.slane %v1469, 1
      %v1472 = vsel %vm1388, %v1467, %v1471
      %v1474 = vshrl.u32 %v1370, 16
      %v1476 = vshll.u32 %v1370, 16
      %v1478 = vrot.slane %v1476, 1
      %v1479 = vor.u32 %v1474, %v1478
      %v1481 = vshll.u32 %v1371, 16
      %v1483 = vrot.slane %v1481, 1
      %v1484 = vsel %vm1388, %v1479, %v1483
      %v1486 = vshrl.u32 %v1372, 16
      %v1488 = vshll.u32 %v1372, 16
      %v1490 = vrot.slane %v1488, 1
      %v1491 = vor.u32 %v1486, %v1490
      %v1493 = vshll.u32 %v1373, 16
      %v1495 = vrot.slane %v1493, 1
      %v1496 = vsel %vm1388, %v1491, %v1495
      %v1498 = vshrl.u32 %v1374, 16
      %v1500 = vshll.u32 %v1374, 16
      %v1502 = vrot.slane %v1500, 1
      %v1503 = vor.u32 %v1498, %v1502
      %v1505 = vshll.u32 %v1375, 16
      %v1507 = vrot.slane %v1505, 1
      %v1508 = vsel %vm1388, %v1503, %v1507
      %v1510 = vshrl.u32 %v1376, 16
      %v1512 = vshll.u32 %v1376, 16
      %v1514 = vrot.slane %v1512, 1
      %v1515 = vor.u32 %v1510, %v1514
      %v1517 = vshll.u32 %v1377, 16
      %v1519 = vrot.slane %v1517, 1
      %v1520 = vsel %vm1388, %v1515, %v1519
      %v1522 = vshrl.u32 %v1378, 16
      %v1524 = vshll.u32 %v1378, 16
      %v1526 = vrot.slane %v1524, 1
      %v1527 = vor.u32 %v1522, %v1526
      %v1529 = vshll.u32 %v1379, 16
      %v1531 = vrot.slane %v1529, 1
      %v1532 = vsel %vm1388, %v1527, %v1531
      %v1534 = vshrl.u32 %v1380, 16
      %v1536 = vshll.u32 %v1380, 16
      %v1538 = vrot.slane %v1536, 1
      %v1539 = vor.u32 %v1534, %v1538
      %v1541 = vshll.u32 %v1381, 16
      %v1543 = vrot.slane %v1541, 1
      %v1544 = vsel %vm1388, %v1539, %v1543
      %v1546 = vshrl.u32 %v1382, 16
      %v1548 = vshll.u32 %v1382, 16
      %v1550 = vrot.slane %v1548, 1
      %v1551 = vor.u32 %v1546, %v1550
      %v1553 = vshll.u32 %v1383, 16
      %v1555 = vrot.slane %v1553, 1
      %v1556 = vsel %vm1388, %v1551, %v1555
      %v1558 = vshrl.u32 %v1384, 16
      %v1560 = vshll.u32 %v1384, 16
      %v1562 = vrot.slane %v1560, 1
      %v1563 = vor.u32 %v1558, %v1562
      %v1565 = vshll.u32 %v1385, 16
      %v1567 = vrot.slane %v1565, 1
      %v1568 = vsel %vm1388, %v1563, %v1567
      %v1570 = vshrl.u32 %v1386, 16
      %v1572 = vshll.u32 %v1386, 16
      %v1574 = vrot.slane %v1572, 1
      %v1575 = vor.u32 %v1570, %v1574
      %v1577 = vshll.u32 %v1387, 16
      %v1579 = vrot.slane %v1577, 1
      %v1580 = vsel %vm1388, %v1575, %v1579
      %1581 = vrot.lane.b32.xlu0 %v1400, 4
      %v1582 = vpop.permute.xlu0 %1581
      %1583 = vrot.lane.b32.xlu0 %v1412, 4
      %v1584 = vpop.permute.xlu0 %1583
      %1585 = vrot.lane.b32.xlu0 %v1424, 4
      %v1586 = vpop.permute.xlu0 %1585
      %1587 = vrot.lane.b32.xlu0 %v1436, 4
      %v1588 = vpop.permute.xlu0 %1587
      %1589 = vrot.lane.b32.xlu0 %v1448, 4
      %v1590 = vpop.permute.xlu0 %1589
      %1591 = vrot.lane.b32.xlu0 %v1460, 4
      %v1592 = vpop.permute.xlu0 %1591
      %1593 = vrot.lane.b32.xlu0 %v1472, 4
      %v1594 = vpop.permute.xlu0 %1593
      %1595 = vrot.lane.b32.xlu0 %v1484, 4
      %v1596 = vpop.permute.xlu0 %1595
      %1597 = vrot.lane.b32.xlu0 %v1496, 4
      %v1598 = vpop.permute.xlu0 %1597
      %1599 = vrot.lane.b32.xlu0 %v1508, 4
      %v1600 = vpop.permute.xlu0 %1599
      %1601 = vrot.lane.b32.xlu0 %v1520, 4
      %v1602 = vpop.permute.xlu0 %1601
      %1603 = vrot.lane.b32.xlu0 %v1532, 4
      %v1604 = vpop.permute.xlu0 %1603
      %1605 = vrot.lane.b32.xlu0 %v1544, 4
      %v1606 = vpop.permute.xlu0 %1605
      %1607 = vrot.lane.b32.xlu0 %v1556, 4
      %v1608 = vpop.permute.xlu0 %1607
      %1609 = vrot.lane.b32.xlu0 %v1568, 4
      %v1610 = vpop.permute.xlu0 %1609
      %1611 = vrot.lane.b32.xlu0 %v1580, 4
      %v1612 = vpop.permute.xlu0 %1611
      %vm1629 = vcmask 64544
      %1630 = vst.msk [vmem:[#allocation3] sm:$0xff] %vm1629, %v1582
      %1631 = vst.msk [vmem:[#allocation3 + $0x8] sm:$0xff] %vm1629, %v1584
      %1632 = vst.msk [vmem:[#allocation3 + $0x10] sm:$0xff] %vm1629, %v1586
      %1633 = vst.msk [vmem:[#allocation3 + $0x18] sm:$0xff] %vm1629, %v1588
      %1634 = vst.msk [vmem:[#allocation3 + $0x20] sm:$0xff] %vm1629, %v1590
      %1635 = vst.msk [vmem:[#allocation3 + $0x28] sm:$0xff] %vm1629, %v1592
      %1636 = vst.msk [vmem:[#allocation3 + $0x30] sm:$0xff] %vm1629, %v1594
      %1637 = vst.msk [vmem:[#allocation3 + $0x38] sm:$0xff] %vm1629, %v1596
      %1638 = vst.msk [vmem:[#allocation3 + $0x40] sm:$0xff] %vm1629, %v1598
      %1639 = vst.msk [vmem:[#allocation3 + $0x48] sm:$0xff] %vm1629, %v1600
      %1640 = vst.msk [vmem:[#allocation3 + $0x50] sm:$0xff] %vm1629, %v1602
      %1641 = vst.msk [vmem:[#allocation3 + $0x58] sm:$0xff] %vm1629, %v1604
      %1642 = vst.msk [vmem:[#allocation3 + $0x60] sm:$0xff] %vm1629, %v1606
      %1643 = vst.msk [vmem:[#allocation3 + $0x68] sm:$0xff] %vm1629, %v1608
      %1644 = vst.msk [vmem:[#allocation3 + $0x70] sm:$0xff] %vm1629, %v1610
      %1645 = vst.msk [vmem:[#allocation3 + $0x78] sm:$0xff] %vm1629, %v1612
      %v1646 = vld [vmem:[#allocation2] sm:$0xe]
      %v1647 = vld [vmem:[#allocation2 + $0x4] sm:$0xf]
      %v1648 = vld [vmem:[#allocation2 + $0x8] sm:$0x1]
      %v1649 = vld [vmem:[#allocation2 + $0xc] sm:$0xe]
      %v1650 = vld [vmem:[#allocation2 + $0x10] sm:$0xf]
      %v1651 = vld [vmem:[#allocation2 + $0x14] sm:$0x1]
      %v1652 = vld [vmem:[#allocation2 + $0x18] sm:$0xe]
      %v1653 = vld [vmem:[#allocation2 + $0x1c] sm:$0xf]
      %v1654 = vld [vmem:[#allocation2 + $0x20] sm:$0x1]
      %v1655 = vld [vmem:[#allocation2 + $0x24] sm:$0xe]
      %v1656 = vld [vmem:[#allocation2 + $0x28] sm:$0xf]
      %v1657 = vld [vmem:[#allocation2 + $0x2c] sm:$0x1]
      %v1658 = vld [vmem:[#allocation2 + $0x30] sm:$0xe]
      %v1659 = vld [vmem:[#allocation2 + $0x34] sm:$0xf]
      %v1660 = vld [vmem:[#allocation2 + $0x38] sm:$0x1]
      %v1661 = vld [vmem:[#allocation2 + $0x3c] sm:$0xe]
      %v1662 = vld [vmem:[#allocation2 + $0x40] sm:$0xf]
      %v1663 = vld [vmem:[#allocation2 + $0x44] sm:$0x1]
      %v1664 = vld [vmem:[#allocation2 + $0x48] sm:$0xe]
      %v1665 = vld [vmem:[#allocation2 + $0x4c] sm:$0xf]
      %v1666 = vld [vmem:[#allocation2 + $0x50] sm:$0x1]
      %v1667 = vld [vmem:[#allocation2 + $0x54] sm:$0xe]
      %v1668 = vld [vmem:[#allocation2 + $0x58] sm:$0xf]
      %v1669 = vld [vmem:[#allocation2 + $0x5c] sm:$0x1]
      %v1670 = vld [vmem:[#allocation2 + $0x60] sm:$0xe]
      %v1671 = vld [vmem:[#allocation2 + $0x64] sm:$0xf]
      %v1672 = vld [vmem:[#allocation2 + $0x68] sm:$0x1]
      %v1673 = vld [vmem:[#allocation2 + $0x6c] sm:$0xe]
      %v1674 = vld [vmem:[#allocation2 + $0x70] sm:$0xf]
      %v1675 = vld [vmem:[#allocation2 + $0x74] sm:$0x1]
      %v1676 = vld [vmem:[#allocation2 + $0x78] sm:$0xe]
      %v1677 = vld [vmem:[#allocation2 + $0x7c] sm:$0xf]
      %v1678 = vld [vmem:[#allocation2 + $0x80] sm:$0x1]
      %v1679 = vld [vmem:[#allocation2 + $0x84] sm:$0xe]
      %v1680 = vld [vmem:[#allocation2 + $0x88] sm:$0xf]
      %v1681 = vld [vmem:[#allocation2 + $0x8c] sm:$0x1]
      %v1682 = vld [vmem:[#allocation2 + $0x90] sm:$0xe]
      %v1683 = vld [vmem:[#allocation2 + $0x94] sm:$0xf]
      %v1684 = vld [vmem:[#allocation2 + $0x98] sm:$0x1]
      %v1685 = vld [vmem:[#allocation2 + $0x9c] sm:$0xe]
      %v1686 = vld [vmem:[#allocation2 + $0xa0] sm:$0xf]
      %v1687 = vld [vmem:[#allocation2 + $0xa4] sm:$0x1]
      %v1688 = vld [vmem:[#allocation2 + $0xa8] sm:$0xe]
      %v1689 = vld [vmem:[#allocation2 + $0xac] sm:$0xf]
      %v1690 = vld [vmem:[#allocation2 + $0xb0] sm:$0x1]
      %v1691 = vld [vmem:[#allocation2 + $0xb4] sm:$0xe]
      %v1692 = vld [vmem:[#allocation2 + $0xb8] sm:$0xf]
      %v1693 = vld [vmem:[#allocation2 + $0xbc] sm:$0x1]
      %v1742 = vunpack.c.l.b16 %v1646
      %v1743 = vunpack.c.l.b16 %v1647
      %v1744 = vunpack.c.l.b16 %v1648
      %v1745 = vunpack.c.l.b16 %v1649
      %v1746 = vunpack.c.l.b16 %v1650
      %v1747 = vunpack.c.l.b16 %v1651
      %v1748 = vunpack.c.l.b16 %v1652
      %v1749 = vunpack.c.l.b16 %v1653
      %v1750 = vunpack.c.l.b16 %v1654
      %v1751 = vunpack.c.l.b16 %v1655
      %v1752 = vunpack.c.l.b16 %v1656
      %v1753 = vunpack.c.l.b16 %v1657
      %v1754 = vunpack.c.l.b16 %v1658
      %v1755 = vunpack.c.l.b16 %v1659
      %v1756 = vunpack.c.l.b16 %v1660
      %v1757 = vunpack.c.l.b16 %v1661
      %v1758 = vunpack.c.l.b16 %v1662
      %v1759 = vunpack.c.l.b16 %v1663
      %v1760 = vunpack.c.l.b16 %v1664
      %v1761 = vunpack.c.l.b16 %v1665
      %v1762 = vunpack.c.l.b16 %v1666
      %v1763 = vunpack.c.l.b16 %v1667
      %v1764 = vunpack.c.l.b16 %v1668
      %v1765 = vunpack.c.l.b16 %v1669
      %v1766 = vunpack.c.l.b16 %v1670
      %v1767 = vunpack.c.l.b16 %v1671
      %v1768 = vunpack.c.l.b16 %v1672
      %v1769 = vunpack.c.l.b16 %v1673
      %v1770 = vunpack.c.l.b16 %v1674
      %v1771 = vunpack.c.l.b16 %v1675
      %v1772 = vunpack.c.l.b16 %v1676
      %v1773 = vunpack.c.l.b16 %v1677
      %v1774 = vunpack.c.l.b16 %v1678
      %v1775 = vunpack.c.l.b16 %v1679
      %v1776 = vunpack.c.l.b16 %v1680
      %v1777 = vunpack.c.l.b16 %v1681
      %v1778 = vunpack.c.l.b16 %v1682
      %v1779 = vunpack.c.l.b16 %v1683
      %v1780 = vunpack.c.l.b16 %v1684
      %v1781 = vunpack.c.l.b16 %v1685
      %v1782 = vunpack.c.l.b16 %v1686
      %v1783 = vunpack.c.l.b16 %v1687
      %v1784 = vunpack.c.l.b16 %v1688
      %v1785 = vunpack.c.l.b16 %v1689
      %v1786 = vunpack.c.l.b16 %v1690
      %v1787 = vunpack.c.l.b16 %v1691
      %v1788 = vunpack.c.l.b16 %v1692
      %v1789 = vunpack.c.l.b16 %v1693
      %v1790 = vpack.c.b16 %v1743, %v1742
      %v1791 = vpack.c.b16 %v1744, %v1744
      %v1792 = vpack.c.b16 %v1746, %v1745
      %v1793 = vpack.c.b16 %v1747, %v1747
      %v1794 = vpack.c.b16 %v1749, %v1748
      %v1795 = vpack.c.b16 %v1750, %v1750
      %v1796 = vpack.c.b16 %v1752, %v1751
      %v1797 = vpack.c.b16 %v1753, %v1753
      %v1798 = vpack.c.b16 %v1755, %v1754
      %v1799 = vpack.c.b16 %v1756, %v1756
      %v1800 = vpack.c.b16 %v1758, %v1757
      %v1801 = vpack.c.b16 %v1759, %v1759
      %v1802 = vpack.c.b16 %v1761, %v1760
      %v1803 = vpack.c.b16 %v1762, %v1762
      %v1804 = vpack.c.b16 %v1764, %v1763
      %v1805 = vpack.c.b16 %v1765, %v1765
      %v1806 = vpack.c.b16 %v1767, %v1766
      %v1807 = vpack.c.b16 %v1768, %v1768
      %v1808 = vpack.c.b16 %v1770, %v1769
      %v1809 = vpack.c.b16 %v1771, %v1771
      %v1810 = vpack.c.b16 %v1773, %v1772
      %v1811 = vpack.c.b16 %v1774, %v1774
      %v1812 = vpack.c.b16 %v1776, %v1775
      %v1813 = vpack.c.b16 %v1777, %v1777
      %v1814 = vpack.c.b16 %v1779, %v1778
      %v1815 = vpack.c.b16 %v1780, %v1780
      %v1816 = vpack.c.b16 %v1782, %v1781
      %v1817 = vpack.c.b16 %v1783, %v1783
      %v1818 = vpack.c.b16 %v1785, %v1784
      %v1819 = vpack.c.b16 %v1786, %v1786
      %v1820 = vpack.c.b16 %v1788, %v1787
      %v1821 = vpack.c.b16 %v1789, %v1789
      %vm1822 = vcmask 1046528
      %v1823 = vrot.slane %v1790, 1
      %v1824 = vrot.slane %v1791, 1
      %v1825 = vsel %vm1822, %v1823, %v1824
      %v1826 = vrot.slane %v1792, 1
      %v1827 = vrot.slane %v1793, 1
      %v1828 = vsel %vm1822, %v1826, %v1827
      %v1829 = vrot.slane %v1794, 1
      %v1830 = vrot.slane %v1795, 1
      %v1831 = vsel %vm1822, %v1829, %v1830
      %v1832 = vrot.slane %v1796, 1
      %v1833 = vrot.slane %v1797, 1
      %v1834 = vsel %vm1822, %v1832, %v1833
      %v1835 = vrot.slane %v1798, 1
      %v1836 = vrot.slane %v1799, 1
      %v1837 = vsel %vm1822, %v1835, %v1836
      %v1838 = vrot.slane %v1800, 1
      %v1839 = vrot.slane %v1801, 1
      %v1840 = vsel %vm1822, %v1838, %v1839
      %v1841 = vrot.slane %v1802, 1
      %v1842 = vrot.slane %v1803, 1
      %v1843 = vsel %vm1822, %v1841, %v1842
      %v1844 = vrot.slane %v1804, 1
      %v1845 = vrot.slane %v1805, 1
      %v1846 = vsel %vm1822, %v1844, %v1845
      %v1847 = vrot.slane %v1806, 1
      %v1848 = vrot.slane %v1807, 1
      %v1849 = vsel %vm1822, %v1847, %v1848
      %v1850 = vrot.slane %v1808, 1
      %v1851 = vrot.slane %v1809, 1
      %v1852 = vsel %vm1822, %v1850, %v1851
      %v1853 = vrot.slane %v1810, 1
      %v1854 = vrot.slane %v1811, 1
      %v1855 = vsel %vm1822, %v1853, %v1854
      %v1856 = vrot.slane %v1812, 1
      %v1857 = vrot.slane %v1813, 1
      %v1858 = vsel %vm1822, %v1856, %v1857
      %v1859 = vrot.slane %v1814, 1
      %v1860 = vrot.slane %v1815, 1
      %v1861 = vsel %vm1822, %v1859, %v1860
      %v1862 = vrot.slane %v1816, 1
      %v1863 = vrot.slane %v1817, 1
      %v1864 = vsel %vm1822, %v1862, %v1863
      %v1865 = vrot.slane %v1818, 1
      %v1866 = vrot.slane %v1819, 1
      %v1867 = vsel %vm1822, %v1865, %v1866
      %v1868 = vrot.slane %v1820, 1
      %v1869 = vrot.slane %v1821, 1
      %v1870 = vsel %vm1822, %v1868, %v1869
      %1871 = vrot.lane.b32.xlu0 %v1825, 8
      %v1872 = vpop.permute.xlu0 %1871
      %1873 = vrot.lane.b32.xlu0 %v1828, 8
      %v1874 = vpop.permute.xlu0 %1873
      %1875 = vrot.lane.b32.xlu0 %v1831, 8
      %v1876 = vpop.permute.xlu0 %1875
      %1877 = vrot.lane.b32.xlu0 %v1834, 8
      %v1878 = vpop.permute.xlu0 %1877
      %1879 = vrot.lane.b32.xlu0 %v1837, 8
      %v1880 = vpop.permute.xlu0 %1879
      %1881 = vrot.lane.b32.xlu0 %v1840, 8
      %v1882 = vpop.permute.xlu0 %1881
      %1883 = vrot.lane.b32.xlu0 %v1843, 8
      %v1884 = vpop.permute.xlu0 %1883
      %1885 = vrot.lane.b32.xlu0 %v1846, 8
      %v1886 = vpop.permute.xlu0 %1885
      %1887 = vrot.lane.b32.xlu0 %v1849, 8
      %v1888 = vpop.permute.xlu0 %1887
      %1889 = vrot.lane.b32.xlu0 %v1852, 8
      %v1890 = vpop.permute.xlu0 %1889
      %1891 = vrot.lane.b32.xlu0 %v1855, 8
      %v1892 = vpop.permute.xlu0 %1891
      %1893 = vrot.lane.b32.xlu0 %v1858, 8
      %v1894 = vpop.permute.xlu0 %1893
      %1895 = vrot.lane.b32.xlu0 %v1861, 8
      %v1896 = vpop.permute.xlu0 %1895
      %1897 = vrot.lane.b32.xlu0 %v1864, 8
      %v1898 = vpop.permute.xlu0 %1897
      %1899 = vrot.lane.b32.xlu0 %v1867, 8
      %v1900 = vpop.permute.xlu0 %1899
      %1901 = vrot.lane.b32.xlu0 %v1870, 8
      %v1902 = vpop.permute.xlu0 %1901
      %vm1919 = vcmask 97344
      %1920 = vst.msk [vmem:[#allocation3] sm:$0xff] %vm1919, %v1872
      %1921 = vst.msk [vmem:[#allocation3 + $0x8] sm:$0xff] %vm1919, %v1874
      %1922 = vst.msk [vmem:[#allocation3 + $0x10] sm:$0xff] %vm1919, %v1876
      %1923 = vst.msk [vmem:[#allocation3 + $0x18] sm:$0xff] %vm1919, %v1878
      %1924 = vst.msk [vmem:[#allocation3 + $0x20] sm:$0xff] %vm1919, %v1880
      %1925 = vst.msk [vmem:[#allocation3 + $0x28] sm:$0xff] %vm1919, %v1882
      %1926 = vst.msk [vmem:[#allocation3 + $0x30] sm:$0xff] %vm1919, %v1884
      %1927 = vst.msk [vmem:[#allocation3 + $0x38] sm:$0xff] %vm1919, %v1886
      %1928 = vst.msk [vmem:[#allocation3 + $0x40] sm:$0xff] %vm1919, %v1888
      %1929 = vst.msk [vmem:[#allocation3 + $0x48] sm:$0xff] %vm1919, %v1890
      %1930 = vst.msk [vmem:[#allocation3 + $0x50] sm:$0xff] %vm1919, %v1892
      %1931 = vst.msk [vmem:[#allocation3 + $0x58] sm:$0xff] %vm1919, %v1894
      %1932 = vst.msk [vmem:[#allocation3 + $0x60] sm:$0xff] %vm1919, %v1896
      %1933 = vst.msk [vmem:[#allocation3 + $0x68] sm:$0xff] %vm1919, %v1898
      %1934 = vst.msk [vmem:[#allocation3 + $0x70] sm:$0xff] %vm1919, %v1900
      %1935 = vst.msk [vmem:[#allocation3 + $0x78] sm:$0xff] %vm1919, %v1902
      %v1936 = vld [vmem:[%s952] sm:$0xf]
      %v1937 = vld [vmem:[%s952 + $0x4] sm:$0xf]
      %v1938 = vld [vmem:[%s952 + $0xc] sm:$0xf]
      %v1939 = vld [vmem:[%s952 + $0x10] sm:$0xf]
      %v1940 = vld [vmem:[%s952 + $0x18] sm:$0xf]
      %v1941 = vld [vmem:[%s952 + $0x1c] sm:$0xf]
      %v1942 = vld [vmem:[%s952 + $0x24] sm:$0xf]
      %v1943 = vld [vmem:[%s952 + $0x28] sm:$0xf]
      %v1944 = vld [vmem:[%s952 + $0x30] sm:$0xf]
      %v1945 = vld [vmem:[%s952 + $0x34] sm:$0xf]
      %v1946 = vld [vmem:[%s952 + $0x3c] sm:$0xf]
      %v1947 = vld [vmem:[%s952 + $0x40] sm:$0xf]
      %v1948 = vld [vmem:[%s952 + $0x48] sm:$0xf]
      %v1949 = vld [vmem:[%s952 + $0x4c] sm:$0xf]
      %v1950 = vld [vmem:[%s952 + $0x54] sm:$0xf]
      %v1951 = vld [vmem:[%s952 + $0x58] sm:$0xf]
      %v1952 = vld [vmem:[%s952 + $0x60] sm:$0xf]
      %v1953 = vld [vmem:[%s952 + $0x64] sm:$0xf]
      %v1954 = vld [vmem:[%s952 + $0x6c] sm:$0xf]
      %v1955 = vld [vmem:[%s952 + $0x70] sm:$0xf]
      %v1956 = vld [vmem:[%s952 + $0x78] sm:$0xf]
      %v1957 = vld [vmem:[%s952 + $0x7c] sm:$0xf]
      %v1958 = vld [vmem:[%s952 + $0x84] sm:$0xf]
      %v1959 = vld [vmem:[%s952 + $0x88] sm:$0xf]
      %v1960 = vld [vmem:[%s952 + $0x90] sm:$0xf]
      %v1961 = vld [vmem:[%s952 + $0x94] sm:$0xf]
      %v1962 = vld [vmem:[%s952 + $0x9c] sm:$0xf]
      %v1963 = vld [vmem:[%s952 + $0xa0] sm:$0xf]
      %v1964 = vld [vmem:[%s952 + $0xa8] sm:$0xf]
      %v1965 = vld [vmem:[%s952 + $0xac] sm:$0xf]
      %v1966 = vld [vmem:[%s952 + $0xb4] sm:$0xf]
      %v1967 = vld [vmem:[%s952 + $0xb8] sm:$0xf]
      %v2000 = vunpack.c.l.b16 %v1936
      %v2001 = vunpack.c.l.b16 %v1937
      %v2002 = vunpack.c.l.b16 %v1938
      %v2003 = vunpack.c.l.b16 %v1939
      %v2004 = vunpack.c.l.b16 %v1940
      %v2005 = vunpack.c.l.b16 %v1941
      %v2006 = vunpack.c.l.b16 %v1942
      %v2007 = vunpack.c.l.b16 %v1943
      %v2008 = vunpack.c.l.b16 %v1944
      %v2009 = vunpack.c.l.b16 %v1945
      %v2010 = vunpack.c.l.b16 %v1946
      %v2011 = vunpack.c.l.b16 %v1947
      %v2012 = vunpack.c.l.b16 %v1948
      %v2013 = vunpack.c.l.b16 %v1949
      %v2014 = vunpack.c.l.b16 %v1950
      %v2015 = vunpack.c.l.b16 %v1951
      %v2016 = vunpack.c.l.b16 %v1952
      %v2017 = vunpack.c.l.b16 %v1953
      %v2018 = vunpack.c.l.b16 %v1954
      %v2019 = vunpack.c.l.b16 %v1955
      %v2020 = vunpack.c.l.b16 %v1956
      %v2021 = vunpack.c.l.b16 %v1957
      %v2022 = vunpack.c.l.b16 %v1958
      %v2023 = vunpack.c.l.b16 %v1959
      %v2024 = vunpack.c.l.b16 %v1960
      %v2025 = vunpack.c.l.b16 %v1961
      %v2026 = vunpack.c.l.b16 %v1962
      %v2027 = vunpack.c.l.b16 %v1963
      %v2028 = vunpack.c.l.b16 %v1964
      %v2029 = vunpack.c.l.b16 %v1965
      %v2030 = vunpack.c.l.b16 %v1966
      %v2031 = vunpack.c.l.b16 %v1967
      %v2032 = vpack.c.b16 %v2001, %v2000
      %v2033 = vpack.c.b16 %v2003, %v2002
      %v2034 = vpack.c.b16 %v2005, %v2004
      %v2035 = vpack.c.b16 %v2007, %v2006
      %v2036 = vpack.c.b16 %v2009, %v2008
      %v2037 = vpack.c.b16 %v2011, %v2010
      %v2038 = vpack.c.b16 %v2013, %v2012
      %v2039 = vpack.c.b16 %v2015, %v2014
      %v2040 = vpack.c.b16 %v2017, %v2016
      %v2041 = vpack.c.b16 %v2019, %v2018
      %v2042 = vpack.c.b16 %v2021, %v2020
      %v2043 = vpack.c.b16 %v2023, %v2022
      %v2044 = vpack.c.b16 %v2025, %v2024
      %v2045 = vpack.c.b16 %v2027, %v2026
      %v2046 = vpack.c.b16 %v2029, %v2028
      %v2047 = vpack.c.b16 %v2031, %v2030
      %2048 = vrot.lane.b32.xlu0 %v2032, 12
      %v2049 = vpop.permute.xlu0 %2048
      %2050 = vrot.lane.b32.xlu0 %v2033, 12
      %v2051 = vpop.permute.xlu0 %2050
      %2052 = vrot.lane.b32.xlu0 %v2034, 12
      %v2053 = vpop.permute.xlu0 %2052
      %2054 = vrot.lane.b32.xlu0 %v2035, 12
      %v2055 = vpop.permute.xlu0 %2054
      %2056 = vrot.lane.b32.xlu0 %v2036, 12
      %v2057 = vpop.permute.xlu0 %2056
      %2058 = vrot.lane.b32.xlu0 %v2037, 12
      %v2059 = vpop.permute.xlu0 %2058
      %2060 = vrot.lane.b32.xlu0 %v2038, 12
      %v2061 = vpop.permute.xlu0 %2060
      %2062 = vrot.lane.b32.xlu0 %v2039, 12
      %v2063 = vpop.permute.xlu0 %2062
      %2064 = vrot.lane.b32.xlu0 %v2040, 12
      %v2065 = vpop.permute.xlu0 %2064
      %2066 = vrot.lane.b32.xlu0 %v2041, 12
      %v2067 = vpop.permute.xlu0 %2066
      %2068 = vrot.lane.b32.xlu0 %v2042, 12
      %v2069 = vpop.permute.xlu0 %2068
      %2070 = vrot.lane.b32.xlu0 %v2043, 12
      %v2071 = vpop.permute.xlu0 %2070
      %2072 = vrot.lane.b32.xlu0 %v2044, 12
      %v2073 = vpop.permute.xlu0 %2072
      %2074 = vrot.lane.b32.xlu0 %v2045, 12
      %v2075 = vpop.permute.xlu0 %2074
      %2076 = vrot.lane.b32.xlu0 %v2046, 12
      %v2077 = vpop.permute.xlu0 %2076
      %2078 = vrot.lane.b32.xlu0 %v2047, 12
      %v2079 = vpop.permute.xlu0 %2078
      %vm2096 = vcmask 130144
      %2097 = vst.msk [vmem:[#allocation3] sm:$0xff] %vm2096, %v2049
      %2098 = vst.msk [vmem:[#allocation3 + $0x8] sm:$0xff] %vm2096, %v2051
      %2099 = vst.msk [vmem:[#allocation3 + $0x10] sm:$0xff] %vm2096, %v2053
      %2100 = vst.msk [vmem:[#allocation3 + $0x18] sm:$0xff] %vm2096, %v2055
      %2101 = vst.msk [vmem:[#allocation3 + $0x20] sm:$0xff] %vm2096, %v2057
      %2102 = vst.msk [vmem:[#allocation3 + $0x28] sm:$0xff] %vm2096, %v2059
      %2103 = vst.msk [vmem:[#allocation3 + $0x30] sm:$0xff] %vm2096, %v2061
      %2104 = vst.msk [vmem:[#allocation3 + $0x38] sm:$0xff] %vm2096, %v2063
      %2105 = vst.msk [vmem:[#allocation3 + $0x40] sm:$0xff] %vm2096, %v2065
      %2106 = vst.msk [vmem:[#allocation3 + $0x48] sm:$0xff] %vm2096, %v2067
      %2107 = vst.msk [vmem:[#allocation3 + $0x50] sm:$0xff] %vm2096, %v2069
      %2108 = vst.msk [vmem:[#allocation3 + $0x58] sm:$0xff] %vm2096, %v2071
      %2109 = vst.msk [vmem:[#allocation3 + $0x60] sm:$0xff] %vm2096, %v2073
      %2110 = vst.msk [vmem:[#allocation3 + $0x68] sm:$0xff] %vm2096, %v2075
      %2111 = vst.msk [vmem:[#allocation3 + $0x70] sm:$0xff] %vm2096, %v2077
      %2112 = vst.msk [vmem:[#allocation3 + $0x78] sm:$0xff] %vm2096, %v2079
      %v2113 = vld [vmem:[%s952] sm:$0xf]
      %v2114 = vld [vmem:[%s952 + $0x4] sm:$0xf]
      %v2115 = vld [vmem:[%s952 + $0x8] sm:$0x1]
      %v2116 = vld [vmem:[%s952 + $0xc] sm:$0xf]
      %v2117 = vld [vmem:[%s952 + $0x10] sm:$0xf]
      %v2118 = vld [vmem:[%s952 + $0x14] sm:$0x1]
      %v2119 = vld [vmem:[%s952 + $0x18] sm:$0xf]
      %v2120 = vld [vmem:[%s952 + $0x1c] sm:$0xf]
      %v2121 = vld [vmem:[%s952 + $0x20] sm:$0x1]
      %v2122 = vld [vmem:[%s952 + $0x24] sm:$0xf]
      %v2123 = vld [vmem:[%s952 + $0x28] sm:$0xf]
      %v2124 = vld [vmem:[%s952 + $0x2c] sm:$0x1]
      %v2125 = vld [vmem:[%s952 + $0x30] sm:$0xf]
      %v2126 = vld [vmem:[%s952 + $0x34] sm:$0xf]
      %v2127 = vld [vmem:[%s952 + $0x38] sm:$0x1]
      %v2128 = vld [vmem:[%s952 + $0x3c] sm:$0xf]
      %v2129 = vld [vmem:[%s952 + $0x40] sm:$0xf]
      %v2130 = vld [vmem:[%s952 + $0x44] sm:$0x1]
      %v2131 = vld [vmem:[%s952 + $0x48] sm:$0xf]
      %v2132 = vld [vmem:[%s952 + $0x4c] sm:$0xf]
      %v2133 = vld [vmem:[%s952 + $0x50] sm:$0x1]
      %v2134 = vld [vmem:[%s952 + $0x54] sm:$0xf]
      %v2135 = vld [vmem:[%s952 + $0x58] sm:$0xf]
      %v2136 = vld [vmem:[%s952 + $0x5c] sm:$0x1]
      %v2137 = vld [vmem:[%s952 + $0x60] sm:$0xf]
      %v2138 = vld [vmem:[%s952 + $0x64] sm:$0xf]
      %v2139 = vld [vmem:[%s952 + $0x68] sm:$0x1]
      %v2140 = vld [vmem:[%s952 + $0x6c] sm:$0xf]
      %v2141 = vld [vmem:[%s952 + $0x70] sm:$0xf]
      %v2142 = vld [vmem:[%s952 + $0x74] sm:$0x1]
      %v2143 = vld [vmem:[%s952 + $0x78] sm:$0xf]
      %v2144 = vld [vmem:[%s952 + $0x7c] sm:$0xf]
      %v2145 = vld [vmem:[%s952 + $0x80] sm:$0x1]
      %v2146 = vld [vmem:[%s952 + $0x84] sm:$0xf]
      %v2147 = vld [vmem:[%s952 + $0x88] sm:$0xf]
      %v2148 = vld [vmem:[%s952 + $0x8c] sm:$0x1]
      %v2149 = vld [vmem:[%s952 + $0x90] sm:$0xf]
      %v2150 = vld [vmem:[%s952 + $0x94] sm:$0xf]
      %v2151 = vld [vmem:[%s952 + $0x98] sm:$0x1]
      %v2152 = vld [vmem:[%s952 + $0x9c] sm:$0xf]
      %v2153 = vld [vmem:[%s952 + $0xa0] sm:$0xf]
      %v2154 = vld [vmem:[%s952 + $0xa4] sm:$0x1]
      %v2155 = vld [vmem:[%s952 + $0xa8] sm:$0xf]
      %v2156 = vld [vmem:[%s952 + $0xac] sm:$0xf]
      %v2157 = vld [vmem:[%s952 + $0xb0] sm:$0x1]
      %v2158 = vld [vmem:[%s952 + $0xb4] sm:$0xf]
      %v2159 = vld [vmem:[%s952 + $0xb8] sm:$0xf]
      %v2160 = vld [vmem:[%s952 + $0xbc] sm:$0x1]
      %v2209 = vunpack.c.l.b16 %v2113
      %v2210 = vunpack.c.l.b16 %v2114
      %v2211 = vunpack.c.l.b16 %v2115
      %v2212 = vunpack.c.l.b16 %v2116
      %v2213 = vunpack.c.l.b16 %v2117
      %v2214 = vunpack.c.l.b16 %v2118
      %v2215 = vunpack.c.l.b16 %v2119
      %v2216 = vunpack.c.l.b16 %v2120
      %v2217 = vunpack.c.l.b16 %v2121
      %v2218 = vunpack.c.l.b16 %v2122
      %v2219 = vunpack.c.l.b16 %v2123
      %v2220 = vunpack.c.l.b16 %v2124
      %v2221 = vunpack.c.l.b16 %v2125
      %v2222 = vunpack.c.l.b16 %v2126
      %v2223 = vunpack.c.l.b16 %v2127
      %v2224 = vunpack.c.l.b16 %v2128
      %v2225 = vunpack.c.l.b16 %v2129
      %v2226 = vunpack.c.l.b16 %v2130
      %v2227 = vunpack.c.l.b16 %v2131
      %v2228 = vunpack.c.l.b16 %v2132
      %v2229 = vunpack.c.l.b16 %v2133
      %v2230 = vunpack.c.l.b16 %v2134
      %v2231 = vunpack.c.l.b16 %v2135
      %v2232 = vunpack.c.l.b16 %v2136
      %v2233 = vunpack.c.l.b16 %v2137
      %v2234 = vunpack.c.l.b16 %v2138
      %v2235 = vunpack.c.l.b16 %v2139
      %v2236 = vunpack.c.l.b16 %v2140
      %v2237 = vunpack.c.l.b16 %v2141
      %v2238 = vunpack.c.l.b16 %v2142
      %v2239 = vunpack.c.l.b16 %v2143
      %v2240 = vunpack.c.l.b16 %v2144
      %v2241 = vunpack.c.l.b16 %v2145
      %v2242 = vunpack.c.l.b16 %v2146
      %v2243 = vunpack.c.l.b16 %v2147
      %v2244 = vunpack.c.l.b16 %v2148
      %v2245 = vunpack.c.l.b16 %v2149
      %v2246 = vunpack.c.l.b16 %v2150
      %v2247 = vunpack.c.l.b16 %v2151
      %v2248 = vunpack.c.l.b16 %v2152
      %v2249 = vunpack.c.l.b16 %v2153
      %v2250 = vunpack.c.l.b16 %v2154
      %v2251 = vunpack.c.l.b16 %v2155
      %v2252 = vunpack.c.l.b16 %v2156
      %v2253 = vunpack.c.l.b16 %v2157
      %v2254 = vunpack.c.l.b16 %v2158
      %v2255 = vunpack.c.l.b16 %v2159
      %v2256 = vunpack.c.l.b16 %v2160
      %v2257 = vpack.c.b16 %v2210, %v2209
      %v2258 = vpack.c.b16 %v2211, %v2211
      %v2259 = vpack.c.b16 %v2213, %v2212
      %v2260 = vpack.c.b16 %v2214, %v2214
      %v2261 = vpack.c.b16 %v2216, %v2215
      %v2262 = vpack.c.b16 %v2217, %v2217
      %v2263 = vpack.c.b16 %v2219, %v2218
      %v2264 = vpack.c.b16 %v2220, %v2220
      %v2265 = vpack.c.b16 %v2222, %v2221
      %v2266 = vpack.c.b16 %v2223, %v2223
      %v2267 = vpack.c.b16 %v2225, %v2224
      %v2268 = vpack.c.b16 %v2226, %v2226
      %v2269 = vpack.c.b16 %v2228, %v2227
      %v2270 = vpack.c.b16 %v2229, %v2229
      %v2271 = vpack.c.b16 %v2231, %v2230
      %v2272 = vpack.c.b16 %v2232, %v2232
      %v2273 = vpack.c.b16 %v2234, %v2233
      %v2274 = vpack.c.b16 %v2235, %v2235
      %v2275 = vpack.c.b16 %v2237, %v2236
      %v2276 = vpack.c.b16 %v2238, %v2238
      %v2277 = vpack.c.b16 %v2240, %v2239
      %v2278 = vpack.c.b16 %v2241, %v2241
      %v2279 = vpack.c.b16 %v2243, %v2242
      %v2280 = vpack.c.b16 %v2244, %v2244
      %v2281 = vpack.c.b16 %v2246, %v2245
      %v2282 = vpack.c.b16 %v2247, %v2247
      %v2283 = vpack.c.b16 %v2249, %v2248
      %v2284 = vpack.c.b16 %v2250, %v2250
      %v2285 = vpack.c.b16 %v2252, %v2251
      %v2286 = vpack.c.b16 %v2253, %v2253
      %v2287 = vpack.c.b16 %v2255, %v2254
      %v2288 = vpack.c.b16 %v2256, %v2256
      %v2290 = vshrl.u32 %v2257, 16
      %v2292 = vshll.u32 %v2257, 16
      %v2294 = vrot.slane %v2292, 1
      %v2295 = vor.u32 %v2290, %v2294
      %v2297 = vshll.u32 %v2258, 16
      %v2299 = vrot.slane %v2297, 1
      %v2300 = vsel %vm1388, %v2295, %v2299
      %v2302 = vshrl.u32 %v2259, 16
      %v2304 = vshll.u32 %v2259, 16
      %v2306 = vrot.slane %v2304, 1
      %v2307 = vor.u32 %v2302, %v2306
      %v2309 = vshll.u32 %v2260, 16
      %v2311 = vrot.slane %v2309, 1
      %v2312 = vsel %vm1388, %v2307, %v2311
      %v2314 = vshrl.u32 %v2261, 16
      %v2316 = vshll.u32 %v2261, 16
      %v2318 = vrot.slane %v2316, 1
      %v2319 = vor.u32 %v2314, %v2318
      %v2321 = vshll.u32 %v2262, 16
      %v2323 = vrot.slane %v2321, 1
      %v2324 = vsel %vm1388, %v2319, %v2323
      %v2326 = vshrl.u32 %v2263, 16
      %v2328 = vshll.u32 %v2263, 16
      %v2330 = vrot.slane %v2328, 1
      %v2331 = vor.u32 %v2326, %v2330
      %v2333 = vshll.u32 %v2264, 16
      %v2335 = vrot.slane %v2333, 1
      %v2336 = vsel %vm1388, %v2331, %v2335
      %v2338 = vshrl.u32 %v2265, 16
      %v2340 = vshll.u32 %v2265, 16
      %v2342 = vrot.slane %v2340, 1
      %v2343 = vor.u32 %v2338, %v2342
      %v2345 = vshll.u32 %v2266, 16
      %v2347 = vrot.slane %v2345, 1
      %v2348 = vsel %vm1388, %v2343, %v2347
      %v2350 = vshrl.u32 %v2267, 16
      %v2352 = vshll.u32 %v2267, 16
      %v2354 = vrot.slane %v2352, 1
      %v2355 = vor.u32 %v2350, %v2354
      %v2357 = vshll.u32 %v2268, 16
      %v2359 = vrot.slane %v2357, 1
      %v2360 = vsel %vm1388, %v2355, %v2359
      %v2362 = vshrl.u32 %v2269, 16
      %v2364 = vshll.u32 %v2269, 16
      %v2366 = vrot.slane %v2364, 1
      %v2367 = vor.u32 %v2362, %v2366
      %v2369 = vshll.u32 %v2270, 16
      %v2371 = vrot.slane %v2369, 1
      %v2372 = vsel %vm1388, %v2367, %v2371
      %v2374 = vshrl.u32 %v2271, 16
      %v2376 = vshll.u32 %v2271, 16
      %v2378 = vrot.slane %v2376, 1
      %v2379 = vor.u32 %v2374, %v2378
      %v2381 = vshll.u32 %v2272, 16
      %v2383 = vrot.slane %v2381, 1
      %v2384 = vsel %vm1388, %v2379, %v2383
      %v2386 = vshrl.u32 %v2273, 16
      %v2388 = vshll.u32 %v2273, 16
      %v2390 = vrot.slane %v2388, 1
      %v2391 = vor.u32 %v2386, %v2390
      %v2393 = vshll.u32 %v2274, 16
      %v2395 = vrot.slane %v2393, 1
      %v2396 = vsel %vm1388, %v2391, %v2395
      %v2398 = vshrl.u32 %v2275, 16
      %v2400 = vshll.u32 %v2275, 16
      %v2402 = vrot.slane %v2400, 1
      %v2403 = vor.u32 %v2398, %v2402
      %v2405 = vshll.u32 %v2276, 16
      %v2407 = vrot.slane %v2405, 1
      %v2408 = vsel %vm1388, %v2403, %v2407
      %v2410 = vshrl.u32 %v2277, 16
      %v2412 = vshll.u32 %v2277, 16
      %v2414 = vrot.slane %v2412, 1
      %v2415 = vor.u32 %v2410, %v2414
      %v2417 = vshll.u32 %v2278, 16
      %v2419 = vrot.slane %v2417, 1
      %v2420 = vsel %vm1388, %v2415, %v2419
      %v2422 = vshrl.u32 %v2279, 16
      %v2424 = vshll.u32 %v2279, 16
      %v2426 = vrot.slane %v2424, 1
      %v2427 = vor.u32 %v2422, %v2426
      %v2429 = vshll.u32 %v2280, 16
      %v2431 = vrot.slane %v2429, 1
      %v2432 = vsel %vm1388, %v2427, %v2431
      %v2434 = vshrl.u32 %v2281, 16
      %v2436 = vshll.u32 %v2281, 16
      %v2438 = vrot.slane %v2436, 1
      %v2439 = vor.u32 %v2434, %v2438
      %v2441 = vshll.u32 %v2282, 16
      %v2443 = vrot.slane %v2441, 1
      %v2444 = vsel %vm1388, %v2439, %v2443
      %v2446 = vshrl.u32 %v2283, 16
      %v2448 = vshll.u32 %v2283, 16
      %v2450 = vrot.slane %v2448, 1
      %v2451 = vor.u32 %v2446, %v2450
      %v2453 = vshll.u32 %v2284, 16
      %v2455 = vrot.slane %v2453, 1
      %v2456 = vsel %vm1388, %v2451, %v2455
      %v2458 = vshrl.u32 %v2285, 16
      %v2460 = vshll.u32 %v2285, 16
      %v2462 = vrot.slane %v2460, 1
      %v2463 = vor.u32 %v2458, %v2462
      %v2465 = vshll.u32 %v2286, 16
      %v2467 = vrot.slane %v2465, 1
      %v2468 = vsel %vm1388, %v2463, %v2467
      %v2470 = vshrl.u32 %v2287, 16
      %v2472 = vshll.u32 %v2287, 16
      %v2474 = vrot.slane %v2472, 1
      %v2475 = vor.u32 %v2470, %v2474
      %v2477 = vshll.u32 %v2288, 16
      %v2479 = vrot.slane %v2477, 1
      %v2480 = vsel %vm1388, %v2475, %v2479
      %2481 = vrot.lane.b32.xlu0 %v2300, 16
      %v2482 = vpop.permute.xlu0 %2481
      %2483 = vrot.lane.b32.xlu0 %v2312, 16
      %v2484 = vpop.permute.xlu0 %2483
      %2485 = vrot.lane.b32.xlu0 %v2324, 16
      %v2486 = vpop.permute.xlu0 %2485
      %2487 = vrot.lane.b32.xlu0 %v2336, 16
      %v2488 = vpop.permute.xlu0 %2487
      %2489 = vrot.lane.b32.xlu0 %v2348, 16
      %v2490 = vpop.permute.xlu0 %2489
      %2491 = vrot.lane.b32.xlu0 %v2360, 16
      %v2492 = vpop.permute.xlu0 %2491
      %2493 = vrot.lane.b32.xlu0 %v2372, 16
      %v2494 = vpop.permute.xlu0 %2493
      %2495 = vrot.lane.b32.xlu0 %v2384, 16
      %v2496 = vpop.permute.xlu0 %2495
      %2497 = vrot.lane.b32.xlu0 %v2396, 16
      %v2498 = vpop.permute.xlu0 %2497
      %2499 = vrot.lane.b32.xlu0 %v2408, 16
      %v2500 = vpop.permute.xlu0 %2499
      %2501 = vrot.lane.b32.xlu0 %v2420, 16
      %v2502 = vpop.permute.xlu0 %2501
      %2503 = vrot.lane.b32.xlu0 %v2432, 16
      %v2504 = vpop.permute.xlu0 %2503
      %2505 = vrot.lane.b32.xlu0 %v2444, 16
      %v2506 = vpop.permute.xlu0 %2505
      %2507 = vrot.lane.b32.xlu0 %v2456, 16
      %v2508 = vpop.permute.xlu0 %2507
      %2509 = vrot.lane.b32.xlu0 %v2468, 16
      %v2510 = vpop.permute.xlu0 %2509
      %2511 = vrot.lane.b32.xlu0 %v2480, 16
      %v2512 = vpop.permute.xlu0 %2511
      %vm2529 = vcmask 162944
      %2530 = vst.msk [vmem:[#allocation3] sm:$0xff] %vm2529, %v2482
      %2531 = vst.msk [vmem:[#allocation3 + $0x8] sm:$0xff] %vm2529, %v2484
      %2532 = vst.msk [vmem:[#allocation3 + $0x10] sm:$0xff] %vm2529, %v2486
      %2533 = vst.msk [vmem:[#allocation3 + $0x18] sm:$0xff] %vm2529, %v2488
      %2534 = vst.msk [vmem:[#allocation3 + $0x20] sm:$0xff] %vm2529, %v2490
      %2535 = vst.msk [vmem:[#allocation3 + $0x28] sm:$0xff] %vm2529, %v2492
      %2536 = vst.msk [vmem:[#allocation3 + $0x30] sm:$0xff] %vm2529, %v2494
      %2537 = vst.msk [vmem:[#allocation3 + $0x38] sm:$0xff] %vm2529, %v2496
      %2538 = vst.msk [vmem:[#allocation3 + $0x40] sm:$0xff] %vm2529, %v2498
      %2539 = vst.msk [vmem:[#allocation3 + $0x48] sm:$0xff] %vm2529, %v2500
      %2540 = vst.msk [vmem:[#allocation3 + $0x50] sm:$0xff] %vm2529, %v2502
      %2541 = vst.msk [vmem:[#allocation3 + $0x58] sm:$0xff] %vm2529, %v2504
      %2542 = vst.msk [vmem:[#allocation3 + $0x60] sm:$0xff] %vm2529, %v2506
      %2543 = vst.msk [vmem:[#allocation3 + $0x68] sm:$0xff] %vm2529, %v2508
      %2544 = vst.msk [vmem:[#allocation3 + $0x70] sm:$0xff] %vm2529, %v2510
      %2545 = vst.msk [vmem:[#allocation3 + $0x78] sm:$0xff] %vm2529, %v2512
      %v2546 = vld [vmem:[%s952] sm:$0xe]
      %v2547 = vld [vmem:[%s952 + $0x4] sm:$0xf]
      %v2548 = vld [vmem:[%s952 + $0x8] sm:$0x1]
      %v2549 = vld [vmem:[%s952 + $0xc] sm:$0xe]
      %v2550 = vld [vmem:[%s952 + $0x10] sm:$0xf]
      %v2551 = vld [vmem:[%s952 + $0x14] sm:$0x1]
      %v2552 = vld [vmem:[%s952 + $0x18] sm:$0xe]
      %v2553 = vld [vmem:[%s952 + $0x1c] sm:$0xf]
      %v2554 = vld [vmem:[%s952 + $0x20] sm:$0x1]
      %v2555 = vld [vmem:[%s952 + $0x24] sm:$0xe]
      %v2556 = vld [vmem:[%s952 + $0x28] sm:$0xf]
      %v2557 = vld [vmem:[%s952 + $0x2c] sm:$0x1]
      %v2558 = vld [vmem:[%s952 + $0x30] sm:$0xe]
      %v2559 = vld [vmem:[%s952 + $0x34] sm:$0xf]
      %v2560 = vld [vmem:[%s952 + $0x38] sm:$0x1]
      %v2561 = vld [vmem:[%s952 + $0x3c] sm:$0xe]
      %v2562 = vld [vmem:[%s952 + $0x40] sm:$0xf]
      %v2563 = vld [vmem:[%s952 + $0x44] sm:$0x1]
      %v2564 = vld [vmem:[%s952 + $0x48] sm:$0xe]
      %v2565 = vld [vmem:[%s952 + $0x4c] sm:$0xf]
      %v2566 = vld [vmem:[%s952 + $0x50] sm:$0x1]
      %v2567 = vld [vmem:[%s952 + $0x54] sm:$0xe]
      %v2568 = vld [vmem:[%s952 + $0x58] sm:$0xf]
      %v2569 = vld [vmem:[%s952 + $0x5c] sm:$0x1]
      %v2570 = vld [vmem:[%s952 + $0x60] sm:$0xe]
      %v2571 = vld [vmem:[%s952 + $0x64] sm:$0xf]
      %v2572 = vld [vmem:[%s952 + $0x68] sm:$0x1]
      %v2573 = vld [vmem:[%s952 + $0x6c] sm:$0xe]
      %v2574 = vld [vmem:[%s952 + $0x70] sm:$0xf]
      %v2575 = vld [vmem:[%s952 + $0x74] sm:$0x1]
      %v2576 = vld [vmem:[%s952 + $0x78] sm:$0xe]
      %v2577 = vld [vmem:[%s952 + $0x7c] sm:$0xf]
      %v2578 = vld [vmem:[%s952 + $0x80] sm:$0x1]
      %v2579 = vld [vmem:[%s952 + $0x84] sm:$0xe]
      %v2580 = vld [vmem:[%s952 + $0x88] sm:$0xf]
      %v2581 = vld [vmem:[%s952 + $0x8c] sm:$0x1]
      %v2582 = vld [vmem:[%s952 + $0x90] sm:$0xe]
      %v2583 = vld [vmem:[%s952 + $0x94] sm:$0xf]
      %v2584 = vld [vmem:[%s952 + $0x98] sm:$0x1]
      %v2585 = vld [vmem:[%s952 + $0x9c] sm:$0xe]
      %v2586 = vld [vmem:[%s952 + $0xa0] sm:$0xf]
      %v2587 = vld [vmem:[%s952 + $0xa4] sm:$0x1]
      %v2588 = vld [vmem:[%s952 + $0xa8] sm:$0xe]
      %v2589 = vld [vmem:[%s952 + $0xac] sm:$0xf]
      %v2590 = vld [vmem:[%s952 + $0xb0] sm:$0x1]
      %v2591 = vld [vmem:[%s952 + $0xb4] sm:$0xe]
      %v2592 = vld [vmem:[%s952 + $0xb8] sm:$0xf]
      %v2593 = vld [vmem:[%s952 + $0xbc] sm:$0x1]
      %v2642 = vunpack.c.l.b16 %v2546
      %v2643 = vunpack.c.l.b16 %v2547
      %v2644 = vunpack.c.l.b16 %v2548
      %v2645 = vunpack.c.l.b16 %v2549
      %v2646 = vunpack.c.l.b16 %v2550
      %v2647 = vunpack.c.l.b16 %v2551
      %v2648 = vunpack.c.l.b16 %v2552
      %v2649 = vunpack.c.l.b16 %v2553
      %v2650 = vunpack.c.l.b16 %v2554
      %v2651 = vunpack.c.l.b16 %v2555
      %v2652 = vunpack.c.l.b16 %v2556
      %v2653 = vunpack.c.l.b16 %v2557
      %v2654 = vunpack.c.l.b16 %v2558
      %v2655 = vunpack.c.l.b16 %v2559
      %v2656 = vunpack.c.l.b16 %v2560
      %v2657 = vunpack.c.l.b16 %v2561
      %v2658 = vunpack.c.l.b16 %v2562
      %v2659 = vunpack.c.l.b16 %v2563
      %v2660 = vunpack.c.l.b16 %v2564
      %v2661 = vunpack.c.l.b16 %v2565
      %v2662 = vunpack.c.l.b16 %v2566
      %v2663 = vunpack.c.l.b16 %v2567
      %v2664 = vunpack.c.l.b16 %v2568
      %v2665 = vunpack.c.l.b16 %v2569
      %v2666 = vunpack.c.l.b16 %v2570
      %v2667 = vunpack.c.l.b16 %v2571
      %v2668 = vunpack.c.l.b16 %v2572
      %v2669 = vunpack.c.l.b16 %v2573
      %v2670 = vunpack.c.l.b16 %v2574
      %v2671 = vunpack.c.l.b16 %v2575
      %v2672 = vunpack.c.l.b16 %v2576
      %v2673 = vunpack.c.l.b16 %v2577
      %v2674 = vunpack.c.l.b16 %v2578
      %v2675 = vunpack.c.l.b16 %v2579
      %v2676 = vunpack.c.l.b16 %v2580
      %v2677 = vunpack.c.l.b16 %v2581
      %v2678 = vunpack.c.l.b16 %v2582
      %v2679 = vunpack.c.l.b16 %v2583
      %v2680 = vunpack.c.l.b16 %v2584
      %v2681 = vunpack.c.l.b16 %v2585
      %v2682 = vunpack.c.l.b16 %v2586
      %v2683 = vunpack.c.l.b16 %v2587
      %v2684 = vunpack.c.l.b16 %v2588
      %v2685 = vunpack.c.l.b16 %v2589
      %v2686 = vunpack.c.l.b16 %v2590
      %v2687 = vunpack.c.l.b16 %v2591
      %v2688 = vunpack.c.l.b16 %v2592
      %v2689 = vunpack.c.l.b16 %v2593
      %v2690 = vpack.c.b16 %v2643, %v2642
      %v2691 = vpack.c.b16 %v2644, %v2644
      %v2692 = vpack.c.b16 %v2646, %v2645
      %v2693 = vpack.c.b16 %v2647, %v2647
      %v2694 = vpack.c.b16 %v2649, %v2648
      %v2695 = vpack.c.b16 %v2650, %v2650
      %v2696 = vpack.c.b16 %v2652, %v2651
      %v2697 = vpack.c.b16 %v2653, %v2653
      %v2698 = vpack.c.b16 %v2655, %v2654
      %v2699 = vpack.c.b16 %v2656, %v2656
      %v2700 = vpack.c.b16 %v2658, %v2657
      %v2701 = vpack.c.b16 %v2659, %v2659
      %v2702 = vpack.c.b16 %v2661, %v2660
      %v2703 = vpack.c.b16 %v2662, %v2662
      %v2704 = vpack.c.b16 %v2664, %v2663
      %v2705 = vpack.c.b16 %v2665, %v2665
      %v2706 = vpack.c.b16 %v2667, %v2666
      %v2707 = vpack.c.b16 %v2668, %v2668
      %v2708 = vpack.c.b16 %v2670, %v2669
      %v2709 = vpack.c.b16 %v2671, %v2671
      %v2710 = vpack.c.b16 %v2673, %v2672
      %v2711 = vpack.c.b16 %v2674, %v2674
      %v2712 = vpack.c.b16 %v2676, %v2675
      %v2713 = vpack.c.b16 %v2677, %v2677
      %v2714 = vpack.c.b16 %v2679, %v2678
      %v2715 = vpack.c.b16 %v2680, %v2680
      %v2716 = vpack.c.b16 %v2682, %v2681
      %v2717 = vpack.c.b16 %v2683, %v2683
      %v2718 = vpack.c.b16 %v2685, %v2684
      %v2719 = vpack.c.b16 %v2686, %v2686
      %v2720 = vpack.c.b16 %v2688, %v2687
      %v2721 = vpack.c.b16 %v2689, %v2689
      %v2722 = vrot.slane %v2690, 1
      %v2723 = vrot.slane %v2691, 1
      %v2724 = vsel %vm1822, %v2722, %v2723
      %v2725 = vrot.slane %v2692, 1
      %v2726 = vrot.slane %v2693, 1
      %v2727 = vsel %vm1822, %v2725, %v2726
      %v2728 = vrot.slane %v2694, 1
      %v2729 = vrot.slane %v2695, 1
      %v2730 = vsel %vm1822, %v2728, %v2729
      %v2731 = vrot.slane %v2696, 1
      %v2732 = vrot.slane %v2697, 1
      %v2733 = vsel %vm1822, %v2731, %v2732
      %v2734 = vrot.slane %v2698, 1
      %v2735 = vrot.slane %v2699, 1
      %v2736 = vsel %vm1822, %v2734, %v2735
      %v2737 = vrot.slane %v2700, 1
      %v2738 = vrot.slane %v2701, 1
      %v2739 = vsel %vm1822, %v2737, %v2738
      %v2740 = vrot.slane %v2702, 1
      %v2741 = vrot.slane %v2703, 1
      %v2742 = vsel %vm1822, %v2740, %v2741
      %v2743 = vrot.slane %v2704, 1
      %v2744 = vrot.slane %v2705, 1
      %v2745 = vsel %vm1822, %v2743, %v2744
      %v2746 = vrot.slane %v2706, 1
      %v2747 = vrot.slane %v2707, 1
      %v2748 = vsel %vm1822, %v2746, %v2747
      %v2749 = vrot.slane %v2708, 1
      %v2750 = vrot.slane %v2709, 1
      %v2751 = vsel %vm1822, %v2749, %v2750
      %v2752 = vrot.slane %v2710, 1
      %v2753 = vrot.slane %v2711, 1
      %v2754 = vsel %vm1822, %v2752, %v2753
      %v2755 = vrot.slane %v2712, 1
      %v2756 = vrot.slane %v2713, 1
      %v2757 = vsel %vm1822, %v2755, %v2756
      %v2758 = vrot.slane %v2714, 1
      %v2759 = vrot.slane %v2715, 1
      %v2760 = vsel %vm1822, %v2758, %v2759
      %v2761 = vrot.slane %v2716, 1
      %v2762 = vrot.slane %v2717, 1
      %v2763 = vsel %vm1822, %v2761, %v2762
      %v2764 = vrot.slane %v2718, 1
      %v2765 = vrot.slane %v2719, 1
      %v2766 = vsel %vm1822, %v2764, %v2765
      %v2767 = vrot.slane %v2720, 1
      %v2768 = vrot.slane %v2721, 1
      %v2769 = vsel %vm1822, %v2767, %v2768
      %2770 = vrot.lane.b32.xlu0 %v2724, 20
      %v2771 = vpop.permute.xlu0 %2770
      %2772 = vrot.lane.b32.xlu0 %v2727, 20
      %v2773 = vpop.permute.xlu0 %2772
      %2774 = vrot.lane.b32.xlu0 %v2730, 20
      %v2775 = vpop.permute.xlu0 %2774
      %2776 = vrot.lane.b32.xlu0 %v2733, 20
      %v2777 = vpop.permute.xlu0 %2776
      %2778 = vrot.lane.b32.xlu0 %v2736, 20
      %v2779 = vpop.permute.xlu0 %2778
      %2780 = vrot.lane.b32.xlu0 %v2739, 20
      %v2781 = vpop.permute.xlu0 %2780
      %2782 = vrot.lane.b32.xlu0 %v2742, 20
      %v2783 = vpop.permute.xlu0 %2782
      %2784 = vrot.lane.b32.xlu0 %v2745, 20
      %v2785 = vpop.permute.xlu0 %2784
      %2786 = vrot.lane.b32.xlu0 %v2748, 20
      %v2787 = vpop.permute.xlu0 %2786
      %2788 = vrot.lane.b32.xlu0 %v2751, 20
      %v2789 = vpop.permute.xlu0 %2788
      %2790 = vrot.lane.b32.xlu0 %v2754, 20
      %v2791 = vpop.permute.xlu0 %2790
      %2792 = vrot.lane.b32.xlu0 %v2757, 20
      %v2793 = vpop.permute.xlu0 %2792
      %2794 = vrot.lane.b32.xlu0 %v2760, 20
      %v2795 = vpop.permute.xlu0 %2794
      %2796 = vrot.lane.b32.xlu0 %v2763, 20
      %v2797 = vpop.permute.xlu0 %2796
      %2798 = vrot.lane.b32.xlu0 %v2766, 20
      %v2799 = vpop.permute.xlu0 %2798
      %2800 = vrot.lane.b32.xlu0 %v2769, 20
      %v2801 = vpop.permute.xlu0 %2800
      %vm2818 = vcmask 195744
      %2819 = vst.msk [vmem:[#allocation3] sm:$0xff] %vm2818, %v2771
      %2820 = vst.msk [vmem:[#allocation3 + $0x8] sm:$0xff] %vm2818, %v2773
      %2821 = vst.msk [vmem:[#allocation3 + $0x10] sm:$0xff] %vm2818, %v2775
      %2822 = vst.msk [vmem:[#allocation3 + $0x18] sm:$0xff] %vm2818, %v2777
      %2823 = vst.msk [vmem:[#allocation3 + $0x20] sm:$0xff] %vm2818, %v2779
      %2824 = vst.msk [vmem:[#allocation3 + $0x28] sm:$0xff] %vm2818, %v2781
      %2825 = vst.msk [vmem:[#allocation3 + $0x30] sm:$0xff] %vm2818, %v2783
      %2826 = vst.msk [vmem:[#allocation3 + $0x38] sm:$0xff] %vm2818, %v2785
      %2827 = vst.msk [vmem:[#allocation3 + $0x40] sm:$0xff] %vm2818, %v2787
      %2828 = vst.msk [vmem:[#allocation3 + $0x48] sm:$0xff] %vm2818, %v2789
      %2829 = vst.msk [vmem:[#allocation3 + $0x50] sm:$0xff] %vm2818, %v2791
      %2830 = vst.msk [vmem:[#allocation3 + $0x58] sm:$0xff] %vm2818, %v2793
      %2831 = vst.msk [vmem:[#allocation3 + $0x60] sm:$0xff] %vm2818, %v2795
      %2832 = vst.msk [vmem:[#allocation3 + $0x68] sm:$0xff] %vm2818, %v2797
      %2833 = vst.msk [vmem:[#allocation3 + $0x70] sm:$0xff] %vm2818, %v2799
      %2834 = vst.msk [vmem:[#allocation3 + $0x78] sm:$0xff] %vm2818, %v2801
      %s2835 = scalar_lea.vmem [#allocation2], 24
      %v2836 = vld [vmem:[%s2835] sm:$0xf]
      %v2837 = vld [vmem:[%s2835 + $0x4] sm:$0xf]
      %v2838 = vld [vmem:[%s2835 + $0xc] sm:$0xf]
      %v2839 = vld [vmem:[%s2835 + $0x10] sm:$0xf]
      %v2840 = vld [vmem:[%s2835 + $0x18] sm:$0xf]
      %v2841 = vld [vmem:[%s2835 + $0x1c] sm:$0xf]
      %v2842 = vld [vmem:[%s2835 + $0x24] sm:$0xf]
      %v2843 = vld [vmem:[%s2835 + $0x28] sm:$0xf]
      %v2844 = vld [vmem:[%s2835 + $0x30] sm:$0xf]
      %v2845 = vld [vmem:[%s2835 + $0x34] sm:$0xf]
      %v2846 = vld [vmem:[%s2835 + $0x3c] sm:$0xf]
      %v2847 = vld [vmem:[%s2835 + $0x40] sm:$0xf]
      %v2848 = vld [vmem:[%s2835 + $0x48] sm:$0xf]
      %v2849 = vld [vmem:[%s2835 + $0x4c] sm:$0xf]
      %v2850 = vld [vmem:[%s2835 + $0x54] sm:$0xf]
      %v2851 = vld [vmem:[%s2835 + $0x58] sm:$0xf]
      %v2852 = vld [vmem:[%s2835 + $0x60] sm:$0xf]
      %v2853 = vld [vmem:[%s2835 + $0x64] sm:$0xf]
      %v2854 = vld [vmem:[%s2835 + $0x6c] sm:$0xf]
      %v2855 = vld [vmem:[%s2835 + $0x70] sm:$0xf]
      %v2856 = vld [vmem:[%s2835 + $0x78] sm:$0xf]
      %v2857 = vld [vmem:[%s2835 + $0x7c] sm:$0xf]
      %v2858 = vld [vmem:[%s2835 + $0x84] sm:$0xf]
      %v2859 = vld [vmem:[%s2835 + $0x88] sm:$0xf]
      %v2860 = vld [vmem:[%s2835 + $0x90] sm:$0xf]
      %v2861 = vld [vmem:[%s2835 + $0x94] sm:$0xf]
      %v2862 = vld [vmem:[%s2835 + $0x9c] sm:$0xf]
      %v2863 = vld [vmem:[%s2835 + $0xa0] sm:$0xf]
      %v2864 = vld [vmem:[%s2835 + $0xa8] sm:$0xf]
      %v2865 = vld [vmem:[%s2835 + $0xac] sm:$0xf]
      %v2866 = vld [vmem:[%s2835 + $0xb4] sm:$0xf]
      %v2867 = vld [vmem:[%s2835 + $0xb8] sm:$0xf]
      %v2900 = vunpack.c.l.b16 %v2836
      %v2901 = vunpack.c.l.b16 %v2837
      %v2902 = vunpack.c.l.b16 %v2838
      %v2903 = vunpack.c.l.b16 %v2839
      %v2904 = vunpack.c.l.b16 %v2840
      %v2905 = vunpack.c.l.b16 %v2841
      %v2906 = vunpack.c.l.b16 %v2842
      %v2907 = vunpack.c.l.b16 %v2843
      %v2908 = vunpack.c.l.b16 %v2844
      %v2909 = vunpack.c.l.b16 %v2845
      %v2910 = vunpack.c.l.b16 %v2846
      %v2911 = vunpack.c.l.b16 %v2847
      %v2912 = vunpack.c.l.b16 %v2848
      %v2913 = vunpack.c.l.b16 %v2849
      %v2914 = vunpack.c.l.b16 %v2850
      %v2915 = vunpack.c.l.b16 %v2851
      %v2916 = vunpack.c.l.b16 %v2852
      %v2917 = vunpack.c.l.b16 %v2853
      %v2918 = vunpack.c.l.b16 %v2854
      %v2919 = vunpack.c.l.b16 %v2855
      %v2920 = vunpack.c.l.b16 %v2856
      %v2921 = vunpack.c.l.b16 %v2857
      %v2922 = vunpack.c.l.b16 %v2858
      %v2923 = vunpack.c.l.b16 %v2859
      %v2924 = vunpack.c.l.b16 %v2860
      %v2925 = vunpack.c.l.b16 %v2861
      %v2926 = vunpack.c.l.b16 %v2862
      %v2927 = vunpack.c.l.b16 %v2863
      %v2928 = vunpack.c.l.b16 %v2864
      %v2929 = vunpack.c.l.b16 %v2865
      %v2930 = vunpack.c.l.b16 %v2866
      %v2931 = vunpack.c.l.b16 %v2867
      %v2932 = vpack.c.b16 %v2901, %v2900
      %v2933 = vpack.c.b16 %v2903, %v2902
      %v2934 = vpack.c.b16 %v2905, %v2904
      %v2935 = vpack.c.b16 %v2907, %v2906
      %v2936 = vpack.c.b16 %v2909, %v2908
      %v2937 = vpack.c.b16 %v2911, %v2910
      %v2938 = vpack.c.b16 %v2913, %v2912
      %v2939 = vpack.c.b16 %v2915, %v2914
      %v2940 = vpack.c.b16 %v2917, %v2916
      %v2941 = vpack.c.b16 %v2919, %v2918
      %v2942 = vpack.c.b16 %v2921, %v2920
      %v2943 = vpack.c.b16 %v2923, %v2922
      %v2944 = vpack.c.b16 %v2925, %v2924
      %v2945 = vpack.c.b16 %v2927, %v2926
      %v2946 = vpack.c.b16 %v2929, %v2928
      %v2947 = vpack.c.b16 %v2931, %v2930
      %2948 = vrot.lane.b32.xlu0 %v2932, 24
      %v2949 = vpop.permute.xlu0 %2948
      %2950 = vrot.lane.b32.xlu0 %v2933, 24
      %v2951 = vpop.permute.xlu0 %2950
      %2952 = vrot.lane.b32.xlu0 %v2934, 24
      %v2953 = vpop.permute.xlu0 %2952
      %2954 = vrot.lane.b32.xlu0 %v2935, 24
      %v2955 = vpop.permute.xlu0 %2954
      %2956 = vrot.lane.b32.xlu0 %v2936, 24
      %v2957 = vpop.permute.xlu0 %2956
      %2958 = vrot.lane.b32.xlu0 %v2937, 24
      %v2959 = vpop.permute.xlu0 %2958
      %2960 = vrot.lane.b32.xlu0 %v2938, 24
      %v2961 = vpop.permute.xlu0 %2960
      %2962 = vrot.lane.b32.xlu0 %v2939, 24
      %v2963 = vpop.permute.xlu0 %2962
      %2964 = vrot.lane.b32.xlu0 %v2940, 24
      %v2965 = vpop.permute.xlu0 %2964
      %2966 = vrot.lane.b32.xlu0 %v2941, 24
      %v2967 = vpop.permute.xlu0 %2966
      %2968 = vrot.lane.b32.xlu0 %v2942, 24
      %v2969 = vpop.permute.xlu0 %2968
      %2970 = vrot.lane.b32.xlu0 %v2943, 24
      %v2971 = vpop.permute.xlu0 %2970
      %2972 = vrot.lane.b32.xlu0 %v2944, 24
      %v2973 = vpop.permute.xlu0 %2972
      %2974 = vrot.lane.b32.xlu0 %v2945, 24
      %v2975 = vpop.permute.xlu0 %2974
      %2976 = vrot.lane.b32.xlu0 %v2946, 24
      %v2977 = vpop.permute.xlu0 %2976
      %2978 = vrot.lane.b32.xlu0 %v2947, 24
      %v2979 = vpop.permute.xlu0 %2978
      %vm2996 = vcmask 228544
      %2997 = vst.msk [vmem:[#allocation3] sm:$0xff] %vm2996, %v2949
      %2998 = vst.msk [vmem:[#allocation3 + $0x8] sm:$0xff] %vm2996, %v2951
      %2999 = vst.msk [vmem:[#allocation3 + $0x10] sm:$0xff] %vm2996, %v2953
      %3000 = vst.msk [vmem:[#allocation3 + $0x18] sm:$0xff] %vm2996, %v2955
      %3001 = vst.msk [vmem:[#allocation3 + $0x20] sm:$0xff] %vm2996, %v2957
      %3002 = vst.msk [vmem:[#allocation3 + $0x28] sm:$0xff] %vm2996, %v2959
      %3003 = vst.msk [vmem:[#allocation3 + $0x30] sm:$0xff] %vm2996, %v2961
      %3004 = vst.msk [vmem:[#allocation3 + $0x38] sm:$0xff] %vm2996, %v2963
      %3005 = vst.msk [vmem:[#allocation3 + $0x40] sm:$0xff] %vm2996, %v2965
      %3006 = vst.msk [vmem:[#allocation3 + $0x48] sm:$0xff] %vm2996, %v2967
      %3007 = vst.msk [vmem:[#allocation3 + $0x50] sm:$0xff] %vm2996, %v2969
      %3008 = vst.msk [vmem:[#allocation3 + $0x58] sm:$0xff] %vm2996, %v2971
      %3009 = vst.msk [vmem:[#allocation3 + $0x60] sm:$0xff] %vm2996, %v2973
      %3010 = vst.msk [vmem:[#allocation3 + $0x68] sm:$0xff] %vm2996, %v2975
      %3011 = vst.msk [vmem:[#allocation3 + $0x70] sm:$0xff] %vm2996, %v2977
      %3012 = vst.msk [vmem:[#allocation3 + $0x78] sm:$0xff] %vm2996, %v2979
      %v3013 = vld [vmem:[%s2835] sm:$0xf]
      %v3014 = vld [vmem:[%s2835 + $0x4] sm:$0xf]
      %v3015 = vld [vmem:[%s2835 + $0x8] sm:$0x1]
      %v3016 = vld [vmem:[%s2835 + $0xc] sm:$0xf]
      %v3017 = vld [vmem:[%s2835 + $0x10] sm:$0xf]
      %v3018 = vld [vmem:[%s2835 + $0x14] sm:$0x1]
      %v3019 = vld [vmem:[%s2835 + $0x18] sm:$0xf]
      %v3020 = vld [vmem:[%s2835 + $0x1c] sm:$0xf]
      %v3021 = vld [vmem:[%s2835 + $0x20] sm:$0x1]
      %v3022 = vld [vmem:[%s2835 + $0x24] sm:$0xf]
      %v3023 = vld [vmem:[%s2835 + $0x28] sm:$0xf]
      %v3024 = vld [vmem:[%s2835 + $0x2c] sm:$0x1]
      %v3025 = vld [vmem:[%s2835 + $0x30] sm:$0xf]
      %v3026 = vld [vmem:[%s2835 + $0x34] sm:$0xf]
      %v3027 = vld [vmem:[%s2835 + $0x38] sm:$0x1]
      %v3028 = vld [vmem:[%s2835 + $0x3c] sm:$0xf]
      %v3029 = vld [vmem:[%s2835 + $0x40] sm:$0xf]
      %v3030 = vld [vmem:[%s2835 + $0x44] sm:$0x1]
      %v3031 = vld [vmem:[%s2835 + $0x48] sm:$0xf]
      %v3032 = vld [vmem:[%s2835 + $0x4c] sm:$0xf]
      %v3033 = vld [vmem:[%s2835 + $0x50] sm:$0x1]
      %v3034 = vld [vmem:[%s2835 + $0x54] sm:$0xf]
      %v3035 = vld [vmem:[%s2835 + $0x58] sm:$0xf]
      %v3036 = vld [vmem:[%s2835 + $0x5c] sm:$0x1]
      %v3037 = vld [vmem:[%s2835 + $0x60] sm:$0xf]
      %v3038 = vld [vmem:[%s2835 + $0x64] sm:$0xf]
      %v3039 = vld [vmem:[%s2835 + $0x68] sm:$0x1]
      %v3040 = vld [vmem:[%s2835 + $0x6c] sm:$0xf]
      %v3041 = vld [vmem:[%s2835 + $0x70] sm:$0xf]
      %v3042 = vld [vmem:[%s2835 + $0x74] sm:$0x1]
      %v3043 = vld [vmem:[%s2835 + $0x78] sm:$0xf]
      %v3044 = vld [vmem:[%s2835 + $0x7c] sm:$0xf]
      %v3045 = vld [vmem:[%s2835 + $0x80] sm:$0x1]
      %v3046 = vld [vmem:[%s2835 + $0x84] sm:$0xf]
      %v3047 = vld [vmem:[%s2835 + $0x88] sm:$0xf]
      %v3048 = vld [vmem:[%s2835 + $0x8c] sm:$0x1]
      %v3049 = vld [vmem:[%s2835 + $0x90] sm:$0xf]
      %v3050 = vld [vmem:[%s2835 + $0x94] sm:$0xf]
      %v3051 = vld [vmem:[%s2835 + $0x98] sm:$0x1]
      %v3052 = vld [vmem:[%s2835 + $0x9c] sm:$0xf]
      %v3053 = vld [vmem:[%s2835 + $0xa0] sm:$0xf]
      %v3054 = vld [vmem:[%s2835 + $0xa4] sm:$0x1]
      %v3055 = vld [vmem:[%s2835 + $0xa8] sm:$0xf]
      %v3056 = vld [vmem:[%s2835 + $0xac] sm:$0xf]
      %v3057 = vld [vmem:[%s2835 + $0xb0] sm:$0x1]
      %v3058 = vld [vmem:[%s2835 + $0xb4] sm:$0xf]
      %v3059 = vld [vmem:[%s2835 + $0xb8] sm:$0xf]
      %v3060 = vld [vmem:[%s2835 + $0xbc] sm:$0x1]
      %v3109 = vunpack.c.l.b16 %v3013
      %v3110 = vunpack.c.l.b16 %v3014
      %v3111 = vunpack.c.l.b16 %v3015
      %v3112 = vunpack.c.l.b16 %v3016
      %v3113 = vunpack.c.l.b16 %v3017
      %v3114 = vunpack.c.l.b16 %v3018
      %v3115 = vunpack.c.l.b16 %v3019
      %v3116 = vunpack.c.l.b16 %v3020
      %v3117 = vunpack.c.l.b16 %v3021
      %v3118 = vunpack.c.l.b16 %v3022
      %v3119 = vunpack.c.l.b16 %v3023
      %v3120 = vunpack.c.l.b16 %v3024
      %v3121 = vunpack.c.l.b16 %v3025
      %v3122 = vunpack.c.l.b16 %v3026
      %v3123 = vunpack.c.l.b16 %v3027
      %v3124 = vunpack.c.l.b16 %v3028
      %v3125 = vunpack.c.l.b16 %v3029
      %v3126 = vunpack.c.l.b16 %v3030
      %v3127 = vunpack.c.l.b16 %v3031
      %v3128 = vunpack.c.l.b16 %v3032
      %v3129 = vunpack.c.l.b16 %v3033
      %v3130 = vunpack.c.l.b16 %v3034
      %v3131 = vunpack.c.l.b16 %v3035
      %v3132 = vunpack.c.l.b16 %v3036
      %v3133 = vunpack.c.l.b16 %v3037
      %v3134 = vunpack.c.l.b16 %v3038
      %v3135 = vunpack.c.l.b16 %v3039
      %v3136 = vunpack.c.l.b16 %v3040
      %v3137 = vunpack.c.l.b16 %v3041
      %v3138 = vunpack.c.l.b16 %v3042
      %v3139 = vunpack.c.l.b16 %v3043
      %v3140 = vunpack.c.l.b16 %v3044
      %v3141 = vunpack.c.l.b16 %v3045
      %v3142 = vunpack.c.l.b16 %v3046
      %v3143 = vunpack.c.l.b16 %v3047
      %v3144 = vunpack.c.l.b16 %v3048
      %v3145 = vunpack.c.l.b16 %v3049
      %v3146 = vunpack.c.l.b16 %v3050
      %v3147 = vunpack.c.l.b16 %v3051
      %v3148 = vunpack.c.l.b16 %v3052
      %v3149 = vunpack.c.l.b16 %v3053
      %v3150 = vunpack.c.l.b16 %v3054
      %v3151 = vunpack.c.l.b16 %v3055
      %v3152 = vunpack.c.l.b16 %v3056
      %v3153 = vunpack.c.l.b16 %v3057
      %v3154 = vunpack.c.l.b16 %v3058
      %v3155 = vunpack.c.l.b16 %v3059
      %v3156 = vunpack.c.l.b16 %v3060
      %v3157 = vpack.c.b16 %v3110, %v3109
      %v3158 = vpack.c.b16 %v3111, %v3111
      %v3159 = vpack.c.b16 %v3113, %v3112
      %v3160 = vpack.c.b16 %v3114, %v3114
      %v3161 = vpack.c.b16 %v3116, %v3115
      %v3162 = vpack.c.b16 %v3117, %v3117
      %v3163 = vpack.c.b16 %v3119, %v3118
      %v3164 = vpack.c.b16 %v3120, %v3120
      %v3165 = vpack.c.b16 %v3122, %v3121
      %v3166 = vpack.c.b16 %v3123, %v3123
      %v3167 = vpack.c.b16 %v3125, %v3124
      %v3168 = vpack.c.b16 %v3126, %v3126
      %v3169 = vpack.c.b16 %v3128, %v3127
      %v3170 = vpack.c.b16 %v3129, %v3129
      %v3171 = vpack.c.b16 %v3131, %v3130
      %v3172 = vpack.c.b16 %v3132, %v3132
      %v3173 = vpack.c.b16 %v3134, %v3133
      %v3174 = vpack.c.b16 %v3135, %v3135
      %v3175 = vpack.c.b16 %v3137, %v3136
      %v3176 = vpack.c.b16 %v3138, %v3138
      %v3177 = vpack.c.b16 %v3140, %v3139
      %v3178 = vpack.c.b16 %v3141, %v3141
      %v3179 = vpack.c.b16 %v3143, %v3142
      %v3180 = vpack.c.b16 %v3144, %v3144
      %v3181 = vpack.c.b16 %v3146, %v3145
      %v3182 = vpack.c.b16 %v3147, %v3147
      %v3183 = vpack.c.b16 %v3149, %v3148
      %v3184 = vpack.c.b16 %v3150, %v3150
      %v3185 = vpack.c.b16 %v3152, %v3151
      %v3186 = vpack.c.b16 %v3153, %v3153
      %v3187 = vpack.c.b16 %v3155, %v3154
      %v3188 = vpack.c.b16 %v3156, %v3156
      %v3190 = vshrl.u32 %v3157, 16
      %v3192 = vshll.u32 %v3157, 16
      %v3194 = vrot.slane %v3192, 1
      %v3195 = vor.u32 %v3190, %v3194
      %v3197 = vshll.u32 %v3158, 16
      %v3199 = vrot.slane %v3197, 1
      %v3200 = vsel %vm1388, %v3195, %v3199
      %v3202 = vshrl.u32 %v3159, 16
      %v3204 = vshll.u32 %v3159, 16
      %v3206 = vrot.slane %v3204, 1
      %v3207 = vor.u32 %v3202, %v3206
      %v3209 = vshll.u32 %v3160, 16
      %v3211 = vrot.slane %v3209, 1
      %v3212 = vsel %vm1388, %v3207, %v3211
      %v3214 = vshrl.u32 %v3161, 16
      %v3216 = vshll.u32 %v3161, 16
      %v3218 = vrot.slane %v3216, 1
      %v3219 = vor.u32 %v3214, %v3218
      %v3221 = vshll.u32 %v3162, 16
      %v3223 = vrot.slane %v3221, 1
      %v3224 = vsel %vm1388, %v3219, %v3223
      %v3226 = vshrl.u32 %v3163, 16
      %v3228 = vshll.u32 %v3163, 16
      %v3230 = vrot.slane %v3228, 1
      %v3231 = vor.u32 %v3226, %v3230
      %v3233 = vshll.u32 %v3164, 16
      %v3235 = vrot.slane %v3233, 1
      %v3236 = vsel %vm1388, %v3231, %v3235
      %v3238 = vshrl.u32 %v3165, 16
      %v3240 = vshll.u32 %v3165, 16
      %v3242 = vrot.slane %v3240, 1
      %v3243 = vor.u32 %v3238, %v3242
      %v3245 = vshll.u32 %v3166, 16
      %v3247 = vrot.slane %v3245, 1
      %v3248 = vsel %vm1388, %v3243, %v3247
      %v3250 = vshrl.u32 %v3167, 16
      %v3252 = vshll.u32 %v3167, 16
      %v3254 = vrot.slane %v3252, 1
      %v3255 = vor.u32 %v3250, %v3254
      %v3257 = vshll.u32 %v3168, 16
      %v3259 = vrot.slane %v3257, 1
      %v3260 = vsel %vm1388, %v3255, %v3259
      %v3262 = vshrl.u32 %v3169, 16
      %v3264 = vshll.u32 %v3169, 16
      %v3266 = vrot.slane %v3264, 1
      %v3267 = vor.u32 %v3262, %v3266
      %v3269 = vshll.u32 %v3170, 16
      %v3271 = vrot.slane %v3269, 1
      %v3272 = vsel %vm1388, %v3267, %v3271
      %v3274 = vshrl.u32 %v3171, 16
      %v3276 = vshll.u32 %v3171, 16
      %v3278 = vrot.slane %v3276, 1
      %v3279 = vor.u32 %v3274, %v3278
      %v3281 = vshll.u32 %v3172, 16
      %v3283 = vrot.slane %v3281, 1
      %v3284 = vsel %vm1388, %v3279, %v3283
      %v3286 = vshrl.u32 %v3173, 16
      %v3288 = vshll.u32 %v3173, 16
      %v3290 = vrot.slane %v3288, 1
      %v3291 = vor.u32 %v3286, %v3290
      %v3293 = vshll.u32 %v3174, 16
      %v3295 = vrot.slane %v3293, 1
      %v3296 = vsel %vm1388, %v3291, %v3295
      %v3298 = vshrl.u32 %v3175, 16
      %v3300 = vshll.u32 %v3175, 16
      %v3302 = vrot.slane %v3300, 1
      %v3303 = vor.u32 %v3298, %v3302
      %v3305 = vshll.u32 %v3176, 16
      %v3307 = vrot.slane %v3305, 1
      %v3308 = vsel %vm1388, %v3303, %v3307
      %v3310 = vshrl.u32 %v3177, 16
      %v3312 = vshll.u32 %v3177, 16
      %v3314 = vrot.slane %v3312, 1
      %v3315 = vor.u32 %v3310, %v3314
      %v3317 = vshll.u32 %v3178, 16
      %v3319 = vrot.slane %v3317, 1
      %v3320 = vsel %vm1388, %v3315, %v3319
      %v3322 = vshrl.u32 %v3179, 16
      %v3324 = vshll.u32 %v3179, 16
      %v3326 = vrot.slane %v3324, 1
      %v3327 = vor.u32 %v3322, %v3326
      %v3329 = vshll.u32 %v3180, 16
      %v3331 = vrot.slane %v3329, 1
      %v3332 = vsel %vm1388, %v3327, %v3331
      %v3334 = vshrl.u32 %v3181, 16
      %v3336 = vshll.u32 %v3181, 16
      %v3338 = vrot.slane %v3336, 1
      %v3339 = vor.u32 %v3334, %v3338
      %v3341 = vshll.u32 %v3182, 16
      %v3343 = vrot.slane %v3341, 1
      %v3344 = vsel %vm1388, %v3339, %v3343
      %v3346 = vshrl.u32 %v3183, 16
      %v3348 = vshll.u32 %v3183, 16
      %v3350 = vrot.slane %v3348, 1
      %v3351 = vor.u32 %v3346, %v3350
      %v3353 = vshll.u32 %v3184, 16
      %v3355 = vrot.slane %v3353, 1
      %v3356 = vsel %vm1388, %v3351, %v3355
      %v3358 = vshrl.u32 %v3185, 16
      %v3360 = vshll.u32 %v3185, 16
      %v3362 = vrot.slane %v3360, 1
      %v3363 = vor.u32 %v3358, %v3362
      %v3365 = vshll.u32 %v3186, 16
      %v3367 = vrot.slane %v3365, 1
      %v3368 = vsel %vm1388, %v3363, %v3367
      %v3370 = vshrl.u32 %v3187, 16
      %v3372 = vshll.u32 %v3187, 16
      %v3374 = vrot.slane %v3372, 1
      %v3375 = vor.u32 %v3370, %v3374
      %v3377 = vshll.u32 %v3188, 16
      %v3379 = vrot.slane %v3377, 1
      %v3380 = vsel %vm1388, %v3375, %v3379
      %3381 = vrot.lane.b32.xlu0 %v3200, 28
      %v3382 = vpop.permute.xlu0 %3381
      %3383 = vrot.lane.b32.xlu0 %v3212, 28
      %v3384 = vpop.permute.xlu0 %3383
      %3385 = vrot.lane.b32.xlu0 %v3224, 28
      %v3386 = vpop.permute.xlu0 %3385
      %3387 = vrot.lane.b32.xlu0 %v3236, 28
      %v3388 = vpop.permute.xlu0 %3387
      %3389 = vrot.lane.b32.xlu0 %v3248, 28
      %v3390 = vpop.permute.xlu0 %3389
      %3391 = vrot.lane.b32.xlu0 %v3260, 28
      %v3392 = vpop.permute.xlu0 %3391
      %3393 = vrot.lane.b32.xlu0 %v3272, 28
      %v3394 = vpop.permute.xlu0 %3393
      %3395 = vrot.lane.b32.xlu0 %v3284, 28
      %v3396 = vpop.permute.xlu0 %3395
      %3397 = vrot.lane.b32.xlu0 %v3296, 28
      %v3398 = vpop.permute.xlu0 %3397
      %3399 = vrot.lane.b32.xlu0 %v3308, 28
      %v3400 = vpop.permute.xlu0 %3399
      %3401 = vrot.lane.b32.xlu0 %v3320, 28
      %v3402 = vpop.permute.xlu0 %3401
      %3403 = vrot.lane.b32.xlu0 %v3332, 28
      %v3404 = vpop.permute.xlu0 %3403
      %3405 = vrot.lane.b32.xlu0 %v3344, 28
      %v3406 = vpop.permute.xlu0 %3405
      %3407 = vrot.lane.b32.xlu0 %v3356, 28
      %v3408 = vpop.permute.xlu0 %3407
      %3409 = vrot.lane.b32.xlu0 %v3368, 28
      %v3410 = vpop.permute.xlu0 %3409
      %3411 = vrot.lane.b32.xlu0 %v3380, 28
      %v3412 = vpop.permute.xlu0 %3411
      %vm3429 = vcmask 261344
      %3430 = vst.msk [vmem:[#allocation3] sm:$0xff] %vm3429, %v3382
      %3431 = vst.msk [vmem:[#allocation3 + $0x8] sm:$0xff] %vm3429, %v3384
      %3432 = vst.msk [vmem:[#allocation3 + $0x10] sm:$0xff] %vm3429, %v3386
      %3433 = vst.msk [vmem:[#allocation3 + $0x18] sm:$0xff] %vm3429, %v3388
      %3434 = vst.msk [vmem:[#allocation3 + $0x20] sm:$0xff] %vm3429, %v3390
      %3435 = vst.msk [vmem:[#allocation3 + $0x28] sm:$0xff] %vm3429, %v3392
      %3436 = vst.msk [vmem:[#allocation3 + $0x30] sm:$0xff] %vm3429, %v3394
      %3437 = vst.msk [vmem:[#allocation3 + $0x38] sm:$0xff] %vm3429, %v3396
      %3438 = vst.msk [vmem:[#allocation3 + $0x40] sm:$0xff] %vm3429, %v3398
      %3439 = vst.msk [vmem:[#allocation3 + $0x48] sm:$0xff] %vm3429, %v3400
      %3440 = vst.msk [vmem:[#allocation3 + $0x50] sm:$0xff] %vm3429, %v3402
      %3441 = vst.msk [vmem:[#allocation3 + $0x58] sm:$0xff] %vm3429, %v3404
      %3442 = vst.msk [vmem:[#allocation3 + $0x60] sm:$0xff] %vm3429, %v3406
      %3443 = vst.msk [vmem:[#allocation3 + $0x68] sm:$0xff] %vm3429, %v3408
      %3444 = vst.msk [vmem:[#allocation3 + $0x70] sm:$0xff] %vm3429, %v3410
      %3445 = vst.msk [vmem:[#allocation3 + $0x78] sm:$0xff] %vm3429, %v3412
      %v3446 = vld [vmem:[%s2835] sm:$0xe]
      %v3447 = vld [vmem:[%s2835 + $0x4] sm:$0xf]
      %v3448 = vld [vmem:[%s2835 + $0x8] sm:$0x1]
      %v3449 = vld [vmem:[%s2835 + $0xc] sm:$0xe]
      %v3450 = vld [vmem:[%s2835 + $0x10] sm:$0xf]
      %v3451 = vld [vmem:[%s2835 + $0x14] sm:$0x1]
      %v3452 = vld [vmem:[%s2835 + $0x18] sm:$0xe]
      %v3453 = vld [vmem:[%s2835 + $0x1c] sm:$0xf]
      %v3454 = vld [vmem:[%s2835 + $0x20] sm:$0x1]
      %v3455 = vld [vmem:[%s2835 + $0x24] sm:$0xe]
      %v3456 = vld [vmem:[%s2835 + $0x28] sm:$0xf]
      %v3457 = vld [vmem:[%s2835 + $0x2c] sm:$0x1]
      %v3458 = vld [vmem:[%s2835 + $0x30] sm:$0xe]
      %v3459 = vld [vmem:[%s2835 + $0x34] sm:$0xf]
      %v3460 = vld [vmem:[%s2835 + $0x38] sm:$0x1]
      %v3461 = vld [vmem:[%s2835 + $0x3c] sm:$0xe]
      %v3462 = vld [vmem:[%s2835 + $0x40] sm:$0xf]
      %v3463 = vld [vmem:[%s2835 + $0x44] sm:$0x1]
      %v3464 = vld [vmem:[%s2835 + $0x48] sm:$0xe]
      %v3465 = vld [vmem:[%s2835 + $0x4c] sm:$0xf]
      %v3466 = vld [vmem:[%s2835 + $0x50] sm:$0x1]
      %v3467 = vld [vmem:[%s2835 + $0x54] sm:$0xe]
      %v3468 = vld [vmem:[%s2835 + $0x58] sm:$0xf]
      %v3469 = vld [vmem:[%s2835 + $0x5c] sm:$0x1]
      %v3470 = vld [vmem:[%s2835 + $0x60] sm:$0xe]
      %v3471 = vld [vmem:[%s2835 + $0x64] sm:$0xf]
      %v3472 = vld [vmem:[%s2835 + $0x68] sm:$0x1]
      %v3473 = vld [vmem:[%s2835 + $0x6c] sm:$0xe]
      %v3474 = vld [vmem:[%s2835 + $0x70] sm:$0xf]
      %v3475 = vld [vmem:[%s2835 + $0x74] sm:$0x1]
      %v3476 = vld [vmem:[%s2835 + $0x78] sm:$0xe]
      %v3477 = vld [vmem:[%s2835 + $0x7c] sm:$0xf]
      %v3478 = vld [vmem:[%s2835 + $0x80] sm:$0x1]
      %v3479 = vld [vmem:[%s2835 + $0x84] sm:$0xe]
      %v3480 = vld [vmem:[%s2835 + $0x88] sm:$0xf]
      %v3481 = vld [vmem:[%s2835 + $0x8c] sm:$0x1]
      %v3482 = vld [vmem:[%s2835 + $0x90] sm:$0xe]
      %v3483 = vld [vmem:[%s2835 + $0x94] sm:$0xf]
      %v3484 = vld [vmem:[%s2835 + $0x98] sm:$0x1]
      %v3485 = vld [vmem:[%s2835 + $0x9c] sm:$0xe]
      %v3486 = vld [vmem:[%s2835 + $0xa0] sm:$0xf]
      %v3487 = vld [vmem:[%s2835 + $0xa4] sm:$0x1]
      %v3488 = vld [vmem:[%s2835 + $0xa8] sm:$0xe]
      %v3489 = vld [vmem:[%s2835 + $0xac] sm:$0xf]
      %v3490 = vld [vmem:[%s2835 + $0xb0] sm:$0x1]
      %v3491 = vld [vmem:[%s2835 + $0xb4] sm:$0xe]
      %v3492 = vld [vmem:[%s2835 + $0xb8] sm:$0xf]
      %v3493 = vld [vmem:[%s2835 + $0xbc] sm:$0x1]
      %v3542 = vunpack.c.l.b16 %v3446
      %v3543 = vunpack.c.l.b16 %v3447
      %v3544 = vunpack.c.l.b16 %v3448
      %v3545 = vunpack.c.l.b16 %v3449
      %v3546 = vunpack.c.l.b16 %v3450
      %v3547 = vunpack.c.l.b16 %v3451
      %v3548 = vunpack.c.l.b16 %v3452
      %v3549 = vunpack.c.l.b16 %v3453
      %v3550 = vunpack.c.l.b16 %v3454
      %v3551 = vunpack.c.l.b16 %v3455
      %v3552 = vunpack.c.l.b16 %v3456
      %v3553 = vunpack.c.l.b16 %v3457
      %v3554 = vunpack.c.l.b16 %v3458
      %v3555 = vunpack.c.l.b16 %v3459
      %v3556 = vunpack.c.l.b16 %v3460
      %v3557 = vunpack.c.l.b16 %v3461
      %v3558 = vunpack.c.l.b16 %v3462
      %v3559 = vunpack.c.l.b16 %v3463
      %v3560 = vunpack.c.l.b16 %v3464
      %v3561 = vunpack.c.l.b16 %v3465
      %v3562 = vunpack.c.l.b16 %v3466
      %v3563 = vunpack.c.l.b16 %v3467
      %v3564 = vunpack.c.l.b16 %v3468
      %v3565 = vunpack.c.l.b16 %v3469
      %v3566 = vunpack.c.l.b16 %v3470
      %v3567 = vunpack.c.l.b16 %v3471
      %v3568 = vunpack.c.l.b16 %v3472
      %v3569 = vunpack.c.l.b16 %v3473
      %v3570 = vunpack.c.l.b16 %v3474
      %v3571 = vunpack.c.l.b16 %v3475
      %v3572 = vunpack.c.l.b16 %v3476
      %v3573 = vunpack.c.l.b16 %v3477
      %v3574 = vunpack.c.l.b16 %v3478
      %v3575 = vunpack.c.l.b16 %v3479
      %v3576 = vunpack.c.l.b16 %v3480
      %v3577 = vunpack.c.l.b16 %v3481
      %v3578 = vunpack.c.l.b16 %v3482
      %v3579 = vunpack.c.l.b16 %v3483
      %v3580 = vunpack.c.l.b16 %v3484
      %v3581 = vunpack.c.l.b16 %v3485
      %v3582 = vunpack.c.l.b16 %v3486
      %v3583 = vunpack.c.l.b16 %v3487
      %v3584 = vunpack.c.l.b16 %v3488
      %v3585 = vunpack.c.l.b16 %v3489
      %v3586 = vunpack.c.l.b16 %v3490
      %v3587 = vunpack.c.l.b16 %v3491
      %v3588 = vunpack.c.l.b16 %v3492
      %v3589 = vunpack.c.l.b16 %v3493
      %v3590 = vpack.c.b16 %v3543, %v3542
      %v3591 = vpack.c.b16 %v3544, %v3544
      %v3592 = vpack.c.b16 %v3546, %v3545
      %v3593 = vpack.c.b16 %v3547, %v3547
      %v3594 = vpack.c.b16 %v3549, %v3548
      %v3595 = vpack.c.b16 %v3550, %v3550
      %v3596 = vpack.c.b16 %v3552, %v3551
      %v3597 = vpack.c.b16 %v3553, %v3553
      %v3598 = vpack.c.b16 %v3555, %v3554
      %v3599 = vpack.c.b16 %v3556, %v3556
      %v3600 = vpack.c.b16 %v3558, %v3557
      %v3601 = vpack.c.b16 %v3559, %v3559
      %v3602 = vpack.c.b16 %v3561, %v3560
      %v3603 = vpack.c.b16 %v3562, %v3562
      %v3604 = vpack.c.b16 %v3564, %v3563
      %v3605 = vpack.c.b16 %v3565, %v3565
      %v3606 = vpack.c.b16 %v3567, %v3566
      %v3607 = vpack.c.b16 %v3568, %v3568
      %v3608 = vpack.c.b16 %v3570, %v3569
      %v3609 = vpack.c.b16 %v3571, %v3571
      %v3610 = vpack.c.b16 %v3573, %v3572
      %v3611 = vpack.c.b16 %v3574, %v3574
      %v3612 = vpack.c.b16 %v3576, %v3575
      %v3613 = vpack.c.b16 %v3577, %v3577
      %v3614 = vpack.c.b16 %v3579, %v3578
      %v3615 = vpack.c.b16 %v3580, %v3580
      %v3616 = vpack.c.b16 %v3582, %v3581
      %v3617 = vpack.c.b16 %v3583, %v3583
      %v3618 = vpack.c.b16 %v3585, %v3584
      %v3619 = vpack.c.b16 %v3586, %v3586
      %v3620 = vpack.c.b16 %v3588, %v3587
      %v3621 = vpack.c.b16 %v3589, %v3589
      %v3622 = vrot.slane %v3590, 1
      %v3623 = vrot.slane %v3591, 1
      %v3624 = vsel %vm1822, %v3622, %v3623
      %v3625 = vrot.slane %v3592, 1
      %v3626 = vrot.slane %v3593, 1
      %v3627 = vsel %vm1822, %v3625, %v3626
      %v3628 = vrot.slane %v3594, 1
      %v3629 = vrot.slane %v3595, 1
      %v3630 = vsel %vm1822, %v3628, %v3629
      %v3631 = vrot.slane %v3596, 1
      %v3632 = vrot.slane %v3597, 1
      %v3633 = vsel %vm1822, %v3631, %v3632
      %v3634 = vrot.slane %v3598, 1
      %v3635 = vrot.slane %v3599, 1
      %v3636 = vsel %vm1822, %v3634, %v3635
      %v3637 = vrot.slane %v3600, 1
      %v3638 = vrot.slane %v3601, 1
      %v3639 = vsel %vm1822, %v3637, %v3638
      %v3640 = vrot.slane %v3602, 1
      %v3641 = vrot.slane %v3603, 1
      %v3642 = vsel %vm1822, %v3640, %v3641
      %v3643 = vrot.slane %v3604, 1
      %v3644 = vrot.slane %v3605, 1
      %v3645 = vsel %vm1822, %v3643, %v3644
      %v3646 = vrot.slane %v3606, 1
      %v3647 = vrot.slane %v3607, 1
      %v3648 = vsel %vm1822, %v3646, %v3647
      %v3649 = vrot.slane %v3608, 1
      %v3650 = vrot.slane %v3609, 1
      %v3651 = vsel %vm1822, %v3649, %v3650
      %v3652 = vrot.slane %v3610, 1
      %v3653 = vrot.slane %v3611, 1
      %v3654 = vsel %vm1822, %v3652, %v3653
      %v3655 = vrot.slane %v3612, 1
      %v3656 = vrot.slane %v3613, 1
      %v3657 = vsel %vm1822, %v3655, %v3656
      %v3658 = vrot.slane %v3614, 1
      %v3659 = vrot.slane %v3615, 1
      %v3660 = vsel %vm1822, %v3658, %v3659
      %v3661 = vrot.slane %v3616, 1
      %v3662 = vrot.slane %v3617, 1
      %v3663 = vsel %vm1822, %v3661, %v3662
      %v3664 = vrot.slane %v3618, 1
      %v3665 = vrot.slane %v3619, 1
      %v3666 = vsel %vm1822, %v3664, %v3665
      %v3667 = vrot.slane %v3620, 1
      %v3668 = vrot.slane %v3621, 1
      %v3669 = vsel %vm1822, %v3667, %v3668
      %3670 = vrot.lane.b32.xlu0 %v3624, 32
      %v3671 = vpop.permute.xlu0 %3670
      %3672 = vrot.lane.b32.xlu0 %v3627, 32
      %v3673 = vpop.permute.xlu0 %3672
      %3674 = vrot.lane.b32.xlu0 %v3630, 32
      %v3675 = vpop.permute.xlu0 %3674
      %3676 = vrot.lane.b32.xlu0 %v3633, 32
      %v3677 = vpop.permute.xlu0 %3676
      %3678 = vrot.lane.b32.xlu0 %v3636, 32
      %v3679 = vpop.permute.xlu0 %3678
      %3680 = vrot.lane.b32.xlu0 %v3639, 32
      %v3681 = vpop.permute.xlu0 %3680
      %3682 = vrot.lane.b32.xlu0 %v3642, 32
      %v3683 = vpop.permute.xlu0 %3682
      %3684 = vrot.lane.b32.xlu0 %v3645, 32
      %v3685 = vpop.permute.xlu0 %3684
      %3686 = vrot.lane.b32.xlu0 %v3648, 32
      %v3687 = vpop.permute.xlu0 %3686
      %3688 = vrot.lane.b32.xlu0 %v3651, 32
      %v3689 = vpop.permute.xlu0 %3688
      %3690 = vrot.lane.b32.xlu0 %v3654, 32
      %v3691 = vpop.permute.xlu0 %3690
      %3692 = vrot.lane.b32.xlu0 %v3657, 32
      %v3693 = vpop.permute.xlu0 %3692
      %3694 = vrot.lane.b32.xlu0 %v3660, 32
      %v3695 = vpop.permute.xlu0 %3694
      %3696 = vrot.lane.b32.xlu0 %v3663, 32
      %v3697 = vpop.permute.xlu0 %3696
      %3698 = vrot.lane.b32.xlu0 %v3666, 32
      %v3699 = vpop.permute.xlu0 %3698
      %3700 = vrot.lane.b32.xlu0 %v3669, 32
      %v3701 = vpop.permute.xlu0 %3700
      %vm3718 = vcmask 294144
      %3719 = vst.msk [vmem:[#allocation3] sm:$0xff] %vm3718, %v3671
      %3720 = vst.msk [vmem:[#allocation3 + $0x8] sm:$0xff] %vm3718, %v3673
      %3721 = vst.msk [vmem:[#allocation3 + $0x10] sm:$0xff] %vm3718, %v3675
      %3722 = vst.msk [vmem:[#allocation3 + $0x18] sm:$0xff] %vm3718, %v3677
      %3723 = vst.msk [vmem:[#allocation3 + $0x20] sm:$0xff] %vm3718, %v3679
      %3724 = vst.msk [vmem:[#allocation3 + $0x28] sm:$0xff] %vm3718, %v3681
      %3725 = vst.msk [vmem:[#allocation3 + $0x30] sm:$0xff] %vm3718, %v3683
      %3726 = vst.msk [vmem:[#allocation3 + $0x38] sm:$0xff] %vm3718, %v3685
      %3727 = vst.msk [vmem:[#allocation3 + $0x40] sm:$0xff] %vm3718, %v3687
      %3728 = vst.msk [vmem:[#allocation3 + $0x48] sm:$0xff] %vm3718, %v3689
      %3729 = vst.msk [vmem:[#allocation3 + $0x50] sm:$0xff] %vm3718, %v3691
      %3730 = vst.msk [vmem:[#allocation3 + $0x58] sm:$0xff] %vm3718, %v3693
      %3731 = vst.msk [vmem:[#allocation3 + $0x60] sm:$0xff] %vm3718, %v3695
      %3732 = vst.msk [vmem:[#allocation3 + $0x68] sm:$0xff] %vm3718, %v3697
      %3733 = vst.msk [vmem:[#allocation3 + $0x70] sm:$0xff] %vm3718, %v3699
      %3734 = vst.msk [vmem:[#allocation3 + $0x78] sm:$0xff] %vm3718, %v3701
      %v3735 = vld [vmem:[#allocation3] sm:$0xff]
      %v3736 = vld [vmem:[#allocation3 + $0x8] sm:$0xff]
      %v3737 = vld [vmem:[#allocation3 + $0x10] sm:$0xff]
      %v3738 = vld [vmem:[#allocation3 + $0x18] sm:$0xff]
      %v3739 = vld [vmem:[#allocation3 + $0x20] sm:$0xff]
      %v3740 = vld [vmem:[#allocation3 + $0x28] sm:$0xff]
      %v3741 = vld [vmem:[#allocation3 + $0x30] sm:$0xff]
      %v3742 = vld [vmem:[#allocation3 + $0x38] sm:$0xff]
      %v3743 = vld [vmem:[#allocation3 + $0x40] sm:$0xff]
      %v3744 = vld [vmem:[#allocation3 + $0x48] sm:$0xff]
      %v3745 = vld [vmem:[#allocation3 + $0x50] sm:$0xff]
      %v3746 = vld [vmem:[#allocation3 + $0x58] sm:$0xff]
      %v3747 = vld [vmem:[#allocation3 + $0x60] sm:$0xff]
      %v3748 = vld [vmem:[#allocation3 + $0x68] sm:$0xff]
      %v3749 = vld [vmem:[#allocation3 + $0x70] sm:$0xff]
      %v3750 = vld [vmem:[#allocation3 + $0x78] sm:$0xff]
      %v3751 = vld [vmem:[%s3] sm:$0xf]
      %v3752 = vld [vmem:[%s3 + $0x4] sm:$0xf]
      %v3753 = vld [vmem:[%s3 + $0x8] sm:$0xf]
      %v3754 = vld [vmem:[%s3 + $0xc] sm:$0xf]
      %v3755 = vld [vmem:[%s3 + $0x10] sm:$0x3]
      %v3761 = vunpack.c.l.b16 %v3751
      %v3762 = vunpack.c.l.b16 %v3752
      %v3763 = vunpack.c.l.b16 %v3753
      %v3764 = vunpack.c.l.b16 %v3754
      %v3765 = vunpack.c.l.b16 %v3755
      %v3766 = vpack.c.b16 %v3762, %v3761
      %v3767 = vpack.c.b16 %v3764, %v3763
      %v3768 = vpack.c.b16 %v3765, %v3765
      %vm3771 = vcmask 293888
      %v3773 = vsel %vm3771, %v3735, 0
      %v3776 = vsel %vm3771, %v3736, 0
      %v3779 = vsel %vm3771, %v3737, 0
      %v3782 = vsel %vm3771, %v3738, 0
      %v3785 = vsel %vm3771, %v3739, 0
      %v3788 = vsel %vm3771, %v3740, 0
      %v3791 = vsel %vm3771, %v3741, 0
      %v3794 = vsel %vm3771, %v3742, 0
      %v3797 = vsel %vm3771, %v3743, 0
      %v3800 = vsel %vm3771, %v3744, 0
      %v3803 = vsel %vm3771, %v3745, 0
      %v3806 = vsel %vm3771, %v3746, 0
      %v3809 = vsel %vm3771, %v3747, 0
      %v3812 = vsel %vm3771, %v3748, 0
      %v3815 = vsel %vm3771, %v3749, 0
      %v3818 = vsel %vm3771, %v3750, 0
      %vm3820 = vcmask 1041408
      %v3822 = vsel %vm3820, %v3768, 0
      %3824 = vmatprep.subr.bf16.mxu0 0
      %3825 = vmatpush1.bf16.msra.mxu0 %v3766
      %3826 = vmatprep.subr.bf16.mxu0 0
      %3827 = vmatpush1.bf16.msra.mxu0 %v3767
      %3828 = vmatprep.subr.bf16.mxu0 0
      %3829 = vmatpush1.bf16.msra.mxu0 %v3822
      %3830 = vmatprep.subr.bf16.mxu0 0
      %3831 = vmatpush1.bf16.msra.mxu0 0
      %3832 = vmatprep.subr.bf16.mxu0 0
      %3833 = vmatpush1.bf16.msra.mxu0 0
      %3834 = vmatprep.subr.bf16.mxu0 0
      %3835 = vmatpush1.bf16.msra.mxu0 0
      %3836 = vmatprep.subr.bf16.mxu0 0
      %3837 = vmatpush1.bf16.msra.mxu0 0
      %3838 = vmatprep.subr.bf16.mxu0 0
      %3839 = vmatpush1.bf16.msra.mxu0 0
      %3840 = vmatprep.subr.bf16.mxu0 0
      %3841 = vmatpush1.bf16.msra.mxu0 0
      %3842 = vmatprep.subr.bf16.mxu0 0
      %3843 = vmatpush1.bf16.msra.mxu0 0
      %3844 = vmatprep.subr.bf16.mxu0 0
      %3845 = vmatpush1.bf16.msra.mxu0 0
      %3846 = vmatprep.subr.bf16.mxu0 0
      %3847 = vmatpush1.bf16.msra.mxu0 0
      %3848 = vmatprep.subr.bf16.mxu0 0
      %3849 = vmatpush1.bf16.msra.mxu0 0
      %3850 = vmatprep.subr.bf16.mxu0 0
      %3851 = vmatpush1.bf16.msra.mxu0 0
      %3852 = vmatprep.subr.bf16.mxu0 0
      %3853 = vmatpush1.bf16.msra.mxu0 0
      %3854 = vmatprep.subr.bf16.mxu0 0
      %3855 = vmatpush1.bf16.msra.mxu0 0
      %3856 = vmatprep.mubr.bf16.mxu0 0
      %3857 = vmatmul.mubr.bf16.gmra.mrb[0].mxu0 %v3773
      %v3858 = vpop.f32.mrb[0].mxu0
      %v3859 = vadd.f32 0.0, %v3858
      %v3860 = vpop.f32.mrb[0].mxu0
      %v3861 = vpop.f32.mrb[0].mxu0
      %v3862 = vadd.f32 0.0, %v3861
      %v3863 = vpop.f32.mrb[0].mxu0
      %3864 = vmatprep.mubr.bf16.mxu0 0
      %3865 = vmatmul.mubr.bf16.gmra.mrb[0].mxu0 %v3776
      %v3866 = vpop.f32.mrb[0].mxu0
      %v3867 = vadd.f32 0.0, %v3866
      %v3868 = vpop.f32.mrb[0].mxu0
      %v3869 = vpop.f32.mrb[0].mxu0
      %v3870 = vadd.f32 0.0, %v3869
      %v3871 = vpop.f32.mrb[0].mxu0
      %3872 = vmatprep.mubr.bf16.mxu0 0
      %3873 = vmatmul.mubr.bf16.gmra.mrb[0].mxu0 %v3779
      %v3874 = vpop.f32.mrb[0].mxu0
      %v3875 = vadd.f32 0.0, %v3874
      %v3876 = vpop.f32.mrb[0].mxu0
      %v3877 = vpop.f32.mrb[0].mxu0
      %v3878 = vadd.f32 0.0, %v3877
      %v3879 = vpop.f32.mrb[0].mxu0
      %3880 = vmatprep.mubr.bf16.mxu0 0
      %3881 = vmatmul.mubr.bf16.gmra.mrb[0].mxu0 %v3782
      %v3882 = vpop.f32.mrb[0].mxu0
      %v3883 = vadd.f32 0.0, %v3882
      %v3884 = vpop.f32.mrb[0].mxu0
      %v3885 = vpop.f32.mrb[0].mxu0
      %v3886 = vadd.f32 0.0, %v3885
      %v3887 = vpop.f32.mrb[0].mxu0
      %3888 = vmatprep.mubr.bf16.mxu0 0
      %3889 = vmatmul.mubr.bf16.gmra.mrb[0].mxu0 %v3785
      %v3890 = vpop.f32.mrb[0].mxu0
      %v3891 = vadd.f32 0.0, %v3890
      %v3892 = vpop.f32.mrb[0].mxu0
      %v3893 = vpop.f32.mrb[0].mxu0
      %v3894 = vadd.f32 0.0, %v3893
      %v3895 = vpop.f32.mrb[0].mxu0
      %3896 = vmatprep.mubr.bf16.mxu0 0
      %3897 = vmatmul.mubr.bf16.gmra.mrb[0].mxu0 %v3788
      %v3898 = vpop.f32.mrb[0].mxu0
      %v3899 = vadd.f32 0.0, %v3898
      %v3900 = vpop.f32.mrb[0].mxu0
      %v3901 = vpop.f32.mrb[0].mxu0
      %v3902 = vadd.f32 0.0, %v3901
      %v3903 = vpop.f32.mrb[0].mxu0
      %3904 = vmatprep.mubr.bf16.mxu0 0
      %3905 = vmatmul.mubr.bf16.gmra.mrb[0].mxu0 %v3791
      %v3906 = vpop.f32.mrb[0].mxu0
      %v3907 = vadd.f32 0.0, %v3906
      %v3908 = vpop.f32.mrb[0].mxu0
      %v3909 = vpop.f32.mrb[0].mxu0
      %v3910 = vadd.f32 0.0, %v3909
      %v3911 = vpop.f32.mrb[0].mxu0
      %3912 = vmatprep.mubr.bf16.mxu0 0
      %3913 = vmatmul.mubr.bf16.gmra.mrb[0].mxu0 %v3794
      %v3914 = vpop.f32.mrb[0].mxu0
      %v3915 = vadd.f32 0.0, %v3914
      %v3916 = vpop.f32.mrb[0].mxu0
      %v3917 = vpop.f32.mrb[0].mxu0
      %v3918 = vadd.f32 0.0, %v3917
      %v3919 = vpop.f32.mrb[0].mxu0
      %3920 = vmatprep.mubr.bf16.mxu0 0
      %3921 = vmatmul.mubr.bf16.gmra.mrb[0].mxu0 %v3797
      %v3922 = vpop.f32.mrb[0].mxu0
      %v3923 = vadd.f32 0.0, %v3922
      %v3924 = vpop.f32.mrb[0].mxu0
      %v3925 = vpop.f32.mrb[0].mxu0
      %v3926 = vadd.f32 0.0, %v3925
      %v3927 = vpop.f32.mrb[0].mxu0
      %3928 = vmatprep.mubr.bf16.mxu0 0
      %3929 = vmatmul.mubr.bf16.gmra.mrb[0].mxu0 %v3800
      %v3930 = vpop.f32.mrb[0].mxu0
      %v3931 = vadd.f32 0.0, %v3930
      %v3932 = vpop.f32.mrb[0].mxu0
      %v3933 = vpop.f32.mrb[0].mxu0
      %v3934 = vadd.f32 0.0, %v3933
      %v3935 = vpop.f32.mrb[0].mxu0
      %3936 = vmatprep.mubr.bf16.mxu0 0
      %3937 = vmatmul.mubr.bf16.gmra.mrb[0].mxu0 %v3803
      %v3938 = vpop.f32.mrb[0].mxu0
      %v3939 = vadd.f32 0.0, %v3938
      %v3940 = vpop.f32.mrb[0].mxu0
      %v3941 = vpop.f32.mrb[0].mxu0
      %v3942 = vadd.f32 0.0, %v3941
      %v3943 = vpop.f32.mrb[0].mxu0
      %3944 = vmatprep.mubr.bf16.mxu0 0
      %3945 = vmatmul.mubr.bf16.gmra.mrb[0].mxu0 %v3806
      %v3946 = vpop.f32.mrb[0].mxu0
      %v3947 = vadd.f32 0.0, %v3946
      %v3948 = vpop.f32.mrb[0].mxu0
      %v3949 = vpop.f32.mrb[0].mxu0
      %v3950 = vadd.f32 0.0, %v3949
      %v3951 = vpop.f32.mrb[0].mxu0
      %3952 = vmatprep.mubr.bf16.mxu0 0
      %3953 = vmatmul.mubr.bf16.gmra.mrb[0].mxu0 %v3809
      %v3954 = vpop.f32.mrb[0].mxu0
      %v3955 = vadd.f32 0.0, %v3954
      %v3956 = vpop.f32.mrb[0].mxu0
      %v3957 = vpop.f32.mrb[0].mxu0
      %v3958 = vadd.f32 0.0, %v3957
      %v3959 = vpop.f32.mrb[0].mxu0
      %3960 = vmatprep.mubr.bf16.mxu0 0
      %3961 = vmatmul.mubr.bf16.gmra.mrb[0].mxu0 %v3812
      %v3962 = vpop.f32.mrb[0].mxu0
      %v3963 = vadd.f32 0.0, %v3962
      %v3964 = vpop.f32.mrb[0].mxu0
      %v3965 = vpop.f32.mrb[0].mxu0
      %v3966 = vadd.f32 0.0, %v3965
      %v3967 = vpop.f32.mrb[0].mxu0
      %3968 = vmatprep.mubr.bf16.mxu0 0
      %3969 = vmatmul.mubr.bf16.gmra.mrb[0].mxu0 %v3815
      %v3970 = vpop.f32.mrb[0].mxu0
      %v3971 = vadd.f32 0.0, %v3970
      %v3972 = vpop.f32.mrb[0].mxu0
      %v3973 = vpop.f32.mrb[0].mxu0
      %v3974 = vadd.f32 0.0, %v3973
      %v3975 = vpop.f32.mrb[0].mxu0
      %3976 = vmatprep.mubr.bf16.mxu0 0
      %3977 = vmatmul.mubr.bf16.gmra.mrb[0].mxu0 %v3818
      %v3978 = vpop.f32.mrb[0].mxu0
      %v3979 = vadd.f32 0.0, %v3978
      %v3980 = vpop.f32.mrb[0].mxu0
      %v3981 = vpop.f32.mrb[0].mxu0
      %v3982 = vadd.f32 0.0, %v3981
      %v3983 = vpop.f32.mrb[0].mxu0
      %3984 = vdwg.mxu0
      %v3985 = vsel %vm1195, %v3859, 0.0
      %v3986 = vsel %vm1195, %v3862, 0.0
      %v3987 = vadd.f32 %v3985, %v3986
      %v3988 = vsel %vm1195, %v3867, 0.0
      %v3989 = vadd.f32 %v3987, %v3988
      %v3990 = vsel %vm1195, %v3870, 0.0
      %v3991 = vadd.f32 %v3989, %v3990
      %v3992 = vsel %vm1195, %v3875, 0.0
      %v3993 = vadd.f32 %v3991, %v3992
      %v3994 = vsel %vm1195, %v3878, 0.0
      %v3995 = vadd.f32 %v3993, %v3994
      %v3996 = vsel %vm1195, %v3883, 0.0
      %v3997 = vadd.f32 %v3995, %v3996
      %v3998 = vsel %vm1195, %v3886, 0.0
      %v3999 = vadd.f32 %v3997, %v3998
      %v4000 = vsel %vm1195, %v3891, 0.0
      %v4001 = vadd.f32 %v3999, %v4000
      %v4002 = vsel %vm1195, %v3894, 0.0
      %v4003 = vadd.f32 %v4001, %v4002
      %v4004 = vsel %vm1195, %v3899, 0.0
      %v4005 = vadd.f32 %v4003, %v4004
      %v4006 = vsel %vm1195, %v3902, 0.0
      %v4007 = vadd.f32 %v4005, %v4006
      %v4008 = vsel %vm1195, %v3907, 0.0
      %v4009 = vadd.f32 %v4007, %v4008
      %v4010 = vsel %vm1195, %v3910, 0.0
      %v4011 = vadd.f32 %v4009, %v4010
      %v4012 = vsel %vm1195, %v3915, 0.0
      %v4013 = vadd.f32 %v4011, %v4012
      %v4014 = vsel %vm1195, %v3918, 0.0
      %v4015 = vadd.f32 %v4013, %v4014
      %v4016 = vsel %vm1195, %v3923, 0.0
      %v4017 = vadd.f32 %v4015, %v4016
      %v4018 = vsel %vm1195, %v3926, 0.0
      %v4019 = vadd.f32 %v4017, %v4018
      %v4020 = vsel %vm1195, %v3931, 0.0
      %v4021 = vadd.f32 %v4019, %v4020
      %v4022 = vsel %vm1195, %v3934, 0.0
      %v4023 = vadd.f32 %v4021, %v4022
      %v4024 = vsel %vm1195, %v3939, 0.0
      %v4025 = vadd.f32 %v4023, %v4024
      %v4026 = vsel %vm1195, %v3942, 0.0
      %v4027 = vadd.f32 %v4025, %v4026
      %v4028 = vsel %vm1195, %v3947, 0.0
      %v4029 = vadd.f32 %v4027, %v4028
      %v4030 = vsel %vm1195, %v3950, 0.0
      %v4031 = vadd.f32 %v4029, %v4030
      %v4032 = vsel %vm1195, %v3955, 0.0
      %v4033 = vadd.f32 %v4031, %v4032
      %v4034 = vsel %vm1195, %v3958, 0.0
      %v4035 = vadd.f32 %v4033, %v4034
      %v4036 = vsel %vm1195, %v3963, 0.0
      %v4037 = vadd.f32 %v4035, %v4036
      %v4038 = vsel %vm1195, %v3966, 0.0
      %v4039 = vadd.f32 %v4037, %v4038
      %v4040 = vsel %vm1195, %v3971, 0.0
      %v4041 = vadd.f32 %v4039, %v4040
      %v4042 = vsel %vm1195, %v3974, 0.0
      %v4043 = vadd.f32 %v4041, %v4042
      %v4044 = vsel %vm1195, %v3979, 0.0
      %v4045 = vadd.f32 %v4043, %v4044
      %v4046 = vsel %vm1195, %v3982, 0.0
      %v4047 = vadd.f32 %v4045, %v4046
      %v4048 = vrot.slane %v4047, 4
      %v4049 = vadd.f32 %v4047, %v4048
      %v4050 = vrot.slane %v4049, 2
      %v4051 = vadd.f32 %v4049, %v4050
      %v4052 = vrot.slane %v4051, 1
      %v4053 = vadd.f32 %v4051, %v4052
      %4054 = vst.msk [vmem:[%s265] sm:$0x1] %vm431, %v4053
      %v4055 = vmul.f32 %v3859, %v3859
      %v4056 = vmul.f32 %v3862, %v3862
      %v4057 = vmul.f32 %v3867, %v3867
      %v4058 = vmul.f32 %v3870, %v3870
      %v4059 = vmul.f32 %v3875, %v3875
      %v4060 = vmul.f32 %v3878, %v3878
      %v4061 = vmul.f32 %v3883, %v3883
      %v4062 = vmul.f32 %v3886, %v3886
      %v4063 = vmul.f32 %v3891, %v3891
      %v4064 = vmul.f32 %v3894, %v3894
      %v4065 = vmul.f32 %v3899, %v3899
      %v4066 = vmul.f32 %v3902, %v3902
      %v4067 = vmul.f32 %v3907, %v3907
      %v4068 = vmul.f32 %v3910, %v3910
      %v4069 = vmul.f32 %v3915, %v3915
      %v4070 = vmul.f32 %v3918, %v3918
      %v4071 = vmul.f32 %v3923, %v3923
      %v4072 = vmul.f32 %v3926, %v3926
      %v4073 = vmul.f32 %v3931, %v3931
      %v4074 = vmul.f32 %v3934, %v3934
      %v4075 = vmul.f32 %v3939, %v3939
      %v4076 = vmul.f32 %v3942, %v3942
      %v4077 = vmul.f32 %v3947, %v3947
      %v4078 = vmul.f32 %v3950, %v3950
      %v4079 = vmul.f32 %v3955, %v3955
      %v4080 = vmul.f32 %v3958, %v3958
      %v4081 = vmul.f32 %v3963, %v3963
      %v4082 = vmul.f32 %v3966, %v3966
      %v4083 = vmul.f32 %v3971, %v3971
      %v4084 = vmul.f32 %v3974, %v3974
      %v4085 = vmul.f32 %v3979, %v3979
      %v4086 = vmul.f32 %v3982, %v3982
      %v4087 = vsel %vm1195, %v4055, 0.0
      %v4088 = vsel %vm1195, %v4056, 0.0
      %v4089 = vadd.f32 %v4087, %v4088
      %v4090 = vsel %vm1195, %v4057, 0.0
      %v4091 = vadd.f32 %v4089, %v4090
      %v4092 = vsel %vm1195, %v4058, 0.0
      %v4093 = vadd.f32 %v4091, %v4092
      %v4094 = vsel %vm1195, %v4059, 0.0
      %v4095 = vadd.f32 %v4093, %v4094
      %v4096 = vsel %vm1195, %v4060, 0.0
      %v4097 = vadd.f32 %v4095, %v4096
      %v4098 = vsel %vm1195, %v4061, 0.0
      %v4099 = vadd.f32 %v4097, %v4098
      %v4100 = vsel %vm1195, %v4062, 0.0
      %v4101 = vadd.f32 %v4099, %v4100
      %v4102 = vsel %vm1195, %v4063, 0.0
      %v4103 = vadd.f32 %v4101, %v4102
      %v4104 = vsel %vm1195, %v4064, 0.0
      %v4105 = vadd.f32 %v4103, %v4104
      %v4106 = vsel %vm1195, %v4065, 0.0
      %v4107 = vadd.f32 %v4105, %v4106
      %v4108 = vsel %vm1195, %v4066, 0.0
      %v4109 = vadd.f32 %v4107, %v4108
      %v4110 = vsel %vm1195, %v4067, 0.0
      %v4111 = vadd.f32 %v4109, %v4110
      %v4112 = vsel %vm1195, %v4068, 0.0
      %v4113 = vadd.f32 %v4111, %v4112
      %v4114 = vsel %vm1195, %v4069, 0.0
      %v4115 = vadd.f32 %v4113, %v4114
      %v4116 = vsel %vm1195, %v4070, 0.0
      %v4117 = vadd.f32 %v4115, %v4116
      %v4118 = vsel %vm1195, %v4071, 0.0
      %v4119 = vadd.f32 %v4117, %v4118
      %v4120 = vsel %vm1195, %v4072, 0.0
      %v4121 = vadd.f32 %v4119, %v4120
      %v4122 = vsel %vm1195, %v4073, 0.0
      %v4123 = vadd.f32 %v4121, %v4122
      %v4124 = vsel %vm1195, %v4074, 0.0
      %v4125 = vadd.f32 %v4123, %v4124
      %v4126 = vsel %vm1195, %v4075, 0.0
      %v4127 = vadd.f32 %v4125, %v4126
      %v4128 = vsel %vm1195, %v4076, 0.0
      %v4129 = vadd.f32 %v4127, %v4128
      %v4130 = vsel %vm1195, %v4077, 0.0
      %v4131 = vadd.f32 %v4129, %v4130
      %v4132 = vsel %vm1195, %v4078, 0.0
      %v4133 = vadd.f32 %v4131, %v4132
      %v4134 = vsel %vm1195, %v4079, 0.0
      %v4135 = vadd.f32 %v4133, %v4134
      %v4136 = vsel %vm1195, %v4080, 0.0
      %v4137 = vadd.f32 %v4135, %v4136
      %v4138 = vsel %vm1195, %v4081, 0.0
      %v4139 = vadd.f32 %v4137, %v4138
      %v4140 = vsel %vm1195, %v4082, 0.0
      %v4141 = vadd.f32 %v4139, %v4140
      %v4142 = vsel %vm1195, %v4083, 0.0
      %v4143 = vadd.f32 %v4141, %v4142
      %v4144 = vsel %vm1195, %v4084, 0.0
      %v4145 = vadd.f32 %v4143, %v4144
      %v4146 = vsel %vm1195, %v4085, 0.0
      %v4147 = vadd.f32 %v4145, %v4146
      %v4148 = vsel %vm1195, %v4086, 0.0
      %v4149 = vadd.f32 %v4147, %v4148
      %v4150 = vrot.slane %v4149, 4
      %v4151 = vadd.f32 %v4149, %v4150
      %v4152 = vrot.slane %v4151, 2
      %v4153 = vadd.f32 %v4151, %v4152
      %v4154 = vrot.slane %v4153, 1
      %v4155 = vadd.f32 %v4153, %v4154
      %4156 = vst.msk [vmem:[%s268] sm:$0x1] %vm431, %v4155
      %4157 = vst.msk [vmem:[%s262] sm:$0xff] %vm1195, %v3859
      %4158 = vst.msk [vmem:[%s262 + $0x8] sm:$0xff] %vm1195, %v3862
      %4159 = vst.msk [vmem:[%s262 + $0x10] sm:$0xff] %vm1195, %v3867
      %4160 = vst.msk [vmem:[%s262 + $0x18] sm:$0xff] %vm1195, %v3870
      %4161 = vst.msk [vmem:[%s262 + $0x20] sm:$0xff] %vm1195, %v3875
      %4162 = vst.msk [vmem:[%s262 + $0x28] sm:$0xff] %vm1195, %v3878
      %4163 = vst.msk [vmem:[%s262 + $0x30] sm:$0xff] %vm1195, %v3883
      %4164 = vst.msk [vmem:[%s262 + $0x38] sm:$0xff] %vm1195, %v3886
      %4165 = vst.msk [vmem:[%s262 + $0x40] sm:$0xff] %vm1195, %v3891
      %4166 = vst.msk [vmem:[%s262 + $0x48] sm:$0xff] %vm1195, %v3894
      %4167 = vst.msk [vmem:[%s262 + $0x50] sm:$0xff] %vm1195, %v3899
      %4168 = vst.msk [vmem:[%s262 + $0x58] sm:$0xff] %vm1195, %v3902
      %4169 = vst.msk [vmem:[%s262 + $0x60] sm:$0xff] %vm1195, %v3907
      %4170 = vst.msk [vmem:[%s262 + $0x68] sm:$0xff] %vm1195, %v3910
      %4171 = vst.msk [vmem:[%s262 + $0x70] sm:$0xff] %vm1195, %v3915
      %4172 = vst.msk [vmem:[%s262 + $0x78] sm:$0xff] %vm1195, %v3918
      %4173 = vst.msk [vmem:[%s262 + $0x80] sm:$0xff] %vm1195, %v3923
      %4174 = vst.msk [vmem:[%s262 + $0x88] sm:$0xff] %vm1195, %v3926
      %4175 = vst.msk [vmem:[%s262 + $0x90] sm:$0xff] %vm1195, %v3931
      %4176 = vst.msk [vmem:[%s262 + $0x98] sm:$0xff] %vm1195, %v3934
      %4177 = vst.msk [vmem:[%s262 + $0xa0] sm:$0xff] %vm1195, %v3939
      %4178 = vst.msk [vmem:[%s262 + $0xa8] sm:$0xff] %vm1195, %v3942
      %4179 = vst.msk [vmem:[%s262 + $0xb0] sm:$0xff] %vm1195, %v3947
      %4180 = vst.msk [vmem:[%s262 + $0xb8] sm:$0xff] %vm1195, %v3950
      %4181 = vst.msk [vmem:[%s262 + $0xc0] sm:$0xff] %vm1195, %v3955
      %4182 = vst.msk [vmem:[%s262 + $0xc8] sm:$0xff] %vm1195, %v3958
      %4183 = vst.msk [vmem:[%s262 + $0xd0] sm:$0xff] %vm1195, %v3963
      %4184 = vst.msk [vmem:[%s262 + $0xd8] sm:$0xff] %vm1195, %v3966
      %4185 = vst.msk [vmem:[%s262 + $0xe0] sm:$0xff] %vm1195, %v3971
      %4186 = vst.msk [vmem:[%s262 + $0xe8] sm:$0xff] %vm1195, %v3974
      %4187 = vst.msk [vmem:[%s262 + $0xf0] sm:$0xff] %vm1195, %v3979
      %4188 = vst.msk [vmem:[%s262 + $0xf8] sm:$0xff] %vm1195, %v3982
      %p4189 = scmp.lt.s32.totalorder %s18, 1
      %s4190 = scalar_select %p4189, %s18, 1
      %s4191 = smul.addr %s4190, 32
      %s4192 = smul.addr %s4191, 8
      %s4193 = scalar_lea.vmem %s4, %s4192
      %p4194 = scmp.lt.s32.totalorder %s18, 1
      %s4195 = scalar_select %p4194, %s18, 1
      %s4196 = scalar_lea.vmem %s5, %s4195
      %p4197 = scmp.lt.s32.totalorder %s18, 1
      %s4198 = scalar_select %p4197, %s18, 1
      %s4199 = scalar_lea.vmem %s6, %s4198
      // Predicated region
      $region37: #{preact_block_nhwc.4} parent=35 // pred_check
        %p4200 = pneg %p125
      $region38: #{preact_block_nhwc.4} parent=35 // pred_check_branch
        %4202 = sbr.rel (%p4200) target = $region40
      $region39: #{preact_block_nhwc.4} parent=35 // pred_region
        _
      $region40: #{preact_block_nhwc.4} parent=35 // pred_fallthru
        _
      // Predicated region
      $region41: #{preact_block_nhwc.4} parent=35 // pred_check
        %p4203 = pneg %p151
      $region42: #{preact_block_nhwc.4} parent=35 // pred_check_branch
        %4205 = sbr.rel (%p4203) target = $region44
      $region43: #{preact_block_nhwc.4} parent=35 // pred_region
        _
      $region44: #{preact_block_nhwc.4} parent=35 // pred_fallthru
        _
      // Predicated region
      $region45: #{preact_block_nhwc.4} parent=35 // pred_check
        %p4206 = pneg %p177
      $region46: #{preact_block_nhwc.4} parent=35 // pred_check_branch
        %4208 = sbr.rel (%p4206) target = $region48
      $region47: #{preact_block_nhwc.4} parent=35 // pred_region
        _
      $region48: #{preact_block_nhwc.4} parent=35 // pred_fallthru
        _
    $region36: #{preact_block_nhwc.4} parent=5 // pred_fallthru
      _
    %p4209 = scmp.le.s32.totalorder 2, %s13
    // Predicated region
    $region49: #{preact_block_nhwc.4} parent=5 // pred_check
      %p4210 = pneg %p4209
    $region50: #{preact_block_nhwc.4} parent=5 // pred_check_branch
      %4212 = sbr.rel (%p4210) target = $region52
    $region51: #{preact_block_nhwc.4} parent=5 // pred_region
      %s4213 = ssub.s32 %s13, 2
      // Predicated region
      $region53: #{preact_block_nhwc.4} parent=51 // pred_check
        %p4214 = pneg %p131
      $region54: #{preact_block_nhwc.4} parent=51 // pred_check_branch
        %4216 = sbr.rel (%p4214) target = $region56
      $region55: #{preact_block_nhwc.4} parent=51 // pred_region
        %p4217 = scmp.lt.s32.totalorder %s19, 1
        %s4218 = scalar_select %p4217, %s19, 1
        %s4219 = smul.addr %s4218, 32
        %s4220 = smul.addr %s4219, 8
        %s4221 = scalar_lea.vmem %s4, %s4220
      $region56: #{preact_block_nhwc.4} parent=51 // pred_fallthru
        _
      // Predicated region
      $region57: #{preact_block_nhwc.4} parent=51 // pred_check
        %p4222 = pneg %p157
      $region58: #{preact_block_nhwc.4} parent=51 // pred_check_branch
        %4224 = sbr.rel (%p4222) target = $region60
      $region59: #{preact_block_nhwc.4} parent=51 // pred_region
        %p4225 = scmp.lt.s32.totalorder %s19, 1
        %s4226 = scalar_select %p4225, %s19, 1
        %s4227 = scalar_lea.vmem %s5, %s4226
      $region60: #{preact_block_nhwc.4} parent=51 // pred_fallthru
        _
      // Predicated region
      $region61: #{preact_block_nhwc.4} parent=51 // pred_check
        %p4228 = pneg %p183
      $region62: #{preact_block_nhwc.4} parent=51 // pred_check_branch
        %4230 = sbr.rel (%p4228) target = $region64
      $region63: #{preact_block_nhwc.4} parent=51 // pred_region
        %p4231 = scmp.lt.s32.totalorder %s19, 1
        %s4232 = scalar_select %p4231, %s19, 1
        %s4233 = scalar_lea.vmem %s6, %s4232
      $region64: #{preact_block_nhwc.4} parent=51 // pred_fallthru
        _
    $region52: #{preact_block_nhwc.4} parent=5 // pred_fallthru
      _
  $region6: #{preact_block_nhwc.4} parent=0 // loop_footer
    %s17 = sadd.s32 1, %s13
  $region7: #{preact_block_nhwc.4} parent=0 // loop_footer_branch
    %12 = sbr.rel target = $region3
  $region8: #{preact_block_nhwc.4} parent=0 // loop_exit
    _

// kernel: preact_block_nhwc.5
$region0: #{preact_block_nhwc.5}
  #allocation0 [shape = 'u32[]', space=smem, size = 0x4, offset = 0x4, fixed_abs, tag = 'smem constant byte address 0x4 - core index']
  #allocation1 [shape = 'u32[144,128]{1,0:T(1,128)}', space=vmem, size = 0x12000, scoped, tag = 'internal scratch']
  #allocation2 [shape = 'bf16[18,18,4]{2,1,0:T(8,128)(2,1)}', space=vmem, size = 0x1b000, scoped, tag = 'scratch operand']
  #allocation3 [shape = 'bf16[16,16,36]{2,1,0:T(16,128)(2,1)}', space=vmem, size = 0x10000, scoped, tag = 'scratch operand']
  %s0 = inlined_call_operand.vmem [shape: f32[2,16,16,4], index: 0, kind: input, shape index: {}]
  %s1 = inlined_call_operand.vmem [shape: f32[2,16,16,4], index: 1, kind: input, shape index: {}]
  %s2 = inlined_call_operand.vmem [shape: f32[1,4], index: 2, kind: input, shape index: {}]
  %s3 = inlined_call_operand.vmem [shape: f32[1,4], index: 3, kind: input, shape index: {}]
  %s4 = inlined_call_operand.vmem [shape: bf16[36,4], index: 4, kind: input, shape index: {}]
  %s5 = inlined_call_operand.vmem [shape: f32[2,16,16,4], index: 5, kind: output, shape index: {}]
  %s6 = sld [smem:[#allocation0]]
  $region53: #{preact_block_nhwc.5} parent=0
    _
  %s8 = ssub.s32 1, %s6
  %s9 = scalar_select 0, %s8, %s6
  loop: start=0, step=1, limit=4
  $region2: #{preact_block_nhwc.5} parent=0 // loop_pre_header
    _
  $region3: #{preact_block_nhwc.5} parent=0 // loop_header
    %s11 = sphi 0, %s15
    %p12 = scmp.ge.s32.totalorder %s11, 4
    %s21 = sphi 0, %s23
    %s24 = sphi 0, %s21
    %s25 = sphi 0, %s24
    %s41 = sphi 0, %s25
    %s47 = sphi 0, %s49
    %s50 = sphi 0, %s47
    %s51 = sphi 0, %s50
    %s67 = sphi 0, %s51
    %s71 = sphi 0, %s71
    %s73 = sphi 0, %s71
    %s74 = sphi 0, %s73
    %s88 = sphi 0, %s74
    %s92 = sphi 0, %s92
    %s94 = sphi 0, %s92
    %s95 = sphi 0, %s94
    %s109 = sphi 0, %s95
    %s113 = sphi 0, %s113
    %s115 = sphi 0, %s113
    %s116 = sphi 0, %s115
    %s130 = sphi 0, %s116
    %s136 = sphi 0, %s138
    %s139 = sphi 0, %s136
    %s140 = sphi 0, %s139
    %s156 = sphi 0, %s140
  $region4: #{preact_block_nhwc.5} parent=0 // loop_header_branch
    %14 = sbr.rel (%p12) target = $region8
  $region5: #{preact_block_nhwc.5} parent=0 // loop_body
    %s16 = ssub.s32 %s11, 1
    %s17 = ssub.s32 %s11, 2
    %s18 = sadd.s32 %s11, 1
    %s19 = ssub.s32 %s11, %s18
    %p20 = scmp.eq.s32.totalorder %s19, 0
    %s22 = sadd.s32 %s21, 1
    %s23 = scalar_select %p20, %s21, %s22
    %p26 = pneg %p20
    %p27 = scmp.eq.s32.totalorder %s11, 1
    %p28 = por %p26, %p27
    %p29 = scmp.ne.s32.totalorder %s21, %s24
    %p30 = scmp.eq.s32.totalorder %s11, 0
    %p31 = por %p29, %p30
    %p32 = scmp.ne.s32.totalorder %s21, %s24
    %p33 = scmp.eq.s32.totalorder %s16, 1
    %p34 = por %p32, %p33
    %p35 = scmp.ne.s32.totalorder %s24, %s25
    %p36 = scmp.eq.s32.totalorder %s16, 0
    %p37 = por %p35, %p36
    %p38 = scmp.ne.s32.totalorder %s24, %s25
    %p39 = scmp.eq.s32.totalorder %s17, 1
    %p40 = por %p38, %p39
    %p42 = scmp.ne.s32.totalorder %s25, %s41
    %p43 = scmp.eq.s32.totalorder %s17, 0
    %p44 = por %p42, %p43
    %s45 = ssub.s32 %s11, %s18
    %p46 = scmp.eq.s32.totalorder %s45, 0
    %s48 = sadd.s32 %s47, 1
    %s49 = scalar_select %p46, %s47, %s48
    %p52 = pneg %p46
    %p53 = scmp.eq.s32.totalorder %s11, 1
    %p54 = por %p52, %p53
    %p55 = scmp.ne.s32.totalorder %s47, %s50
    %p56 = scmp.eq.s32.totalorder %s11, 0
    %p57 = por %p55, %p56
    %p58 = scmp.ne.s32.totalorder %s47, %s50
    %p59 = scmp.eq.s32.totalorder %s16, 1
    %p60 = por %p58, %p59
    %p61 = scmp.ne.s32.totalorder %s50, %s51
    %p62 = scmp.eq.s32.totalorder %s16, 0
    %p63 = por %p61, %p62
    %p64 = scmp.ne.s32.totalorder %s50, %s51
    %p65 = scmp.eq.s32.totalorder %s17, 1
    %p66 = por %p64, %p65
    %p68 = scmp.ne.s32.totalorder %s51, %s67
    %p69 = scmp.eq.s32.totalorder %s17, 0
    %p70 = por %p68, %p69
    %s72 = sadd.s32 %s71, 1
    %p75 = scmp.eq.s32.totalorder %s11, 1
    %p76 = scmp.ne.s32.totalorder %s71, %s73
    %p77 = scmp.eq.s32.totalorder %s11, 0
    %p78 = por %p76, %p77
    %p79 = scmp.ne.s32.totalorder %s71, %s73
    %p80 = scmp.eq.s32.totalorder %s16, 1
    %p81 = por %p79, %p80
    %p82 = scmp.ne.s32.totalorder %s73, %s74
    %p83 = scmp.eq.s32.totalorder %s16, 0
    %p84 = por %p82, %p83
    %p85 = scmp.ne.s32.totalorder %s73, %s74
    %p86 = scmp.eq.s32.totalorder %s17, 1
    %p87 = por %p85, %p86
    %p89 = scmp.ne.s32.totalorder %s74, %s88
    %p90 = scmp.eq.s32.totalorder %s17, 0
    %p91 = por %p89, %p90
    %s93 = sadd.s32 %s92, 1
    %p96 = scmp.eq.s32.totalorder %s11, 1
    %p97 = scmp.ne.s32.totalorder %s92, %s94
    %p98 = scmp.eq.s32.totalorder %s11, 0
    %p99 = por %p97, %p98
    %p100 = scmp.ne.s32.totalorder %s92, %s94
    %p101 = scmp.eq.s32.totalorder %s16, 1
    %p102 = por %p100, %p101
    %p103 = scmp.ne.s32.totalorder %s94, %s95
    %p104 = scmp.eq.s32.totalorder %s16, 0
    %p105 = por %p103, %p104
    %p106 = scmp.ne.s32.totalorder %s94, %s95
    %p107 = scmp.eq.s32.totalorder %s17, 1
    %p108 = por %p106, %p107
    %p110 = scmp.ne.s32.totalorder %s95, %s109
    %p111 = scmp.eq.s32.totalorder %s17, 0
    %p112 = por %p110, %p111
    %s114 = sadd.s32 %s113, 1
    %p117 = scmp.eq.s32.totalorder %s11, 1
    %p118 = scmp.ne.s32.totalorder %s113, %s115
    %p119 = scmp.eq.s32.totalorder %s11, 0
    %p120 = por %p118, %p119
    %p121 = scmp.ne.s32.totalorder %s113, %s115
    %p122 = scmp.eq.s32.totalorder %s16, 1
    %p123 = por %p121, %p122
    %p124 = scmp.ne.s32.totalorder %s115, %s116
    %p125 = scmp.eq.s32.totalorder %s16, 0
    %p126 = por %p124, %p125
    %p127 = scmp.ne.s32.totalorder %s115, %s116
    %p128 = scmp.eq.s32.totalorder %s17, 1
    %p129 = por %p127, %p128
    %p131 = scmp.ne.s32.totalorder %s116, %s130
    %p132 = scmp.eq.s32.totalorder %s17, 0
    %p133 = por %p131, %p132
    %s134 = ssub.s32 %s11, %s18
    %p135 = scmp.eq.s32.totalorder %s134, 0
    %s137 = sadd.s32 %s136, 1
    %s138 = scalar_select %p135, %s136, %s137
    %p141 = pneg %p135
    %p142 = scmp.eq.s32.totalorder %s11, 1
    %p143 = por %p141, %p142
    %p144 = scmp.ne.s32.totalorder %s136, %s139
    %p145 = scmp.eq.s32.totalorder %s11, 0
    %p146 = por %p144, %p145
    %p147 = scmp.ne.s32.totalorder %s136, %s139
    %p148 = scmp.eq.s32.totalorder %s16, 1
    %p149 = por %p147, %p148
    %p150 = scmp.ne.s32.totalorder %s139, %s140
    %p151 = scmp.eq.s32.totalorder %s16, 0
    %p152 = por %p150, %p151
    %p153 = scmp.ne.s32.totalorder %s139, %s140
    %p154 = scmp.eq.s32.totalorder %s17, 1
    %p155 = por %p153, %p154
    %p157 = scmp.ne.s32.totalorder %s140, %s156
    %p158 = scmp.eq.s32.totalorder %s17, 0
    %p159 = por %p157, %p158
    %p160 = scmp.le.s32.totalorder 1, %s11
    %p161 = scmp.lt.s32.totalorder %s11, 3
    %p162 = pnand %p160, %p161
    %p163 = pneg %p162
    // Predicated region
    $region9: #{preact_block_nhwc.5} parent=5 // pred_check
      _
    $region10: #{preact_block_nhwc.5} parent=5 // pred_check_branch
      %165 = sbr.rel (%p162) target = $region12
    $region11: #{preact_block_nhwc.5} parent=5 // pred_region
      %s166 = ssub.s32 %s11, 1
      // Predicated region
      $region13: #{preact_block_nhwc.5} parent=11 // pred_check
        %p167 = pneg %p84
      $region14: #{preact_block_nhwc.5} parent=11 // pred_check_branch
        %169 = sbr.rel (%p167) target = $region16
      $region15: #{preact_block_nhwc.5} parent=11 // pred_region
        _
      $region16: #{preact_block_nhwc.5} parent=11 // pred_fallthru
        _
      // Predicated region
      $region17: #{preact_block_nhwc.5} parent=11 // pred_check
        %p170 = pneg %p105
      $region18: #{preact_block_nhwc.5} parent=11 // pred_check_branch
        %172 = sbr.rel (%p170) target = $region20
      $region19: #{preact_block_nhwc.5} parent=11 // pred_region
        _
      $region20: #{preact_block_nhwc.5} parent=11 // pred_fallthru
        _
      // Predicated region
      $region21: #{preact_block_nhwc.5} parent=11 // pred_check
        %p173 = pneg %p126
      $region22: #{preact_block_nhwc.5} parent=11 // pred_check_branch
        %175 = sbr.rel (%p173) target = $region24
      $region23: #{preact_block_nhwc.5} parent=11 // pred_region
        _
      $region24: #{preact_block_nhwc.5} parent=11 // pred_fallthru
        _
    $region12: #{preact_block_nhwc.5} parent=5 // pred_fallthru
      _
    %p176 = scmp.lt.s32.totalorder %s11, 2
    // Predicated region
    $region25: #{preact_block_nhwc.5} parent=5 // pred_check
      %p177 = pneg %p176
    $region26: #{preact_block_nhwc.5} parent=5 // pred_check_branch
      %179 = sbr.rel (%p177) target = $region28
    $region27: #{preact_block_nhwc.5} parent=5 // pred_region
      // Predicated region
      $region29: #{preact_block_nhwc.5} parent=27 // pred_check
        %p180 = pneg %p31
      $region30: #{preact_block_nhwc.5} parent=27 // pred_check_branch
        %182 = sbr.rel (%p180) target = $region32
      $region31: #{preact_block_nhwc.5} parent=27 // pred_region
        %p183 = scmp.lt.s32.totalorder %s11, 1
        %s184 = scalar_select %p183, %s11, 1
        %s185 = smul.addr %s184, 32
        %s186 = smul.addr %s185, 8
        %s187 = scalar_lea.vmem %s0, %s186
      $region32: #{preact_block_nhwc.5} parent=27 // pred_fallthru
        _
      // Predicated region
      $region33: #{preact_block_nhwc.5} parent=27 // pred_check
        %p188 = pneg %p57
      $region34: #{preact_block_nhwc.5} parent=27 // pred_check_branch
        %190 = sbr.rel (%p188) target = $region36
      $region35: #{preact_block_nhwc.5} parent=27 // pred_region
        %p191 = scmp.lt.s32.totalorder %s11, 1
        %s192 = scalar_select %p191, %s11, 1
        %s193 = smul.addr %s192, 32
        %s194 = smul.addr %s193, 8
        %s195 = scalar_lea.vmem %s1, %s194
      $region36: #{preact_block_nhwc.5} parent=27 // pred_fallthru
        _
    $region28: #{preact_block_nhwc.5} parent=5 // pred_fallthru
      _
    %p196 = scmp.le.s32.totalorder 1, %s11
    %p197 = scmp.lt.s32.totalorder %s11, 3
    %p198 = pnand %p196, %p197
    %p199 = pneg %p198
    // Predicated region
    $region37: #{preact_block_nhwc.5} parent=5 // pred_check
      _
    $region38: #{preact_block_nhwc.5} parent=5 // pred_check_branch
      %201 = sbr.rel (%p198) target = $region40
    $region39: #{preact_block_nhwc.5} parent=5 // pred_region
      %s202 = ssub.s32 %s11, 1
      %p203 = scmp.lt.s32.totalorder %s16, 1
      %s204 = scalar_select %p203, %s16, 1
      %s205 = smul.addr %s204, 32
      %s206 = smul.addr %s205, 8
      %s207 = scalar_lea.vmem %s0, %s206
      %p208 = pneg %p37
      %p209 = pneg %p34
      %p210 = scmp.lt.s32.totalorder %s16, 1
      %s211 = scalar_select %p210, %s16, 1
      %s212 = smul.addr %s211, 32
      %s213 = smul.addr %s212, 8
      %s214 = scalar_lea.vmem %s1, %s213
      %p215 = pneg %p63
      %p216 = pneg %p60
      %p217 = pneg %p84
      %p218 = pneg %p81
      %p219 = pneg %p105
      %p220 = pneg %p102
      %p221 = pneg %p126
      %p222 = pneg %p123
      %p223 = pneg %p152
      %p224 = pneg %p149
      %p225 = scmp.lt.s32.totalorder %s16, 1
      %s226 = scalar_select %p225, %s16, 1
      %s227 = smul.addr %s226, 32
      %s228 = smul.addr %s227, 8
      %s229 = scalar_lea.vmem %s5, %s228
      %p230 = scmp.lt.s32.totalorder %s16, 1
      %s231 = scalar_select %p230, %s16, 1
      %s232 = smul.addr %s231, 32
      %s233 = smul.addr %s232, 8
      %s234 = scalar_lea.vmem %s0, %s233
      %p235 = scmp.lt.s32.totalorder %s16, 1
      %s236 = scalar_select %p235, %s16, 1
      %s237 = smul.addr %s236, 32
      %s238 = smul.addr %s237, 8
      %s239 = scalar_lea.vmem %s1, %s238
      %p240 = scmp.lt.s32.totalorder %s16, 1
      %s241 = scalar_select %p240, %s16, 1
      %s242 = smul.addr %s241, 32
      %s243 = smul.addr %s242, 8
      %s244 = scalar_lea.vmem %s5, %s243
      %v246 = vld [vmem:[%s234] sm:$0xff]
      %v247 = vld [vmem:[%s234 + $0x8] sm:$0xff]
      %v248 = vld [vmem:[%s234 + $0x10] sm:$0xff]
      %v249 = vld [vmem:[%s234 + $0x18] sm:$0xff]
      %v250 = vld [vmem:[%s234 + $0x20] sm:$0xff]
      %v251 = vld [vmem:[%s234 + $0x28] sm:$0xff]
      %v252 = vld [vmem:[%s234 + $0x30] sm:$0xff]
      %v253 = vld [vmem:[%s234 + $0x38] sm:$0xff]
      %v254 = vld [vmem:[%s234 + $0x40] sm:$0xff]
      %v255 = vld [vmem:[%s234 + $0x48] sm:$0xff]
      %v256 = vld [vmem:[%s234 + $0x50] sm:$0xff]
      %v257 = vld [vmem:[%s234 + $0x58] sm:$0xff]
      %v258 = vld [vmem:[%s234 + $0x60] sm:$0xff]
      %v259 = vld [vmem:[%s234 + $0x68] sm:$0xff]
      %v260 = vld [vmem:[%s234 + $0x70] sm:$0xff]
      %v261 = vld [vmem:[%s234 + $0x78] sm:$0xff]
      %v262 = vld [vmem:[%s234 + $0x80] sm:$0xff]
      %v263 = vld [vmem:[%s234 + $0x88] sm:$0xff]
      %v264 = vld [vmem:[%s234 + $0x90] sm:$0xff]
      %v265 = vld [vmem:[%s234 + $0x98] sm:$0xff]
      %v266 = vld [vmem:[%s234 + $0xa0] sm:$0xff]
      %v267 = vld [vmem:[%s234 + $0xa8] sm:$0xff]
      %v268 = vld [vmem:[%s234 + $0xb0] sm:$0xff]
      %v269 = vld [vmem:[%s234 + $0xb8] sm:$0xff]
      %v270 = vld [vmem:[%s234 + $0xc0] sm:$0xff]
      %v271 = vld [vmem:[%s234 + $0xc8] sm:$0xff]
      %v272 = vld [vmem:[%s234 + $0xd0] sm:$0xff]
      %v273 = vld [vmem:[%s234 + $0xd8] sm:$0xff]
      %v274 = vld [vmem:[%s234 + $0xe0] sm:$0xff]
      %v275 = vld [vmem:[%s234 + $0xe8] sm:$0xff]
      %v276 = vld [vmem:[%s234 + $0xf0] sm:$0xff]
      %v277 = vld [vmem:[%s234 + $0xf8] sm:$0xff]
      %v278 = vld [vmem:[%s2] sm:$0x1]
      %v280 = vlaneseq
      %v281 = vshrl.u32 %v280, 7
      %v282 = vsub.s32 0, %v281
      %v283 = vrot.slane %v278, %v282
      %v285 = vmul.f32 %v246, %v283
      %v286 = vmul.f32 %v247, %v283
      %v287 = vmul.f32 %v248, %v283
      %v288 = vmul.f32 %v249, %v283
      %v289 = vmul.f32 %v250, %v283
      %v290 = vmul.f32 %v251, %v283
      %v291 = vmul.f32 %v252, %v283
      %v292 = vmul.f32 %v253, %v283
      %v293 = vmul.f32 %v254, %v283
      %v294 = vmul.f32 %v255, %v283
      %v295 = vmul.f32 %v256, %v283
      %v296 = vmul.f32 %v257, %v283
      %v297 = vmul.f32 %v258, %v283
      %v298 = vmul.f32 %v259, %v283
      %v299 = vmul.f32 %v260, %v283
      %v300 = vmul.f32 %v261, %v283
      %v301 = vmul.f32 %v262, %v283
      %v302 = vmul.f32 %v263, %v283
      %v303 = vmul.f32 %v264, %v283
      %v304 = vmul.f32 %v265, %v283
      %v305 = vmul.f32 %v266, %v283
      %v306 = vmul.f32 %v267, %v283
      %v307 = vmul.f32 %v268, %v283
      %v308 = vmul.f32 %v269, %v283
      %v309 = vmul.f32 %v270, %v283
      %v310 = vmul.f32 %v271, %v283
      %v311 = vmul.f32 %v272, %v283
      %v312 = vmul.f32 %v273, %v283
      %v313 = vmul.f32 %v274, %v283
      %v314 = vmul.f32 %v275, %v283
      %v315 = vmul.f32 %v276, %v283
      %v316 = vmul.f32 %v277, %v283
      %v317 = vld [vmem:[%s3] sm:$0x1]
      %v319 = vlaneseq
      %v320 = vshrl.u32 %v319, 7
      %v321 = vsub.s32 0, %v320
      %v322 = vrot.slane %v317, %v321
      %v324 = vadd.f32 %v285, %v322
      %v325 = vadd.f32 %v286, %v322
      %v326 = vadd.f32 %v287, %v322
      %v327 = vadd.f32 %v288, %v322
      %v328 = vadd.f32 %v289, %v322
      %v329 = vadd.f32 %v290, %v322
      %v330 = vadd.f32 %v291, %v322
      %v331 = vadd.f32 %v292, %v322
      %v332 = vadd.f32 %v293, %v322
      %v333 = vadd.f32 %v294, %v322
      %v334 = vadd.f32 %v295, %v322
      %v335 = vadd.f32 %v296, %v322
      %v336 = vadd.f32 %v297, %v322
      %v337 = vadd.f32 %v298, %v322
      %v338 = vadd.f32 %v299, %v322
      %v339 = vadd.f32 %v300, %v322
      %v340 = vadd.f32 %v301, %v322
      %v341 = vadd.f32 %v302, %v322
      %v342 = vadd.f32 %v303, %v322
      %v343 = vadd.f32 %v304, %v322
      %v344 = vadd.f32 %v305, %v322
      %v345 = vadd.f32 %v306, %v322
      %v346 = vadd.f32 %v307, %v322
      %v347 = vadd.f32 %v308, %v322
      %v348 = vadd.f32 %v309, %v322
      %v349 = vadd.f32 %v310, %v322
      %v350 = vadd.f32 %v311, %v322
      %v351 = vadd.f32 %v312, %v322
      %v352 = vadd.f32 %v313, %v322
      %v353 = vadd.f32 %v314, %v322
      %v354 = vadd.f32 %v315, %v322
      %v355 = vadd.f32 %v316, %v322
      %v356 = vmax.f32 %v324, 0.0
      %v357 = vmax.f32 %v325, 0.0
      %v358 = vmax.f32 %v326, 0.0
      %v359 = vmax.f32 %v327, 0.0
      %v360 = vmax.f32 %v328, 0.0
      %v361 = vmax.f32 %v329, 0.0
      %v362 = vmax.f32 %v330, 0.0
      %v363 = vmax.f32 %v331, 0.0
      %v364 = vmax.f32 %v332, 0.0
      %v365 = vmax.f32 %v333, 0.0
      %v366 = vmax.f32 %v334, 0.0
      %v367 = vmax.f32 %v335, 0.0
      %v368 = vmax.f32 %v336, 0.0
      %v369 = vmax.f32 %v337, 0.0
      %v370 = vmax.f32 %v338, 0.0
      %v371 = vmax.f32 %v339, 0.0
      %v372 = vmax.f32 %v340, 0.0
      %v373 = vmax.f32 %v341, 0.0
      %v374 = vmax.f32 %v342, 0.0
      %v375 = vmax.f32 %v343, 0.0
      %v376 = vmax.f32 %v344, 0.0
      %v377 = vmax.f32 %v345, 0.0
      %v378 = vmax.f32 %v346, 0.0
      %v379 = vmax.f32 %v347, 0.0
      %v380 = vmax.f32 %v348, 0.0
      %v381 = vmax.f32 %v349, 0.0
      %v382 = vmax.f32 %v350, 0.0
      %v383 = vmax.f32 %v351, 0.0
      %v384 = vmax.f32 %v352, 0.0
      %v385 = vmax.f32 %v353, 0.0
      %v386 = vmax.f32 %v354, 0.0
      %v387 = vmax.f32 %v355, 0.0
      %v388 = vpack.c.bf16 %v357, %v356
      %v389 = vpack.c.bf16 %v359, %v358
      %v390 = vpack.c.bf16 %v361, %v360
      %v391 = vpack.c.bf16 %v363, %v362
      %v392 = vpack.c.bf16 %v365, %v364
      %v393 = vpack.c.bf16 %v367, %v366
      %v394 = vpack.c.bf16 %v369, %v368
      %v395 = vpack.c.bf16 %v371, %v370
      %v396 = vpack.c.bf16 %v373, %v372
      %v397 = vpack.c.bf16 %v375, %v374
      %v398 = vpack.c.bf16 %v377, %v376
      %v399 = vpack.c.bf16 %v379, %v378
      %v400 = vpack.c.bf16 %v381, %v380
      %v401 = vpack.c.bf16 %v383, %v382
      %v402 = vpack.c.bf16 %v385, %v384
      %v403 = vpack.c.bf16 %v387, %v386
      %vm404 = vcmask 27648
      %405 = vst.msk [vmem:[#allocation2] sm:$0xf] %vm404, 0
      %406 = vst.msk [vmem:[#allocation2 + $0x4] sm:$0xf] %vm404, 0
      %vm407 = vcmask 24576
      %408 = vst.msk [vmem:[#allocation2 + $0x8] sm:$0x1] %vm407, 0
      %s409 = scalar_lea.vmem [#allocation2], 204
      %410 = vst.msk [vmem:[%s409] sm:$0xf] %vm404, 0
      %411 = vst.msk [vmem:[%s409 + $0x4] sm:$0xf] %vm404, 0
      %412 = vst.msk [vmem:[%s409 + $0x8] sm:$0x1] %vm407, 0
      %vm413 = vcmask 24576
      %vm414 = vsmask.f32 256
      %vm415 = vmand %vm413, %vm414
      %v416 = vld [vmem:[#allocation2] sm:$0x1]
      %v417 = vsel %vm415, 0, %v416
      %418 = vst [vmem:[#allocation2] sm:$0x1] %v417
      %v419 = vld [vmem:[#allocation2 + $0xc] sm:$0x1]
      %v420 = vsel %vm415, 0, %v419
      %421 = vst [vmem:[#allocation2 + $0xc] sm:$0x1] %v420
      %v422 = vld [vmem:[#allocation2 + $0x18] sm:$0x1]
      %v423 = vsel %vm415, 0, %v422
      %424 = vst [vmem:[#allocation2 + $0x18] sm:$0x1] %v423
      %v425 = vld [vmem:[#allocation2 + $0x24] sm:$0x1]
      %v426 = vsel %vm415, 0, %v425
      %427 = vst [vmem:[#allocation2 + $0x24] sm:$0x1] %v426
      %v428 = vld [vmem:[#allocation2 + $0x30] sm:$0x1]
      %v429 = vsel %vm415, 0, %v428
      %430 = vst [vmem:[#allocation2 + $0x30] sm:$0x1] %v429
      %v431 = vld [vmem:[#allocation2 + $0x3c] sm:$0x1]
      %v432 = vsel %vm415, 0, %v431
      %433 = vst [vmem:[#allocation2 + $0x3c] sm:$0x1] %v432
      %v434 = vld [vmem:[#allocation2 + $0x48] sm:$0x1]
      %v435 = vsel %vm415, 0, %v434
      %436 = vst [vmem:[#allocation2 + $0x48] sm:$0x1] %v435
      %v437 = vld [vmem:[#allocation2 + $0x54] sm:$0x1]
      %v438 = vsel %vm415, 0, %v437
      %439 = vst [vmem:[#allocation2 + $0x54] sm:$0x1] %v438
      %v440 = vld [vmem:[#allocation2 + $0x60] sm:$0x1]
      %v441 = vsel %vm415, 0, %v440
      %442 = vst [vmem:[#allocation2 + $0x60] sm:$0x1] %v441
      %v443 = vld [vmem:[#allocation2 + $0x6c] sm:$0x1]
      %v444 = vsel %vm415, 0, %v443
      %445 = vst [vmem:[#allocation2 + $0x6c] sm:$0x1] %v444
      %v446 = vld [vmem:[#allocation2 + $0x78] sm:$0x1]
      %v447 = vsel %vm415, 0, %v446
      %448 = vst [vmem:[#allocation2 + $0x78] sm:$0x1] %v447
      %v449 = vld [vmem:[#allocation2 + $0x84] sm:$0x1]
      %v450 = vsel %vm415, 0, %v449
      %451 = vst [vmem:[#allocation2 + $0x84] sm:$0x1] %v450
      %v452 = vld [vmem:[#allocation2 + $0x90] sm:$0x1]
      %v453 = vsel %vm415, 0, %v452
      %454 = vst [vmem:[#allocation2 + $0x90] sm:$0x1] %v453
      %v455 = vld [vmem:[#allocation2 + $0x9c] sm:$0x1]
      %v456 = vsel %vm415, 0, %v455
      %457 = vst [vmem:[#allocation2 + $0x9c] sm:$0x1] %v456
      %v458 = vld [vmem:[#allocation2 + $0xa8] sm:$0x1]
      %v459 = vsel %vm415, 0, %v458
      %460 = vst [vmem:[#allocation2 + $0xa8] sm:$0x1] %v459
      %v461 = vld [vmem:[#allocation2 + $0xb4] sm:$0x1]
      %v462 = vsel %vm415, 0, %v461
      %463 = vst [vmem:[#allocation2 + $0xb4] sm:$0x1] %v462
      %v464 = vld [vmem:[#allocation2 + $0xc0] sm:$0x1]
      %v465 = vsel %vm415, 0, %v464
      %466 = vst [vmem:[#allocation2 + $0xc0] sm:$0x1] %v465
      %v467 = vld [vmem:[#allocation2 + $0xcc] sm:$0x1]
      %v468 = vsel %vm415, 0, %v467
      %469 = vst [vmem:[#allocation2 + $0xcc] sm:$0x1] %v468
      %vm470 = vsmask.f32 7938
      %vm471 = vmand %vm413, %vm470
      %v472 = vld [vmem:[#allocation2 + $0x8] sm:$0x1]
      %v473 = vsel %vm471, 0, %v472
      %474 = vst [vmem:[#allocation2 + $0x8] sm:$0x1] %v473
      %v475 = vld [vmem:[#allocation2 + $0x14] sm:$0x1]
      %v476 = vsel %vm471, 0, %v475
      %477 = vst [vmem:[#allocation2 + $0x14] sm:$0x1] %v476
      %v478 = vld [vmem:[#allocation2 + $0x20] sm:$0x1]
      %v479 = vsel %vm471, 0, %v478
      %480 = vst [vmem:[#allocation2 + $0x20] sm:$0x1] %v479
      %v481 = vld [vmem:[#allocation2 + $0x2c] sm:$0x1]
      %v482 = vsel %vm471, 0, %v481
      %483 = vst [vmem:[#allocation2 + $0x2c] sm:$0x1] %v482
      %v484 = vld [vmem:[#allocation2 + $0x38] sm:$0x1]
      %v485 = vsel %vm471, 0, %v484
      %486 = vst [vmem:[#allocation2 + $0x38] sm:$0x1] %v485
      %v487 = vld [vmem:[#allocation2 + $0x44] sm:$0x1]
      %v488 = vsel %vm471, 0, %v487
      %489 = vst [vmem:[#allocation2 + $0x44] sm:$0x1] %v488
      %v490 = vld [vmem:[#allocation2 + $0x50] sm:$0x1]
      %v491 = vsel %vm471, 0, %v490
      %492 = vst [vmem:[#allocation2 + $0x50] sm:$0x1] %v491
      %v493 = vld [vmem:[#allocation2 + $0x5c] sm:$0x1]
      %v494 = vsel %vm471, 0, %v493
      %495 = vst [vmem:[#allocation2 + $0x5c] sm:$0x1] %v494
      %v496 = vld [vmem:[#allocation2 + $0x68] sm:$0x1]
      %v497 = vsel %vm471, 0, %v496
      %498 = vst [vmem:[#allocation2 + $0x68] sm:$0x1] %v497
      %v499 = vld [vmem:[#allocation2 + $0x74] sm:$0x1]
      %v500 = vsel %vm471, 0, %v499
      %501 = vst [vmem:[#allocation2 + $0x74] sm:$0x1] %v500
      %v502 = vld [vmem:[#allocation2 + $0x80] sm:$0x1]
      %v503 = vsel %vm471, 0, %v502
      %504 = vst [vmem:[#allocation2 + $0x80] sm:$0x1] %v503
      %v505 = vld [vmem:[#allocation2 + $0x8c] sm:$0x1]
      %v506 = vsel %vm471, 0, %v505
      %507 = vst [vmem:[#allocation2 + $0x8c] sm:$0x1] %v506
      %v508 = vld [vmem:[#allocation2 + $0x98] sm:$0x1]
      %v509 = vsel %vm471, 0, %v508
      %510 = vst [vmem:[#allocation2 + $0x98] sm:$0x1] %v509
      %v511 = vld [vmem:[#allocation2 + $0xa4] sm:$0x1]
      %v512 = vsel %vm471, 0, %v511
      %513 = vst [vmem:[#allocation2 + $0xa4] sm:$0x1] %v512
      %v514 = vld [vmem:[#allocation2 + $0xb0] sm:$0x1]
      %v515 = vsel %vm471, 0, %v514
      %516 = vst [vmem:[#allocation2 + $0xb0] sm:$0x1] %v515
      %v517 = vld [vmem:[#allocation2 + $0xbc] sm:$0x1]
      %v518 = vsel %vm471, 0, %v517
      %519 = vst [vmem:[#allocation2 + $0xbc] sm:$0x1] %v518
      %v520 = vld [vmem:[#allocation2 + $0xc8] sm:$0x1]
      %v521 = vsel %vm471, 0, %v520
      %522 = vst [vmem:[#allocation2 + $0xc8] sm:$0x1] %v521
      %v523 = vld [vmem:[#allocation2 + $0xd4] sm:$0x1]
      %v524 = vsel %vm471, 0, %v523
      %525 = vst [vmem:[#allocation2 + $0xd4] sm:$0x1] %v524
      %v542 = vunpack.c.l.b16 %v388
      %v543 = vunpack.c.h.b16 %v388
      %v544 = vunpack.c.l.b16 %v389
      %v545 = vunpack.c.h.b16 %v389
      %v546 = vunpack.c.l.b16 %v390
      %v547 = vunpack.c.h.b16 %v390
      %v548 = vunpack.c.l.b16 %v391
      %v549 = vunpack.c.h.b16 %v391
      %v550 = vunpack.c.l.b16 %v392
      %v551 = vunpack.c.h.b16 %v392
      %v552 = vunpack.c.l.b16 %v393
      %v553 = vunpack.c.h.b16 %v393
      %v554 = vunpack.c.l.b16 %v394
      %v555 = vunpack.c.h.b16 %v394
      %v556 = vunpack.c.l.b16 %v395
      %v557 = vunpack.c.h.b16 %v395
      %v558 = vunpack.c.l.b16 %v396
      %v559 = vunpack.c.h.b16 %v396
      %v560 = vunpack.c.l.b16 %v397
      %v561 = vunpack.c.h.b16 %v397
      %v562 = vunpack.c.l.b16 %v398
      %v563 = vunpack.c.h.b16 %v398
      %v564 = vunpack.c.l.b16 %v399
      %v565 = vunpack.c.h.b16 %v399
      %v566 = vunpack.c.l.b16 %v400
      %v567 = vunpack.c.h.b16 %v400
      %v568 = vunpack.c.l.b16 %v401
      %v569 = vunpack.c.h.b16 %v401
      %v570 = vunpack.c.l.b16 %v402
      %v571 = vunpack.c.h.b16 %v402
      %v572 = vunpack.c.l.b16 %v403
      %v573 = vunpack.c.h.b16 %v403
      %v574 = vpack.c.b16 %v542, %v542
      %v575 = vpack.c.b16 %v543, %v543
      %v576 = vpack.c.b16 %v544, %v544
      %v577 = vpack.c.b16 %v545, %v545
      %v578 = vpack.c.b16 %v546, %v546
      %v579 = vpack.c.b16 %v547, %v547
      %v580 = vpack.c.b16 %v548, %v548
      %v581 = vpack.c.b16 %v549, %v549
      %v582 = vpack.c.b16 %v550, %v550
      %v583 = vpack.c.b16 %v551, %v551
      %v584 = vpack.c.b16 %v552, %v552
      %v585 = vpack.c.b16 %v553, %v553
      %v586 = vpack.c.b16 %v554, %v554
      %v587 = vpack.c.b16 %v555, %v555
      %v588 = vpack.c.b16 %v556, %v556
      %v589 = vpack.c.b16 %v557, %v557
      %v590 = vpack.c.b16 %v558, %v558
      %v591 = vpack.c.b16 %v559, %v559
      %v592 = vpack.c.b16 %v560, %v560
      %v593 = vpack.c.b16 %v561, %v561
      %v594 = vpack.c.b16 %v562, %v562
      %v595 = vpack.c.b16 %v563, %v563
      %v596 = vpack.c.b16 %v564, %v564
      %v597 = vpack.c.b16 %v565, %v565
      %v598 = vpack.c.b16 %v566, %v566
      %v599 = vpack.c.b16 %v567, %v567
      %v600 = vpack.c.b16 %v568, %v568
      %v601 = vpack.c.b16 %v569, %v569
      %v602 = vpack.c.b16 %v570, %v570
      %v603 = vpack.c.b16 %v571, %v571
      %v604 = vpack.c.b16 %v572, %v572
      %v605 = vpack.c.b16 %v573, %v573
      %vm606 = vsmask.f32 4368
      %vm607 = vmor %vm414, %vm606
      %v609 = vshrl.u32 %v574, 16
      %v611 = vrot.slane %v609, 7
      %v612 = vshll.u32 %v574, 16
      %v614 = vor.u32 %v611, %v612
      %v615 = vrot.slane %v611, 4
      %v617 = vshrl.u32 %v575, 16
      %v619 = vrot.slane %v617, 7
      %v620 = vshll.u32 %v575, 16
      %v622 = vor.u32 %v619, %v620
      %v623 = vsel %vm607, %v615, %v622
      %v624 = vrot.slane %v619, 4
      %v626 = vshrl.u32 %v576, 16
      %v628 = vrot.slane %v626, 7
      %v629 = vshll.u32 %v576, 16
      %v631 = vor.u32 %v628, %v629
      %v632 = vrot.slane %v628, 4
      %v634 = vshrl.u32 %v577, 16
      %v636 = vrot.slane %v634, 7
      %v637 = vshll.u32 %v577, 16
      %v639 = vor.u32 %v636, %v637
      %v640 = vsel %vm607, %v632, %v639
      %v641 = vrot.slane %v636, 4
      %v643 = vshrl.u32 %v578, 16
      %v645 = vrot.slane %v643, 7
      %v646 = vshll.u32 %v578, 16
      %v648 = vor.u32 %v645, %v646
      %v649 = vrot.slane %v645, 4
      %v651 = vshrl.u32 %v579, 16
      %v653 = vrot.slane %v651, 7
      %v654 = vshll.u32 %v579, 16
      %v656 = vor.u32 %v653, %v654
      %v657 = vsel %vm607, %v649, %v656
      %v658 = vrot.slane %v653, 4
      %v660 = vshrl.u32 %v580, 16
      %v662 = vrot.slane %v660, 7
      %v663 = vshll.u32 %v580, 16
      %v665 = vor.u32 %v662, %v663
      %v666 = vrot.slane %v662, 4
      %v668 = vshrl.u32 %v581, 16
      %v670 = vrot.slane %v668, 7
      %v671 = vshll.u32 %v581, 16
      %v673 = vor.u32 %v670, %v671
      %v674 = vsel %vm607, %v666, %v673
      %v675 = vrot.slane %v670, 4
      %v677 = vshrl.u32 %v582, 16
      %v679 = vrot.slane %v677, 7
      %v680 = vshll.u32 %v582, 16
      %v682 = vor.u32 %v679, %v680
      %v683 = vrot.slane %v679, 4
      %v685 = vshrl.u32 %v583, 16
      %v687 = vrot.slane %v685, 7
      %v688 = vshll.u32 %v583, 16
      %v690 = vor.u32 %v687, %v688
      %v691 = vsel %vm607, %v683, %v690
      %v692 = vrot.slane %v687, 4
      %v694 = vshrl.u32 %v584, 16
      %v696 = vrot.slane %v694, 7
      %v697 = vshll.u32 %v584, 16
      %v699 = vor.u32 %v696, %v697
      %v700 = vrot.slane %v696, 4
      %v702 = vshrl.u32 %v585, 16
      %v704 = vrot.slane %v702, 7
      %v705 = vshll.u32 %v585, 16
      %v707 = vor.u32 %v704, %v705
      %v708 = vsel %vm607, %v700, %v707
      %v709 = vrot.slane %v704, 4
      %v711 = vshrl.u32 %v586, 16
      %v713 = vrot.slane %v711, 7
      %v714 = vshll.u32 %v586, 16
      %v716 = vor.u32 %v713, %v714
      %v717 = vrot.slane %v713, 4
      %v719 = vshrl.u32 %v587, 16
      %v721 = vrot.slane %v719, 7
      %v722 = vshll.u32 %v587, 16
      %v724 = vor.u32 %v721, %v722
      %v725 = vsel %vm607, %v717, %v724
      %v726 = vrot.slane %v721, 4
      %v728 = vshrl.u32 %v588, 16
      %v730 = vrot.slane %v728, 7
      %v731 = vshll.u32 %v588, 16
      %v733 = vor.u32 %v730, %v731
      %v734 = vrot.slane %v730, 4
      %v736 = vshrl.u32 %v589, 16
      %v738 = vrot.slane %v736, 7
      %v739 = vshll.u32 %v589, 16
      %v741 = vor.u32 %v738, %v739
      %v742 = vsel %vm607, %v734, %v741
      %v743 = vrot.slane %v738, 4
      %v745 = vshrl.u32 %v590, 16
      %v747 = vrot.slane %v745, 7
      %v748 = vshll.u32 %v590, 16
      %v750 = vor.u32 %v747, %v748
      %v751 = vrot.slane %v747, 4
      %v753 = vshrl.u32 %v591, 16
      %v755 = vrot.slane %v753, 7
      %v756 = vshll.u32 %v591, 16
      %v758 = vor.u32 %v755, %v756
      %v759 = vsel %vm607, %v751, %v758
      %v760 = vrot.slane %v755, 4
      %v762 = vshrl.u32 %v592, 16
      %v764 = vrot.slane %v762, 7
      %v765 = vshll.u32 %v592, 16
      %v767 = vor.u32 %v764, %v765
      %v768 = vrot.slane %v764, 4
      %v770 = vshrl.u32 %v593, 16
      %v772 = vrot.slane %v770, 7
      %v773 = vshll.u32 %v593, 16
      %v775 = vor.u32 %v772, %v773
      %v776 = vsel %vm607, %v768, %v775
      %v777 = vrot.slane %v772, 4
      %v779 = vshrl.u32 %v594, 16
      %v781 = vrot.slane %v779, 7
      %v782 = vshll.u32 %v594, 16
      %v784 = vor.u32 %v781, %v782
      %v785 = vrot.slane %v781, 4
      %v787 = vshrl.u32 %v595, 16
      %v789 = vrot.slane %v787, 7
      %v790 = vshll.u32 %v595, 16
      %v792 = vor.u32 %v789, %v790
      %v793 = vsel %vm607, %v785, %v792
      %v794 = vrot.slane %v789, 4
      %v796 = vshrl.u32 %v596, 16
      %v798 = vrot.slane %v796, 7
      %v799 = vshll.u32 %v596, 16
      %v801 = vor.u32 %v798, %v799
      %v802 = vrot.slane %v798, 4
      %v804 = vshrl.u32 %v597, 16
      %v806 = vrot.slane %v804, 7
      %v807 = vshll.u32 %v597, 16
      %v809 = vor.u32 %v806, %v807
      %v810 = vsel %vm607, %v802, %v809
      %v811 = vrot.slane %v806, 4
      %v813 = vshrl.u32 %v598, 16
      %v815 = vrot.slane %v813, 7
      %v816 = vshll.u32 %v598, 16
      %v818 = vor.u32 %v815, %v816
      %v819 = vrot.slane %v815, 4
      %v821 = vshrl.u32 %v599, 16
      %v823 = vrot.slane %v821, 7
      %v824 = vshll.u32 %v599, 16
      %v826 = vor.u32 %v823, %v824
      %v827 = vsel %vm607, %v819, %v826
      %v828 = vrot.slane %v823, 4
      %v830 = vshrl.u32 %v600, 16
      %v832 = vrot.slane %v830, 7
      %v833 = vshll.u32 %v600, 16
      %v835 = vor.u32 %v832, %v833
      %v836 = vrot.slane %v832, 4
      %v838 = vshrl.u32 %v601, 16
      %v840 = vrot.slane %v838, 7
      %v841 = vshll.u32 %v601, 16
      %v843 = vor.u32 %v840, %v841
      %v844 = vsel %vm607, %v836, %v843
      %v845 = vrot.slane %v840, 4
      %v847 = vshrl.u32 %v602, 16
      %v849 = vrot.slane %v847, 7
      %v850 = vshll.u32 %v602, 16
      %v852 = vor.u32 %v849, %v850
      %v853 = vrot.slane %v849, 4
      %v855 = vshrl.u32 %v603, 16
      %v857 = vrot.slane %v855, 7
      %v858 = vshll.u32 %v603, 16
      %v860 = vor.u32 %v857, %v858
      %v861 = vsel %vm607, %v853, %v860
      %v862 = vrot.slane %v857, 4
      %v864 = vshrl.u32 %v604, 16
      %v866 = vrot.slane %v864, 7
      %v867 = vshll.u32 %v604, 16
      %v869 = vor.u32 %v866, %v867
      %v870 = vrot.slane %v866, 4
      %v872 = vshrl.u32 %v605, 16
      %v874 = vrot.slane %v872, 7
      %v875 = vshll.u32 %v605, 16
      %v877 = vor.u32 %v874, %v875
      %v878 = vsel %vm607, %v870, %v877
      %v879 = vrot.slane %v874, 4
      %s928 = scalar_lea.vmem [#allocation2], 12
      %vm929 = vcmask 27648
      %vm930 = vmand %vm929, %vm470
      %v931 = vld [vmem:[%s928] sm:$0xf]
      %v932 = vsel %vm930, %v614, %v931
      %933 = vst [vmem:[%s928] sm:$0xf] %v932
      %934 = vst.msk [vmem:[%s928 + $0x4] sm:$0xf] %vm404, %v623
      %v935 = vld [vmem:[%s928 + $0x8] sm:$0x1]
      %v936 = vsel %vm415, %v624, %v935
      %937 = vst [vmem:[%s928 + $0x8] sm:$0x1] %v936
      %v938 = vld [vmem:[%s928 + $0xc] sm:$0xf]
      %v939 = vsel %vm930, %v631, %v938
      %940 = vst [vmem:[%s928 + $0xc] sm:$0xf] %v939
      %941 = vst.msk [vmem:[%s928 + $0x10] sm:$0xf] %vm404, %v640
      %v942 = vld [vmem:[%s928 + $0x14] sm:$0x1]
      %v943 = vsel %vm415, %v641, %v942
      %944 = vst [vmem:[%s928 + $0x14] sm:$0x1] %v943
      %v945 = vld [vmem:[%s928 + $0x18] sm:$0xf]
      %v946 = vsel %vm930, %v648, %v945
      %947 = vst [vmem:[%s928 + $0x18] sm:$0xf] %v946
      %948 = vst.msk [vmem:[%s928 + $0x1c] sm:$0xf] %vm404, %v657
      %v949 = vld [vmem:[%s928 + $0x20] sm:$0x1]
      %v950 = vsel %vm415, %v658, %v949
      %951 = vst [vmem:[%s928 + $0x20] sm:$0x1] %v950
      %v952 = vld [vmem:[%s928 + $0x24] sm:$0xf]
      %v953 = vsel %vm930, %v665, %v952
      %954 = vst [vmem:[%s928 + $0x24] sm:$0xf] %v953
      %955 = vst.msk [vmem:[%s928 + $0x28] sm:$0xf] %vm404, %v674
      %v956 = vld [vmem:[%s928 + $0x2c] sm:$0x1]
      %v957 = vsel %vm415, %v675, %v956
      %958 = vst [vmem:[%s928 + $0x2c] sm:$0x1] %v957
      %v959 = vld [vmem:[%s928 + $0x30] sm:$0xf]
      %v960 = vsel %vm930, %v682, %v959
      %961 = vst [vmem:[%s928 + $0x30] sm:$0xf] %v960
      %962 = vst.msk [vmem:[%s928 + $0x34] sm:$0xf] %vm404, %v691
      %v963 = vld [vmem:[%s928 + $0x38] sm:$0x1]
      %v964 = vsel %vm415, %v692, %v963
      %965 = vst [vmem:[%s928 + $0x38] sm:$0x1] %v964
      %v966 = vld [vmem:[%s928 + $0x3c] sm:$0xf]
      %v967 = vsel %vm930, %v699, %v966
      %968 = vst [vmem:[%s928 + $0x3c] sm:$0xf] %v967
      %969 = vst.msk [vmem:[%s928 + $0x40] sm:$0xf] %vm404, %v708
      %v970 = vld [vmem:[%s928 + $0x44] sm:$0x1]
      %v971 = vsel %vm415, %v709, %v970
      %972 = vst [vmem:[%s928 + $0x44] sm:$0x1] %v971
      %v973 = vld [vmem:[%s928 + $0x48] sm:$0xf]
      %v974 = vsel %vm930, %v716, %v973
      %975 = vst [vmem:[%s928 + $0x48] sm:$0xf] %v974
      %976 = vst.msk [vmem:[%s928 + $0x4c] sm:$0xf] %vm404, %v725
      %v977 = vld [vmem:[%s928 + $0x50] sm:$0x1]
      %v978 = vsel %vm415, %v726, %v977
      %979 = vst [vmem:[%s928 + $0x50] sm:$0x1] %v978
      %v980 = vld [vmem:[%s928 + $0x54] sm:$0xf]
      %v981 = vsel %vm930, %v733, %v980
      %982 = vst [vmem:[%s928 + $0x54] sm:$0xf] %v981
      %983 = vst.msk [vmem:[%s928 + $0x58] sm:$0xf] %vm404, %v742
      %v984 = vld [vmem:[%s928 + $0x5c] sm:$0x1]
      %v985 = vsel %vm415, %v743, %v984
      %986 = vst [vmem:[%s928 + $0x5c] sm:$0x1] %v985
      %v987 = vld [vmem:[%s928 + $0x60] sm:$0xf]
      %v988 = vsel %vm930, %v750, %v987
      %989 = vst [vmem:[%s928 + $0x60] sm:$0xf] %v988
      %990 = vst.msk [vmem:[%s928 + $0x64] sm:$0xf] %vm404, %v759
      %v991 = vld [vmem:[%s928 + $0x68] sm:$0x1]
      %v992 = vsel %vm415, %v760, %v991
      %993 = vst [vmem:[%s928 + $0x68] sm:$0x1] %v992
      %v994 = vld [vmem:[%s928 + $0x6c] sm:$0xf]
      %v995 = vsel %vm930, %v767, %v994
      %996 = vst [vmem:[%s928 + $0x6c] sm:$0xf] %v995
      %997 = vst.msk [vmem:[%s928 + $0x70] sm:$0xf] %vm404, %v776
      %v998 = vld [vmem:[%s928 + $0x74] sm:$0x1]
      %v999 = vsel %vm415, %v777, %v998
      %1000 = vst [vmem:[%s928 + $0x74] sm:$0x1] %v999
      %v1001 = vld [vmem:[%s928 + $0x78] sm:$0xf]
      %v1002 = vsel %vm930, %v784, %v1001
      %1003 = vst [vmem:[%s928 + $0x78] sm:$0xf] %v1002
      %1004 = vst.msk [vmem:[%s928 + $0x7c] sm:$0xf] %vm404, %v793
      %v1005 = vld [vmem:[%s928 + $0x80] sm:$0x1]
      %v1006 = vsel %vm415, %v794, %v1005
      %1007 = vst [vmem:[%s928 + $0x80] sm:$0x1] %v1006
      %v1008 = vld [vmem:[%s928 + $0x84] sm:$0xf]
      %v1009 = vsel %vm930, %v801, %v1008
      %1010 = vst [vmem:[%s928 + $0x84] sm:$0xf] %v1009
      %1011 = vst.msk [vmem:[%s928 + $0x88] sm:$0xf] %vm404, %v810
      %v1012 = vld [vmem:[%s928 + $0x8c] sm:$0x1]
      %v1013 = vsel %vm415, %v811, %v1012
      %1014 = vst [vmem:[%s928 + $0x8c] sm:$0x1] %v1013
      %v1015 = vld [vmem:[%s928 + $0x90] sm:$0xf]
      %v1016 = vsel %vm930, %v818, %v1015
      %1017 = vst [vmem:[%s928 + $0x90] sm:$0xf] %v1016
      %1018 = vst.msk [vmem:[%s928 + $0x94] sm:$0xf] %vm404, %v827
      %v1019 = vld [vmem:[%s928 + $0x98] sm:$0x1]
      %v1020 = vsel %vm415, %v828, %v1019
      %1021 = vst [vmem:[%s928 + $0x98] sm:$0x1] %v1020
      %v1022 = vld [vmem:[%s928 + $0x9c] sm:$0xf]
      %v1023 = vsel %vm930, %v835, %v1022
      %1024 = vst [vmem:[%s928 + $0x9c] sm:$0xf] %v1023
      %1025 = vst.msk [vmem:[%s928 + $0xa0] sm:$0xf] %vm404, %v844
      %v1026 = vld [vmem:[%s928 + $0xa4] sm:$0x1]
      %v1027 = vsel %vm415, %v845, %v1026
      %1028 = vst [vmem:[%s928 + $0xa4] sm:$0x1] %v1027
      %v1029 = vld [vmem:[%s928 + $0xa8] sm:$0xf]
      %v1030 = vsel %vm930, %v852, %v1029
      %1031 = vst [vmem:[%s928 + $0xa8] sm:$0xf] %v1030
      %1032 = vst.msk [vmem:[%s928 + $0xac] sm:$0xf] %vm404, %v861
      %v1033 = vld [vmem:[%s928 + $0xb0] sm:$0x1]
      %v1034 = vsel %vm415, %v862, %v1033
      %1035 = vst [vmem:[%s928 + $0xb0] sm:$0x1] %v1034
      %v1036 = vld [vmem:[%s928 + $0xb4] sm:$0xf]
      %v1037 = vsel %vm930, %v869, %v1036
      %1038 = vst [vmem:[%s928 + $0xb4] sm:$0xf] %v1037
      %1039 = vst.msk [vmem:[%s928 + $0xb8] sm:$0xf] %vm404, %v878
      %v1040 = vld [vmem:[%s928 + $0xbc] sm:$0x1]
      %v1041 = vsel %vm415, %v879, %v1040
      %1042 = vst [vmem:[%s928 + $0xbc] sm:$0x1] %v1041
      %v1043 = vld [vmem:[#allocation2] sm:$0xf]
      %v1044 = vld [vmem:[#allocation2 + $0x4] sm:$0xf]
      %v1045 = vld [vmem:[#allocation2 + $0xc] sm:$0xf]
      %v1046 = vld [vmem:[#allocation2 + $0x10] sm:$0xf]
      %v1047 = vld [vmem:[#allocation2 + $0x18] sm:$0xf]
      %v1048 = vld [vmem:[#allocation2 + $0x1c] sm:$0xf]
      %v1049 = vld [vmem:[#allocation2 + $0x24] sm:$0xf]
      %v1050 = vld [vmem:[#allocation2 + $0x28] sm:$0xf]
      %v1051 = vld [vmem:[#allocation2 + $0x30] sm:$0xf]
      %v1052 = vld [vmem:[#allocation2 + $0x34] sm:$0xf]
      %v1053 = vld [vmem:[#allocation2 + $0x3c] sm:$0xf]
      %v1054 = vld [vmem:[#allocation2 + $0x40] sm:$0xf]
      %v1055 = vld [vmem:[#allocation2 + $0x48] sm:$0xf]
      %v1056 = vld [vmem:[#allocation2 + $0x4c] sm:$0xf]
      %v1057 = vld [vmem:[#allocation2 + $0x54] sm:$0xf]
      %v1058 = vld [vmem:[#allocation2 + $0x58] sm:$0xf]
      %v1059 = vld [vmem:[#allocation2 + $0x60] sm:$0xf]
      %v1060 = vld [vmem:[#allocation2 + $0x64] sm:$0xf]
      %v1061 = vld [vmem:[#allocation2 + $0x6c] sm:$0xf]
      %v1062 = vld [vmem:[#allocation2 + $0x70] sm:$0xf]
      %v1063 = vld [vmem:[#allocation2 + $0x78] sm:$0xf]
      %v1064 = vld [vmem:[#allocation2 + $0x7c] sm:$0xf]
      %v1065 = vld [vmem:[#allocation2 + $0x84] sm:$0xf]
      %v1066 = vld [vmem:[#allocation2 + $0x88] sm:$0xf]
      %v1067 = vld [vmem:[#allocation2 + $0x90] sm:$0xf]
      %v1068 = vld [vmem:[#allocation2 + $0x94] sm:$0xf]
      %v1069 = vld [vmem:[#allocation2 + $0x9c] sm:$0xf]
      %v1070 = vld [vmem:[#allocation2 + $0xa0] sm:$0xf]
      %v1071 = vld [vmem:[#allocation2 + $0xa8] sm:$0xf]
      %v1072 = vld [vmem:[#allocation2 + $0xac] sm:$0xf]
      %v1073 = vld [vmem:[#allocation2 + $0xb4] sm:$0xf]
      %v1074 = vld [vmem:[#allocation2 + $0xb8] sm:$0xf]
      %v1107 = vunpack.c.l.b16 %v1043
      %v1108 = vunpack.c.l.b16 %v1044
      %v1109 = vunpack.c.l.b16 %v1045
      %v1110 = vunpack.c.l.b16 %v1046
      %v1111 = vunpack.c.l.b16 %v1047
      %v1112 = vunpack.c.l.b16 %v1048
      %v1113 = vunpack.c.l.b16 %v1049
      %v1114 = vunpack.c.l.b16 %v1050
      %v1115 = vunpack.c.l.b16 %v1051
      %v1116 = vunpack.c.l.b16 %v1052
      %v1117 = vunpack.c.l.b16 %v1053
      %v1118 = vunpack.c.l.b16 %v1054
      %v1119 = vunpack.c.l.b16 %v1055
      %v1120 = vunpack.c.l.b16 %v1056
      %v1121 = vunpack.c.l.b16 %v1057
      %v1122 = vunpack.c.l.b16 %v1058
      %v1123 = vunpack.c.l.b16 %v1059
      %v1124 = vunpack.c.l.b16 %v1060
      %v1125 = vunpack.c.l.b16 %v1061
      %v1126 = vunpack.c.l.b16 %v1062
      %v1127 = vunpack.c.l.b16 %v1063
      %v1128 = vunpack.c.l.b16 %v1064
      %v1129 = vunpack.c.l.b16 %v1065
      %v1130 = vunpack.c.l.b16 %v1066
      %v1131 = vunpack.c.l.b16 %v1067
      %v1132 = vunpack.c.l.b16 %v1068
      %v1133 = vunpack.c.l.b16 %v1069
      %v1134 = vunpack.c.l.b16 %v1070
      %v1135 = vunpack.c.l.b16 %v1071
      %v1136 = vunpack.c.l.b16 %v1072
      %v1137 = vunpack.c.l.b16 %v1073
      %v1138 = vunpack.c.l.b16 %v1074
      %v1139 = vpack.c.b16 %v1108, %v1107
      %v1140 = vpack.c.b16 %v1110, %v1109
      %v1141 = vpack.c.b16 %v1112, %v1111
      %v1142 = vpack.c.b16 %v1114, %v1113
      %v1143 = vpack.c.b16 %v1116, %v1115
      %v1144 = vpack.c.b16 %v1118, %v1117
      %v1145 = vpack.c.b16 %v1120, %v1119
      %v1146 = vpack.c.b16 %v1122, %v1121
      %v1147 = vpack.c.b16 %v1124, %v1123
      %v1148 = vpack.c.b16 %v1126, %v1125
      %v1149 = vpack.c.b16 %v1128, %v1127
      %v1150 = vpack.c.b16 %v1130, %v1129
      %v1151 = vpack.c.b16 %v1132, %v1131
      %v1152 = vpack.c.b16 %v1134, %v1133
      %v1153 = vpack.c.b16 %v1136, %v1135
      %v1154 = vpack.c.b16 %v1138, %v1137
      %vm1171 = vcmask 31744
      %1172 = vst.msk [vmem:[#allocation3] sm:$0xff] %vm1171, %v1139
      %1173 = vst.msk [vmem:[#allocation3 + $0x8] sm:$0xff] %vm1171, %v1140
      %1174 = vst.msk [vmem:[#allocation3 + $0x10] sm:$0xff] %vm1171, %v1141
      %1175 = vst.msk [vmem:[#allocation3 + $0x18] sm:$0xff] %vm1171, %v1142
      %1176 = vst.msk [vmem:[#allocation3 + $0x20] sm:$0xff] %vm1171, %v1143
      %1177 = vst.msk [vmem:[#allocation3 + $0x28] sm:$0xff] %vm1171, %v1144
      %1178 = vst.msk [vmem:[#allocation3 + $0x30] sm:$0xff] %vm1171, %v1145
      %1179 = vst.msk [vmem:[#allocation3 + $0x38] sm:$0xff] %vm1171, %v1146
      %1180 = vst.msk [vmem:[#allocation3 + $0x40] sm:$0xff] %vm1171, %v1147
      %1181 = vst.msk [vmem:[#allocation3 + $0x48] sm:$0xff] %vm1171, %v1148
      %1182 = vst.msk [vmem:[#allocation3 + $0x50] sm:$0xff] %vm1171, %v1149
      %1183 = vst.msk [vmem:[#allocation3 + $0x58] sm:$0xff] %vm1171, %v1150
      %1184 = vst.msk [vmem:[#allocation3 + $0x60] sm:$0xff] %vm1171, %v1151
      %1185 = vst.msk [vmem:[#allocation3 + $0x68] sm:$0xff] %vm1171, %v1152
      %1186 = vst.msk [vmem:[#allocation3 + $0x70] sm:$0xff] %vm1171, %v1153
      %1187 = vst.msk [vmem:[#allocation3 + $0x78] sm:$0xff] %vm1171, %v1154
      %v1188 = vld [vmem:[#allocation2] sm:$0xf]
      %v1189 = vld [vmem:[#allocation2 + $0x4] sm:$0xf]
      %v1190 = vld [vmem:[#allocation2 + $0x8] sm:$0x1]
      %v1191 = vld [vmem:[#allocation2 + $0xc] sm:$0xf]
      %v1192 = vld [vmem:[#allocation2 + $0x10] sm:$0xf]
      %v1193 = vld [vmem:[#allocation2 + $0x14] sm:$0x1]
      %v1194 = vld [vmem:[#allocation2 + $0x18] sm:$0xf]
      %v1195 = vld [vmem:[#allocation2 + $0x1c] sm:$0xf]
      %v1196 = vld [vmem:[#allocation2 + $0x20] sm:$0x1]
      %v1197 = vld [vmem:[#allocation2 + $0x24] sm:$0xf]
      %v1198 = vld [vmem:[#allocation2 + $0x28] sm:$0xf]
      %v1199 = vld [vmem:[#allocation2 + $0x2c] sm:$0x1]
      %v1200 = vld [vmem:[#allocation2 + $0x30] sm:$0xf]
      %v1201 = vld [vmem:[#allocation2 + $0x34] sm:$0xf]
      %v1202 = vld [vmem:[#allocation2 + $0x38] sm:$0x1]
      %v1203 = vld [vmem:[#allocation2 + $0x3c] sm:$0xf]
      %v1204 = vld [vmem:[#allocation2 + $0x40] sm:$0xf]
      %v1205 = vld [vmem:[#allocation2 + $0x44] sm:$0x1]
      %v1206 = vld [vmem:[#allocation2 + $0x48] sm:$0xf]
      %v1207 = vld [vmem:[#allocation2 + $0x4c] sm:$0xf]
      %v1208 = vld [vmem:[#allocation2 + $0x50] sm:$0x1]
      %v1209 = vld [vmem:[#allocation2 + $0x54] sm:$0xf]
      %v1210 = vld [vmem:[#allocation2 + $0x58] sm:$0xf]
      %v1211 = vld [vmem:[#allocation2 + $0x5c] sm:$0x1]
      %v1212 = vld [vmem:[#allocation2 + $0x60] sm:$0xf]
      %v1213 = vld [vmem:[#allocation2 + $0x64] sm:$0xf]
      %v1214 = vld [vmem:[#allocation2 + $0x68] sm:$0x1]
      %v1215 = vld [vmem:[#allocation2 + $0x6c] sm:$0xf]
      %v1216 = vld [vmem:[#allocation2 + $0x70] sm:$0xf]
      %v1217 = vld [vmem:[#allocation2 + $0x74] sm:$0x1]
      %v1218 = vld [vmem:[#allocation2 + $0x78] sm:$0xf]
      %v1219 = vld [vmem:[#allocation2 + $0x7c] sm:$0xf]
      %v1220 = vld [vmem:[#allocation2 + $0x80] sm:$0x1]
      %v1221 = vld [vmem:[#allocation2 + $0x84] sm:$0xf]
      %v1222 = vld [vmem:[#allocation2 + $0x88] sm:$0xf]
      %v1223 = vld [vmem:[#allocation2 + $0x8c] sm:$0x1]
      %v1224 = vld [vmem:[#allocation2 + $0x90] sm:$0xf]
      %v1225 = vld [vmem:[#allocation2 + $0x94] sm:$0xf]
      %v1226 = vld [vmem:[#allocation2 + $0x98] sm:$0x1]
      %v1227 = vld [vmem:[#allocation2 + $0x9c] sm:$0xf]
      %v1228 = vld [vmem:[#allocation2 + $0xa0] sm:$0xf]
      %v1229 = vld [vmem:[#allocation2 + $0xa4] sm:$0x1]
      %v1230 = vld [vmem:[#allocation2 + $0xa8] sm:$0xf]
      %v1231 = vld [vmem:[#allocation2 + $0xac] sm:$0xf]
      %v1232 = vld [vmem:[#allocation2 + $0xb0] sm:$0x1]
      %v1233 = vld [vmem:[#allocation2 + $0xb4] sm:$0xf]
      %v1234 = vld [vmem:[#allocation2 + $0xb8] sm:$0xf]
      %v1235 = vld [vmem:[#allocation2 + $0xbc] sm:$0x1]
      %v1284 = vunpack.c.l.b16 %v1188
      %v1285 = vunpack.c.l.b16 %v1189
      %v1286 = vunpack.c.l.b16 %v1190
      %v1287 = vunpack.c.l.b16 %v1191
      %v1288 = vunpack.c.l.b16 %v1192
      %v1289 = vunpack.c.l.b16 %v1193
      %v1290 = vunpack.c.l.b16 %v1194
      %v1291 = vunpack.c.l.b16 %v1195
      %v1292 = vunpack.c.l.b16 %v1196
      %v1293 = vunpack.c.l.b16 %v1197
      %v1294 = vunpack.c.l.b16 %v1198
      %v1295 = vunpack.c.l.b16 %v1199
      %v1296 = vunpack.c.l.b16 %v1200
      %v1297 = vunpack.c.l.b16 %v1201
      %v1298 = vunpack.c.l.b16 %v1202
      %v1299 = vunpack.c.l.b16 %v1203
      %v1300 = vunpack.c.l.b16 %v1204
      %v1301 = vunpack.c.l.b16 %v1205
      %v1302 = vunpack.c.l.b16 %v1206
      %v1303 = vunpack.c.l.b16 %v1207
      %v1304 = vunpack.c.l.b16 %v1208
      %v1305 = vunpack.c.l.b16 %v1209
      %v1306 = vunpack.c.l.b16 %v1210
      %v1307 = vunpack.c.l.b16 %v1211
      %v1308 = vunpack.c.l.b16 %v1212
      %v1309 = vunpack.c.l.b16 %v1213
      %v1310 = vunpack.c.l.b16 %v1214
      %v1311 = vunpack.c.l.b16 %v1215
      %v1312 = vunpack.c.l.b16 %v1216
      %v1313 = vunpack.c.l.b16 %v1217
      %v1314 = vunpack.c.l.b16 %v1218
      %v1315 = vunpack.c.l.b16 %v1219
      %v1316 = vunpack.c.l.b16 %v1220
      %v1317 = vunpack.c.l.b16 %v1221
      %v1318 = vunpack.c.l.b16 %v1222
      %v1319 = vunpack.c.l.b16 %v1223
      %v1320 = vunpack.c.l.b16 %v1224
      %v1321 = vunpack.c.l.b16 %v1225
      %v1322 = vunpack.c.l.b16 %v1226
      %v1323 = vunpack.c.l.b16 %v1227
      %v1324 = vunpack.c.l.b16 %v1228
      %v1325 = vunpack.c.l.b16 %v1229
      %v1326 = vunpack.c.l.b16 %v1230
      %v1327 = vunpack.c.l.b16 %v1231
      %v1328 = vunpack.c.l.b16 %v1232
      %v1329 = vunpack.c.l.b16 %v1233
      %v1330 = vunpack.c.l.b16 %v1234
      %v1331 = vunpack.c.l.b16 %v1235
      %v1332 = vpack.c.b16 %v1285, %v1284
      %v1333 = vpack.c.b16 %v1286, %v1286
      %v1334 = vpack.c.b16 %v1288, %v1287
      %v1335 = vpack.c.b16 %v1289, %v1289
      %v1336 = vpack.c.b16 %v1291, %v1290
      %v1337 = vpack.c.b16 %v1292, %v1292
      %v1338 = vpack.c.b16 %v1294, %v1293
      %v1339 = vpack.c.b16 %v1295, %v1295
      %v1340 = vpack.c.b16 %v1297, %v1296
      %v1341 = vpack.c.b16 %v1298, %v1298
      %v1342 = vpack.c.b16 %v1300, %v1299
      %v1343 = vpack.c.b16 %v1301, %v1301
      %v1344 = vpack.c.b16 %v1303, %v1302
      %v1345 = vpack.c.b16 %v1304, %v1304
      %v1346 = vpack.c.b16 %v1306, %v1305
      %v1347 = vpack.c.b16 %v1307, %v1307
      %v1348 = vpack.c.b16 %v1309, %v1308
      %v1349 = vpack.c.b16 %v1310, %v1310
      %v1350 = vpack.c.b16 %v1312, %v1311
      %v1351 = vpack.c.b16 %v1313, %v1313
      %v1352 = vpack.c.b16 %v1315, %v1314
      %v1353 = vpack.c.b16 %v1316, %v1316
      %v1354 = vpack.c.b16 %v1318, %v1317
      %v1355 = vpack.c.b16 %v1319, %v1319
      %v1356 = vpack.c.b16 %v1321, %v1320
      %v1357 = vpack.c.b16 %v1322, %v1322
      %v1358 = vpack.c.b16 %v1324, %v1323
      %v1359 = vpack.c.b16 %v1325, %v1325
      %v1360 = vpack.c.b16 %v1327, %v1326
      %v1361 = vpack.c.b16 %v1328, %v1328
      %v1362 = vpack.c.b16 %v1330, %v1329
      %v1363 = vpack.c.b16 %v1331, %v1331
      %vm1364 = vsmask.f32 7424
      %v1366 = vshrl.u32 %v1332, 16
      %v1368 = vshll.u32 %v1332, 16
      %v1370 = vrot.slane %v1368, 1
      %v1371 = vor.u32 %v1366, %v1370
      %v1373 = vshll.u32 %v1333, 16
      %v1375 = vrot.slane %v1373, 1
      %v1376 = vsel %vm1364, %v1371, %v1375
      %v1378 = vshrl.u32 %v1334, 16
      %v1380 = vshll.u32 %v1334, 16
      %v1382 = vrot.slane %v1380, 1
      %v1383 = vor.u32 %v1378, %v1382
      %v1385 = vshll.u32 %v1335, 16
      %v1387 = vrot.slane %v1385, 1
      %v1388 = vsel %vm1364, %v1383, %v1387
      %v1390 = vshrl.u32 %v1336, 16
      %v1392 = vshll.u32 %v1336, 16
      %v1394 = vrot.slane %v1392, 1
      %v1395 = vor.u32 %v1390, %v1394
      %v1397 = vshll.u32 %v1337, 16
      %v1399 = vrot.slane %v1397, 1
      %v1400 = vsel %vm1364, %v1395, %v1399
      %v1402 = vshrl.u32 %v1338, 16
      %v1404 = vshll.u32 %v1338, 16
      %v1406 = vrot.slane %v1404, 1
      %v1407 = vor.u32 %v1402, %v1406
      %v1409 = vshll.u32 %v1339, 16
      %v1411 = vrot.slane %v1409, 1
      %v1412 = vsel %vm1364, %v1407, %v1411
      %v1414 = vshrl.u32 %v1340, 16
      %v1416 = vshll.u32 %v1340, 16
      %v1418 = vrot.slane %v1416, 1
      %v1419 = vor.u32 %v1414, %v1418
      %v1421 = vshll.u32 %v1341, 16
      %v1423 = vrot.slane %v1421, 1
      %v1424 = vsel %vm1364, %v1419, %v1423
      %v1426 = vshrl.u32 %v1342, 16
      %v1428 = vshll.u32 %v1342, 16
      %v1430 = vrot.slane %v1428, 1
      %v1431 = vor.u32 %v1426, %v1430
      %v1433 = vshll.u32 %v1343, 16
      %v1435 = vrot.slane %v1433, 1
      %v1436 = vsel %vm1364, %v1431, %v1435
      %v1438 = vshrl.u32 %v1344, 16
      %v1440 = vshll.u32 %v1344, 16
      %v1442 = vrot.slane %v1440, 1
      %v1443 = vor.u32 %v1438, %v1442
      %v1445 = vshll.u32 %v1345, 16
      %v1447 = vrot.slane %v1445, 1
      %v1448 = vsel %vm1364, %v1443, %v1447
      %v1450 = vshrl.u32 %v1346, 16
      %v1452 = vshll.u32 %v1346, 16
      %v1454 = vrot.slane %v1452, 1
      %v1455 = vor.u32 %v1450, %v1454
      %v1457 = vshll.u32 %v1347, 16
      %v1459 = vrot.slane %v1457, 1
      %v1460 = vsel %vm1364, %v1455, %v1459
      %v1462 = vshrl.u32 %v1348, 16
      %v1464 = vshll.u32 %v1348, 16
      %v1466 = vrot.slane %v1464, 1
      %v1467 = vor.u32 %v1462, %v1466
      %v1469 = vshll.u32 %v1349, 16
      %v1471 = vrot.slane %v1469, 1
      %v1472 = vsel %vm1364, %v1467, %v1471
      %v1474 = vshrl.u32 %v1350, 16
      %v1476 = vshll.u32 %v1350, 16
      %v1478 = vrot.slane %v1476, 1
      %v1479 = vor.u32 %v1474, %v1478
      %v1481 = vshll.u32 %v1351, 16
      %v1483 = vrot.slane %v1481, 1
      %v1484 = vsel %vm1364, %v1479, %v1483
      %v1486 = vshrl.u32 %v1352, 16
      %v1488 = vshll.u32 %v1352, 16
      %v1490 = vrot.slane %v1488, 1
      %v1491 = vor.u32 %v1486, %v1490
      %v1493 = vshll.u32 %v1353, 16
      %v1495 = vrot.slane %v1493, 1
      %v1496 = vsel %vm1364, %v1491, %v1495
      %v1498 = vshrl.u32 %v1354, 16
      %v1500 = vshll.u32 %v1354, 16
      %v1502 = vrot.slane %v1500, 1
      %v1503 = vor.u32 %v1498, %v1502
      %v1505 = vshll.u32 %v1355, 16
      %v1507 = vrot.slane %v1505, 1
      %v1508 = vsel %vm1364, %v1503, %v1507
      %v1510 = vshrl.u32 %v1356, 16
      %v1512 = vshll.u32 %v1356, 16
      %v1514 = vrot.slane %v1512, 1
      %v1515 = vor.u32 %v1510, %v1514
      %v1517 = vshll.u32 %v1357, 16
      %v1519 = vrot.slane %v1517, 1
      %v1520 = vsel %vm1364, %v1515, %v1519
      %v1522 = vshrl.u32 %v1358, 16
      %v1524 = vshll.u32 %v1358, 16
      %v1526 = vrot.slane %v1524, 1
      %v1527 = vor.u32 %v1522, %v1526
      %v1529 = vshll.u32 %v1359, 16
      %v1531 = vrot.slane %v1529, 1
      %v1532 = vsel %vm1364, %v1527, %v1531
      %v1534 = vshrl.u32 %v1360, 16
      %v1536 = vshll.u32 %v1360, 16
      %v1538 = vrot.slane %v1536, 1
      %v1539 = vor.u32 %v1534, %v1538
      %v1541 = vshll.u32 %v1361, 16
      %v1543 = vrot.slane %v1541, 1
      %v1544 = vsel %vm1364, %v1539, %v1543
      %v1546 = vshrl.u32 %v1362, 16
      %v1548 = vshll.u32 %v1362, 16
      %v1550 = vrot.slane %v1548, 1
      %v1551 = vor.u32 %v1546, %v1550
      %v1553 = vshll.u32 %v1363, 16
      %v1555 = vrot.slane %v1553, 1
      %v1556 = vsel %vm1364, %v1551, %v1555
      %1557 = vrot.lane.b32.xlu0 %v1376, 4
      %v1558 = vpop.permute.xlu0 %1557
      %1559 = vrot.lane.b32.xlu0 %v1388, 4
      %v1560 = vpop.permute.xlu0 %1559
      %1561 = vrot.lane.b32.xlu0 %v1400, 4
      %v1562 = vpop.permute.xlu0 %1561
      %1563 = vrot.lane.b32.xlu0 %v1412, 4
      %v1564 = vpop.permute.xlu0 %1563
      %1565 = vrot.lane.b32.xlu0 %v1424, 4
      %v1566 = vpop.permute.xlu0 %1565
      %1567 = vrot.lane.b32.xlu0 %v1436, 4
      %v1568 = vpop.permute.xlu0 %1567
      %1569 = vrot.lane.b32.xlu0 %v1448, 4
      %v1570 = vpop.permute.xlu0 %1569
      %1571 = vrot.lane.b32.xlu0 %v1460, 4
      %v1572 = vpop.permute.xlu0 %1571
      %1573 = vrot.lane.b32.xlu0 %v1472, 4
      %v1574 = vpop.permute.xlu0 %1573
      %1575 = vrot.lane.b32.xlu0 %v1484, 4
      %v1576 = vpop.permute.xlu0 %1575
      %1577 = vrot.lane.b32.xlu0 %v1496, 4
      %v1578 = vpop.permute.xlu0 %1577
      %1579 = vrot.lane.b32.xlu0 %v1508, 4
      %v1580 = vpop.permute.xlu0 %1579
      %1581 = vrot.lane.b32.xlu0 %v1520, 4
      %v1582 = vpop.permute.xlu0 %1581
      %1583 = vrot.lane.b32.xlu0 %v1532, 4
      %v1584 = vpop.permute.xlu0 %1583
      %1585 = vrot.lane.b32.xlu0 %v1544, 4
      %v1586 = vpop.permute.xlu0 %1585
      %1587 = vrot.lane.b32.xlu0 %v1556, 4
      %v1588 = vpop.permute.xlu0 %1587
      %vm1605 = vcmask 64544
      %1606 = vst.msk [vmem:[#allocation3] sm:$0xff] %vm1605, %v1558
      %1607 = vst.msk [vmem:[#allocation3 + $0x8] sm:$0xff] %vm1605, %v1560
      %1608 = vst.msk [vmem:[#allocation3 + $0x10] sm:$0xff] %vm1605, %v1562
      %1609 = vst.msk [vmem:[#allocation3 + $0x18] sm:$0xff] %vm1605, %v1564
      %1610 = vst.msk [vmem:[#allocation3 + $0x20] sm:$0xff] %vm1605, %v1566
      %1611 = vst.msk [vmem:[#allocation3 + $0x28] sm:$0xff] %vm1605, %v1568
      %1612 = vst.msk [vmem:[#allocation3 + $0x30] sm:$0xff] %vm1605, %v1570
      %1613 = vst.msk [vmem:[#allocation3 + $0x38] sm:$0xff] %vm1605, %v1572
      %1614 = vst.msk [vmem:[#allocation3 + $0x40] sm:$0xff] %vm1605, %v1574
      %1615 = vst.msk [vmem:[#allocation3 + $0x48] sm:$0xff] %vm1605, %v1576
      %1616 = vst.msk [vmem:[#allocation3 + $0x50] sm:$0xff] %vm1605, %v1578
      %1617 = vst.msk [vmem:[#allocation3 + $0x58] sm:$0xff] %vm1605, %v1580
      %1618 = vst.msk [vmem:[#allocation3 + $0x60] sm:$0xff] %vm1605, %v1582
      %1619 = vst.msk [vmem:[#allocation3 + $0x68] sm:$0xff] %vm1605, %v1584
      %1620 = vst.msk [vmem:[#allocation3 + $0x70] sm:$0xff] %vm1605, %v1586
      %1621 = vst.msk [vmem:[#allocation3 + $0x78] sm:$0xff] %vm1605, %v1588
      %v1622 = vld [vmem:[#allocation2] sm:$0xe]
      %v1623 = vld [vmem:[#allocation2 + $0x4] sm:$0xf]
      %v1624 = vld [vmem:[#allocation2 + $0x8] sm:$0x1]
      %v1625 = vld [vmem:[#allocation2 + $0xc] sm:$0xe]
      %v1626 = vld [vmem:[#allocation2 + $0x10] sm:$0xf]
      %v1627 = vld [vmem:[#allocation2 + $0x14] sm:$0x1]
      %v1628 = vld [vmem:[#allocation2 + $0x18] sm:$0xe]
      %v1629 = vld [vmem:[#allocation2 + $0x1c] sm:$0xf]
      %v1630 = vld [vmem:[#allocation2 + $0x20] sm:$0x1]
      %v1631 = vld [vmem:[#allocation2 + $0x24] sm:$0xe]
      %v1632 = vld [vmem:[#allocation2 + $0x28] sm:$0xf]
      %v1633 = vld [vmem:[#allocation2 + $0x2c] sm:$0x1]
      %v1634 = vld [vmem:[#allocation2 + $0x30] sm:$0xe]
      %v1635 = vld [vmem:[#allocation2 + $0x34] sm:$0xf]
      %v1636 = vld [vmem:[#allocation2 + $0x38] sm:$0x1]
      %v1637 = vld [vmem:[#allocation2 + $0x3c] sm:$0xe]
      %v1638 = vld [vmem:[#allocation2 + $0x40] sm:$0xf]
      %v1639 = vld [vmem:[#allocation2 + $0x44] sm:$0x1]
      %v1640 = vld [vmem:[#allocation2 + $0x48] sm:$0xe]
      %v1641 = vld [vmem:[#allocation2 + $0x4c] sm:$0xf]
      %v1642 = vld [vmem:[#allocation2 + $0x50] sm:$0x1]
      %v1643 = vld [vmem:[#allocation2 + $0x54] sm:$0xe]
      %v1644 = vld [vmem:[#allocation2 + $0x58] sm:$0xf]
      %v1645 = vld [vmem:[#allocation2 + $0x5c] sm:$0x1]
      %v1646 = vld [vmem:[#allocation2 + $0x60] sm:$0xe]
      %v1647 = vld [vmem:[#allocation2 + $0x64] sm:$0xf]
      %v1648 = vld [vmem:[#allocation2 + $0x68] sm:$0x1]
      %v1649 = vld [vmem:[#allocation2 + $0x6c] sm:$0xe]
      %v1650 = vld [vmem:[#allocation2 + $0x70] sm:$0xf]
      %v1651 = vld [vmem:[#allocation2 + $0x74] sm:$0x1]
      %v1652 = vld [vmem:[#allocation2 + $0x78] sm:$0xe]
      %v1653 = vld [vmem:[#allocation2 + $0x7c] sm:$0xf]
      %v1654 = vld [vmem:[#allocation2 + $0x80] sm:$0x1]
      %v1655 = vld [vmem:[#allocation2 + $0x84] sm:$0xe]
      %v1656 = vld [vmem:[#allocation2 + $0x88] sm:$0xf]
      %v1657 = vld [vmem:[#allocation2 + $0x8c] sm:$0x1]
      %v1658 = vld [vmem:[#allocation2 + $0x90] sm:$0xe]
      %v1659 = vld [vmem:[#allocation2 + $0x94] sm:$0xf]
      %v1660 = vld [vmem:[#allocation2 + $0x98] sm:$0x1]
      %v1661 = vld [vmem:[#allocation2 + $0x9c] sm:$0xe]
      %v1662 = vld [vmem:[#allocation2 + $0xa0] sm:$0xf]
      %v1663 = vld [vmem:[#allocation2 + $0xa4] sm:$0x1]
      %v1664 = vld [vmem:[#allocation2 + $0xa8] sm:$0xe]
      %v1665 = vld [vmem:[#allocation2 + $0xac] sm:$0xf]
      %v1666 = vld [vmem:[#allocation2 + $0xb0] sm:$0x1]
      %v1667 = vld [vmem:[#allocation2 + $0xb4] sm:$0xe]
      %v1668 = vld [vmem:[#allocation2 + $0xb8] sm:$0xf]
      %v1669 = vld [vmem:[#allocation2 + $0xbc] sm:$0x1]
      %v1718 = vunpack.c.l.b16 %v1622
      %v1719 = vunpack.c.l.b16 %v1623
      %v1720 = vunpack.c.l.b16 %v1624
      %v1721 = vunpack.c.l.b16 %v1625
      %v1722 = vunpack.c.l.b16 %v1626
      %v1723 = vunpack.c.l.b16 %v1627
      %v1724 = vunpack.c.l.b16 %v1628
      %v1725 = vunpack.c.l.b16 %v1629
      %v1726 = vunpack.c.l.b16 %v1630
      %v1727 = vunpack.c.l.b16 %v1631
      %v1728 = vunpack.c.l.b16 %v1632
      %v1729 = vunpack.c.l.b16 %v1633
      %v1730 = vunpack.c.l.b16 %v1634
      %v1731 = vunpack.c.l.b16 %v1635
      %v1732 = vunpack.c.l.b16 %v1636
      %v1733 = vunpack.c.l.b16 %v1637
      %v1734 = vunpack.c.l.b16 %v1638
      %v1735 = vunpack.c.l.b16 %v1639
      %v1736 = vunpack.c.l.b16 %v1640
      %v1737 = vunpack.c.l.b16 %v1641
      %v1738 = vunpack.c.l.b16 %v1642
      %v1739 = vunpack.c.l.b16 %v1643
      %v1740 = vunpack.c.l.b16 %v1644
      %v1741 = vunpack.c.l.b16 %v1645
      %v1742 = vunpack.c.l.b16 %v1646
      %v1743 = vunpack.c.l.b16 %v1647
      %v1744 = vunpack.c.l.b16 %v1648
      %v1745 = vunpack.c.l.b16 %v1649
      %v1746 = vunpack.c.l.b16 %v1650
      %v1747 = vunpack.c.l.b16 %v1651
      %v1748 = vunpack.c.l.b16 %v1652
      %v1749 = vunpack.c.l.b16 %v1653
      %v1750 = vunpack.c.l.b16 %v1654
      %v1751 = vunpack.c.l.b16 %v1655
      %v1752 = vunpack.c.l.b16 %v1656
      %v1753 = vunpack.c.l.b16 %v1657
      %v1754 = vunpack.c.l.b16 %v1658
      %v1755 = vunpack.c.l.b16 %v1659
      %v1756 = vunpack.c.l.b16 %v1660
      %v1757 = vunpack.c.l.b16 %v1661
      %v1758 = vunpack.c.l.b16 %v1662
      %v1759 = vunpack.c.l.b16 %v1663
      %v1760 = vunpack.c.l.b16 %v1664
      %v1761 = vunpack.c.l.b16 %v1665
      %v1762 = vunpack.c.l.b16 %v1666
      %v1763 = vunpack.c.l.b16 %v1667
      %v1764 = vunpack.c.l.b16 %v1668
      %v1765 = vunpack.c.l.b16 %v1669
      %v1766 = vpack.c.b16 %v1719, %v1718
      %v1767 = vpack.c.b16 %v1720, %v1720
      %v1768 = vpack.c.b16 %v1722, %v1721
      %v1769 = vpack.c.b16 %v1723, %v1723
      %v1770 = vpack.c.b16 %v1725, %v1724
      %v1771 = vpack.c.b16 %v1726, %v1726
      %v1772 = vpack.c.b16 %v1728, %v1727
      %v1773 = vpack.c.b16 %v1729, %v1729
      %v1774 = vpack.c.b16 %v1731, %v1730
      %v1775 = vpack.c.b16 %v1732, %v1732
      %v1776 = vpack.c.b16 %v1734, %v1733
      %v1777 = vpack.c.b16 %v1735, %v1735
      %v1778 = vpack.c.b16 %v1737, %v1736
      %v1779 = vpack.c.b16 %v1738, %v1738
      %v1780 = vpack.c.b16 %v1740, %v1739
      %v1781 = vpack.c.b16 %v1741, %v1741
      %v1782 = vpack.c.b16 %v1743, %v1742
      %v1783 = vpack.c.b16 %v1744, %v1744
      %v1784 = vpack.c.b16 %v1746, %v1745
      %v1785 = vpack.c.b16 %v1747, %v1747
      %v1786 = vpack.c.b16 %v1749, %v1748
      %v1787 = vpack.c.b16 %v1750, %v1750
      %v1788 = vpack.c.b16 %v1752, %v1751
      %v1789 = vpack.c.b16 %v1753, %v1753
      %v1790 = vpack.c.b16 %v1755, %v1754
      %v1791 = vpack.c.b16 %v1756, %v1756
      %v1792 = vpack.c.b16 %v1758, %v1757
      %v1793 = vpack.c.b16 %v1759, %v1759
      %v1794 = vpack.c.b16 %v1761, %v1760
      %v1795 = vpack.c.b16 %v1762, %v1762
      %v1796 = vpack.c.b16 %v1764, %v1763
      %v1797 = vpack.c.b16 %v1765, %v1765
      %vm1798 = vcmask 1046528
      %v1799 = vrot.slane %v1766, 1
      %v1800 = vrot.slane %v1767, 1
      %v1801 = vsel %vm1798, %v1799, %v1800
      %v1802 = vrot.slane %v1768, 1
      %v1803 = vrot.slane %v1769, 1
      %v1804 = vsel %vm1798, %v1802, %v1803
      %v1805 = vrot.slane %v1770, 1
      %v1806 = vrot.slane %v1771, 1
      %v1807 = vsel %vm1798, %v1805, %v1806
      %v1808 = vrot.slane %v1772, 1
      %v1809 = vrot.slane %v1773, 1
      %v1810 = vsel %vm1798, %v1808, %v1809
      %v1811 = vrot.slane %v1774, 1
      %v1812 = vrot.slane %v1775, 1
      %v1813 = vsel %vm1798, %v1811, %v1812
      %v1814 = vrot.slane %v1776, 1
      %v1815 = vrot.slane %v1777, 1
      %v1816 = vsel %vm1798, %v1814, %v1815
      %v1817 = vrot.slane %v1778, 1
      %v1818 = vrot.slane %v1779, 1
      %v1819 = vsel %vm1798, %v1817, %v1818
      %v1820 = vrot.slane %v1780, 1
      %v1821 = vrot.slane %v1781, 1
      %v1822 = vsel %vm1798, %v1820, %v1821
      %v1823 = vrot.slane %v1782, 1
      %v1824 = vrot.slane %v1783, 1
      %v1825 = vsel %vm1798, %v1823, %v1824
      %v1826 = vrot.slane %v1784, 1
      %v1827 = vrot.slane %v1785, 1
      %v1828 = vsel %vm1798, %v1826, %v1827
      %v1829 = vrot.slane %v1786, 1
      %v1830 = vrot.slane %v1787, 1
      %v1831 = vsel %vm1798, %v1829, %v1830
      %v1832 = vrot.slane %v1788, 1
      %v1833 = vrot.slane %v1789, 1
      %v1834 = vsel %vm1798, %v1832, %v1833
      %v1835 = vrot.slane %v1790, 1
      %v1836 = vrot.slane %v1791, 1
      %v1837 = vsel %vm1798, %v1835, %v1836
      %v1838 = vrot.slane %v1792, 1
      %v1839 = vrot.slane %v1793, 1
      %v1840 = vsel %vm1798, %v1838, %v1839
      %v1841 = vrot.slane %v1794, 1
      %v1842 = vrot.slane %v1795, 1
      %v1843 = vsel %vm1798, %v1841, %v1842
      %v1844 = vrot.slane %v1796, 1
      %v1845 = vrot.slane %v1797, 1
      %v1846 = vsel %vm1798, %v1844, %v1845
      %1847 = vrot.lane.b32.xlu0 %v1801, 8
      %v1848 = vpop.permute.xlu0 %1847
      %1849 = vrot.lane.b32.xlu0 %v1804, 8
      %v1850 = vpop.permute.xlu0 %1849
      %1851 = vrot.lane.b32.xlu0 %v1807, 8
      %v1852 = vpop.permute.xlu0 %1851
      %1853 = vrot.lane.b32.xlu0 %v1810, 8
      %v1854 = vpop.permute.xlu0 %1853
      %1855 = vrot.lane.b32.xlu0 %v1813, 8
      %v1856 = vpop.permute.xlu0 %1855
      %1857 = vrot.lane.b32.xlu0 %v1816, 8
      %v1858 = vpop.permute.xlu0 %1857
      %1859 = vrot.lane.b32.xlu0 %v1819, 8
      %v1860 = vpop.permute.xlu0 %1859
      %1861 = vrot.lane.b32.xlu0 %v1822, 8
      %v1862 = vpop.permute.xlu0 %1861
      %1863 = vrot.lane.b32.xlu0 %v1825, 8
      %v1864 = vpop.permute.xlu0 %1863
      %1865 = vrot.lane.b32.xlu0 %v1828, 8
      %v1866 = vpop.permute.xlu0 %1865
      %1867 = vrot.lane.b32.xlu0 %v1831, 8
      %v1868 = vpop.permute.xlu0 %1867
      %1869 = vrot.lane.b32.xlu0 %v1834, 8
      %v1870 = vpop.permute.xlu0 %1869
      %1871 = vrot.lane.b32.xlu0 %v1837, 8
      %v1872 = vpop.permute.xlu0 %1871
      %1873 = vrot.lane.b32.xlu0 %v1840, 8
      %v1874 = vpop.permute.xlu0 %1873
      %1875 = vrot.lane.b32.xlu0 %v1843, 8
      %v1876 = vpop.permute.xlu0 %1875
      %1877 = vrot.lane.b32.xlu0 %v1846, 8
      %v1878 = vpop.permute.xlu0 %1877
      %vm1895 = vcmask 97344
      %1896 = vst.msk [vmem:[#allocation3] sm:$0xff] %vm1895, %v1848
      %1897 = vst.msk [vmem:[#allocation3 + $0x8] sm:$0xff] %vm1895, %v1850
      %1898 = vst.msk [vmem:[#allocation3 + $0x10] sm:$0xff] %vm1895, %v1852
      %1899 = vst.msk [vmem:[#allocation3 + $0x18] sm:$0xff] %vm1895, %v1854
      %1900 = vst.msk [vmem:[#allocation3 + $0x20] sm:$0xff] %vm1895, %v1856
      %1901 = vst.msk [vmem:[#allocation3 + $0x28] sm:$0xff] %vm1895, %v1858
      %1902 = vst.msk [vmem:[#allocation3 + $0x30] sm:$0xff] %vm1895, %v1860
      %1903 = vst.msk [vmem:[#allocation3 + $0x38] sm:$0xff] %vm1895, %v1862
      %1904 = vst.msk [vmem:[#allocation3 + $0x40] sm:$0xff] %vm1895, %v1864
      %1905 = vst.msk [vmem:[#allocation3 + $0x48] sm:$0xff] %vm1895, %v1866
      %1906 = vst.msk [vmem:[#allocation3 + $0x50] sm:$0xff] %vm1895, %v1868
      %1907 = vst.msk [vmem:[#allocation3 + $0x58] sm:$0xff] %vm1895, %v1870
      %1908 = vst.msk [vmem:[#allocation3 + $0x60] sm:$0xff] %vm1895, %v1872
      %1909 = vst.msk [vmem:[#allocation3 + $0x68] sm:$0xff] %vm1895, %v1874
      %1910 = vst.msk [vmem:[#allocation3 + $0x70] sm:$0xff] %vm1895, %v1876
      %1911 = vst.msk [vmem:[#allocation3 + $0x78] sm:$0xff] %vm1895, %v1878
      %v1912 = vld [vmem:[%s928] sm:$0xf]
      %v1913 = vld [vmem:[%s928 + $0x4] sm:$0xf]
      %v1914 = vld [vmem:[%s928 + $0xc] sm:$0xf]
      %v1915 = vld [vmem:[%s928 + $0x10] sm:$0xf]
      %v1916 = vld [vmem:[%s928 + $0x18] sm:$0xf]
      %v1917 = vld [vmem:[%s928 + $0x1c] sm:$0xf]
      %v1918 = vld [vmem:[%s928 + $0x24] sm:$0xf]
      %v1919 = vld [vmem:[%s928 + $0x28] sm:$0xf]
      %v1920 = vld [vmem:[%s928 + $0x30] sm:$0xf]
      %v1921 = vld [vmem:[%s928 + $0x34] sm:$0xf]
      %v1922 = vld [vmem:[%s928 + $0x3c] sm:$0xf]
      %v1923 = vld [vmem:[%s928 + $0x40] sm:$0xf]
      %v1924 = vld [vmem:[%s928 + $0x48] sm:$0xf]
      %v1925 = vld [vmem:[%s928 + $0x4c] sm:$0xf]
      %v1926 = vld [vmem:[%s928 + $0x54] sm:$0xf]
      %v1927 = vld [vmem:[%s928 + $0x58] sm:$0xf]
      %v1928 = vld [vmem:[%s928 + $0x60] sm:$0xf]
      %v1929 = vld [vmem:[%s928 + $0x64] sm:$0xf]
      %v1930 = vld [vmem:[%s928 + $0x6c] sm:$0xf]
      %v1931 = vld [vmem:[%s928 + $0x70] sm:$0xf]
      %v1932 = vld [vmem:[%s928 + $0x78] sm:$0xf]
      %v1933 = vld [vmem:[%s928 + $0x7c] sm:$0xf]
      %v1934 = vld [vmem:[%s928 + $0x84] sm:$0xf]
      %v1935 = vld [vmem:[%s928 + $0x88] sm:$0xf]
      %v1936 = vld [vmem:[%s928 + $0x90] sm:$0xf]
      %v1937 = vld [vmem:[%s928 + $0x94] sm:$0xf]
      %v1938 = vld [vmem:[%s928 + $0x9c] sm:$0xf]
      %v1939 = vld [vmem:[%s928 + $0xa0] sm:$0xf]
      %v1940 = vld [vmem:[%s928 + $0xa8] sm:$0xf]
      %v1941 = vld [vmem:[%s928 + $0xac] sm:$0xf]
      %v1942 = vld [vmem:[%s928 + $0xb4] sm:$0xf]
      %v1943 = vld [vmem:[%s928 + $0xb8] sm:$0xf]
      %v1976 = vunpack.c.l.b16 %v1912
      %v1977 = vunpack.c.l.b16 %v1913
      %v1978 = vunpack.c.l.b16 %v1914
      %v1979 = vunpack.c.l.b16 %v1915
      %v1980 = vunpack.c.l.b16 %v1916
      %v1981 = vunpack.c.l.b16 %v1917
      %v1982 = vunpack.c.l.b16 %v1918
      %v1983 = vunpack.c.l.b16 %v1919
      %v1984 = vunpack.c.l.b16 %v1920
      %v1985 = vunpack.c.l.b16 %v1921
      %v1986 = vunpack.c.l.b16 %v1922
      %v1987 = vunpack.c.l.b16 %v1923
      %v1988 = vunpack.c.l.b16 %v1924
      %v1989 = vunpack.c.l.b16 %v1925
      %v1990 = vunpack.c.l.b16 %v1926
      %v1991 = vunpack.c.l.b16 %v1927
      %v1992 = vunpack.c.l.b16 %v1928
      %v1993 = vunpack.c.l.b16 %v1929
      %v1994 = vunpack.c.l.b16 %v1930
      %v1995 = vunpack.c.l.b16 %v1931
      %v1996 = vunpack.c.l.b16 %v1932
      %v1997 = vunpack.c.l.b16 %v1933
      %v1998 = vunpack.c.l.b16 %v1934
      %v1999 = vunpack.c.l.b16 %v1935
      %v2000 = vunpack.c.l.b16 %v1936
      %v2001 = vunpack.c.l.b16 %v1937
      %v2002 = vunpack.c.l.b16 %v1938
      %v2003 = vunpack.c.l.b16 %v1939
      %v2004 = vunpack.c.l.b16 %v1940
      %v2005 = vunpack.c.l.b16 %v1941
      %v2006 = vunpack.c.l.b16 %v1942
      %v2007 = vunpack.c.l.b16 %v1943
      %v2008 = vpack.c.b16 %v1977, %v1976
      %v2009 = vpack.c.b16 %v1979, %v1978
      %v2010 = vpack.c.b16 %v1981, %v1980
      %v2011 = vpack.c.b16 %v1983, %v1982
      %v2012 = vpack.c.b16 %v1985, %v1984
      %v2013 = vpack.c.b16 %v1987, %v1986
      %v2014 = vpack.c.b16 %v1989, %v1988
      %v2015 = vpack.c.b16 %v1991, %v1990
      %v2016 = vpack.c.b16 %v1993, %v1992
      %v2017 = vpack.c.b16 %v1995, %v1994
      %v2018 = vpack.c.b16 %v1997, %v1996
      %v2019 = vpack.c.b16 %v1999, %v1998
      %v2020 = vpack.c.b16 %v2001, %v2000
      %v2021 = vpack.c.b16 %v2003, %v2002
      %v2022 = vpack.c.b16 %v2005, %v2004
      %v2023 = vpack.c.b16 %v2007, %v2006
      %2024 = vrot.lane.b32.xlu0 %v2008, 12
      %v2025 = vpop.permute.xlu0 %2024
      %2026 = vrot.lane.b32.xlu0 %v2009, 12
      %v2027 = vpop.permute.xlu0 %2026
      %2028 = vrot.lane.b32.xlu0 %v2010, 12
      %v2029 = vpop.permute.xlu0 %2028
      %2030 = vrot.lane.b32.xlu0 %v2011, 12
      %v2031 = vpop.permute.xlu0 %2030
      %2032 = vrot.lane.b32.xlu0 %v2012, 12
      %v2033 = vpop.permute.xlu0 %2032
      %2034 = vrot.lane.b32.xlu0 %v2013, 12
      %v2035 = vpop.permute.xlu0 %2034
      %2036 = vrot.lane.b32.xlu0 %v2014, 12
      %v2037 = vpop.permute.xlu0 %2036
      %2038 = vrot.lane.b32.xlu0 %v2015, 12
      %v2039 = vpop.permute.xlu0 %2038
      %2040 = vrot.lane.b32.xlu0 %v2016, 12
      %v2041 = vpop.permute.xlu0 %2040
      %2042 = vrot.lane.b32.xlu0 %v2017, 12
      %v2043 = vpop.permute.xlu0 %2042
      %2044 = vrot.lane.b32.xlu0 %v2018, 12
      %v2045 = vpop.permute.xlu0 %2044
      %2046 = vrot.lane.b32.xlu0 %v2019, 12
      %v2047 = vpop.permute.xlu0 %2046
      %2048 = vrot.lane.b32.xlu0 %v2020, 12
      %v2049 = vpop.permute.xlu0 %2048
      %2050 = vrot.lane.b32.xlu0 %v2021, 12
      %v2051 = vpop.permute.xlu0 %2050
      %2052 = vrot.lane.b32.xlu0 %v2022, 12
      %v2053 = vpop.permute.xlu0 %2052
      %2054 = vrot.lane.b32.xlu0 %v2023, 12
      %v2055 = vpop.permute.xlu0 %2054
      %vm2072 = vcmask 130144
      %2073 = vst.msk [vmem:[#allocation3] sm:$0xff] %vm2072, %v2025
      %2074 = vst.msk [vmem:[#allocation3 + $0x8] sm:$0xff] %vm2072, %v2027
      %2075 = vst.msk [vmem:[#allocation3 + $0x10] sm:$0xff] %vm2072, %v2029
      %2076 = vst.msk [vmem:[#allocation3 + $0x18] sm:$0xff] %vm2072, %v2031
      %2077 = vst.msk [vmem:[#allocation3 + $0x20] sm:$0xff] %vm2072, %v2033
      %2078 = vst.msk [vmem:[#allocation3 + $0x28] sm:$0xff] %vm2072, %v2035
      %2079 = vst.msk [vmem:[#allocation3 + $0x30] sm:$0xff] %vm2072, %v2037
      %2080 = vst.msk [vmem:[#allocation3 + $0x38] sm:$0xff] %vm2072, %v2039
      %2081 = vst.msk [vmem:[#allocation3 + $0x40] sm:$0xff] %vm2072, %v2041
      %2082 = vst.msk [vmem:[#allocation3 + $0x48] sm:$0xff] %vm2072, %v2043
      %2083 = vst.msk [vmem:[#allocation3 + $0x50] sm:$0xff] %vm2072, %v2045
      %2084 = vst.msk [vmem:[#allocation3 + $0x58] sm:$0xff] %vm2072, %v2047
      %2085 = vst.msk [vmem:[#allocation3 + $0x60] sm:$0xff] %vm2072, %v2049
      %2086 = vst.msk [vmem:[#allocation3 + $0x68] sm:$0xff] %vm2072, %v2051
      %2087 = vst.msk [vmem:[#allocation3 + $0x70] sm:$0xff] %vm2072, %v2053
      %2088 = vst.msk [vmem:[#allocation3 + $0x78] sm:$0xff] %vm2072, %v2055
      %v2089 = vld [vmem:[%s928] sm:$0xf]
      %v2090 = vld [vmem:[%s928 + $0x4] sm:$0xf]
      %v2091 = vld [vmem:[%s928 + $0x8] sm:$0x1]
      %v2092 = vld [vmem:[%s928 + $0xc] sm:$0xf]
      %v2093 = vld [vmem:[%s928 + $0x10] sm:$0xf]
      %v2094 = vld [vmem:[%s928 + $0x14] sm:$0x1]
      %v2095 = vld [vmem:[%s928 + $0x18] sm:$0xf]
      %v2096 = vld [vmem:[%s928 + $0x1c] sm:$0xf]
      %v2097 = vld [vmem:[%s928 + $0x20] sm:$0x1]
      %v2098 = vld [vmem:[%s928 + $0x24] sm:$0xf]
      %v2099 = vld [vmem:[%s928 + $0x28] sm:$0xf]
      %v2100 = vld [vmem:[%s928 + $0x2c] sm:$0x1]
      %v2101 = vld [vmem:[%s928 + $0x30] sm:$0xf]
      %v2102 = vld [vmem:[%s928 + $0x34] sm:$0xf]
      %v2103 = vld [vmem:[%s928 + $0x38] sm:$0x1]
      %v2104 = vld [vmem:[%s928 + $0x3c] sm:$0xf]
      %v2105 = vld [vmem:[%s928 + $0x40] sm:$0xf]
      %v2106 = vld [vmem:[%s928 + $0x44] sm:$0x1]
      %v2107 = vld [vmem:[%s928 + $0x48] sm:$0xf]
      %v2108 = vld [vmem:[%s928 + $0x4c] sm:$0xf]
      %v2109 = vld [vmem:[%s928 + $0x50] sm:$0x1]
      %v2110 = vld [vmem:[%s928 + $0x54] sm:$0xf]
      %v2111 = vld [vmem:[%s928 + $0x58] sm:$0xf]
      %v2112 = vld [vmem:[%s928 + $0x5c] sm:$0x1]
      %v2113 = vld [vmem:[%s928 + $0x60] sm:$0xf]
      %v2114 = vld [vmem:[%s928 + $0x64] sm:$0xf]
      %v2115 = vld [vmem:[%s928 + $0x68] sm:$0x1]
      %v2116 = vld [vmem:[%s928 + $0x6c] sm:$0xf]
      %v2117 = vld [vmem:[%s928 + $0x70] sm:$0xf]
      %v2118 = vld [vmem:[%s928 + $0x74] sm:$0x1]
      %v2119 = vld [vmem:[%s928 + $0x78] sm:$0xf]
      %v2120 = vld [vmem:[%s928 + $0x7c] sm:$0xf]
      %v2121 = vld [vmem:[%s928 + $0x80] sm:$0x1]
      %v2122 = vld [vmem:[%s928 + $0x84] sm:$0xf]
      %v2123 = vld [vmem:[%s928 + $0x88] sm:$0xf]
      %v2124 = vld [vmem:[%s928 + $0x8c] sm:$0x1]
      %v2125 = vld [vmem:[%s928 + $0x90] sm:$0xf]
      %v2126 = vld [vmem:[%s928 + $0x94] sm:$0xf]
      %v2127 = vld [vmem:[%s928 + $0x98] sm:$0x1]
      %v2128 = vld [vmem:[%s928 + $0x9c] sm:$0xf]
      %v2129 = vld [vmem:[%s928 + $0xa0] sm:$0xf]
      %v2130 = vld [vmem:[%s928 + $0xa4] sm:$0x1]
      %v2131 = vld [vmem:[%s928 + $0xa8] sm:$0xf]
      %v2132 = vld [vmem:[%s928 + $0xac] sm:$0xf]
      %v2133 = vld [vmem:[%s928 + $0xb0] sm:$0x1]
      %v2134 = vld [vmem:[%s928 + $0xb4] sm:$0xf]
      %v2135 = vld [vmem:[%s928 + $0xb8] sm:$0xf]
      %v2136 = vld [vmem:[%s928 + $0xbc] sm:$0x1]
      %v2185 = vunpack.c.l.b16 %v2089
      %v2186 = vunpack.c.l.b16 %v2090
      %v2187 = vunpack.c.l.b16 %v2091
      %v2188 = vunpack.c.l.b16 %v2092
      %v2189 = vunpack.c.l.b16 %v2093
      %v2190 = vunpack.c.l.b16 %v2094
      %v2191 = vunpack.c.l.b16 %v2095
      %v2192 = vunpack.c.l.b16 %v2096
      %v2193 = vunpack.c.l.b16 %v2097
      %v2194 = vunpack.c.l.b16 %v2098
      %v2195 = vunpack.c.l.b16 %v2099
      %v2196 = vunpack.c.l.b16 %v2100
      %v2197 = vunpack.c.l.b16 %v2101
      %v2198 = vunpack.c.l.b16 %v2102
      %v2199 = vunpack.c.l.b16 %v2103
      %v2200 = vunpack.c.l.b16 %v2104
      %v2201 = vunpack.c.l.b16 %v2105
      %v2202 = vunpack.c.l.b16 %v2106
      %v2203 = vunpack.c.l.b16 %v2107
      %v2204 = vunpack.c.l.b16 %v2108
      %v2205 = vunpack.c.l.b16 %v2109
      %v2206 = vunpack.c.l.b16 %v2110
      %v2207 = vunpack.c.l.b16 %v2111
      %v2208 = vunpack.c.l.b16 %v2112
      %v2209 = vunpack.c.l.b16 %v2113
      %v2210 = vunpack.c.l.b16 %v2114
      %v2211 = vunpack.c.l.b16 %v2115
      %v2212 = vunpack.c.l.b16 %v2116
      %v2213 = vunpack.c.l.b16 %v2117
      %v2214 = vunpack.c.l.b16 %v2118
      %v2215 = vunpack.c.l.b16 %v2119
      %v2216 = vunpack.c.l.b16 %v2120
      %v2217 = vunpack.c.l.b16 %v2121
      %v2218 = vunpack.c.l.b16 %v2122
      %v2219 = vunpack.c.l.b16 %v2123
      %v2220 = vunpack.c.l.b16 %v2124
      %v2221 = vunpack.c.l.b16 %v2125
      %v2222 = vunpack.c.l.b16 %v2126
      %v2223 = vunpack.c.l.b16 %v2127
      %v2224 = vunpack.c.l.b16 %v2128
      %v2225 = vunpack.c.l.b16 %v2129
      %v2226 = vunpack.c.l.b16 %v2130
      %v2227 = vunpack.c.l.b16 %v2131
      %v2228 = vunpack.c.l.b16 %v2132
      %v2229 = vunpack.c.l.b16 %v2133
      %v2230 = vunpack.c.l.b16 %v2134
      %v2231 = vunpack.c.l.b16 %v2135
      %v2232 = vunpack.c.l.b16 %v2136
      %v2233 = vpack.c.b16 %v2186, %v2185
      %v2234 = vpack.c.b16 %v2187, %v2187
      %v2235 = vpack.c.b16 %v2189, %v2188
      %v2236 = vpack.c.b16 %v2190, %v2190
      %v2237 = vpack.c.b16 %v2192, %v2191
      %v2238 = vpack.c.b16 %v2193, %v2193
      %v2239 = vpack.c.b16 %v2195, %v2194
      %v2240 = vpack.c.b16 %v2196, %v2196
      %v2241 = vpack.c.b16 %v2198, %v2197
      %v2242 = vpack.c.b16 %v2199, %v2199
      %v2243 = vpack.c.b16 %v2201, %v2200
      %v2244 = vpack.c.b16 %v2202, %v2202
      %v2245 = vpack.c.b16 %v2204, %v2203
      %v2246 = vpack.c.b16 %v2205, %v2205
      %v2247 = vpack.c.b16 %v2207, %v2206
      %v2248 = vpack.c.b16 %v2208, %v2208
      %v2249 = vpack.c.b16 %v2210, %v2209
      %v2250 = vpack.c.b16 %v2211, %v2211
      %v2251 = vpack.c.b16 %v2213, %v2212
      %v2252 = vpack.c.b16 %v2214, %v2214
      %v2253 = vpack.c.b16 %v2216, %v2215
      %v2254 = vpack.c.b16 %v2217, %v2217
      %v2255 = vpack.c.b16 %v2219, %v2218
      %v2256 = vpack.c.b16 %v2220, %v2220
      %v2257 = vpack.c.b16 %v2222, %v2221
      %v2258 = vpack.c.b16 %v2223, %v2223
      %v2259 = vpack.c.b16 %v2225, %v2224
      %v2260 = vpack.c.b16 %v2226, %v2226
      %v2261 = vpack.c.b16 %v2228, %v2227
      %v2262 = vpack.c.b16 %v2229, %v2229
      %v2263 = vpack.c.b16 %v2231, %v2230
      %v2264 = vpack.c.b16 %v2232, %v2232
      %v2266 = vshrl.u32 %v2233, 16
      %v2268 = vshll.u32 %v2233, 16
      %v2270 = vrot.slane %v2268, 1
      %v2271 = vor.u32 %v2266, %v2270
      %v2273 = vshll.u32 %v2234, 16
      %v2275 = vrot.slane %v2273, 1
      %v2276 = vsel %vm1364, %v2271, %v2275
      %v2278 = vshrl.u32 %v2235, 16
      %v2280 = vshll.u32 %v2235, 16
      %v2282 = vrot.slane %v2280, 1
      %v2283 = vor.u32 %v2278, %v2282
      %v2285 = vshll.u32 %v2236, 16
      %v2287 = vrot.slane %v2285, 1
      %v2288 = vsel %vm1364, %v2283, %v2287
      %v2290 = vshrl.u32 %v2237, 16
      %v2292 = vshll.u32 %v2237, 16
      %v2294 = vrot.slane %v2292, 1
      %v2295 = vor.u32 %v2290, %v2294
      %v2297 = vshll.u32 %v2238, 16
      %v2299 = vrot.slane %v2297, 1
      %v2300 = vsel %vm1364, %v2295, %v2299
      %v2302 = vshrl.u32 %v2239, 16
      %v2304 = vshll.u32 %v2239, 16
      %v2306 = vrot.slane %v2304, 1
      %v2307 = vor.u32 %v2302, %v2306
      %v2309 = vshll.u32 %v2240, 16
      %v2311 = vrot.slane %v2309, 1
      %v2312 = vsel %vm1364, %v2307, %v2311
      %v2314 = vshrl.u32 %v2241, 16
      %v2316 = vshll.u32 %v2241, 16
      %v2318 = vrot.slane %v2316, 1
      %v2319 = vor.u32 %v2314, %v2318
      %v2321 = vshll.u32 %v2242, 16
      %v2323 = vrot.slane %v2321, 1
      %v2324 = vsel %vm1364, %v2319, %v2323
      %v2326 = vshrl.u32 %v2243, 16
      %v2328 = vshll.u32 %v2243, 16
      %v2330 = vrot.slane %v2328, 1
      %v2331 = vor.u32 %v2326, %v2330
      %v2333 = vshll.u32 %v2244, 16
      %v2335 = vrot.slane %v2333, 1
      %v2336 = vsel %vm1364, %v2331, %v2335
      %v2338 = vshrl.u32 %v2245, 16
      %v2340 = vshll.u32 %v2245, 16
      %v2342 = vrot.slane %v2340, 1
      %v2343 = vor.u32 %v2338, %v2342
      %v2345 = vshll.u32 %v2246, 16
      %v2347 = vrot.slane %v2345, 1
      %v2348 = vsel %vm1364, %v2343, %v2347
      %v2350 = vshrl.u32 %v2247, 16
      %v2352 = vshll.u32 %v2247, 16
      %v2354 = vrot.slane %v2352, 1
      %v2355 = vor.u32 %v2350, %v2354
      %v2357 = vshll.u32 %v2248, 16
      %v2359 = vrot.slane %v2357, 1
      %v2360 = vsel %vm1364, %v2355, %v2359
      %v2362 = vshrl.u32 %v2249, 16
      %v2364 = vshll.u32 %v2249, 16
      %v2366 = vrot.slane %v2364, 1
      %v2367 = vor.u32 %v2362, %v2366
      %v2369 = vshll.u32 %v2250, 16
      %v2371 = vrot.slane %v2369, 1
      %v2372 = vsel %vm1364, %v2367, %v2371
      %v2374 = vshrl.u32 %v2251, 16
      %v2376 = vshll.u32 %v2251, 16
      %v2378 = vrot.slane %v2376, 1
      %v2379 = vor.u32 %v2374, %v2378
      %v2381 = vshll.u32 %v2252, 16
      %v2383 = vrot.slane %v2381, 1
      %v2384 = vsel %vm1364, %v2379, %v2383
      %v2386 = vshrl.u32 %v2253, 16
      %v2388 = vshll.u32 %v2253, 16
      %v2390 = vrot.slane %v2388, 1
      %v2391 = vor.u32 %v2386, %v2390
      %v2393 = vshll.u32 %v2254, 16
      %v2395 = vrot.slane %v2393, 1
      %v2396 = vsel %vm1364, %v2391, %v2395
      %v2398 = vshrl.u32 %v2255, 16
      %v2400 = vshll.u32 %v2255, 16
      %v2402 = vrot.slane %v2400, 1
      %v2403 = vor.u32 %v2398, %v2402
      %v2405 = vshll.u32 %v2256, 16
      %v2407 = vrot.slane %v2405, 1
      %v2408 = vsel %vm1364, %v2403, %v2407
      %v2410 = vshrl.u32 %v2257, 16
      %v2412 = vshll.u32 %v2257, 16
      %v2414 = vrot.slane %v2412, 1
      %v2415 = vor.u32 %v2410, %v2414
      %v2417 = vshll.u32 %v2258, 16
      %v2419 = vrot.slane %v2417, 1
      %v2420 = vsel %vm1364, %v2415, %v2419
      %v2422 = vshrl.u32 %v2259, 16
      %v2424 = vshll.u32 %v2259, 16
      %v2426 = vrot.slane %v2424, 1
      %v2427 = vor.u32 %v2422, %v2426
      %v2429 = vshll.u32 %v2260, 16
      %v2431 = vrot.slane %v2429, 1
      %v2432 = vsel %vm1364, %v2427, %v2431
      %v2434 = vshrl.u32 %v2261, 16
      %v2436 = vshll.u32 %v2261, 16
      %v2438 = vrot.slane %v2436, 1
      %v2439 = vor.u32 %v2434, %v2438
      %v2441 = vshll.u32 %v2262, 16
      %v2443 = vrot.slane %v2441, 1
      %v2444 = vsel %vm1364, %v2439, %v2443
      %v2446 = vshrl.u32 %v2263, 16
      %v2448 = vshll.u32 %v2263, 16
      %v2450 = vrot.slane %v2448, 1
      %v2451 = vor.u32 %v2446, %v2450
      %v2453 = vshll.u32 %v2264, 16
      %v2455 = vrot.slane %v2453, 1
      %v2456 = vsel %vm1364, %v2451, %v2455
      %2457 = vrot.lane.b32.xlu0 %v2276, 16
      %v2458 = vpop.permute.xlu0 %2457
      %2459 = vrot.lane.b32.xlu0 %v2288, 16
      %v2460 = vpop.permute.xlu0 %2459
      %2461 = vrot.lane.b32.xlu0 %v2300, 16
      %v2462 = vpop.permute.xlu0 %2461
      %2463 = vrot.lane.b32.xlu0 %v2312, 16
      %v2464 = vpop.permute.xlu0 %2463
      %2465 = vrot.lane.b32.xlu0 %v2324, 16
      %v2466 = vpop.permute.xlu0 %2465
      %2467 = vrot.lane.b32.xlu0 %v2336, 16
      %v2468 = vpop.permute.xlu0 %2467
      %2469 = vrot.lane.b32.xlu0 %v2348, 16
      %v2470 = vpop.permute.xlu0 %2469
      %2471 = vrot.lane.b32.xlu0 %v2360, 16
      %v2472 = vpop.permute.xlu0 %2471
      %2473 = vrot.lane.b32.xlu0 %v2372, 16
      %v2474 = vpop.permute.xlu0 %2473
      %2475 = vrot.lane.b32.xlu0 %v2384, 16
      %v2476 = vpop.permute.xlu0 %2475
      %2477 = vrot.lane.b32.xlu0 %v2396, 16
      %v2478 = vpop.permute.xlu0 %2477
      %2479 = vrot.lane.b32.xlu0 %v2408, 16
      %v2480 = vpop.permute.xlu0 %2479
      %2481 = vrot.lane.b32.xlu0 %v2420, 16
      %v2482 = vpop.permute.xlu0 %2481
      %2483 = vrot.lane.b32.xlu0 %v2432, 16
      %v2484 = vpop.permute.xlu0 %2483
      %2485 = vrot.lane.b32.xlu0 %v2444, 16
      %v2486 = vpop.permute.xlu0 %2485
      %2487 = vrot.lane.b32.xlu0 %v2456, 16
      %v2488 = vpop.permute.xlu0 %2487
      %vm2505 = vcmask 162944
      %2506 = vst.msk [vmem:[#allocation3] sm:$0xff] %vm2505, %v2458
      %2507 = vst.msk [vmem:[#allocation3 + $0x8] sm:$0xff] %vm2505, %v2460
      %2508 = vst.msk [vmem:[#allocation3 + $0x10] sm:$0xff] %vm2505, %v2462
      %2509 = vst.msk [vmem:[#allocation3 + $0x18] sm:$0xff] %vm2505, %v2464
      %2510 = vst.msk [vmem:[#allocation3 + $0x20] sm:$0xff] %vm2505, %v2466
      %2511 = vst.msk [vmem:[#allocation3 + $0x28] sm:$0xff] %vm2505, %v2468
      %2512 = vst.msk [vmem:[#allocation3 + $0x30] sm:$0xff] %vm2505, %v2470
      %2513 = vst.msk [vmem:[#allocation3 + $0x38] sm:$0xff] %vm2505, %v2472
      %2514 = vst.msk [vmem:[#allocation3 + $0x40] sm:$0xff] %vm2505, %v2474
      %2515 = vst.msk [vmem:[#allocation3 + $0x48] sm:$0xff] %vm2505, %v2476
      %2516 = vst.msk [vmem:[#allocation3 + $0x50] sm:$0xff] %vm2505, %v2478
      %2517 = vst.msk [vmem:[#allocation3 + $0x58] sm:$0xff] %vm2505, %v2480
      %2518 = vst.msk [vmem:[#allocation3 + $0x60] sm:$0xff] %vm2505, %v2482
      %2519 = vst.msk [vmem:[#allocation3 + $0x68] sm:$0xff] %vm2505, %v2484
      %2520 = vst.msk [vmem:[#allocation3 + $0x70] sm:$0xff] %vm2505, %v2486
      %2521 = vst.msk [vmem:[#allocation3 + $0x78] sm:$0xff] %vm2505, %v2488
      %v2522 = vld [vmem:[%s928] sm:$0xe]
      %v2523 = vld [vmem:[%s928 + $0x4] sm:$0xf]
      %v2524 = vld [vmem:[%s928 + $0x8] sm:$0x1]
      %v2525 = vld [vmem:[%s928 + $0xc] sm:$0xe]
      %v2526 = vld [vmem:[%s928 + $0x10] sm:$0xf]
      %v2527 = vld [vmem:[%s928 + $0x14] sm:$0x1]
      %v2528 = vld [vmem:[%s928 + $0x18] sm:$0xe]
      %v2529 = vld [vmem:[%s928 + $0x1c] sm:$0xf]
      %v2530 = vld [vmem:[%s928 + $0x20] sm:$0x1]
      %v2531 = vld [vmem:[%s928 + $0x24] sm:$0xe]
      %v2532 = vld [vmem:[%s928 + $0x28] sm:$0xf]
      %v2533 = vld [vmem:[%s928 + $0x2c] sm:$0x1]
      %v2534 = vld [vmem:[%s928 + $0x30] sm:$0xe]
      %v2535 = vld [vmem:[%s928 + $0x34] sm:$0xf]
      %v2536 = vld [vmem:[%s928 + $0x38] sm:$0x1]
      %v2537 = vld [vmem:[%s928 + $0x3c] sm:$0xe]
      %v2538 = vld [vmem:[%s928 + $0x40] sm:$0xf]
      %v2539 = vld [vmem:[%s928 + $0x44] sm:$0x1]
      %v2540 = vld [vmem:[%s928 + $0x48] sm:$0xe]
      %v2541 = vld [vmem:[%s928 + $0x4c] sm:$0xf]
      %v2542 = vld [vmem:[%s928 + $0x50] sm:$0x1]
      %v2543 = vld [vmem:[%s928 + $0x54] sm:$0xe]
      %v2544 = vld [vmem:[%s928 + $0x58] sm:$0xf]
      %v2545 = vld [vmem:[%s928 + $0x5c] sm:$0x1]
      %v2546 = vld [vmem:[%s928 + $0x60] sm:$0xe]
      %v2547 = vld [vmem:[%s928 + $0x64] sm:$0xf]
      %v2548 = vld [vmem:[%s928 + $0x68] sm:$0x1]
      %v2549 = vld [vmem:[%s928 + $0x6c] sm:$0xe]
      %v2550 = vld [vmem:[%s928 + $0x70] sm:$0xf]
      %v2551 = vld [vmem:[%s928 + $0x74] sm:$0x1]
      %v2552 = vld [vmem:[%s928 + $0x78] sm:$0xe]
      %v2553 = vld [vmem:[%s928 + $0x7c] sm:$0xf]
      %v2554 = vld [vmem:[%s928 + $0x80] sm:$0x1]
      %v2555 = vld [vmem:[%s928 + $0x84] sm:$0xe]
      %v2556 = vld [vmem:[%s928 + $0x88] sm:$0xf]
      %v2557 = vld [vmem:[%s928 + $0x8c] sm:$0x1]
      %v2558 = vld [vmem:[%s928 + $0x90] sm:$0xe]
      %v2559 = vld [vmem:[%s928 + $0x94] sm:$0xf]
      %v2560 = vld [vmem:[%s928 + $0x98] sm:$0x1]
      %v2561 = vld [vmem:[%s928 + $0x9c] sm:$0xe]
      %v2562 = vld [vmem:[%s928 + $0xa0] sm:$0xf]
      %v2563 = vld [vmem:[%s928 + $0xa4] sm:$0x1]
      %v2564 = vld [vmem:[%s928 + $0xa8] sm:$0xe]
      %v2565 = vld [vmem:[%s928 + $0xac] sm:$0xf]
      %v2566 = vld [vmem:[%s928 + $0xb0] sm:$0x1]
      %v2567 = vld [vmem:[%s928 + $0xb4] sm:$0xe]
      %v2568 = vld [vmem:[%s928 + $0xb8] sm:$0xf]
      %v2569 = vld [vmem:[%s928 + $0xbc] sm:$0x1]
      %v2618 = vunpack.c.l.b16 %v2522
      %v2619 = vunpack.c.l.b16 %v2523
      %v2620 = vunpack.c.l.b16 %v2524
      %v2621 = vunpack.c.l.b16 %v2525
      %v2622 = vunpack.c.l.b16 %v2526
      %v2623 = vunpack.c.l.b16 %v2527
      %v2624 = vunpack.c.l.b16 %v2528
      %v2625 = vunpack.c.l.b16 %v2529
      %v2626 = vunpack.c.l.b16 %v2530
      %v2627 = vunpack.c.l.b16 %v2531
      %v2628 = vunpack.c.l.b16 %v2532
      %v2629 = vunpack.c.l.b16 %v2533
      %v2630 = vunpack.c.l.b16 %v2534
      %v2631 = vunpack.c.l.b16 %v2535
      %v2632 = vunpack.c.l.b16 %v2536
      %v2633 = vunpack.c.l.b16 %v2537
      %v2634 = vunpack.c.l.b16 %v2538
      %v2635 = vunpack.c.l.b16 %v2539
      %v2636 = vunpack.c.l.b16 %v2540
      %v2637 = vunpack.c.l.b16 %v2541
      %v2638 = vunpack.c.l.b16 %v2542
      %v2639 = vunpack.c.l.b16 %v2543
      %v2640 = vunpack.c.l.b16 %v2544
      %v2641 = vunpack.c.l.b16 %v2545
      %v2642 = vunpack.c.l.b16 %v2546
      %v2643 = vunpack.c.l.b16 %v2547
      %v2644 = vunpack.c.l.b16 %v2548
      %v2645 = vunpack.c.l.b16 %v2549
      %v2646 = vunpack.c.l.b16 %v2550
      %v2647 = vunpack.c.l.b16 %v2551
      %v2648 = vunpack.c.l.b16 %v2552
      %v2649 = vunpack.c.l.b16 %v2553
      %v2650 = vunpack.c.l.b16 %v2554
      %v2651 = vunpack.c.l.b16 %v2555
      %v2652 = vunpack.c.l.b16 %v2556
      %v2653 = vunpack.c.l.b16 %v2557
      %v2654 = vunpack.c.l.b16 %v2558
      %v2655 = vunpack.c.l.b16 %v2559
      %v2656 = vunpack.c.l.b16 %v2560
      %v2657 = vunpack.c.l.b16 %v2561
      %v2658 = vunpack.c.l.b16 %v2562
      %v2659 = vunpack.c.l.b16 %v2563
      %v2660 = vunpack.c.l.b16 %v2564
      %v2661 = vunpack.c.l.b16 %v2565
      %v2662 = vunpack.c.l.b16 %v2566
      %v2663 = vunpack.c.l.b16 %v2567
      %v2664 = vunpack.c.l.b16 %v2568
      %v2665 = vunpack.c.l.b16 %v2569
      %v2666 = vpack.c.b16 %v2619, %v2618
      %v2667 = vpack.c.b16 %v2620, %v2620
      %v2668 = vpack.c.b16 %v2622, %v2621
      %v2669 = vpack.c.b16 %v2623, %v2623
      %v2670 = vpack.c.b16 %v2625, %v2624
      %v2671 = vpack.c.b16 %v2626, %v2626
      %v2672 = vpack.c.b16 %v2628, %v2627
      %v2673 = vpack.c.b16 %v2629, %v2629
      %v2674 = vpack.c.b16 %v2631, %v2630
      %v2675 = vpack.c.b16 %v2632, %v2632
      %v2676 = vpack.c.b16 %v2634, %v2633
      %v2677 = vpack.c.b16 %v2635, %v2635
      %v2678 = vpack.c.b16 %v2637, %v2636
      %v2679 = vpack.c.b16 %v2638, %v2638
      %v2680 = vpack.c.b16 %v2640, %v2639
      %v2681 = vpack.c.b16 %v2641, %v2641
      %v2682 = vpack.c.b16 %v2643, %v2642
      %v2683 = vpack.c.b16 %v2644, %v2644
      %v2684 = vpack.c.b16 %v2646, %v2645
      %v2685 = vpack.c.b16 %v2647, %v2647
      %v2686 = vpack.c.b16 %v2649, %v2648
      %v2687 = vpack.c.b16 %v2650, %v2650
      %v2688 = vpack.c.b16 %v2652, %v2651
      %v2689 = vpack.c.b16 %v2653, %v2653
      %v2690 = vpack.c.b16 %v2655, %v2654
      %v2691 = vpack.c.b16 %v2656, %v2656
      %v2692 = vpack.c.b16 %v2658, %v2657
      %v2693 = vpack.c.b16 %v2659, %v2659
      %v2694 = vpack.c.b16 %v2661, %v2660
      %v2695 = vpack.c.b16 %v2662, %v2662
      %v2696 = vpack.c.b16 %v2664, %v2663
      %v2697 = vpack.c.b16 %v2665, %v2665
      %v2698 = vrot.slane %v2666, 1
      %v2699 = vrot.slane %v2667, 1
      %v2700 = vsel %vm1798, %v2698, %v2699
      %v2701 = vrot.slane %v2668, 1
      %v2702 = vrot.slane %v2669, 1
      %v2703 = vsel %vm1798, %v2701, %v2702
      %v2704 = vrot.slane %v2670, 1
      %v2705 = vrot.slane %v2671, 1
      %v2706 = vsel %vm1798, %v2704, %v2705
      %v2707 = vrot.slane %v2672, 1
      %v2708 = vrot.slane %v2673, 1
      %v2709 = vsel %vm1798, %v2707, %v2708
      %v2710 = vrot.slane %v2674, 1
      %v2711 = vrot.slane %v2675, 1
      %v2712 = vsel %vm1798, %v2710, %v2711
      %v2713 = vrot.slane %v2676, 1
      %v2714 = vrot.slane %v2677, 1
      %v2715 = vsel %vm1798, %v2713, %v2714
      %v2716 = vrot.slane %v2678, 1
      %v2717 = vrot.slane %v2679, 1
      %v2718 = vsel %vm1798, %v2716, %v2717
      %v2719 = vrot.slane %v2680, 1
      %v2720 = vrot.slane %v2681, 1
      %v2721 = vsel %vm1798, %v2719, %v2720
      %v2722 = vrot.slane %v2682, 1
      %v2723 = vrot.slane %v2683, 1
      %v2724 = vsel %vm1798, %v2722, %v2723
      %v2725 = vrot.slane %v2684, 1
      %v2726 = vrot.slane %v2685, 1
      %v2727 = vsel %vm1798, %v2725, %v2726
      %v2728 = vrot.slane %v2686, 1
      %v2729 = vrot.slane %v2687, 1
      %v2730 = vsel %vm1798, %v2728, %v2729
      %v2731 = vrot.slane %v2688, 1
      %v2732 = vrot.slane %v2689, 1
      %v2733 = vsel %vm1798, %v2731, %v2732
      %v2734 = vrot.slane %v2690, 1
      %v2735 = vrot.slane %v2691, 1
      %v2736 = vsel %vm1798, %v2734, %v2735
      %v2737 = vrot.slane %v2692, 1
      %v2738 = vrot.slane %v2693, 1
      %v2739 = vsel %vm1798, %v2737, %v2738
      %v2740 = vrot.slane %v2694, 1
      %v2741 = vrot.slane %v2695, 1
      %v2742 = vsel %vm1798, %v2740, %v2741
      %v2743 = vrot.slane %v2696, 1
      %v2744 = vrot.slane %v2697, 1
      %v2745 = vsel %vm1798, %v2743, %v2744
      %2746 = vrot.lane.b32.xlu0 %v2700, 20
      %v2747 = vpop.permute.xlu0 %2746
      %2748 = vrot.lane.b32.xlu0 %v2703, 20
      %v2749 = vpop.permute.xlu0 %2748
      %2750 = vrot.lane.b32.xlu0 %v2706, 20
      %v2751 = vpop.permute.xlu0 %2750
      %2752 = vrot.lane.b32.xlu0 %v2709, 20
      %v2753 = vpop.permute.xlu0 %2752
      %2754 = vrot.lane.b32.xlu0 %v2712, 20
      %v2755 = vpop.permute.xlu0 %2754
      %2756 = vrot.lane.b32.xlu0 %v2715, 20
      %v2757 = vpop.permute.xlu0 %2756
      %2758 = vrot.lane.b32.xlu0 %v2718, 20
      %v2759 = vpop.permute.xlu0 %2758
      %2760 = vrot.lane.b32.xlu0 %v2721, 20
      %v2761 = vpop.permute.xlu0 %2760
      %2762 = vrot.lane.b32.xlu0 %v2724, 20
      %v2763 = vpop.permute.xlu0 %2762
      %2764 = vrot.lane.b32.xlu0 %v2727, 20
      %v2765 = vpop.permute.xlu0 %2764
      %2766 = vrot.lane.b32.xlu0 %v2730, 20
      %v2767 = vpop.permute.xlu0 %2766
      %2768 = vrot.lane.b32.xlu0 %v2733, 20
      %v2769 = vpop.permute.xlu0 %2768
      %2770 = vrot.lane.b32.xlu0 %v2736, 20
      %v2771 = vpop.permute.xlu0 %2770
      %2772 = vrot.lane.b32.xlu0 %v2739, 20
      %v2773 = vpop.permute.xlu0 %2772
      %2774 = vrot.lane.b32.xlu0 %v2742, 20
      %v2775 = vpop.permute.xlu0 %2774
      %2776 = vrot.lane.b32.xlu0 %v2745, 20
      %v2777 = vpop.permute.xlu0 %2776
      %vm2794 = vcmask 195744
      %2795 = vst.msk [vmem:[#allocation3] sm:$0xff] %vm2794, %v2747
      %2796 = vst.msk [vmem:[#allocation3 + $0x8] sm:$0xff] %vm2794, %v2749
      %2797 = vst.msk [vmem:[#allocation3 + $0x10] sm:$0xff] %vm2794, %v2751
      %2798 = vst.msk [vmem:[#allocation3 + $0x18] sm:$0xff] %vm2794, %v2753
      %2799 = vst.msk [vmem:[#allocation3 + $0x20] sm:$0xff] %vm2794, %v2755
      %2800 = vst.msk [vmem:[#allocation3 + $0x28] sm:$0xff] %vm2794, %v2757
      %2801 = vst.msk [vmem:[#allocation3 + $0x30] sm:$0xff] %vm2794, %v2759
      %2802 = vst.msk [vmem:[#allocation3 + $0x38] sm:$0xff] %vm2794, %v2761
      %2803 = vst.msk [vmem:[#allocation3 + $0x40] sm:$0xff] %vm2794, %v2763
      %2804 = vst.msk [vmem:[#allocation3 + $0x48] sm:$0xff] %vm2794, %v2765
      %2805 = vst.msk [vmem:[#allocation3 + $0x50] sm:$0xff] %vm2794, %v2767
      %2806 = vst.msk [vmem:[#allocation3 + $0x58] sm:$0xff] %vm2794, %v2769
      %2807 = vst.msk [vmem:[#allocation3 + $0x60] sm:$0xff] %vm2794, %v2771
      %2808 = vst.msk [vmem:[#allocation3 + $0x68] sm:$0xff] %vm2794, %v2773
      %2809 = vst.msk [vmem:[#allocation3 + $0x70] sm:$0xff] %vm2794, %v2775
      %2810 = vst.msk [vmem:[#allocation3 + $0x78] sm:$0xff] %vm2794, %v2777
      %s2811 = scalar_lea.vmem [#allocation2], 24
      %v2812 = vld [vmem:[%s2811] sm:$0xf]
      %v2813 = vld [vmem:[%s2811 + $0x4] sm:$0xf]
      %v2814 = vld [vmem:[%s2811 + $0xc] sm:$0xf]
      %v2815 = vld [vmem:[%s2811 + $0x10] sm:$0xf]
      %v2816 = vld [vmem:[%s2811 + $0x18] sm:$0xf]
      %v2817 = vld [vmem:[%s2811 + $0x1c] sm:$0xf]
      %v2818 = vld [vmem:[%s2811 + $0x24] sm:$0xf]
      %v2819 = vld [vmem:[%s2811 + $0x28] sm:$0xf]
      %v2820 = vld [vmem:[%s2811 + $0x30] sm:$0xf]
      %v2821 = vld [vmem:[%s2811 + $0x34] sm:$0xf]
      %v2822 = vld [vmem:[%s2811 + $0x3c] sm:$0xf]
      %v2823 = vld [vmem:[%s2811 + $0x40] sm:$0xf]
      %v2824 = vld [vmem:[%s2811 + $0x48] sm:$0xf]
      %v2825 = vld [vmem:[%s2811 + $0x4c] sm:$0xf]
      %v2826 = vld [vmem:[%s2811 + $0x54] sm:$0xf]
      %v2827 = vld [vmem:[%s2811 + $0x58] sm:$0xf]
      %v2828 = vld [vmem:[%s2811 + $0x60] sm:$0xf]
      %v2829 = vld [vmem:[%s2811 + $0x64] sm:$0xf]
      %v2830 = vld [vmem:[%s2811 + $0x6c] sm:$0xf]
      %v2831 = vld [vmem:[%s2811 + $0x70] sm:$0xf]
      %v2832 = vld [vmem:[%s2811 + $0x78] sm:$0xf]
      %v2833 = vld [vmem:[%s2811 + $0x7c] sm:$0xf]
      %v2834 = vld [vmem:[%s2811 + $0x84] sm:$0xf]
      %v2835 = vld [vmem:[%s2811 + $0x88] sm:$0xf]
      %v2836 = vld [vmem:[%s2811 + $0x90] sm:$0xf]
      %v2837 = vld [vmem:[%s2811 + $0x94] sm:$0xf]
      %v2838 = vld [vmem:[%s2811 + $0x9c] sm:$0xf]
      %v2839 = vld [vmem:[%s2811 + $0xa0] sm:$0xf]
      %v2840 = vld [vmem:[%s2811 + $0xa8] sm:$0xf]
      %v2841 = vld [vmem:[%s2811 + $0xac] sm:$0xf]
      %v2842 = vld [vmem:[%s2811 + $0xb4] sm:$0xf]
      %v2843 = vld [vmem:[%s2811 + $0xb8] sm:$0xf]
      %v2876 = vunpack.c.l.b16 %v2812
      %v2877 = vunpack.c.l.b16 %v2813
      %v2878 = vunpack.c.l.b16 %v2814
      %v2879 = vunpack.c.l.b16 %v2815
      %v2880 = vunpack.c.l.b16 %v2816
      %v2881 = vunpack.c.l.b16 %v2817
      %v2882 = vunpack.c.l.b16 %v2818
      %v2883 = vunpack.c.l.b16 %v2819
      %v2884 = vunpack.c.l.b16 %v2820
      %v2885 = vunpack.c.l.b16 %v2821
      %v2886 = vunpack.c.l.b16 %v2822
      %v2887 = vunpack.c.l.b16 %v2823
      %v2888 = vunpack.c.l.b16 %v2824
      %v2889 = vunpack.c.l.b16 %v2825
      %v2890 = vunpack.c.l.b16 %v2826
      %v2891 = vunpack.c.l.b16 %v2827
      %v2892 = vunpack.c.l.b16 %v2828
      %v2893 = vunpack.c.l.b16 %v2829
      %v2894 = vunpack.c.l.b16 %v2830
      %v2895 = vunpack.c.l.b16 %v2831
      %v2896 = vunpack.c.l.b16 %v2832
      %v2897 = vunpack.c.l.b16 %v2833
      %v2898 = vunpack.c.l.b16 %v2834
      %v2899 = vunpack.c.l.b16 %v2835
      %v2900 = vunpack.c.l.b16 %v2836
      %v2901 = vunpack.c.l.b16 %v2837
      %v2902 = vunpack.c.l.b16 %v2838
      %v2903 = vunpack.c.l.b16 %v2839
      %v2904 = vunpack.c.l.b16 %v2840
      %v2905 = vunpack.c.l.b16 %v2841
      %v2906 = vunpack.c.l.b16 %v2842
      %v2907 = vunpack.c.l.b16 %v2843
      %v2908 = vpack.c.b16 %v2877, %v2876
      %v2909 = vpack.c.b16 %v2879, %v2878
      %v2910 = vpack.c.b16 %v2881, %v2880
      %v2911 = vpack.c.b16 %v2883, %v2882
      %v2912 = vpack.c.b16 %v2885, %v2884
      %v2913 = vpack.c.b16 %v2887, %v2886
      %v2914 = vpack.c.b16 %v2889, %v2888
      %v2915 = vpack.c.b16 %v2891, %v2890
      %v2916 = vpack.c.b16 %v2893, %v2892
      %v2917 = vpack.c.b16 %v2895, %v2894
      %v2918 = vpack.c.b16 %v2897, %v2896
      %v2919 = vpack.c.b16 %v2899, %v2898
      %v2920 = vpack.c.b16 %v2901, %v2900
      %v2921 = vpack.c.b16 %v2903, %v2902
      %v2922 = vpack.c.b16 %v2905, %v2904
      %v2923 = vpack.c.b16 %v2907, %v2906
      %2924 = vrot.lane.b32.xlu0 %v2908, 24
      %v2925 = vpop.permute.xlu0 %2924
      %2926 = vrot.lane.b32.xlu0 %v2909, 24
      %v2927 = vpop.permute.xlu0 %2926
      %2928 = vrot.lane.b32.xlu0 %v2910, 24
      %v2929 = vpop.permute.xlu0 %2928
      %2930 = vrot.lane.b32.xlu0 %v2911, 24
      %v2931 = vpop.permute.xlu0 %2930
      %2932 = vrot.lane.b32.xlu0 %v2912, 24
      %v2933 = vpop.permute.xlu0 %2932
      %2934 = vrot.lane.b32.xlu0 %v2913, 24
      %v2935 = vpop.permute.xlu0 %2934
      %2936 = vrot.lane.b32.xlu0 %v2914, 24
      %v2937 = vpop.permute.xlu0 %2936
      %2938 = vrot.lane.b32.xlu0 %v2915, 24
      %v2939 = vpop.permute.xlu0 %2938
      %2940 = vrot.lane.b32.xlu0 %v2916, 24
      %v2941 = vpop.permute.xlu0 %2940
      %2942 = vrot.lane.b32.xlu0 %v2917, 24
      %v2943 = vpop.permute.xlu0 %2942
      %2944 = vrot.lane.b32.xlu0 %v2918, 24
      %v2945 = vpop.permute.xlu0 %2944
      %2946 = vrot.lane.b32.xlu0 %v2919, 24
      %v2947 = vpop.permute.xlu0 %2946
      %2948 = vrot.lane.b32.xlu0 %v2920, 24
      %v2949 = vpop.permute.xlu0 %2948
      %2950 = vrot.lane.b32.xlu0 %v2921, 24
      %v2951 = vpop.permute.xlu0 %2950
      %2952 = vrot.lane.b32.xlu0 %v2922, 24
      %v2953 = vpop.permute.xlu0 %2952
      %2954 = vrot.lane.b32.xlu0 %v2923, 24
      %v2955 = vpop.permute.xlu0 %2954
      %vm2972 = vcmask 228544
      %2973 = vst.msk [vmem:[#allocation3] sm:$0xff] %vm2972, %v2925
      %2974 = vst.msk [vmem:[#allocation3 + $0x8] sm:$0xff] %vm2972, %v2927
      %2975 = vst.msk [vmem:[#allocation3 + $0x10] sm:$0xff] %vm2972, %v2929
      %2976 = vst.msk [vmem:[#allocation3 + $0x18] sm:$0xff] %vm2972, %v2931
      %2977 = vst.msk [vmem:[#allocation3 + $0x20] sm:$0xff] %vm2972, %v2933
      %2978 = vst.msk [vmem:[#allocation3 + $0x28] sm:$0xff] %vm2972, %v2935
      %2979 = vst.msk [vmem:[#allocation3 + $0x30] sm:$0xff] %vm2972, %v2937
      %2980 = vst.msk [vmem:[#allocation3 + $0x38] sm:$0xff] %vm2972, %v2939
      %2981 = vst.msk [vmem:[#allocation3 + $0x40] sm:$0xff] %vm2972, %v2941
      %2982 = vst.msk [vmem:[#allocation3 + $0x48] sm:$0xff] %vm2972, %v2943
      %2983 = vst.msk [vmem:[#allocation3 + $0x50] sm:$0xff] %vm2972, %v2945
      %2984 = vst.msk [vmem:[#allocation3 + $0x58] sm:$0xff] %vm2972, %v2947
      %2985 = vst.msk [vmem:[#allocation3 + $0x60] sm:$0xff] %vm2972, %v2949
      %2986 = vst.msk [vmem:[#allocation3 + $0x68] sm:$0xff] %vm2972, %v2951
      %2987 = vst.msk [vmem:[#allocation3 + $0x70] sm:$0xff] %vm2972, %v2953
      %2988 = vst.msk [vmem:[#allocation3 + $0x78] sm:$0xff] %vm2972, %v2955
      %v2989 = vld [vmem:[%s2811] sm:$0xf]
      %v2990 = vld [vmem:[%s2811 + $0x4] sm:$0xf]
      %v2991 = vld [vmem:[%s2811 + $0x8] sm:$0x1]
      %v2992 = vld [vmem:[%s2811 + $0xc] sm:$0xf]
      %v2993 = vld [vmem:[%s2811 + $0x10] sm:$0xf]
      %v2994 = vld [vmem:[%s2811 + $0x14] sm:$0x1]
      %v2995 = vld [vmem:[%s2811 + $0x18] sm:$0xf]
      %v2996 = vld [vmem:[%s2811 + $0x1c] sm:$0xf]
      %v2997 = vld [vmem:[%s2811 + $0x20] sm:$0x1]
      %v2998 = vld [vmem:[%s2811 + $0x24] sm:$0xf]
      %v2999 = vld [vmem:[%s2811 + $0x28] sm:$0xf]
      %v3000 = vld [vmem:[%s2811 + $0x2c] sm:$0x1]
      %v3001 = vld [vmem:[%s2811 + $0x30] sm:$0xf]
      %v3002 = vld [vmem:[%s2811 + $0x34] sm:$0xf]
      %v3003 = vld [vmem:[%s2811 + $0x38] sm:$0x1]
      %v3004 = vld [vmem:[%s2811 + $0x3c] sm:$0xf]
      %v3005 = vld [vmem:[%s2811 + $0x40] sm:$0xf]
      %v3006 = vld [vmem:[%s2811 + $0x44] sm:$0x1]
      %v3007 = vld [vmem:[%s2811 + $0x48] sm:$0xf]
      %v3008 = vld [vmem:[%s2811 + $0x4c] sm:$0xf]
      %v3009 = vld [vmem:[%s2811 + $0x50] sm:$0x1]
      %v3010 = vld [vmem:[%s2811 + $0x54] sm:$0xf]
      %v3011 = vld [vmem:[%s2811 + $0x58] sm:$0xf]
      %v3012 = vld [vmem:[%s2811 + $0x5c] sm:$0x1]
      %v3013 = vld [vmem:[%s2811 + $0x60] sm:$0xf]
      %v3014 = vld [vmem:[%s2811 + $0x64] sm:$0xf]
      %v3015 = vld [vmem:[%s2811 + $0x68] sm:$0x1]
      %v3016 = vld [vmem:[%s2811 + $0x6c] sm:$0xf]
      %v3017 = vld [vmem:[%s2811 + $0x70] sm:$0xf]
      %v3018 = vld [vmem:[%s2811 + $0x74] sm:$0x1]
      %v3019 = vld [vmem:[%s2811 + $0x78] sm:$0xf]
      %v3020 = vld [vmem:[%s2811 + $0x7c] sm:$0xf]
      %v3021 = vld [vmem:[%s2811 + $0x80] sm:$0x1]
      %v3022 = vld [vmem:[%s2811 + $0x84] sm:$0xf]
      %v3023 = vld [vmem:[%s2811 + $0x88] sm:$0xf]
      %v3024 = vld [vmem:[%s2811 + $0x8c] sm:$0x1]
      %v3025 = vld [vmem:[%s2811 + $0x90] sm:$0xf]
      %v3026 = vld [vmem:[%s2811 + $0x94] sm:$0xf]
      %v3027 = vld [vmem:[%s2811 + $0x98] sm:$0x1]
      %v3028 = vld [vmem:[%s2811 + $0x9c] sm:$0xf]
      %v3029 = vld [vmem:[%s2811 + $0xa0] sm:$0xf]
      %v3030 = vld [vmem:[%s2811 + $0xa4] sm:$0x1]
      %v3031 = vld [vmem:[%s2811 + $0xa8] sm:$0xf]
      %v3032 = vld [vmem:[%s2811 + $0xac] sm:$0xf]
      %v3033 = vld [vmem:[%s2811 + $0xb0] sm:$0x1]
      %v3034 = vld [vmem:[%s2811 + $0xb4] sm:$0xf]
      %v3035 = vld [vmem:[%s2811 + $0xb8] sm:$0xf]
      %v3036 = vld [vmem:[%s2811 + $0xbc] sm:$0x1]
      %v3085 = vunpack.c.l.b16 %v2989
      %v3086 = vunpack.c.l.b16 %v2990
      %v3087 = vunpack.c.l.b16 %v2991
      %v3088 = vunpack.c.l.b16 %v2992
      %v3089 = vunpack.c.l.b16 %v2993
      %v3090 = vunpack.c.l.b16 %v2994
      %v3091 = vunpack.c.l.b16 %v2995
      %v3092 = vunpack.c.l.b16 %v2996
      %v3093 = vunpack.c.l.b16 %v2997
      %v3094 = vunpack.c.l.b16 %v2998
      %v3095 = vunpack.c.l.b16 %v2999
      %v3096 = vunpack.c.l.b16 %v3000
      %v3097 = vunpack.c.l.b16 %v3001
      %v3098 = vunpack.c.l.b16 %v3002
      %v3099 = vunpack.c.l.b16 %v3003
      %v3100 = vunpack.c.l.b16 %v3004
      %v3101 = vunpack.c.l.b16 %v3005
      %v3102 = vunpack.c.l.b16 %v3006
      %v3103 = vunpack.c.l.b16 %v3007
      %v3104 = vunpack.c.l.b16 %v3008
      %v3105 = vunpack.c.l.b16 %v3009
      %v3106 = vunpack.c.l.b16 %v3010
      %v3107 = vunpack.c.l.b16 %v3011
      %v3108 = vunpack.c.l.b16 %v3012
      %v3109 = vunpack.c.l.b16 %v3013
      %v3110 = vunpack.c.l.b16 %v3014
      %v3111 = vunpack.c.l.b16 %v3015
      %v3112 = vunpack.c.l.b16 %v3016
      %v3113 = vunpack.c.l.b16 %v3017
      %v3114 = vunpack.c.l.b16 %v3018
      %v3115 = vunpack.c.l.b16 %v3019
      %v3116 = vunpack.c.l.b16 %v3020
      %v3117 = vunpack.c.l.b16 %v3021
      %v3118 = vunpack.c.l.b16 %v3022
      %v3119 = vunpack.c.l.b16 %v3023
      %v3120 = vunpack.c.l.b16 %v3024
      %v3121 = vunpack.c.l.b16 %v3025
      %v3122 = vunpack.c.l.b16 %v3026
      %v3123 = vunpack.c.l.b16 %v3027
      %v3124 = vunpack.c.l.b16 %v3028
      %v3125 = vunpack.c.l.b16 %v3029
      %v3126 = vunpack.c.l.b16 %v3030
      %v3127 = vunpack.c.l.b16 %v3031
      %v3128 = vunpack.c.l.b16 %v3032
      %v3129 = vunpack.c.l.b16 %v3033
      %v3130 = vunpack.c.l.b16 %v3034
      %v3131 = vunpack.c.l.b16 %v3035
      %v3132 = vunpack.c.l.b16 %v3036
      %v3133 = vpack.c.b16 %v3086, %v3085
      %v3134 = vpack.c.b16 %v3087, %v3087
      %v3135 = vpack.c.b16 %v3089, %v3088
      %v3136 = vpack.c.b16 %v3090, %v3090
      %v3137 = vpack.c.b16 %v3092, %v3091
      %v3138 = vpack.c.b16 %v3093, %v3093
      %v3139 = vpack.c.b16 %v3095, %v3094
      %v3140 = vpack.c.b16 %v3096, %v3096
      %v3141 = vpack.c.b16 %v3098, %v3097
      %v3142 = vpack.c.b16 %v3099, %v3099
      %v3143 = vpack.c.b16 %v3101, %v3100
      %v3144 = vpack.c.b16 %v3102, %v3102
      %v3145 = vpack.c.b16 %v3104, %v3103
      %v3146 = vpack.c.b16 %v3105, %v3105
      %v3147 = vpack.c.b16 %v3107, %v3106
      %v3148 = vpack.c.b16 %v3108, %v3108
      %v3149 = vpack.c.b16 %v3110, %v3109
      %v3150 = vpack.c.b16 %v3111, %v3111
      %v3151 = vpack.c.b16 %v3113, %v3112
      %v3152 = vpack.c.b16 %v3114, %v3114
      %v3153 = vpack.c.b16 %v3116, %v3115
      %v3154 = vpack.c.b16 %v3117, %v3117
      %v3155 = vpack.c.b16 %v3119, %v3118
      %v3156 = vpack.c.b16 %v3120, %v3120
      %v3157 = vpack.c.b16 %v3122, %v3121
      %v3158 = vpack.c.b16 %v3123, %v3123
      %v3159 = vpack.c.b16 %v3125, %v3124
      %v3160 = vpack.c.b16 %v3126, %v3126
      %v3161 = vpack.c.b16 %v3128, %v3127
      %v3162 = vpack.c.b16 %v3129, %v3129
      %v3163 = vpack.c.b16 %v3131, %v3130
      %v3164 = vpack.c.b16 %v3132, %v3132
      %v3166 = vshrl.u32 %v3133, 16
      %v3168 = vshll.u32 %v3133, 16
      %v3170 = vrot.slane %v3168, 1
      %v3171 = vor.u32 %v3166, %v3170
      %v3173 = vshll.u32 %v3134, 16
      %v3175 = vrot.slane %v3173, 1
      %v3176 = vsel %vm1364, %v3171, %v3175
      %v3178 = vshrl.u32 %v3135, 16
      %v3180 = vshll.u32 %v3135, 16
      %v3182 = vrot.slane %v3180, 1
      %v3183 = vor.u32 %v3178, %v3182
      %v3185 = vshll.u32 %v3136, 16
      %v3187 = vrot.slane %v3185, 1
      %v3188 = vsel %vm1364, %v3183, %v3187
      %v3190 = vshrl.u32 %v3137, 16
      %v3192 = vshll.u32 %v3137, 16
      %v3194 = vrot.slane %v3192, 1
      %v3195 = vor.u32 %v3190, %v3194
      %v3197 = vshll.u32 %v3138, 16
      %v3199 = vrot.slane %v3197, 1
      %v3200 = vsel %vm1364, %v3195, %v3199
      %v3202 = vshrl.u32 %v3139, 16
      %v3204 = vshll.u32 %v3139, 16
      %v3206 = vrot.slane %v3204, 1
      %v3207 = vor.u32 %v3202, %v3206
      %v3209 = vshll.u32 %v3140, 16
      %v3211 = vrot.slane %v3209, 1
      %v3212 = vsel %vm1364, %v3207, %v3211
      %v3214 = vshrl.u32 %v3141, 16
      %v3216 = vshll.u32 %v3141, 16
      %v3218 = vrot.slane %v3216, 1
      %v3219 = vor.u32 %v3214, %v3218
      %v3221 = vshll.u32 %v3142, 16
      %v3223 = vrot.slane %v3221, 1
      %v3224 = vsel %vm1364, %v3219, %v3223
      %v3226 = vshrl.u32 %v3143, 16
      %v3228 = vshll.u32 %v3143, 16
      %v3230 = vrot.slane %v3228, 1
      %v3231 = vor.u32 %v3226, %v3230
      %v3233 = vshll.u32 %v3144, 16
      %v3235 = vrot.slane %v3233, 1
      %v3236 = vsel %vm1364, %v3231, %v3235
      %v3238 = vshrl.u32 %v3145, 16
      %v3240 = vshll.u32 %v3145, 16
      %v3242 = vrot.slane %v3240, 1
      %v3243 = vor.u32 %v3238, %v3242
      %v3245 = vshll.u32 %v3146, 16
      %v3247 = vrot.slane %v3245, 1
      %v3248 = vsel %vm1364, %v3243, %v3247
      %v3250 = vshrl.u32 %v3147, 16
      %v3252 = vshll.u32 %v3147, 16
      %v3254 = vrot.slane %v3252, 1
      %v3255 = vor.u32 %v3250, %v3254
      %v3257 = vshll.u32 %v3148, 16
      %v3259 = vrot.slane %v3257, 1
      %v3260 = vsel %vm1364, %v3255, %v3259
      %v3262 = vshrl.u32 %v3149, 16
      %v3264 = vshll.u32 %v3149, 16
      %v3266 = vrot.slane %v3264, 1
      %v3267 = vor.u32 %v3262, %v3266
      %v3269 = vshll.u32 %v3150, 16
      %v3271 = vrot.slane %v3269, 1
      %v3272 = vsel %vm1364, %v3267, %v3271
      %v3274 = vshrl.u32 %v3151, 16
      %v3276 = vshll.u32 %v3151, 16
      %v3278 = vrot.slane %v3276, 1
      %v3279 = vor.u32 %v3274, %v3278
      %v3281 = vshll.u32 %v3152, 16
      %v3283 = vrot.slane %v3281, 1
      %v3284 = vsel %vm1364, %v3279, %v3283
      %v3286 = vshrl.u32 %v3153, 16
      %v3288 = vshll.u32 %v3153, 16
      %v3290 = vrot.slane %v3288, 1
      %v3291 = vor.u32 %v3286, %v3290
      %v3293 = vshll.u32 %v3154, 16
      %v3295 = vrot.slane %v3293, 1
      %v3296 = vsel %vm1364, %v3291, %v3295
      %v3298 = vshrl.u32 %v3155, 16
      %v3300 = vshll.u32 %v3155, 16
      %v3302 = vrot.slane %v3300, 1
      %v3303 = vor.u32 %v3298, %v3302
      %v3305 = vshll.u32 %v3156, 16
      %v3307 = vrot.slane %v3305, 1
      %v3308 = vsel %vm1364, %v3303, %v3307
      %v3310 = vshrl.u32 %v3157, 16
      %v3312 = vshll.u32 %v3157, 16
      %v3314 = vrot.slane %v3312, 1
      %v3315 = vor.u32 %v3310, %v3314
      %v3317 = vshll.u32 %v3158, 16
      %v3319 = vrot.slane %v3317, 1
      %v3320 = vsel %vm1364, %v3315, %v3319
      %v3322 = vshrl.u32 %v3159, 16
      %v3324 = vshll.u32 %v3159, 16
      %v3326 = vrot.slane %v3324, 1
      %v3327 = vor.u32 %v3322, %v3326
      %v3329 = vshll.u32 %v3160, 16
      %v3331 = vrot.slane %v3329, 1
      %v3332 = vsel %vm1364, %v3327, %v3331
      %v3334 = vshrl.u32 %v3161, 16
      %v3336 = vshll.u32 %v3161, 16
      %v3338 = vrot.slane %v3336, 1
      %v3339 = vor.u32 %v3334, %v3338
      %v3341 = vshll.u32 %v3162, 16
      %v3343 = vrot.slane %v3341, 1
      %v3344 = vsel %vm1364, %v3339, %v3343
      %v3346 = vshrl.u32 %v3163, 16
      %v3348 = vshll.u32 %v3163, 16
      %v3350 = vrot.slane %v3348, 1
      %v3351 = vor.u32 %v3346, %v3350
      %v3353 = vshll.u32 %v3164, 16
      %v3355 = vrot.slane %v3353, 1
      %v3356 = vsel %vm1364, %v3351, %v3355
      %3357 = vrot.lane.b32.xlu0 %v3176, 28
      %v3358 = vpop.permute.xlu0 %3357
      %3359 = vrot.lane.b32.xlu0 %v3188, 28
      %v3360 = vpop.permute.xlu0 %3359
      %3361 = vrot.lane.b32.xlu0 %v3200, 28
      %v3362 = vpop.permute.xlu0 %3361
      %3363 = vrot.lane.b32.xlu0 %v3212, 28
      %v3364 = vpop.permute.xlu0 %3363
      %3365 = vrot.lane.b32.xlu0 %v3224, 28
      %v3366 = vpop.permute.xlu0 %3365
      %3367 = vrot.lane.b32.xlu0 %v3236, 28
      %v3368 = vpop.permute.xlu0 %3367
      %3369 = vrot.lane.b32.xlu0 %v3248, 28
      %v3370 = vpop.permute.xlu0 %3369
      %3371 = vrot.lane.b32.xlu0 %v3260, 28
      %v3372 = vpop.permute.xlu0 %3371
      %3373 = vrot.lane.b32.xlu0 %v3272, 28
      %v3374 = vpop.permute.xlu0 %3373
      %3375 = vrot.lane.b32.xlu0 %v3284, 28
      %v3376 = vpop.permute.xlu0 %3375
      %3377 = vrot.lane.b32.xlu0 %v3296, 28
      %v3378 = vpop.permute.xlu0 %3377
      %3379 = vrot.lane.b32.xlu0 %v3308, 28
      %v3380 = vpop.permute.xlu0 %3379
      %3381 = vrot.lane.b32.xlu0 %v3320, 28
      %v3382 = vpop.permute.xlu0 %3381
      %3383 = vrot.lane.b32.xlu0 %v3332, 28
      %v3384 = vpop.permute.xlu0 %3383
      %3385 = vrot.lane.b32.xlu0 %v3344, 28
      %v3386 = vpop.permute.xlu0 %3385
      %3387 = vrot.lane.b32.xlu0 %v3356, 28
      %v3388 = vpop.permute.xlu0 %3387
      %vm3405 = vcmask 261344
      %3406 = vst.msk [vmem:[#allocation3] sm:$0xff] %vm3405, %v3358
      %3407 = vst.msk [vmem:[#allocation3 + $0x8] sm:$0xff] %vm3405, %v3360
      %3408 = vst.msk [vmem:[#allocation3 + $0x10] sm:$0xff] %vm3405, %v3362
      %3409 = vst.msk [vmem:[#allocation3 + $0x18] sm:$0xff] %vm3405, %v3364
      %3410 = vst.msk [vmem:[#allocation3 + $0x20] sm:$0xff] %vm3405, %v3366
      %3411 = vst.msk [vmem:[#allocation3 + $0x28] sm:$0xff] %vm3405, %v3368
      %3412 = vst.msk [vmem:[#allocation3 + $0x30] sm:$0xff] %vm3405, %v3370
      %3413 = vst.msk [vmem:[#allocation3 + $0x38] sm:$0xff] %vm3405, %v3372
      %3414 = vst.msk [vmem:[#allocation3 + $0x40] sm:$0xff] %vm3405, %v3374
      %3415 = vst.msk [vmem:[#allocation3 + $0x48] sm:$0xff] %vm3405, %v3376
      %3416 = vst.msk [vmem:[#allocation3 + $0x50] sm:$0xff] %vm3405, %v3378
      %3417 = vst.msk [vmem:[#allocation3 + $0x58] sm:$0xff] %vm3405, %v3380
      %3418 = vst.msk [vmem:[#allocation3 + $0x60] sm:$0xff] %vm3405, %v3382
      %3419 = vst.msk [vmem:[#allocation3 + $0x68] sm:$0xff] %vm3405, %v3384
      %3420 = vst.msk [vmem:[#allocation3 + $0x70] sm:$0xff] %vm3405, %v3386
      %3421 = vst.msk [vmem:[#allocation3 + $0x78] sm:$0xff] %vm3405, %v3388
      %v3422 = vld [vmem:[%s2811] sm:$0xe]
      %v3423 = vld [vmem:[%s2811 + $0x4] sm:$0xf]
      %v3424 = vld [vmem:[%s2811 + $0x8] sm:$0x1]
      %v3425 = vld [vmem:[%s2811 + $0xc] sm:$0xe]
      %v3426 = vld [vmem:[%s2811 + $0x10] sm:$0xf]
      %v3427 = vld [vmem:[%s2811 + $0x14] sm:$0x1]
      %v3428 = vld [vmem:[%s2811 + $0x18] sm:$0xe]
      %v3429 = vld [vmem:[%s2811 + $0x1c] sm:$0xf]
      %v3430 = vld [vmem:[%s2811 + $0x20] sm:$0x1]
      %v3431 = vld [vmem:[%s2811 + $0x24] sm:$0xe]
      %v3432 = vld [vmem:[%s2811 + $0x28] sm:$0xf]
      %v3433 = vld [vmem:[%s2811 + $0x2c] sm:$0x1]
      %v3434 = vld [vmem:[%s2811 + $0x30] sm:$0xe]
      %v3435 = vld [vmem:[%s2811 + $0x34] sm:$0xf]
      %v3436 = vld [vmem:[%s2811 + $0x38] sm:$0x1]
      %v3437 = vld [vmem:[%s2811 + $0x3c] sm:$0xe]
      %v3438 = vld [vmem:[%s2811 + $0x40] sm:$0xf]
      %v3439 = vld [vmem:[%s2811 + $0x44] sm:$0x1]
      %v3440 = vld [vmem:[%s2811 + $0x48] sm:$0xe]
      %v3441 = vld [vmem:[%s2811 + $0x4c] sm:$0xf]
      %v3442 = vld [vmem:[%s2811 + $0x50] sm:$0x1]
      %v3443 = vld [vmem:[%s2811 + $0x54] sm:$0xe]
      %v3444 = vld [vmem:[%s2811 + $0x58] sm:$0xf]
      %v3445 = vld [vmem:[%s2811 + $0x5c] sm:$0x1]
      %v3446 = vld [vmem:[%s2811 + $0x60] sm:$0xe]
      %v3447 = vld [vmem:[%s2811 + $0x64] sm:$0xf]
      %v3448 = vld [vmem:[%s2811 + $0x68] sm:$0x1]
      %v3449 = vld [vmem:[%s2811 + $0x6c] sm:$0xe]
      %v3450 = vld [vmem:[%s2811 + $0x70] sm:$0xf]
      %v3451 = vld [vmem:[%s2811 + $0x74] sm:$0x1]
      %v3452 = vld [vmem:[%s2811 + $0x78] sm:$0xe]
      %v3453 = vld [vmem:[%s2811 + $0x7c] sm:$0xf]
      %v3454 = vld [vmem:[%s2811 + $0x80] sm:$0x1]
      %v3455 = vld [vmem:[%s2811 + $0x84] sm:$0xe]
      %v3456 = vld [vmem:[%s2811 + $0x88] sm:$0xf]
      %v3457 = vld [vmem:[%s2811 + $0x8c] sm:$0x1]
      %v3458 = vld [vmem:[%s2811 + $0x90] sm:$0xe]
      %v3459 = vld [vmem:[%s2811 + $0x94] sm:$0xf]
      %v3460 = vld [vmem:[%s2811 + $0x98] sm:$0x1]
      %v3461 = vld [vmem:[%s2811 + $0x9c] sm:$0xe]
      %v3462 = vld [vmem:[%s2811 + $0xa0] sm:$0xf]
      %v3463 = vld [vmem:[%s2811 + $0xa4] sm:$0x1]
      %v3464 = vld [vmem:[%s2811 + $0xa8] sm:$0xe]
      %v3465 = vld [vmem:[%s2811 + $0xac] sm:$0xf]
      %v3466 = vld [vmem:[%s2811 + $0xb0] sm:$0x1]
      %v3467 = vld [vmem:[%s2811 + $0xb4] sm:$0xe]
      %v3468 = vld [vmem:[%s2811 + $0xb8] sm:$0xf]
      %v3469 = vld [vmem:[%s2811 + $0xbc] sm:$0x1]
      %v3518 = vunpack.c.l.b16 %v3422
      %v3519 = vunpack.c.l.b16 %v3423
      %v3520 = vunpack.c.l.b16 %v3424
      %v3521 = vunpack.c.l.b16 %v3425
      %v3522 = vunpack.c.l.b16 %v3426
      %v3523 = vunpack.c.l.b16 %v3427
      %v3524 = vunpack.c.l.b16 %v3428
      %v3525 = vunpack.c.l.b16 %v3429
      %v3526 = vunpack.c.l.b16 %v3430
      %v3527 = vunpack.c.l.b16 %v3431
      %v3528 = vunpack.c.l.b16 %v3432
      %v3529 = vunpack.c.l.b16 %v3433
      %v3530 = vunpack.c.l.b16 %v3434
      %v3531 = vunpack.c.l.b16 %v3435
      %v3532 = vunpack.c.l.b16 %v3436
      %v3533 = vunpack.c.l.b16 %v3437
      %v3534 = vunpack.c.l.b16 %v3438
      %v3535 = vunpack.c.l.b16 %v3439
      %v3536 = vunpack.c.l.b16 %v3440
      %v3537 = vunpack.c.l.b16 %v3441
      %v3538 = vunpack.c.l.b16 %v3442
      %v3539 = vunpack.c.l.b16 %v3443
      %v3540 = vunpack.c.l.b16 %v3444
      %v3541 = vunpack.c.l.b16 %v3445
      %v3542 = vunpack.c.l.b16 %v3446
      %v3543 = vunpack.c.l.b16 %v3447
      %v3544 = vunpack.c.l.b16 %v3448
      %v3545 = vunpack.c.l.b16 %v3449
      %v3546 = vunpack.c.l.b16 %v3450
      %v3547 = vunpack.c.l.b16 %v3451
      %v3548 = vunpack.c.l.b16 %v3452
      %v3549 = vunpack.c.l.b16 %v3453
      %v3550 = vunpack.c.l.b16 %v3454
      %v3551 = vunpack.c.l.b16 %v3455
      %v3552 = vunpack.c.l.b16 %v3456
      %v3553 = vunpack.c.l.b16 %v3457
      %v3554 = vunpack.c.l.b16 %v3458
      %v3555 = vunpack.c.l.b16 %v3459
      %v3556 = vunpack.c.l.b16 %v3460
      %v3557 = vunpack.c.l.b16 %v3461
      %v3558 = vunpack.c.l.b16 %v3462
      %v3559 = vunpack.c.l.b16 %v3463
      %v3560 = vunpack.c.l.b16 %v3464
      %v3561 = vunpack.c.l.b16 %v3465
      %v3562 = vunpack.c.l.b16 %v3466
      %v3563 = vunpack.c.l.b16 %v3467
      %v3564 = vunpack.c.l.b16 %v3468
      %v3565 = vunpack.c.l.b16 %v3469
      %v3566 = vpack.c.b16 %v3519, %v3518
      %v3567 = vpack.c.b16 %v3520, %v3520
      %v3568 = vpack.c.b16 %v3522, %v3521
      %v3569 = vpack.c.b16 %v3523, %v3523
      %v3570 = vpack.c.b16 %v3525, %v3524
      %v3571 = vpack.c.b16 %v3526, %v3526
      %v3572 = vpack.c.b16 %v3528, %v3527
      %v3573 = vpack.c.b16 %v3529, %v3529
      %v3574 = vpack.c.b16 %v3531, %v3530
      %v3575 = vpack.c.b16 %v3532, %v3532
      %v3576 = vpack.c.b16 %v3534, %v3533
      %v3577 = vpack.c.b16 %v3535, %v3535
      %v3578 = vpack.c.b16 %v3537, %v3536
      %v3579 = vpack.c.b16 %v3538, %v3538
      %v3580 = vpack.c.b16 %v3540, %v3539
      %v3581 = vpack.c.b16 %v3541, %v3541
      %v3582 = vpack.c.b16 %v3543, %v3542
      %v3583 = vpack.c.b16 %v3544, %v3544
      %v3584 = vpack.c.b16 %v3546, %v3545
      %v3585 = vpack.c.b16 %v3547, %v3547
      %v3586 = vpack.c.b16 %v3549, %v3548
      %v3587 = vpack.c.b16 %v3550, %v3550
      %v3588 = vpack.c.b16 %v3552, %v3551
      %v3589 = vpack.c.b16 %v3553, %v3553
      %v3590 = vpack.c.b16 %v3555, %v3554
      %v3591 = vpack.c.b16 %v3556, %v3556
      %v3592 = vpack.c.b16 %v3558, %v3557
      %v3593 = vpack.c.b16 %v3559, %v3559
      %v3594 = vpack.c.b16 %v3561, %v3560
      %v3595 = vpack.c.b16 %v3562, %v3562
      %v3596 = vpack.c.b16 %v3564, %v3563
      %v3597 = vpack.c.b16 %v3565, %v3565
      %v3598 = vrot.slane %v3566, 1
      %v3599 = vrot.slane %v3567, 1
      %v3600 = vsel %vm1798, %v3598, %v3599
      %v3601 = vrot.slane %v3568, 1
      %v3602 = vrot.slane %v3569, 1
      %v3603 = vsel %vm1798, %v3601, %v3602
      %v3604 = vrot.slane %v3570, 1
      %v3605 = vrot.slane %v3571, 1
      %v3606 = vsel %vm1798, %v3604, %v3605
      %v3607 = vrot.slane %v3572, 1
      %v3608 = vrot.slane %v3573, 1
      %v3609 = vsel %vm1798, %v3607, %v3608
      %v3610 = vrot.slane %v3574, 1
      %v3611 = vrot.slane %v3575, 1
      %v3612 = vsel %vm1798, %v3610, %v3611
      %v3613 = vrot.slane %v3576, 1
      %v3614 = vrot.slane %v3577, 1
      %v3615 = vsel %vm1798, %v3613, %v3614
      %v3616 = vrot.slane %v3578, 1
      %v3617 = vrot.slane %v3579, 1
      %v3618 = vsel %vm1798, %v3616, %v3617
      %v3619 = vrot.slane %v3580, 1
      %v3620 = vrot.slane %v3581, 1
      %v3621 = vsel %vm1798, %v3619, %v3620
      %v3622 = vrot.slane %v3582, 1
      %v3623 = vrot.slane %v3583, 1
      %v3624 = vsel %vm1798, %v3622, %v3623
      %v3625 = vrot.slane %v3584, 1
      %v3626 = vrot.slane %v3585, 1
      %v3627 = vsel %vm1798, %v3625, %v3626
      %v3628 = vrot.slane %v3586, 1
      %v3629 = vrot.slane %v3587, 1
      %v3630 = vsel %vm1798, %v3628, %v3629
      %v3631 = vrot.slane %v3588, 1
      %v3632 = vrot.slane %v3589, 1
      %v3633 = vsel %vm1798, %v3631, %v3632
      %v3634 = vrot.slane %v3590, 1
      %v3635 = vrot.slane %v3591, 1
      %v3636 = vsel %vm1798, %v3634, %v3635
      %v3637 = vrot.slane %v3592, 1
      %v3638 = vrot.slane %v3593, 1
      %v3639 = vsel %vm1798, %v3637, %v3638
      %v3640 = vrot.slane %v3594, 1
      %v3641 = vrot.slane %v3595, 1
      %v3642 = vsel %vm1798, %v3640, %v3641
      %v3643 = vrot.slane %v3596, 1
      %v3644 = vrot.slane %v3597, 1
      %v3645 = vsel %vm1798, %v3643, %v3644
      %3646 = vrot.lane.b32.xlu0 %v3600, 32
      %v3647 = vpop.permute.xlu0 %3646
      %3648 = vrot.lane.b32.xlu0 %v3603, 32
      %v3649 = vpop.permute.xlu0 %3648
      %3650 = vrot.lane.b32.xlu0 %v3606, 32
      %v3651 = vpop.permute.xlu0 %3650
      %3652 = vrot.lane.b32.xlu0 %v3609, 32
      %v3653 = vpop.permute.xlu0 %3652
      %3654 = vrot.lane.b32.xlu0 %v3612, 32
      %v3655 = vpop.permute.xlu0 %3654
      %3656 = vrot.lane.b32.xlu0 %v3615, 32
      %v3657 = vpop.permute.xlu0 %3656
      %3658 = vrot.lane.b32.xlu0 %v3618, 32
      %v3659 = vpop.permute.xlu0 %3658
      %3660 = vrot.lane.b32.xlu0 %v3621, 32
      %v3661 = vpop.permute.xlu0 %3660
      %3662 = vrot.lane.b32.xlu0 %v3624, 32
      %v3663 = vpop.permute.xlu0 %3662
      %3664 = vrot.lane.b32.xlu0 %v3627, 32
      %v3665 = vpop.permute.xlu0 %3664
      %3666 = vrot.lane.b32.xlu0 %v3630, 32
      %v3667 = vpop.permute.xlu0 %3666
      %3668 = vrot.lane.b32.xlu0 %v3633, 32
      %v3669 = vpop.permute.xlu0 %3668
      %3670 = vrot.lane.b32.xlu0 %v3636, 32
      %v3671 = vpop.permute.xlu0 %3670
      %3672 = vrot.lane.b32.xlu0 %v3639, 32
      %v3673 = vpop.permute.xlu0 %3672
      %3674 = vrot.lane.b32.xlu0 %v3642, 32
      %v3675 = vpop.permute.xlu0 %3674
      %3676 = vrot.lane.b32.xlu0 %v3645, 32
      %v3677 = vpop.permute.xlu0 %3676
      %vm3694 = vcmask 294144
      %3695 = vst.msk [vmem:[#allocation3] sm:$0xff] %vm3694, %v3647
      %3696 = vst.msk [vmem:[#allocation3 + $0x8] sm:$0xff] %vm3694, %v3649
      %3697 = vst.msk [vmem:[#allocation3 + $0x10] sm:$0xff] %vm3694, %v3651
      %3698 = vst.msk [vmem:[#allocation3 + $0x18] sm:$0xff] %vm3694, %v3653
      %3699 = vst.msk [vmem:[#allocation3 + $0x20] sm:$0xff] %vm3694, %v3655
      %3700 = vst.msk [vmem:[#allocation3 + $0x28] sm:$0xff] %vm3694, %v3657
      %3701 = vst.msk [vmem:[#allocation3 + $0x30] sm:$0xff] %vm3694, %v3659
      %3702 = vst.msk [vmem:[#allocation3 + $0x38] sm:$0xff] %vm3694, %v3661
      %3703 = vst.msk [vmem:[#allocation3 + $0x40] sm:$0xff] %vm3694, %v3663
      %3704 = vst.msk [vmem:[#allocation3 + $0x48] sm:$0xff] %vm3694, %v3665
      %3705 = vst.msk [vmem:[#allocation3 + $0x50] sm:$0xff] %vm3694, %v3667
      %3706 = vst.msk [vmem:[#allocation3 + $0x58] sm:$0xff] %vm3694, %v3669
      %3707 = vst.msk [vmem:[#allocation3 + $0x60] sm:$0xff] %vm3694, %v3671
      %3708 = vst.msk [vmem:[#allocation3 + $0x68] sm:$0xff] %vm3694, %v3673
      %3709 = vst.msk [vmem:[#allocation3 + $0x70] sm:$0xff] %vm3694, %v3675
      %3710 = vst.msk [vmem:[#allocation3 + $0x78] sm:$0xff] %vm3694, %v3677
      %v3711 = vld [vmem:[#allocation3] sm:$0xff]
      %v3712 = vld [vmem:[#allocation3 + $0x8] sm:$0xff]
      %v3713 = vld [vmem:[#allocation3 + $0x10] sm:$0xff]
      %v3714 = vld [vmem:[#allocation3 + $0x18] sm:$0xff]
      %v3715 = vld [vmem:[#allocation3 + $0x20] sm:$0xff]
      %v3716 = vld [vmem:[#allocation3 + $0x28] sm:$0xff]
      %v3717 = vld [vmem:[#allocation3 + $0x30] sm:$0xff]
      %v3718 = vld [vmem:[#allocation3 + $0x38] sm:$0xff]
      %v3719 = vld [vmem:[#allocation3 + $0x40] sm:$0xff]
      %v3720 = vld [vmem:[#allocation3 + $0x48] sm:$0xff]
      %v3721 = vld [vmem:[#allocation3 + $0x50] sm:$0xff]
      %v3722 = vld [vmem:[#allocation3 + $0x58] sm:$0xff]
      %v3723 = vld [vmem:[#allocation3 + $0x60] sm:$0xff]
      %v3724 = vld [vmem:[#allocation3 + $0x68] sm:$0xff]
      %v3725 = vld [vmem:[#allocation3 + $0x70] sm:$0xff]
      %v3726 = vld [vmem:[#allocation3 + $0x78] sm:$0xff]
      %v3727 = vld [vmem:[%s4] sm:$0xf]
      %v3728 = vld [vmem:[%s4 + $0x4] sm:$0xf]
      %v3729 = vld [vmem:[%s4 + $0x8] sm:$0xf]
      %v3730 = vld [vmem:[%s4 + $0xc] sm:$0xf]
      %v3731 = vld [vmem:[%s4 + $0x10] sm:$0x3]
      %v3737 = vunpack.c.l.b16 %v3727
      %v3738 = vunpack.c.l.b16 %v3728
      %v3739 = vunpack.c.l.b16 %v3729
      %v3740 = vunpack.c.l.b16 %v3730
      %v3741 = vunpack.c.l.b16 %v3731
      %v3742 = vpack.c.b16 %v3738, %v3737
      %v3743 = vpack.c.b16 %v3740, %v3739
      %v3744 = vpack.c.b16 %v3741, %v3741
      %vm3747 = vcmask 293888
      %v3749 = vsel %vm3747, %v3711, 0
      %v3752 = vsel %vm3747, %v3712, 0
      %v3755 = vsel %vm3747, %v3713, 0
      %v3758 = vsel %vm3747, %v3714, 0
      %v3761 = vsel %vm3747, %v3715, 0
      %v3764 = vsel %vm3747, %v3716, 0
      %v3767 = vsel %vm3747, %v3717, 0
      %v3770 = vsel %vm3747, %v3718, 0
      %v3773 = vsel %vm3747, %v3719, 0
      %v3776 = vsel %vm3747, %v3720, 0
      %v3779 = vsel %vm3747, %v3721, 0
      %v3782 = vsel %vm3747, %v3722, 0
      %v3785 = vsel %vm3747, %v3723, 0
      %v3788 = vsel %vm3747, %v3724, 0
      %v3791 = vsel %vm3747, %v3725, 0
      %v3794 = vsel %vm3747, %v3726, 0
      %vm3796 = vcmask 1041408
      %v3798 = vsel %vm3796, %v3744, 0
      %3800 = vmatprep.subr.bf16.mxu0 0
      %3801 = vmatpush1.bf16.msra.mxu0 %v3742
      %3802 = vmatprep.subr.bf16.mxu0 0
      %3803 = vmatpush1.bf16.msra.mxu0 %v3743
      %3804 = vmatprep.subr.bf16.mxu0 0
      %3805 = vmatpush1.bf16.msra.mxu0 %v3798
      %3806 = vmatprep.subr.bf16.mxu0 0
      %3807 = vmatpush1.bf16.msra.mxu0 0
      %3808 = vmatprep.subr.bf16.mxu0 0
      %3809 = vmatpush1.bf16.msra.mxu0 0
      %3810 = vmatprep.subr.bf16.mxu0 0
      %3811 = vmatpush1.bf16.msra.mxu0 0
      %3812 = vmatprep.subr.bf16.mxu0 0
      %3813 = vmatpush1.bf16.msra.mxu0 0
      %3814 = vmatprep.subr.bf16.mxu0 0
      %3815 = vmatpush1.bf16.msra.mxu0 0
      %3816 = vmatprep.subr.bf16.mxu0 0
      %3817 = vmatpush1.bf16.msra.mxu0 0
      %3818 = vmatprep.subr.bf16.mxu0 0
      %3819 = vmatpush1.bf16.msra.mxu0 0
      %3820 = vmatprep.subr.bf16.mxu0 0
      %3821 = vmatpush1.bf16.msra.mxu0 0
      %3822 = vmatprep.subr.bf16.mxu0 0
      %3823 = vmatpush1.bf16.msra.mxu0 0
      %3824 = vmatprep.subr.bf16.mxu0 0
      %3825 = vmatpush1.bf16.msra.mxu0 0
      %3826 = vmatprep.subr.bf16.mxu0 0
      %3827 = vmatpush1.bf16.msra.mxu0 0
      %3828 = vmatprep.subr.bf16.mxu0 0
      %3829 = vmatpush1.bf16.msra.mxu0 0
      %3830 = vmatprep.subr.bf16.mxu0 0
      %3831 = vmatpush1.bf16.msra.mxu0 0
      %3832 = vmatprep.mubr.bf16.mxu0 0
      %3833 = vmatmul.mubr.bf16.gmra.mrb[0].mxu0 %v3749
      %v3834 = vpop.f32.mrb[0].mxu0
      %v3835 = vadd.f32 0.0, %v3834
      %v3836 = vpop.f32.mrb[0].mxu0
      %v3837 = vpop.f32.mrb[0].mxu0
      %v3838 = vadd.f32 0.0, %v3837
      %v3839 = vpop.f32.mrb[0].mxu0
      %3840 = vmatprep.mubr.bf16.mxu0 0
      %3841 = vmatmul.mubr.bf16.gmra.mrb[0].mxu0 %v3752
      %v3842 = vpop.f32.mrb[0].mxu0
      %v3843 = vadd.f32 0.0, %v3842
      %v3844 = vpop.f32.mrb[0].mxu0
      %v3845 = vpop.f32.mrb[0].mxu0
      %v3846 = vadd.f32 0.0, %v3845
      %v3847 = vpop.f32.mrb[0].mxu0
      %3848 = vmatprep.mubr.bf16.mxu0 0
      %3849 = vmatmul.mubr.bf16.gmra.mrb[0].mxu0 %v3755
      %v3850 = vpop.f32.mrb[0].mxu0
      %v3851 = vadd.f32 0.0, %v3850
      %v3852 = vpop.f32.mrb[0].mxu0
      %v3853 = vpop.f32.mrb[0].mxu0
      %v3854 = vadd.f32 0.0, %v3853
      %v3855 = vpop.f32.mrb[0].mxu0
      %3856 = vmatprep.mubr.bf16.mxu0 0
      %3857 = vmatmul.mubr.bf16.gmra.mrb[0].mxu0 %v3758
      %v3858 = vpop.f32.mrb[0].mxu0
      %v3859 = vadd.f32 0.0, %v3858
      %v3860 = vpop.f32.mrb[0].mxu0
      %v3861 = vpop.f32.mrb[0].mxu0
      %v3862 = vadd.f32 0.0, %v3861
      %v3863 = vpop.f32.mrb[0].mxu0
      %3864 = vmatprep.mubr.bf16.mxu0 0
      %3865 = vmatmul.mubr.bf16.gmra.mrb[0].mxu0 %v3761
      %v3866 = vpop.f32.mrb[0].mxu0
      %v3867 = vadd.f32 0.0, %v3866
      %v3868 = vpop.f32.mrb[0].mxu0
      %v3869 = vpop.f32.mrb[0].mxu0
      %v3870 = vadd.f32 0.0, %v3869
      %v3871 = vpop.f32.mrb[0].mxu0
      %3872 = vmatprep.mubr.bf16.mxu0 0
      %3873 = vmatmul.mubr.bf16.gmra.mrb[0].mxu0 %v3764
      %v3874 = vpop.f32.mrb[0].mxu0
      %v3875 = vadd.f32 0.0, %v3874
      %v3876 = vpop.f32.mrb[0].mxu0
      %v3877 = vpop.f32.mrb[0].mxu0
      %v3878 = vadd.f32 0.0, %v3877
      %v3879 = vpop.f32.mrb[0].mxu0
      %3880 = vmatprep.mubr.bf16.mxu0 0
      %3881 = vmatmul.mubr.bf16.gmra.mrb[0].mxu0 %v3767
      %v3882 = vpop.f32.mrb[0].mxu0
      %v3883 = vadd.f32 0.0, %v3882
      %v3884 = vpop.f32.mrb[0].mxu0
      %v3885 = vpop.f32.mrb[0].mxu0
      %v3886 = vadd.f32 0.0, %v3885
      %v3887 = vpop.f32.mrb[0].mxu0
      %3888 = vmatprep.mubr.bf16.mxu0 0
      %3889 = vmatmul.mubr.bf16.gmra.mrb[0].mxu0 %v3770
      %v3890 = vpop.f32.mrb[0].mxu0
      %v3891 = vadd.f32 0.0, %v3890
      %v3892 = vpop.f32.mrb[0].mxu0
      %v3893 = vpop.f32.mrb[0].mxu0
      %v3894 = vadd.f32 0.0, %v3893
      %v3895 = vpop.f32.mrb[0].mxu0
      %3896 = vmatprep.mubr.bf16.mxu0 0
      %3897 = vmatmul.mubr.bf16.gmra.mrb[0].mxu0 %v3773
      %v3898 = vpop.f32.mrb[0].mxu0
      %v3899 = vadd.f32 0.0, %v3898
      %v3900 = vpop.f32.mrb[0].mxu0
      %v3901 = vpop.f32.mrb[0].mxu0
      %v3902 = vadd.f32 0.0, %v3901
      %v3903 = vpop.f32.mrb[0].mxu0
      %3904 = vmatprep.mubr.bf16.mxu0 0
      %3905 = vmatmul.mubr.bf16.gmra.mrb[0].mxu0 %v3776
      %v3906 = vpop.f32.mrb[0].mxu0
      %v3907 = vadd.f32 0.0, %v3906
      %v3908 = vpop.f32.mrb[0].mxu0
      %v3909 = vpop.f32.mrb[0].mxu0
      %v3910 = vadd.f32 0.0, %v3909
      %v3911 = vpop.f32.mrb[0].mxu0
      %3912 = vmatprep.mubr.bf16.mxu0 0
      %3913 = vmatmul.mubr.bf16.gmra.mrb[0].mxu0 %v3779
      %v3914 = vpop.f32.mrb[0].mxu0
      %v3915 = vadd.f32 0.0, %v3914
      %v3916 = vpop.f32.mrb[0].mxu0
      %v3917 = vpop.f32.mrb[0].mxu0
      %v3918 = vadd.f32 0.0, %v3917
      %v3919 = vpop.f32.mrb[0].mxu0
      %3920 = vmatprep.mubr.bf16.mxu0 0
      %3921 = vmatmul.mubr.bf16.gmra.mrb[0].mxu0 %v3782
      %v3922 = vpop.f32.mrb[0].mxu0
      %v3923 = vadd.f32 0.0, %v3922
      %v3924 = vpop.f32.mrb[0].mxu0
      %v3925 = vpop.f32.mrb[0].mxu0
      %v3926 = vadd.f32 0.0, %v3925
      %v3927 = vpop.f32.mrb[0].mxu0
      %3928 = vmatprep.mubr.bf16.mxu0 0
      %3929 = vmatmul.mubr.bf16.gmra.mrb[0].mxu0 %v3785
      %v3930 = vpop.f32.mrb[0].mxu0
      %v3931 = vadd.f32 0.0, %v3930
      %v3932 = vpop.f32.mrb[0].mxu0
      %v3933 = vpop.f32.mrb[0].mxu0
      %v3934 = vadd.f32 0.0, %v3933
      %v3935 = vpop.f32.mrb[0].mxu0
      %3936 = vmatprep.mubr.bf16.mxu0 0
      %3937 = vmatmul.mubr.bf16.gmra.mrb[0].mxu0 %v3788
      %v3938 = vpop.f32.mrb[0].mxu0
      %v3939 = vadd.f32 0.0, %v3938
      %v3940 = vpop.f32.mrb[0].mxu0
      %v3941 = vpop.f32.mrb[0].mxu0
      %v3942 = vadd.f32 0.0, %v3941
      %v3943 = vpop.f32.mrb[0].mxu0
      %3944 = vmatprep.mubr.bf16.mxu0 0
      %3945 = vmatmul.mubr.bf16.gmra.mrb[0].mxu0 %v3791
      %v3946 = vpop.f32.mrb[0].mxu0
      %v3947 = vadd.f32 0.0, %v3946
      %v3948 = vpop.f32.mrb[0].mxu0
      %v3949 = vpop.f32.mrb[0].mxu0
      %v3950 = vadd.f32 0.0, %v3949
      %v3951 = vpop.f32.mrb[0].mxu0
      %3952 = vmatprep.mubr.bf16.mxu0 0
      %3953 = vmatmul.mubr.bf16.gmra.mrb[0].mxu0 %v3794
      %v3954 = vpop.f32.mrb[0].mxu0
      %v3955 = vadd.f32 0.0, %v3954
      %v3956 = vpop.f32.mrb[0].mxu0
      %v3957 = vpop.f32.mrb[0].mxu0
      %v3958 = vadd.f32 0.0, %v3957
      %v3959 = vpop.f32.mrb[0].mxu0
      %3960 = vdwg.mxu0
      %v3961 = vld [vmem:[%s239] sm:$0xff]
      %v3962 = vld [vmem:[%s239 + $0x8] sm:$0xff]
      %v3963 = vld [vmem:[%s239 + $0x10] sm:$0xff]
      %v3964 = vld [vmem:[%s239 + $0x18] sm:$0xff]
      %v3965 = vld [vmem:[%s239 + $0x20] sm:$0xff]
      %v3966 = vld [vmem:[%s239 + $0x28] sm:$0xff]
      %v3967 = vld [vmem:[%s239 + $0x30] sm:$0xff]
      %v3968 = vld [vmem:[%s239 + $0x38] sm:$0xff]
      %v3969 = vld [vmem:[%s239 + $0x40] sm:$0xff]
      %v3970 = vld [vmem:[%s239 + $0x48] sm:$0xff]
      %v3971 = vld [vmem:[%s239 + $0x50] sm:$0xff]
      %v3972 = vld [vmem:[%s239 + $0x58] sm:$0xff]
      %v3973 = vld [vmem:[%s239 + $0x60] sm:$0xff]
      %v3974 = vld [vmem:[%s239 + $0x68] sm:$0xff]
      %v3975 = vld [vmem:[%s239 + $0x70] sm:$0xff]
      %v3976 = vld [vmem:[%s239 + $0x78] sm:$0xff]
      %v3977 = vld [vmem:[%s239 + $0x80] sm:$0xff]
      %v3978 = vld [vmem:[%s239 + $0x88] sm:$0xff]
      %v3979 = vld [vmem:[%s239 + $0x90] sm:$0xff]
      %v3980 = vld [vmem:[%s239 + $0x98] sm:$0xff]
      %v3981 = vld [vmem:[%s239 + $0xa0] sm:$0xff]
      %v3982 = vld [vmem:[%s239 + $0xa8] sm:$0xff]
      %v3983 = vld [vmem:[%s239 + $0xb0] sm:$0xff]
      %v3984 = vld [vmem:[%s239 + $0xb8] sm:$0xff]
      %v3985 = vld [vmem:[%s239 + $0xc0] sm:$0xff]
      %v3986 = vld [vmem:[%s239 + $0xc8] sm:$0xff]
      %v3987 = vld [vmem:[%s239 + $0xd0] sm:$0xff]
      %v3988 = vld [vmem:[%s239 + $0xd8] sm:$0xff]
      %v3989 = vld [vmem:[%s239 + $0xe0] sm:$0xff]
      %v3990 = vld [vmem:[%s239 + $0xe8] sm:$0xff]
      %v3991 = vld [vmem:[%s239 + $0xf0] sm:$0xff]
      %v3992 = vld [vmem:[%s239 + $0xf8] sm:$0xff]
      %v3993 = vadd.f32 %v3835, %v3961
      %v3994 = vadd.f32 %v3838, %v3962
      %v3995 = vadd.f32 %v3843, %v3963
      %v3996 = vadd.f32 %v3846, %v3964
      %v3997 = vadd.f32 %v3851, %v3965
      %v3998 = vadd.f32 %v3854, %v3966
      %v3999 = vadd.f32 %v3859, %v3967
      %v4000 = vadd.f32 %v3862, %v3968
      %v4001 = vadd.f32 %v3867, %v3969
      %v4002 = vadd.f32 %v3870, %v3970
      %v4003 = vadd.f32 %v3875, %v3971
      %v4004 = vadd.f32 %v3878, %v3972
      %v4005 = vadd.f32 %v3883, %v3973
      %v4006 = vadd.f32 %v3886, %v3974
      %v4007 = vadd.f32 %v3891, %v3975
      %v4008 = vadd.f32 %v3894, %v3976
      %v4009 = vadd.f32 %v3899, %v3977
      %v4010 = vadd.f32 %v3902, %v3978
      %v4011 = vadd.f32 %v3907, %v3979
      %v4012 = vadd.f32 %v3910, %v3980
      %v4013 = vadd.f32 %v3915, %v3981
      %v4014 = vadd.f32 %v3918, %v3982
      %v4015 = vadd.f32 %v3923, %v3983
      %v4016 = vadd.f32 %v3926, %v3984
      %v4017 = vadd.f32 %v3931, %v3985
      %v4018 = vadd.f32 %v3934, %v3986
      %v4019 = vadd.f32 %v3939, %v3987
      %v4020 = vadd.f32 %v3942, %v3988
      %v4021 = vadd.f32 %v3947, %v3989
      %v4022 = vadd.f32 %v3950, %v3990
      %v4023 = vadd.f32 %v3955, %v3991
      %v4024 = vadd.f32 %v3958, %v3992
      %4025 = vst.msk [vmem:[%s244] sm:$0xff] %vm1171, %v3993
      %4026 = vst.msk [vmem:[%s244 + $0x8] sm:$0xff] %vm1171, %v3994
      %4027 = vst.msk [vmem:[%s244 + $0x10] sm:$0xff] %vm1171, %v3995
      %4028 = vst.msk [vmem:[%s244 + $0x18] sm:$0xff] %vm1171, %v3996
      %4029 = vst.msk [vmem:[%s244 + $0x20] sm:$0xff] %vm1171, %v3997
      %4030 = vst.msk [vmem:[%s244 + $0x28] sm:$0xff] %vm1171, %v3998
      %4031 = vst.msk [vmem:[%s244 + $0x30] sm:$0xff] %vm1171, %v3999
      %4032 = vst.msk [vmem:[%s244 + $0x38] sm:$0xff] %vm1171, %v4000
      %4033 = vst.msk [vmem:[%s244 + $0x40] sm:$0xff] %vm1171, %v4001
      %4034 = vst.msk [vmem:[%s244 + $0x48] sm:$0xff] %vm1171, %v4002
      %4035 = vst.msk [vmem:[%s244 + $0x50] sm:$0xff] %vm1171, %v4003
      %4036 = vst.msk [vmem:[%s244 + $0x58] sm:$0xff] %vm1171, %v4004
      %4037 = vst.msk [vmem:[%s244 + $0x60] sm:$0xff] %vm1171, %v4005
      %4038 = vst.msk [vmem:[%s244 + $0x68] sm:$0xff] %vm1171, %v4006
      %4039 = vst.msk [vmem:[%s244 + $0x70] sm:$0xff] %vm1171, %v4007
      %4040 = vst.msk [vmem:[%s244 + $0x78] sm:$0xff] %vm1171, %v4008
      %4041 = vst.msk [vmem:[%s244 + $0x80] sm:$0xff] %vm1171, %v4009
      %4042 = vst.msk [vmem:[%s244 + $0x88] sm:$0xff] %vm1171, %v4010
      %4043 = vst.msk [vmem:[%s244 + $0x90] sm:$0xff] %vm1171, %v4011
      %4044 = vst.msk [vmem:[%s244 + $0x98] sm:$0xff] %vm1171, %v4012
      %4045 = vst.msk [vmem:[%s244 + $0xa0] sm:$0xff] %vm1171, %v4013
      %4046 = vst.msk [vmem:[%s244 + $0xa8] sm:$0xff] %vm1171, %v4014
      %4047 = vst.msk [vmem:[%s244 + $0xb0] sm:$0xff] %vm1171, %v4015
      %4048 = vst.msk [vmem:[%s244 + $0xb8] sm:$0xff] %vm1171, %v4016
      %4049 = vst.msk [vmem:[%s244 + $0xc0] sm:$0xff] %vm1171, %v4017
      %4050 = vst.msk [vmem:[%s244 + $0xc8] sm:$0xff] %vm1171, %v4018
      %4051 = vst.msk [vmem:[%s244 + $0xd0] sm:$0xff] %vm1171, %v4019
      %4052 = vst.msk [vmem:[%s244 + $0xd8] sm:$0xff] %vm1171, %v4020
      %4053 = vst.msk [vmem:[%s244 + $0xe0] sm:$0xff] %vm1171, %v4021
      %4054 = vst.msk [vmem:[%s244 + $0xe8] sm:$0xff] %vm1171, %v4022
      %4055 = vst.msk [vmem:[%s244 + $0xf0] sm:$0xff] %vm1171, %v4023
      %4056 = vst.msk [vmem:[%s244 + $0xf8] sm:$0xff] %vm1171, %v4024
      %p4057 = scmp.lt.s32.totalorder %s16, 1
      %s4058 = scalar_select %p4057, %s16, 1
      %s4059 = smul.addr %s4058, 32
      %s4060 = smul.addr %s4059, 8
      %s4061 = scalar_lea.vmem %s5, %s4060
      // Predicated region
      $region41: #{preact_block_nhwc.5} parent=39 // pred_check
        %p4062 = pneg %p149
      $region42: #{preact_block_nhwc.5} parent=39 // pred_check_branch
        %4064 = sbr.rel (%p4062) target = $region44
      $region43: #{preact_block_nhwc.5} parent=39 // pred_region
        _
      $region44: #{preact_block_nhwc.5} parent=39 // pred_fallthru
        _
    $region40: #{preact_block_nhwc.5} parent=5 // pred_fallthru
      _
    %p4065 = scmp.le.s32.totalorder 2, %s11
    // Predicated region
    $region45: #{preact_block_nhwc.5} parent=5 // pred_check
      %p4066 = pneg %p4065
    $region46: #{preact_block_nhwc.5} parent=5 // pred_check_branch
      %4068 = sbr.rel (%p4066) target = $region48
    $region47: #{preact_block_nhwc.5} parent=5 // pred_region
      %s4069 = ssub.s32 %s11, 2
      // Predicated region
      $region49: #{preact_block_nhwc.5} parent=47 // pred_check
        %p4070 = pneg %p155
      $region50: #{preact_block_nhwc.5} parent=47 // pred_check_branch
        %4072 = sbr.rel (%p4070) target = $region52
      $region51: #{preact_block_nhwc.5} parent=47 // pred_region
        %p4073 = scmp.lt.s32.totalorder %s17, 1
        %s4074 = scalar_select %p4073, %s17, 1
        %s4075 = smul.addr %s4074, 32
        %s4076 = smul.addr %s4075, 8
        %s4077 = scalar_lea.vmem %s5, %s4076
      $region52: #{preact_block_nhwc.5} parent=47 // pred_fallthru
        _
    $region48: #{preact_block_nhwc.5} parent=5 // pred_fallthru
      _
  $region6: #{preact_block_nhwc.5} parent=0 // loop_footer
    %s15 = sadd.s32 1, %s11
  $region7: #{preact_block_nhwc.5} parent=0 // loop_footer_branch
    %10 = sbr.rel target = $region3
  $region8: #{preact_block_nhwc.5} parent=0 // loop_exit
    _

</llo_original>
